<compile_context>
chip_gen: v6e
topology: v6e:2x2x1
jax: 0.10.0
libtpu: 0.0.40
codegen_flags: <defaults>
</compile_context>

<pallas_src>
import functools

import numpy as np
import jax
import jax.numpy as jnp
from jax import lax
from jax.experimental import pallas as pl
from jax.experimental.pallas import tpu as pltpu

F32 = jnp.float32
F_PAD = 128          # shared lane-dense feature width for every layer


# ----------------------------------------------------------------------------
# in-kernel math helpers (plain functions traced inside the kernel)
# ----------------------------------------------------------------------------
def _row_l2_normalize(h):
    ss = jnp.sum(h * h, axis=1, keepdims=True)
    # == x / max(||x||_2, 1e-12) ; rsqrt runs on the EUP slot
    return h * lax.rsqrt(jnp.maximum(ss, 1e-24))


def _elu(h):
    # exp only on the non-positive branch
    return jnp.where(h > 0.0, h, jnp.exp(jnp.minimum(h, 0.0)) - 1.0)


def _sigmoid(z):
    # numerically stable, EUP tanh
    return 0.5 * (jnp.tanh(0.5 * z) + 1.0)


def _sum_all(v):      # full reduce kept as a (1,1) array (no 0-d scalars in-kernel)
    return jnp.sum(jnp.sum(v, axis=1, keepdims=True), axis=0, keepdims=True)


def _min_all(v):
    return jnp.min(jnp.min(v, axis=1, keepdims=True), axis=0, keepdims=True)


def _normalize_adj_val(adj, eye):
    a = adj + eye
    inv_d = lax.rsqrt(jnp.maximum(jnp.sum(a, axis=0, keepdims=True), 1e-12))  # (1,n)
    return a * inv_d * inv_d.T            # a[i,j] / (D[i] * D[j])


# ----------------------------------------------------------------------------
# the fused forward kernel
# ----------------------------------------------------------------------------
def _edgecut_kernel(x_ref, adj_ref, adjc_ref,
                    enc_w_ref, enc_b_ref,
                    wfc_ref, bfc_ref, a1_ref, a2_ref,
                    encf_w_ref, encf_b_ref,
                    dec_w1_ref, dec_w2_ref, dec_b_ref,
                    decf_w_ref, decf_b_ref,
                    out_ref, cs_ref, atts_ref,
                    vals_sc,
                    *, num_pool, n_gcns, p, out_dim, n_closure):
    n = adj_ref.shape[0]

    x = x_ref[...]                        # (n, F_PAD), lanes >= real width are zero
    adj = adj_ref[...]                    # (n, n)
    adjc = adjc_ref[...]                  # (n, n)

    row_i = lax.broadcasted_iota(jnp.int32, (n, n), 0)
    col_i = lax.broadcasted_iota(jnp.int32, (n, n), 1)
    eye = (row_i == col_i).astype(F32)
    row_f = row_i.astype(F32)
    col_f = col_i.astype(F32)
    idx_lane = col_f[0:1, :]              # (1, n): 0..n-1
    # selector used to emit (n, n) matrices as lane-dense (n, F_PAD) slabs via one
    # tiny MXU matmul (exact: 0/1 entries, single nonzero term per output lane).
    sel = (lax.broadcasted_iota(jnp.int32, (n, F_PAD), 0)
           == lax.broadcasted_iota(jnp.int32, (n, F_PAD), 1)).astype(F32)

    valid = jnp.ones((1, n), F32)         # level-0: every slot is a real node

    xs, cts, adjcs = [], [], [adjc]

    for k in range(num_pool):
        # ------------------------- encoder GCN stack -------------------------
        for l in range(n_gcns):
            li = n_gcns * k + l
            x1 = x
            support = jnp.dot(x, enc_w_ref[li], preferred_element_type=jnp.float32)
            h = jnp.dot(adjc, support, preferred_element_type=jnp.float32) + enc_b_ref[li]
            h = jnp.maximum(h, 0.0)                       # relu
            if li > 0:                                    # residual for layers > 0
                h = h + x1
            x = _row_l2_normalize(h)
        xs.append(x)

        # --------------------------- edge scores -----------------------------
        hfc = jnp.dot(x, wfc_ref[k], preferred_element_type=jnp.float32) + bfc_ref[k]
        s1 = jnp.sum(hfc * a1_ref[k], axis=1, keepdims=True)   # (n,1) VPU mul + XLU reduce
        s2 = jnp.sum(hfc * a2_ref[k], axis=1, keepdims=True)
        e = _sigmoid(s1 + s2.T)
        att = jnp.where(adj > 0.0, e, 0.0)
        att = 0.5 * (att + att.T)
        att = jnp.where(row_i == col_i, 1.0, att)         # diag forced to 1 (cut <= 1 relies on this)
        atts_ref[k] = jnp.dot(att, sel, preferred_element_type=jnp.float32)

        # ----------------- percentile cut (in-kernel, exact) -----------------
        # positives among valid slots only (invalid diag-1 entries are excluded)
        pos = jnp.logical_and(att > 0.0,
                              jnp.logical_and(valid > 0.0, valid.T > 0.0))
        pos_f = pos.astype(F32)
        vals = jnp.where(pos, att, jnp.inf)
        vals_sc[...] = vals

        def count_body(r, cnt):
            trow = vals_sc[pl.ds(r, 1), :]                # (1, n) dynamic sublane read
            for c in range(n):                            # static lane slices
                cnt = cnt + (vals >= trow[:, c:c + 1]).astype(F32)
            return cnt

        # cnt[i,j] = #{positives <= vals[i,j]}  (inf thresholds never count)
        cnt = lax.fori_loop(0, n, count_body, jnp.zeros((n, n), F32))

        m = _sum_all(pos_f)                               # (1,1) number of positives, >= 1
        hr = (p * (m - 1.0)) / 100.0                      # exact when the true rank is integral
        lo = jnp.floor(hr)
        frac = hr - lo
        hi = jnp.minimum(lo + 1.0, m - 1.0)
        s_lo = _min_all(jnp.where(jnp.logical_and(pos, cnt >= lo + 1.0), vals, jnp.inf))
        s_hi = _min_all(jnp.where(jnp.logical_and(pos, cnt >= hi + 1.0), vals, jnp.inf))
        cut = (1.0 - frac) * s_lo + frac * s_hi           # (1,1) np.percentile 'linear'

        # ------------------------------ pool ---------------------------------
        thr = att * (att >= cut).astype(F32)
        counts = jnp.sum((thr > 0.0).astype(F32), axis=1, keepdims=True)
        # exact reciprocal of small-integer counts (approx=True would be cheaper
        # but slightly perturbs pooled features vs the torch reference)
        att_norm = thr * pl.reciprocal(jnp.maximum(counts, 1.0), approx=False)

        # connected components via boolean reachability closure (diag always set).
        r = (thr > 0.0).astype(F32)
        for _ in range(n_closure):
            r = (jnp.dot(r, r, preferred_element_type=jnp.float32) > 0.0).astype(F32)
        # component representative = min reachable index (float equality on small
        # integer iota values: exact for n < 2^24)
        lab_col = jnp.min(jnp.where(r > 0.0, col_f, 1e9), axis=1, keepdims=True)  # (n,1)
        lab_row = jnp.min(jnp.where(r > 0.0, row_f, 1e9), axis=0, keepdims=True)  # (1,n)
        c_mat = (row_f == lab_row).astype(F32)            # C [c, i]
        ct_mat = (col_f == lab_col).astype(F32)           # C.T [i, c]
        cs_ref[k] = jnp.dot(c_mat, sel, preferred_element_type=jnp.float32)
        cts.append(ct_mat)

        # pooled features: x' = L2-normalize( C @ (att_norm @ x) )
        y = jnp.dot(att_norm, x, preferred_element_type=jnp.float32)
        x = _row_l2_normalize(jnp.dot(c_mat, y, preferred_element_type=jnp.float32))

        # pooled adjacency: C @ adj @ C.T, symmetrized, then GCN-normalized (adj + I)
        t_adj = jnp.dot(c_mat, adj, preferred_element_type=jnp.float32)
        s_adj = jnp.dot(t_adj, ct_mat, preferred_element_type=jnp.float32)
        adj = 0.5 * (s_adj + s_adj.T)
        adjc = _normalize_adj_val(adj, eye)
        adjcs.append(adjc)

        # a slot stays valid iff it is its own (min-index) component representative
        valid = valid * (lab_row == idx_lane).astype(F32)

    # --------------------------- final encode GCN -----------------------------
    support = jnp.dot(x, encf_w_ref[...], preferred_element_type=jnp.float32)
    h = jnp.dot(adjc, support, preferred_element_type=jnp.float32) + encf_b_ref[...]
    x = _row_l2_normalize(_elu(h))
    xs.append(x)

    # -------------------------------- decode ----------------------------------
    for k in range(num_pool):
        i = num_pool - k - 1
        xu = jnp.dot(cts[i], x, preferred_element_type=jnp.float32)   # unpool (C.T @ x)
        support = (jnp.dot(xu, dec_w1_ref[k], preferred_element_type=jnp.float32)
                   + jnp.dot(xs[i], dec_w2_ref[k], preferred_element_type=jnp.float32))
        h = jnp.dot(adjcs[i], support, preferred_element_type=jnp.float32) + dec_b_ref[k]
        x = _row_l2_normalize(_elu(h))

    # ----------------- classifier GCN + masked log_softmax --------------------
    support = jnp.dot(x, decf_w_ref[...], preferred_element_type=jnp.float32)
    h = jnp.dot(adjcs[0], support, preferred_element_type=jnp.float32) + decf_b_ref[...]
    colf = lax.broadcasted_iota(jnp.int32, (n, F_PAD), 1)
    hm = jnp.where(colf < out_dim, h, -1e30)              # padded lanes excluded
    mmax = jnp.max(hm, axis=1, keepdims=True)
    lse = mmax + jnp.log(jnp.sum(jnp.exp(hm - mmax), axis=1, keepdims=True))
    out_ref[...] = hm - lse


# ----------------------------------------------------------------------------
# host-side wrappers
# ----------------------------------------------------------------------------
def _full_spec(shape):
    zeros = (0,) * len(shape)
    return pl.BlockSpec(shape, lambda *_: zeros)


def _pad2(w, rows, cols):
    w = jnp.asarray(w, F32)
    return jnp.zeros((rows, cols), F32).at[: w.shape[0], : w.shape[1]].set(w)


def _pad_row(b, cols):
    b = jnp.asarray(b, F32).reshape(1, -1)
    return jnp.zeros((1, cols), F32).at[:, : b.shape[1]].set(b)


def normalize_adj_host(adj, k):
    """Input-prep version of EdgeCut.normalize_adj (plain jnp; forward takes adjC)."""
    a = jnp.asarray(adj, F32) + k * jnp.eye(adj.shape[0], dtype=F32)
    d = jnp.sqrt(jnp.sum(a, axis=0))
    return (a / d) / d[:, None]


def init_params(key, in_features, h_dims, out_dim, num_pool, n_gcns):
    """Deterministic params with the same shapes as EdgeCut.__init__."""
    h1, hfc = h_dims
    keys = iter(jax.random.split(key, 64))

    def gcn_init(fin, fout):
        stdv = 1.0 / float(np.sqrt(fout))
        w = jax.random.uniform(next(keys), (fin, fout), F32, -stdv, stdv)
        b = jax.random.uniform(next(keys), (fout,), F32, -stdv, stdv)
        return w, b

    enc = [gcn_init(in_features, h1)]
    for _ in range(1, n_gcns):
        enc.append(gcn_init(h1, h1))
    for _k in range(1, num_pool + 1):
        for _l in range(n_gcns):
            enc.append(gcn_init(h1, h1))

    dec = [gcn_init(2 * h1, h1) for _ in range(num_pool)]
    dec.append(gcn_init(h1, out_dim))

    fc, a = [], []
    for _k in range(num_pool):
        bound_a = 1.414 * float(np.sqrt(6.0 / (2 * hfc + 1)))
        a.append(jax.random.uniform(next(keys), (2 * hfc, 1), F32, -bound_a, bound_a))
        bound_fc = float(np.sqrt(6.0 / (h1 + hfc)))
        wfc = jax.random.uniform(next(keys), (h1, hfc), F32, -bound_fc, bound_fc)
        bfc = jax.random.uniform(next(keys), (hfc,), F32, -bound_fc, bound_fc)
        fc.append((wfc, bfc))

    return {"enc": enc, "dec": dec, "fc": fc, "a": a}


def prepare_params(raw, h_dims, num_pool, n_gcns):
    """Zero-pad everything to the shared 128-lane width and stack per level."""
    h1, hfc = h_dims
    enc, dec, fc, a = raw["enc"], raw["dec"], raw["fc"], raw["a"]
    L = num_pool * n_gcns

    enc_w = jnp.stack([_pad2(enc[i][0], F_PAD, F_PAD) for i in range(L)])
    enc_b = jnp.stack([_pad_row(enc[i][1], F_PAD) for i in range(L)])
    # matches torch's gcns_encode[num_pool] usage in encode()
    encf_w = _pad2(enc[num_pool][0], F_PAD, F_PAD)
    encf_b = _pad_row(enc[num_pool][1], F_PAD)

    wfc = jnp.stack([_pad2(fc[k][0], F_PAD, F_PAD) for k in range(num_pool)])
    bfc = jnp.stack([_pad_row(fc[k][1], F_PAD) for k in range(num_pool)])
    a1 = jnp.stack([_pad_row(a[k][:hfc, 0], F_PAD) for k in range(num_pool)])
    a2 = jnp.stack([_pad_row(a[k][hfc:, 0], F_PAD) for k in range(num_pool)])

    dec_w1 = jnp.stack([_pad2(dec[k][0][:h1], F_PAD, F_PAD) for k in range(num_pool)])
    dec_w2 = jnp.stack([_pad2(dec[k][0][h1:], F_PAD, F_PAD) for k in range(num_pool)])
    dec_b = jnp.stack([_pad_row(dec[k][1], F_PAD) for k in range(num_pool)])
    decf_w = _pad2(dec[num_pool][0], F_PAD, F_PAD)
    decf_b = _pad_row(dec[num_pool][1], F_PAD)

    return {"enc_w": enc_w, "enc_b": enc_b, "encf_w": encf_w, "encf_b": encf_b,
            "wfc": wfc, "bfc": bfc, "a1": a1, "a2": a2,
            "dec_w1": dec_w1, "dec_w2": dec_w2, "dec_b": dec_b,
            "decf_w": decf_w, "decf_b": decf_b}


def edgecut_forward(params, x, adjC, adj, *, ps, num_pool, n_gcns, out_dim):
    n = adj.shape[0]
    n_closure = max(1, int(np.ceil(np.log2(max(n, 2)))))
    x_pad = _pad2(x, n, F_PAD)

    kernel = functools.partial(
        _edgecut_kernel, num_pool=num_pool, n_gcns=n_gcns,
        p=float(ps[0]), out_dim=out_dim, n_closure=n_closure)

    inputs = [x_pad, jnp.asarray(adj, F32), jnp.asarray(adjC, F32),
              params["enc_w"], params["enc_b"],
              params["wfc"], params["bfc"], params["a1"], params["a2"],
              params["encf_w"], params["encf_b"],
              params["dec_w1"], params["dec_w2"], params["dec_b"],
              params["decf_w"], params["decf_b"]]

    out, cs, atts = pl.pallas_call(
        kernel,
        grid=(1,),
        in_specs=[_full_spec(tuple(a_.shape)) for a_ in inputs],
        out_specs=(_full_spec((n, F_PAD)),
                   _full_spec((num_pool, n, F_PAD)),
                   _full_spec((num_pool, n, F_PAD))),
        out_shape=(jax.ShapeDtypeStruct((n, F_PAD), F32),
                   jax.ShapeDtypeStruct((num_pool, n, F_PAD), F32),
                   jax.ShapeDtypeStruct((num_pool, n, F_PAD), F32)),
        scratch_shapes=[pltpu.VMEM((n, n), F32)],
        compiler_params=pltpu.CompilerParams(
            dimension_semantics=("arbitrary",)),
    )(*inputs)

    # NOTE: Cs / atts are in padded N-slot form (invalid cluster slots are all-zero
    # rows / isolated diag-1 entries); the classification output rows are exact.
    Cs = [cs[k, :, :n] for k in range(num_pool)]
    atts_l = [atts[k, :, :n] for k in range(num_pool)]
    return out[:, :out_dim], Cs, atts_l


# ----------------------------------------------------------------------------
if __name__ == "__main__":
    key = jax.random.PRNGKey(0)
    k_adj, k_x, k_p = jax.random.split(key, 3)

    N = 16
    in_features = 8
    h_dims = (32, 16)      # (h_dim1, h_dim_fc)
    out_dim = 4
    ps = [60.0]
    num_pool = 3
    n_gcns = 1

    # deterministic symmetric 0/1 adjacency with self loops
    probs = np.asarray(jax.random.uniform(k_adj, (N, N)))
    upper = np.triu((probs > 0.6).astype(np.float32), 1)
    adj_np = upper + upper.T
    np.fill_diagonal(adj_np, 1.0)
    adj = jnp.asarray(adj_np, F32)

    x = jax.random.normal(k_x, (N, in_features), F32)
    adjC = normalize_adj_host(adj, 1.0)

    raw = init_params(k_p, in_features, h_dims, out_dim, num_pool, n_gcns)
    params = prepare_params(raw, h_dims, num_pool, n_gcns)

    fwd = jax.jit(functools.partial(edgecut_forward, ps=tuple(ps),
                                    num_pool=num_pool, n_gcns=n_gcns,
                                    out_dim=out_dim))
    out, Cs, atts = fwd(params, x, adjC, adj)
    jax.block_until_ready((out, tuple(Cs), tuple(atts)))

    assert out.shape == (N, out_dim)
    assert Cs[0].shape == (N, N) and atts[0].shape == (N, N)
    assert bool(jnp.all(jnp.isfinite(out)))
    # log_softmax rows must be valid probability distributions
    row_sums = jnp.sum(jnp.exp(out), axis=1)
    assert bool(jnp.max(jnp.abs(row_sums - 1.0)) < 5e-3)
    print("KERNEL_OK")
</pallas_src>

<mosaic_0001>
module attributes {stable_mosaic.version = 11 : i64} {
  func.func @_edgecut_kernel(%arg0: i32, %arg1: memref<16x128xf32, #tpu.memory_space<vmem>>, %arg2: memref<16x16xf32, #tpu.memory_space<vmem>>, %arg3: memref<16x16xf32, #tpu.memory_space<vmem>>, %arg4: memref<3x128x128xf32, #tpu.memory_space<vmem>>, %arg5: memref<3x1x128xf32, #tpu.memory_space<vmem>>, %arg6: memref<3x128x128xf32, #tpu.memory_space<vmem>>, %arg7: memref<3x1x128xf32, #tpu.memory_space<vmem>>, %arg8: memref<3x1x128xf32, #tpu.memory_space<vmem>>, %arg9: memref<3x1x128xf32, #tpu.memory_space<vmem>>, %arg10: memref<128x128xf32, #tpu.memory_space<vmem>>, %arg11: memref<1x128xf32, #tpu.memory_space<vmem>>, %arg12: memref<3x128x128xf32, #tpu.memory_space<vmem>>, %arg13: memref<3x128x128xf32, #tpu.memory_space<vmem>>, %arg14: memref<3x1x128xf32, #tpu.memory_space<vmem>>, %arg15: memref<128x128xf32, #tpu.memory_space<vmem>>, %arg16: memref<1x128xf32, #tpu.memory_space<vmem>>, %arg17: memref<16x128xf32, #tpu.memory_space<vmem>>, %arg18: memref<3x16x128xf32, #tpu.memory_space<vmem>>, %arg19: memref<3x16x128xf32, #tpu.memory_space<vmem>>, %arg20: memref<16x16xf32, #tpu.memory_space<vmem>>) attributes {dimension_semantics = [#tpu.dimension_semantics<arbitrary>], iteration_bounds = array<i64: 1>, scalar_prefetch = 0 : i64, scratch_operands = 1 : i64, tpu.core_type = #tpu.core_type<tc>, window_params = [{pipeline_mode = #tpu.pipeline_mode<synchronous>, transform_indices = @transform_0, window_bounds = array<i64: 16, 128>}, {pipeline_mode = #tpu.pipeline_mode<synchronous>, transform_indices = @transform_1, window_bounds = array<i64: 16, 16>}, {pipeline_mode = #tpu.pipeline_mode<synchronous>, transform_indices = @transform_2, window_bounds = array<i64: 16, 16>}, {pipeline_mode = #tpu.pipeline_mode<synchronous>, transform_indices = @transform_3, window_bounds = array<i64: 3, 128, 128>}, {pipeline_mode = #tpu.pipeline_mode<synchronous>, transform_indices = @transform_4, window_bounds = array<i64: 3, 1, 128>}, {pipeline_mode = #tpu.pipeline_mode<synchronous>, transform_indices = @transform_5, window_bounds = array<i64: 3, 128, 128>}, {pipeline_mode = #tpu.pipeline_mode<synchronous>, transform_indices = @transform_6, window_bounds = array<i64: 3, 1, 128>}, {pipeline_mode = #tpu.pipeline_mode<synchronous>, transform_indices = @transform_7, window_bounds = array<i64: 3, 1, 128>}, {pipeline_mode = #tpu.pipeline_mode<synchronous>, transform_indices = @transform_8, window_bounds = array<i64: 3, 1, 128>}, {pipeline_mode = #tpu.pipeline_mode<synchronous>, transform_indices = @transform_9, window_bounds = array<i64: 128, 128>}, {pipeline_mode = #tpu.pipeline_mode<synchronous>, transform_indices = @transform_10, window_bounds = array<i64: 1, 128>}, {pipeline_mode = #tpu.pipeline_mode<synchronous>, transform_indices = @transform_11, window_bounds = array<i64: 3, 128, 128>}, {pipeline_mode = #tpu.pipeline_mode<synchronous>, transform_indices = @transform_12, window_bounds = array<i64: 3, 128, 128>}, {pipeline_mode = #tpu.pipeline_mode<synchronous>, transform_indices = @transform_13, window_bounds = array<i64: 3, 1, 128>}, {pipeline_mode = #tpu.pipeline_mode<synchronous>, transform_indices = @transform_14, window_bounds = array<i64: 128, 128>}, {pipeline_mode = #tpu.pipeline_mode<synchronous>, transform_indices = @transform_15, window_bounds = array<i64: 1, 128>}, {pipeline_mode = #tpu.pipeline_mode<synchronous>, transform_indices = @transform_16, window_bounds = array<i64: 16, 128>}, {pipeline_mode = #tpu.pipeline_mode<synchronous>, transform_indices = @transform_17, window_bounds = array<i64: 3, 16, 128>}, {pipeline_mode = #tpu.pipeline_mode<synchronous>, transform_indices = @transform_18, window_bounds = array<i64: 3, 16, 128>}]} {
    %c0 = arith.constant 0 : index
    %c0_0 = arith.constant 0 : index
    %0 = vector.load %arg1[%c0, %c0_0] : memref<16x128xf32, #tpu.memory_space<vmem>>, vector<16x128xf32>
    %c0_1 = arith.constant 0 : index
    %c0_2 = arith.constant 0 : index
    %1 = vector.load %arg2[%c0_1, %c0_2] : memref<16x16xf32, #tpu.memory_space<vmem>>, vector<16x16xf32>
    %c0_3 = arith.constant 0 : index
    %c0_4 = arith.constant 0 : index
    %2 = vector.load %arg3[%c0_3, %c0_4] : memref<16x16xf32, #tpu.memory_space<vmem>>, vector<16x16xf32>
    %3 = tpu.iota {dimensions = array<i32: 0>} : vector<16x16xi32>
    %4 = tpu.iota {dimensions = array<i32: 1>} : vector<16x16xi32>
    %5 = arith.cmpi eq, %3, %4 : vector<16x16xi32>
    %6 = arith.extui %5 : vector<16x16xi1> to vector<16x16xi32>
    %7 = arith.sitofp %6 : vector<16x16xi32> to vector<16x16xf32>
    %8 = arith.sitofp %3 : vector<16x16xi32> to vector<16x16xf32>
    %9 = arith.sitofp %4 : vector<16x16xi32> to vector<16x16xf32>
    %10 = vector.extract_strided_slice %9 {offsets = [0, 0], sizes = [1, 16], strides = [1, 1]} : vector<16x16xf32> to vector<1x16xf32>
    %11 = tpu.iota {dimensions = array<i32: 0>} : vector<16x128xi32>
    %12 = tpu.iota {dimensions = array<i32: 1>} : vector<16x128xi32>
    %13 = arith.cmpi eq, %11, %12 : vector<16x128xi32>
    %14 = arith.extui %13 : vector<16x128xi1> to vector<16x128xi32>
    %15 = arith.sitofp %14 : vector<16x128xi32> to vector<16x128xf32>
    %cst = arith.constant 1.000000e+00 : f32
    %16 = vector.broadcast %cst : f32 to vector<1x16xf32>
    %c0_5 = arith.constant 0 : index
    %c0_6 = arith.constant 0 : index
    %c0_7 = arith.constant 0 : index
    %17 = vector.load %arg4[%c0_5, %c0_6, %c0_7] : memref<3x128x128xf32, #tpu.memory_space<vmem>>, vector<1x128x128xf32>
    %18 = vector.shape_cast %17 : vector<1x128x128xf32> to vector<128x128xf32>
    %cst_8 = arith.constant dense<0.000000e+00> : vector<16x128xf32>
    %19 = tpu.matmul %0, %18, %cst_8 {dimension_numbers = #tpu.dot_dimension_numbers<[1], [0], [0], [1], [0, 0, 1, 1], [], []>} : vector<16x128xf32>, vector<128x128xf32>, vector<16x128xf32> -> vector<16x128xf32>
    %cst_9 = arith.constant dense<0.000000e+00> : vector<16x128xf32>
    %20 = tpu.matmul %2, %19, %cst_9 {dimension_numbers = #tpu.dot_dimension_numbers<[1], [0], [0], [1], [0, 0, 1, 1], [], []>} : vector<16x16xf32>, vector<16x128xf32>, vector<16x128xf32> -> vector<16x128xf32>
    %c0_10 = arith.constant 0 : index
    %c0_11 = arith.constant 0 : index
    %c0_12 = arith.constant 0 : index
    %21 = vector.load %arg5[%c0_10, %c0_11, %c0_12] : memref<3x1x128xf32, #tpu.memory_space<vmem>>, vector<1x1x128xf32>
    %22 = vector.shape_cast %21 : vector<1x1x128xf32> to vector<1x128xf32>
    %23 = vector.broadcast %22 : vector<1x128xf32> to vector<16x128xf32>
    %24 = arith.addf %20, %23 : vector<16x128xf32>
    %cst_13 = arith.constant 0.000000e+00 : f32
    %25 = vector.broadcast %cst_13 : f32 to vector<16x128xf32>
    %26 = arith.maximumf %24, %25 : vector<16x128xf32>
    %27 = arith.mulf %26, %26 : vector<16x128xf32>
    %cst_14 = arith.constant dense<0.000000e+00> : vector<16xf32>
    %28 = vector.multi_reduction <add>, %27, %cst_14 [1] : vector<16x128xf32> to vector<16xf32>
    %29 = vector.shape_cast %28 : vector<16xf32> to vector<16x1xf32>
    %cst_15 = arith.constant 1.000000e-24 : f32
    %30 = vector.broadcast %cst_15 : f32 to vector<16x1xf32>
    %31 = arith.maximumf %29, %30 : vector<16x1xf32>
    %32 = math.rsqrt %31 : vector<16x1xf32>
    %33 = vector.broadcast %32 : vector<16x1xf32> to vector<16x128xf32>
    %34 = arith.mulf %26, %33 : vector<16x128xf32>
    %c0_16 = arith.constant 0 : index
    %c0_17 = arith.constant 0 : index
    %c0_18 = arith.constant 0 : index
    %35 = vector.load %arg6[%c0_16, %c0_17, %c0_18] : memref<3x128x128xf32, #tpu.memory_space<vmem>>, vector<1x128x128xf32>
    %36 = vector.shape_cast %35 : vector<1x128x128xf32> to vector<128x128xf32>
    %cst_19 = arith.constant dense<0.000000e+00> : vector<16x128xf32>
    %37 = tpu.matmul %34, %36, %cst_19 {dimension_numbers = #tpu.dot_dimension_numbers<[1], [0], [0], [1], [0, 0, 1, 1], [], []>} : vector<16x128xf32>, vector<128x128xf32>, vector<16x128xf32> -> vector<16x128xf32>
    %c0_20 = arith.constant 0 : index
    %c0_21 = arith.constant 0 : index
    %c0_22 = arith.constant 0 : index
    %38 = vector.load %arg7[%c0_20, %c0_21, %c0_22] : memref<3x1x128xf32, #tpu.memory_space<vmem>>, vector<1x1x128xf32>
    %39 = vector.shape_cast %38 : vector<1x1x128xf32> to vector<1x128xf32>
    %40 = vector.broadcast %39 : vector<1x128xf32> to vector<16x128xf32>
    %41 = arith.addf %37, %40 : vector<16x128xf32>
    %c0_23 = arith.constant 0 : index
    %c0_24 = arith.constant 0 : index
    %c0_25 = arith.constant 0 : index
    %42 = vector.load %arg8[%c0_23, %c0_24, %c0_25] : memref<3x1x128xf32, #tpu.memory_space<vmem>>, vector<1x1x128xf32>
    %43 = vector.shape_cast %42 : vector<1x1x128xf32> to vector<1x128xf32>
    %44 = vector.broadcast %43 : vector<1x128xf32> to vector<16x128xf32>
    %45 = arith.mulf %41, %44 : vector<16x128xf32>
    %cst_26 = arith.constant dense<0.000000e+00> : vector<16xf32>
    %46 = vector.multi_reduction <add>, %45, %cst_26 [1] : vector<16x128xf32> to vector<16xf32>
    %47 = vector.shape_cast %46 : vector<16xf32> to vector<16x1xf32>
    %c0_27 = arith.constant 0 : index
    %c0_28 = arith.constant 0 : index
    %c0_29 = arith.constant 0 : index
    %48 = vector.load %arg9[%c0_27, %c0_28, %c0_29] : memref<3x1x128xf32, #tpu.memory_space<vmem>>, vector<1x1x128xf32>
    %49 = vector.shape_cast %48 : vector<1x1x128xf32> to vector<1x128xf32>
    %50 = vector.broadcast %49 : vector<1x128xf32> to vector<16x128xf32>
    %51 = arith.mulf %41, %50 : vector<16x128xf32>
    %cst_30 = arith.constant dense<0.000000e+00> : vector<16xf32>
    %52 = vector.multi_reduction <add>, %51, %cst_30 [1] : vector<16x128xf32> to vector<16xf32>
    %53 = vector.shape_cast %52 : vector<16xf32> to vector<16x1xf32>
    %54 = tpu.transpose %53, [1, 0] : vector<16x1xf32> -> vector<1x16xf32>
    %55 = vector.broadcast %47 : vector<16x1xf32> to vector<16x16xf32>
    %56 = vector.broadcast %54 : vector<1x16xf32> to vector<16x16xf32>
    %57 = arith.addf %55, %56 : vector<16x16xf32>
    %cst_31 = arith.constant 5.000000e-01 : f32
    %58 = vector.broadcast %cst_31 : f32 to vector<16x16xf32>
    %59 = arith.mulf %58, %57 : vector<16x16xf32>
    %60 = math.tanh %59 : vector<16x16xf32>
    %cst_32 = arith.constant 1.000000e+00 : f32
    %61 = vector.broadcast %cst_32 : f32 to vector<16x16xf32>
    %62 = arith.addf %60, %61 : vector<16x16xf32>
    %cst_33 = arith.constant 5.000000e-01 : f32
    %63 = vector.broadcast %cst_33 : f32 to vector<16x16xf32>
    %64 = arith.mulf %63, %62 : vector<16x16xf32>
    %cst_34 = arith.constant 0.000000e+00 : f32
    %65 = vector.broadcast %cst_34 : f32 to vector<16x16xf32>
    %66 = arith.cmpf ogt, %1, %65 : vector<16x16xf32>
    %cst_35 = arith.constant 0.000000e+00 : f32
    %67 = vector.broadcast %cst_35 : f32 to vector<16x16xf32>
    %68 = arith.select %66, %64, %67 : vector<16x16xi1>, vector<16x16xf32>
    %69 = tpu.transpose %68, [1, 0] : vector<16x16xf32> -> vector<16x16xf32>
    %70 = arith.addf %68, %69 : vector<16x16xf32>
    %cst_36 = arith.constant 5.000000e-01 : f32
    %71 = vector.broadcast %cst_36 : f32 to vector<16x16xf32>
    %72 = arith.mulf %71, %70 : vector<16x16xf32>
    %73 = arith.cmpi eq, %3, %4 : vector<16x16xi32>
    %cst_37 = arith.constant 1.000000e+00 : f32
    %74 = vector.broadcast %cst_37 : f32 to vector<16x16xf32>
    %75 = arith.select %73, %74, %72 : vector<16x16xi1>, vector<16x16xf32>
    %cst_38 = arith.constant dense<0.000000e+00> : vector<16x128xf32>
    %76 = tpu.matmul %75, %15, %cst_38 {dimension_numbers = #tpu.dot_dimension_numbers<[1], [0], [0], [1], [0, 0, 1, 1], [], []>} : vector<16x16xf32>, vector<16x128xf32>, vector<16x128xf32> -> vector<16x128xf32>
    %c0_39 = arith.constant 0 : index
    %c0_40 = arith.constant 0 : index
    %c0_41 = arith.constant 0 : index
    %77 = vector.load %arg19[%c0_39, %c0_40, %c0_41] : memref<3x16x128xf32, #tpu.memory_space<vmem>>, vector<1x16x128xf32>
    %78 = vector.shape_cast %77 : vector<1x16x128xf32> to vector<16x128xf32>
    %79 = vector.shape_cast %76 : vector<16x128xf32> to vector<1x16x128xf32>
    tpu.vector_store %arg19[%c0_39, %c0_40, %c0_41], %79 {strides = array<i32>} : memref<3x16x128xf32, #tpu.memory_space<vmem>>, vector<1x16x128xf32>,
    %cst_42 = arith.constant 0.000000e+00 : f32
    %80 = vector.broadcast %cst_42 : f32 to vector<16x16xf32>
    %81 = arith.cmpf ogt, %75, %80 : vector<16x16xf32>
    %cst_43 = arith.constant 0.000000e+00 : f32
    %82 = vector.broadcast %cst_43 : f32 to vector<1x16xf32>
    %83 = arith.cmpf ogt, %16, %82 : vector<1x16xf32>
    %84 = tpu.transpose %16, [1, 0] : vector<1x16xf32> -> vector<16x1xf32>
    %cst_44 = arith.constant 0.000000e+00 : f32
    %85 = vector.broadcast %cst_44 : f32 to vector<16x1xf32>
    %86 = arith.cmpf ogt, %84, %85 : vector<16x1xf32>
    %87 = vector.broadcast %83 : vector<1x16xi1> to vector<16x16xi1>
    %88 = vector.broadcast %86 : vector<16x1xi1> to vector<16x16xi1>
    %89 = arith.andi %87, %88 : vector<16x16xi1>
    %90 = arith.andi %81, %89 : vector<16x16xi1>
    %91 = arith.extui %90 : vector<16x16xi1> to vector<16x16xi32>
    %92 = arith.sitofp %91 : vector<16x16xi32> to vector<16x16xf32>
    %cst_45 = arith.constant 0x7F800000 : f32
    %93 = vector.broadcast %cst_45 : f32 to vector<16x16xf32>
    %94 = arith.select %90, %75, %93 : vector<16x16xi1>, vector<16x16xf32>
    %c0_46 = arith.constant 0 : index
    %c0_47 = arith.constant 0 : index
    %95 = vector.load %arg20[%c0_46, %c0_47] : memref<16x16xf32, #tpu.memory_space<vmem>>, vector<16x16xf32>
    tpu.vector_store %arg20[%c0_46, %c0_47], %94 {strides = array<i32>} : memref<16x16xf32, #tpu.memory_space<vmem>>, vector<16x16xf32>,
    %cst_48 = arith.constant 0.000000e+00 : f32
    %96 = vector.broadcast %cst_48 : f32 to vector<16x16xf32>
    %c0_i32 = arith.constant 0 : i32
    %c16_i32 = arith.constant 16 : i32
    %97 = arith.addi %c0_i32, %c16_i32 : i32
    %c1_i32 = arith.constant 1 : i32
    %98 = scf.for %arg21 = %c0_i32 to %97 step %c1_i32 iter_args(%arg22 = %96) -> (vector<16x16xf32>)  : i32 {
      %810 = arith.index_cast %arg21 : i32 to index
      %c0_361 = arith.constant 0 : index
      %811 = vector.load %arg20[%810, %c0_361] : memref<16x16xf32, #tpu.memory_space<vmem>>, vector<1x16xf32>
      %812 = vector.extract_strided_slice %811 {offsets = [0, 0], sizes = [1, 1], strides = [1, 1]} : vector<1x16xf32> to vector<1x1xf32>
      %813 = vector.broadcast %812 : vector<1x1xf32> to vector<16x16xf32>
      %814 = arith.cmpf oge, %94, %813 : vector<16x16xf32>
      %815 = arith.extui %814 : vector<16x16xi1> to vector<16x16xi32>
      %816 = arith.sitofp %815 : vector<16x16xi32> to vector<16x16xf32>
      %817 = arith.addf %arg22, %816 : vector<16x16xf32>
      %818 = vector.extract_strided_slice %811 {offsets = [0, 1], sizes = [1, 1], strides = [1, 1]} : vector<1x16xf32> to vector<1x1xf32>
      %819 = vector.broadcast %818 : vector<1x1xf32> to vector<16x16xf32>
      %820 = arith.cmpf oge, %94, %819 : vector<16x16xf32>
      %821 = arith.extui %820 : vector<16x16xi1> to vector<16x16xi32>
      %822 = arith.sitofp %821 : vector<16x16xi32> to vector<16x16xf32>
      %823 = arith.addf %817, %822 : vector<16x16xf32>
      %824 = vector.extract_strided_slice %811 {offsets = [0, 2], sizes = [1, 1], strides = [1, 1]} : vector<1x16xf32> to vector<1x1xf32>
      %825 = vector.broadcast %824 : vector<1x1xf32> to vector<16x16xf32>
      %826 = arith.cmpf oge, %94, %825 : vector<16x16xf32>
      %827 = arith.extui %826 : vector<16x16xi1> to vector<16x16xi32>
      %828 = arith.sitofp %827 : vector<16x16xi32> to vector<16x16xf32>
      %829 = arith.addf %823, %828 : vector<16x16xf32>
      %830 = vector.extract_strided_slice %811 {offsets = [0, 3], sizes = [1, 1], strides = [1, 1]} : vector<1x16xf32> to vector<1x1xf32>
      %831 = vector.broadcast %830 : vector<1x1xf32> to vector<16x16xf32>
      %832 = arith.cmpf oge, %94, %831 : vector<16x16xf32>
      %833 = arith.extui %832 : vector<16x16xi1> to vector<16x16xi32>
      %834 = arith.sitofp %833 : vector<16x16xi32> to vector<16x16xf32>
      %835 = arith.addf %829, %834 : vector<16x16xf32>
      %836 = vector.extract_strided_slice %811 {offsets = [0, 4], sizes = [1, 1], strides = [1, 1]} : vector<1x16xf32> to vector<1x1xf32>
      %837 = vector.broadcast %836 : vector<1x1xf32> to vector<16x16xf32>
      %838 = arith.cmpf oge, %94, %837 : vector<16x16xf32>
      %839 = arith.extui %838 : vector<16x16xi1> to vector<16x16xi32>
      %840 = arith.sitofp %839 : vector<16x16xi32> to vector<16x16xf32>
      %841 = arith.addf %835, %840 : vector<16x16xf32>
      %842 = vector.extract_strided_slice %811 {offsets = [0, 5], sizes = [1, 1], strides = [1, 1]} : vector<1x16xf32> to vector<1x1xf32>
      %843 = vector.broadcast %842 : vector<1x1xf32> to vector<16x16xf32>
      %844 = arith.cmpf oge, %94, %843 : vector<16x16xf32>
      %845 = arith.extui %844 : vector<16x16xi1> to vector<16x16xi32>
      %846 = arith.sitofp %845 : vector<16x16xi32> to vector<16x16xf32>
      %847 = arith.addf %841, %846 : vector<16x16xf32>
      %848 = vector.extract_strided_slice %811 {offsets = [0, 6], sizes = [1, 1], strides = [1, 1]} : vector<1x16xf32> to vector<1x1xf32>
      %849 = vector.broadcast %848 : vector<1x1xf32> to vector<16x16xf32>
      %850 = arith.cmpf oge, %94, %849 : vector<16x16xf32>
      %851 = arith.extui %850 : vector<16x16xi1> to vector<16x16xi32>
      %852 = arith.sitofp %851 : vector<16x16xi32> to vector<16x16xf32>
      %853 = arith.addf %847, %852 : vector<16x16xf32>
      %854 = vector.extract_strided_slice %811 {offsets = [0, 7], sizes = [1, 1], strides = [1, 1]} : vector<1x16xf32> to vector<1x1xf32>
      %855 = vector.broadcast %854 : vector<1x1xf32> to vector<16x16xf32>
      %856 = arith.cmpf oge, %94, %855 : vector<16x16xf32>
      %857 = arith.extui %856 : vector<16x16xi1> to vector<16x16xi32>
      %858 = arith.sitofp %857 : vector<16x16xi32> to vector<16x16xf32>
      %859 = arith.addf %853, %858 : vector<16x16xf32>
      %860 = vector.extract_strided_slice %811 {offsets = [0, 8], sizes = [1, 1], strides = [1, 1]} : vector<1x16xf32> to vector<1x1xf32>
      %861 = vector.broadcast %860 : vector<1x1xf32> to vector<16x16xf32>
      %862 = arith.cmpf oge, %94, %861 : vector<16x16xf32>
      %863 = arith.extui %862 : vector<16x16xi1> to vector<16x16xi32>
      %864 = arith.sitofp %863 : vector<16x16xi32> to vector<16x16xf32>
      %865 = arith.addf %859, %864 : vector<16x16xf32>
      %866 = vector.extract_strided_slice %811 {offsets = [0, 9], sizes = [1, 1], strides = [1, 1]} : vector<1x16xf32> to vector<1x1xf32>
      %867 = vector.broadcast %866 : vector<1x1xf32> to vector<16x16xf32>
      %868 = arith.cmpf oge, %94, %867 : vector<16x16xf32>
      %869 = arith.extui %868 : vector<16x16xi1> to vector<16x16xi32>
      %870 = arith.sitofp %869 : vector<16x16xi32> to vector<16x16xf32>
      %871 = arith.addf %865, %870 : vector<16x16xf32>
      %872 = vector.extract_strided_slice %811 {offsets = [0, 10], sizes = [1, 1], strides = [1, 1]} : vector<1x16xf32> to vector<1x1xf32>
      %873 = vector.broadcast %872 : vector<1x1xf32> to vector<16x16xf32>
      %874 = arith.cmpf oge, %94, %873 : vector<16x16xf32>
      %875 = arith.extui %874 : vector<16x16xi1> to vector<16x16xi32>
      %876 = arith.sitofp %875 : vector<16x16xi32> to vector<16x16xf32>
      %877 = arith.addf %871, %876 : vector<16x16xf32>
      %878 = vector.extract_strided_slice %811 {offsets = [0, 11], sizes = [1, 1], strides = [1, 1]} : vector<1x16xf32> to vector<1x1xf32>
      %879 = vector.broadcast %878 : vector<1x1xf32> to vector<16x16xf32>
      %880 = arith.cmpf oge, %94, %879 : vector<16x16xf32>
      %881 = arith.extui %880 : vector<16x16xi1> to vector<16x16xi32>
      %882 = arith.sitofp %881 : vector<16x16xi32> to vector<16x16xf32>
      %883 = arith.addf %877, %882 : vector<16x16xf32>
      %884 = vector.extract_strided_slice %811 {offsets = [0, 12], sizes = [1, 1], strides = [1, 1]} : vector<1x16xf32> to vector<1x1xf32>
      %885 = vector.broadcast %884 : vector<1x1xf32> to vector<16x16xf32>
      %886 = arith.cmpf oge, %94, %885 : vector<16x16xf32>
      %887 = arith.extui %886 : vector<16x16xi1> to vector<16x16xi32>
      %888 = arith.sitofp %887 : vector<16x16xi32> to vector<16x16xf32>
      %889 = arith.addf %883, %888 : vector<16x16xf32>
      %890 = vector.extract_strided_slice %811 {offsets = [0, 13], sizes = [1, 1], strides = [1, 1]} : vector<1x16xf32> to vector<1x1xf32>
      %891 = vector.broadcast %890 : vector<1x1xf32> to vector<16x16xf32>
      %892 = arith.cmpf oge, %94, %891 : vector<16x16xf32>
      %893 = arith.extui %892 : vector<16x16xi1> to vector<16x16xi32>
      %894 = arith.sitofp %893 : vector<16x16xi32> to vector<16x16xf32>
      %895 = arith.addf %889, %894 : vector<16x16xf32>
      %896 = vector.extract_strided_slice %811 {offsets = [0, 14], sizes = [1, 1], strides = [1, 1]} : vector<1x16xf32> to vector<1x1xf32>
      %897 = vector.broadcast %896 : vector<1x1xf32> to vector<16x16xf32>
      %898 = arith.cmpf oge, %94, %897 : vector<16x16xf32>
      %899 = arith.extui %898 : vector<16x16xi1> to vector<16x16xi32>
      %900 = arith.sitofp %899 : vector<16x16xi32> to vector<16x16xf32>
      %901 = arith.addf %895, %900 : vector<16x16xf32>
      %902 = vector.extract_strided_slice %811 {offsets = [0, 15], sizes = [1, 1], strides = [1, 1]} : vector<1x16xf32> to vector<1x1xf32>
      %903 = vector.broadcast %902 : vector<1x1xf32> to vector<16x16xf32>
      %904 = arith.cmpf oge, %94, %903 : vector<16x16xf32>
      %905 = arith.extui %904 : vector<16x16xi1> to vector<16x16xi32>
      %906 = arith.sitofp %905 : vector<16x16xi32> to vector<16x16xf32>
      %907 = arith.addf %901, %906 : vector<16x16xf32>
      scf.yield %907 : vector<16x16xf32>
    }
    %c16_i32_49 = arith.constant 16 : i32
    %cst_50 = arith.constant dense<0.000000e+00> : vector<16xf32>
    %99 = vector.multi_reduction <add>, %92, %cst_50 [1] : vector<16x16xf32> to vector<16xf32>
    %100 = vector.shape_cast %99 : vector<16xf32> to vector<16x1xf32>
    %cst_51 = arith.constant dense<0.000000e+00> : vector<1xf32>
    %101 = vector.multi_reduction <add>, %100, %cst_51 [0] : vector<16x1xf32> to vector<1xf32>
    %102 = vector.shape_cast %101 : vector<1xf32> to vector<1x1xf32>
    %cst_52 = arith.constant 1.000000e+00 : f32
    %103 = vector.broadcast %cst_52 : f32 to vector<1x1xf32>
    %104 = arith.subf %102, %103 : vector<1x1xf32>
    %cst_53 = arith.constant 6.000000e+01 : f32
    %105 = vector.broadcast %cst_53 : f32 to vector<1x1xf32>
    %106 = arith.mulf %105, %104 : vector<1x1xf32>
    %cst_54 = arith.constant 1.000000e+02 : f32
    %107 = vector.broadcast %cst_54 : f32 to vector<1x1xf32>
    %108 = arith.divf %106, %107 : vector<1x1xf32>
    %109 = math.floor %108 : vector<1x1xf32>
    %110 = arith.subf %108, %109 : vector<1x1xf32>
    %cst_55 = arith.constant 1.000000e+00 : f32
    %111 = vector.broadcast %cst_55 : f32 to vector<1x1xf32>
    %112 = arith.addf %109, %111 : vector<1x1xf32>
    %cst_56 = arith.constant 1.000000e+00 : f32
    %113 = vector.broadcast %cst_56 : f32 to vector<1x1xf32>
    %114 = arith.subf %102, %113 : vector<1x1xf32>
    %115 = arith.minimumf %112, %114 : vector<1x1xf32>
    %cst_57 = arith.constant 1.000000e+00 : f32
    %116 = vector.broadcast %cst_57 : f32 to vector<1x1xf32>
    %117 = arith.addf %109, %116 : vector<1x1xf32>
    %118 = vector.broadcast %117 : vector<1x1xf32> to vector<16x16xf32>
    %119 = arith.cmpf oge, %98, %118 : vector<16x16xf32>
    %120 = arith.andi %90, %119 : vector<16x16xi1>
    %cst_58 = arith.constant 0x7F800000 : f32
    %121 = vector.broadcast %cst_58 : f32 to vector<16x16xf32>
    %122 = arith.select %120, %94, %121 : vector<16x16xi1>, vector<16x16xf32>
    %cst_59 = arith.constant dense<0x7F800000> : vector<16xf32>
    %123 = vector.multi_reduction <minimumf>, %122, %cst_59 [1] : vector<16x16xf32> to vector<16xf32>
    %124 = vector.shape_cast %123 : vector<16xf32> to vector<16x1xf32>
    %cst_60 = arith.constant dense<0x7F800000> : vector<1xf32>
    %125 = vector.multi_reduction <minimumf>, %124, %cst_60 [0] : vector<16x1xf32> to vector<1xf32>
    %126 = vector.shape_cast %125 : vector<1xf32> to vector<1x1xf32>
    %cst_61 = arith.constant 1.000000e+00 : f32
    %127 = vector.broadcast %cst_61 : f32 to vector<1x1xf32>
    %128 = arith.addf %115, %127 : vector<1x1xf32>
    %129 = vector.broadcast %128 : vector<1x1xf32> to vector<16x16xf32>
    %130 = arith.cmpf oge, %98, %129 : vector<16x16xf32>
    %131 = arith.andi %90, %130 : vector<16x16xi1>
    %cst_62 = arith.constant 0x7F800000 : f32
    %132 = vector.broadcast %cst_62 : f32 to vector<16x16xf32>
    %133 = arith.select %131, %94, %132 : vector<16x16xi1>, vector<16x16xf32>
    %cst_63 = arith.constant dense<0x7F800000> : vector<16xf32>
    %134 = vector.multi_reduction <minimumf>, %133, %cst_63 [1] : vector<16x16xf32> to vector<16xf32>
    %135 = vector.shape_cast %134 : vector<16xf32> to vector<16x1xf32>
    %cst_64 = arith.constant dense<0x7F800000> : vector<1xf32>
    %136 = vector.multi_reduction <minimumf>, %135, %cst_64 [0] : vector<16x1xf32> to vector<1xf32>
    %137 = vector.shape_cast %136 : vector<1xf32> to vector<1x1xf32>
    %cst_65 = arith.constant 1.000000e+00 : f32
    %138 = vector.broadcast %cst_65 : f32 to vector<1x1xf32>
    %139 = arith.subf %138, %110 : vector<1x1xf32>
    %140 = arith.mulf %139, %126 : vector<1x1xf32>
    %141 = arith.mulf %110, %137 : vector<1x1xf32>
    %142 = arith.addf %140, %141 : vector<1x1xf32>
    %143 = vector.broadcast %142 : vector<1x1xf32> to vector<16x16xf32>
    %144 = arith.cmpf oge, %75, %143 : vector<16x16xf32>
    %145 = arith.extui %144 : vector<16x16xi1> to vector<16x16xi32>
    %146 = arith.sitofp %145 : vector<16x16xi32> to vector<16x16xf32>
    %147 = arith.mulf %75, %146 : vector<16x16xf32>
    %cst_66 = arith.constant 0.000000e+00 : f32
    %148 = vector.broadcast %cst_66 : f32 to vector<16x16xf32>
    %149 = arith.cmpf ogt, %147, %148 : vector<16x16xf32>
    %150 = arith.extui %149 : vector<16x16xi1> to vector<16x16xi32>
    %151 = arith.sitofp %150 : vector<16x16xi32> to vector<16x16xf32>
    %cst_67 = arith.constant dense<0.000000e+00> : vector<16xf32>
    %152 = vector.multi_reduction <add>, %151, %cst_67 [1] : vector<16x16xf32> to vector<16xf32>
    %153 = vector.shape_cast %152 : vector<16xf32> to vector<16x1xf32>
    %cst_68 = arith.constant 1.000000e+00 : f32
    %154 = vector.broadcast %cst_68 : f32 to vector<16x1xf32>
    %155 = arith.maximumf %153, %154 : vector<16x1xf32>
    %156 = tpu.reciprocal %155 : vector<16x1xf32> -> vector<16x1xf32>
    %157 = vector.broadcast %156 : vector<16x1xf32> to vector<16x16xf32>
    %158 = arith.mulf %147, %157 : vector<16x16xf32>
    %cst_69 = arith.constant 0.000000e+00 : f32
    %159 = vector.broadcast %cst_69 : f32 to vector<16x16xf32>
    %160 = arith.cmpf ogt, %147, %159 : vector<16x16xf32>
    %161 = arith.extui %160 : vector<16x16xi1> to vector<16x16xi32>
    %162 = arith.sitofp %161 : vector<16x16xi32> to vector<16x16xf32>
    %cst_70 = arith.constant dense<0.000000e+00> : vector<16x16xf32>
    %163 = tpu.matmul %162, %162, %cst_70 {dimension_numbers = #tpu.dot_dimension_numbers<[1], [0], [0], [1], [0, 0, 1, 1], [], []>} : vector<16x16xf32>, vector<16x16xf32>, vector<16x16xf32> -> vector<16x16xf32>
    %cst_71 = arith.constant 0.000000e+00 : f32
    %164 = vector.broadcast %cst_71 : f32 to vector<16x16xf32>
    %165 = arith.cmpf ogt, %163, %164 : vector<16x16xf32>
    %166 = arith.extui %165 : vector<16x16xi1> to vector<16x16xi32>
    %167 = arith.sitofp %166 : vector<16x16xi32> to vector<16x16xf32>
    %cst_72 = arith.constant dense<0.000000e+00> : vector<16x16xf32>
    %168 = tpu.matmul %167, %167, %cst_72 {dimension_numbers = #tpu.dot_dimension_numbers<[1], [0], [0], [1], [0, 0, 1, 1], [], []>} : vector<16x16xf32>, vector<16x16xf32>, vector<16x16xf32> -> vector<16x16xf32>
    %cst_73 = arith.constant 0.000000e+00 : f32
    %169 = vector.broadcast %cst_73 : f32 to vector<16x16xf32>
    %170 = arith.cmpf ogt, %168, %169 : vector<16x16xf32>
    %171 = arith.extui %170 : vector<16x16xi1> to vector<16x16xi32>
    %172 = arith.sitofp %171 : vector<16x16xi32> to vector<16x16xf32>
    %cst_74 = arith.constant dense<0.000000e+00> : vector<16x16xf32>
    %173 = tpu.matmul %172, %172, %cst_74 {dimension_numbers = #tpu.dot_dimension_numbers<[1], [0], [0], [1], [0, 0, 1, 1], [], []>} : vector<16x16xf32>, vector<16x16xf32>, vector<16x16xf32> -> vector<16x16xf32>
    %cst_75 = arith.constant 0.000000e+00 : f32
    %174 = vector.broadcast %cst_75 : f32 to vector<16x16xf32>
    %175 = arith.cmpf ogt, %173, %174 : vector<16x16xf32>
    %176 = arith.extui %175 : vector<16x16xi1> to vector<16x16xi32>
    %177 = arith.sitofp %176 : vector<16x16xi32> to vector<16x16xf32>
    %cst_76 = arith.constant dense<0.000000e+00> : vector<16x16xf32>
    %178 = tpu.matmul %177, %177, %cst_76 {dimension_numbers = #tpu.dot_dimension_numbers<[1], [0], [0], [1], [0, 0, 1, 1], [], []>} : vector<16x16xf32>, vector<16x16xf32>, vector<16x16xf32> -> vector<16x16xf32>
    %cst_77 = arith.constant 0.000000e+00 : f32
    %179 = vector.broadcast %cst_77 : f32 to vector<16x16xf32>
    %180 = arith.cmpf ogt, %178, %179 : vector<16x16xf32>
    %181 = arith.extui %180 : vector<16x16xi1> to vector<16x16xi32>
    %182 = arith.sitofp %181 : vector<16x16xi32> to vector<16x16xf32>
    %cst_78 = arith.constant 0.000000e+00 : f32
    %183 = vector.broadcast %cst_78 : f32 to vector<16x16xf32>
    %184 = arith.cmpf ogt, %182, %183 : vector<16x16xf32>
    %cst_79 = arith.constant 1.000000e+09 : f32
    %185 = vector.broadcast %cst_79 : f32 to vector<16x16xf32>
    %186 = arith.select %184, %9, %185 : vector<16x16xi1>, vector<16x16xf32>
    %cst_80 = arith.constant dense<0x7F800000> : vector<16xf32>
    %187 = vector.multi_reduction <minimumf>, %186, %cst_80 [1] : vector<16x16xf32> to vector<16xf32>
    %188 = vector.shape_cast %187 : vector<16xf32> to vector<16x1xf32>
    %cst_81 = arith.constant 0.000000e+00 : f32
    %189 = vector.broadcast %cst_81 : f32 to vector<16x16xf32>
    %190 = arith.cmpf ogt, %182, %189 : vector<16x16xf32>
    %cst_82 = arith.constant 1.000000e+09 : f32
    %191 = vector.broadcast %cst_82 : f32 to vector<16x16xf32>
    %192 = arith.select %190, %8, %191 : vector<16x16xi1>, vector<16x16xf32>
    %cst_83 = arith.constant dense<0x7F800000> : vector<16xf32>
    %193 = vector.multi_reduction <minimumf>, %192, %cst_83 [0] : vector<16x16xf32> to vector<16xf32>
    %194 = vector.shape_cast %193 : vector<16xf32> to vector<1x16xf32>
    %195 = vector.broadcast %194 : vector<1x16xf32> to vector<16x16xf32>
    %196 = arith.cmpf oeq, %8, %195 : vector<16x16xf32>
    %197 = arith.extui %196 : vector<16x16xi1> to vector<16x16xi32>
    %198 = arith.sitofp %197 : vector<16x16xi32> to vector<16x16xf32>
    %199 = vector.broadcast %188 : vector<16x1xf32> to vector<16x16xf32>
    %200 = arith.cmpf oeq, %9, %199 : vector<16x16xf32>
    %201 = arith.extui %200 : vector<16x16xi1> to vector<16x16xi32>
    %202 = arith.sitofp %201 : vector<16x16xi32> to vector<16x16xf32>
    %cst_84 = arith.constant dense<0.000000e+00> : vector<16x128xf32>
    %203 = tpu.matmul %198, %15, %cst_84 {dimension_numbers = #tpu.dot_dimension_numbers<[1], [0], [0], [1], [0, 0, 1, 1], [], []>} : vector<16x16xf32>, vector<16x128xf32>, vector<16x128xf32> -> vector<16x128xf32>
    %c0_85 = arith.constant 0 : index
    %c0_86 = arith.constant 0 : index
    %c0_87 = arith.constant 0 : index
    %204 = vector.load %arg18[%c0_85, %c0_86, %c0_87] : memref<3x16x128xf32, #tpu.memory_space<vmem>>, vector<1x16x128xf32>
    %205 = vector.shape_cast %204 : vector<1x16x128xf32> to vector<16x128xf32>
    %206 = vector.shape_cast %203 : vector<16x128xf32> to vector<1x16x128xf32>
    tpu.vector_store %arg18[%c0_85, %c0_86, %c0_87], %206 {strides = array<i32>} : memref<3x16x128xf32, #tpu.memory_space<vmem>>, vector<1x16x128xf32>,
    %cst_88 = arith.constant dense<0.000000e+00> : vector<16x128xf32>
    %207 = tpu.matmul %158, %34, %cst_88 {dimension_numbers = #tpu.dot_dimension_numbers<[1], [0], [0], [1], [0, 0, 1, 1], [], []>} : vector<16x16xf32>, vector<16x128xf32>, vector<16x128xf32> -> vector<16x128xf32>
    %cst_89 = arith.constant dense<0.000000e+00> : vector<16x128xf32>
    %208 = tpu.matmul %198, %207, %cst_89 {dimension_numbers = #tpu.dot_dimension_numbers<[1], [0], [0], [1], [0, 0, 1, 1], [], []>} : vector<16x16xf32>, vector<16x128xf32>, vector<16x128xf32> -> vector<16x128xf32>
    %209 = arith.mulf %208, %208 : vector<16x128xf32>
    %cst_90 = arith.constant dense<0.000000e+00> : vector<16xf32>
    %210 = vector.multi_reduction <add>, %209, %cst_90 [1] : vector<16x128xf32> to vector<16xf32>
    %211 = vector.shape_cast %210 : vector<16xf32> to vector<16x1xf32>
    %cst_91 = arith.constant 1.000000e-24 : f32
    %212 = vector.broadcast %cst_91 : f32 to vector<16x1xf32>
    %213 = arith.maximumf %211, %212 : vector<16x1xf32>
    %214 = math.rsqrt %213 : vector<16x1xf32>
    %215 = vector.broadcast %214 : vector<16x1xf32> to vector<16x128xf32>
    %216 = arith.mulf %208, %215 : vector<16x128xf32>
    %cst_92 = arith.constant dense<0.000000e+00> : vector<16x16xf32>
    %217 = tpu.matmul %198, %1, %cst_92 {dimension_numbers = #tpu.dot_dimension_numbers<[1], [0], [0], [1], [0, 0, 1, 1], [], []>} : vector<16x16xf32>, vector<16x16xf32>, vector<16x16xf32> -> vector<16x16xf32>
    %cst_93 = arith.constant dense<0.000000e+00> : vector<16x16xf32>
    %218 = tpu.matmul %217, %202, %cst_93 {dimension_numbers = #tpu.dot_dimension_numbers<[1], [0], [0], [1], [0, 0, 1, 1], [], []>} : vector<16x16xf32>, vector<16x16xf32>, vector<16x16xf32> -> vector<16x16xf32>
    %219 = tpu.transpose %218, [1, 0] : vector<16x16xf32> -> vector<16x16xf32>
    %220 = arith.addf %218, %219 : vector<16x16xf32>
    %cst_94 = arith.constant 5.000000e-01 : f32
    %221 = vector.broadcast %cst_94 : f32 to vector<16x16xf32>
    %222 = arith.mulf %221, %220 : vector<16x16xf32>
    %223 = arith.addf %222, %7 : vector<16x16xf32>
    %cst_95 = arith.constant dense<0.000000e+00> : vector<16xf32>
    %224 = vector.multi_reduction <add>, %223, %cst_95 [0] : vector<16x16xf32> to vector<16xf32>
    %225 = vector.shape_cast %224 : vector<16xf32> to vector<1x16xf32>
    %cst_96 = arith.constant 9.99999996E-13 : f32
    %226 = vector.broadcast %cst_96 : f32 to vector<1x16xf32>
    %227 = arith.maximumf %225, %226 : vector<1x16xf32>
    %228 = math.rsqrt %227 : vector<1x16xf32>
    %229 = vector.broadcast %228 : vector<1x16xf32> to vector<16x16xf32>
    %230 = arith.mulf %223, %229 : vector<16x16xf32>
    %231 = tpu.transpose %228, [1, 0] : vector<1x16xf32> -> vector<16x1xf32>
    %232 = vector.broadcast %231 : vector<16x1xf32> to vector<16x16xf32>
    %233 = arith.mulf %230, %232 : vector<16x16xf32>
    %234 = arith.cmpf oeq, %194, %10 : vector<1x16xf32>
    %235 = arith.extui %234 : vector<1x16xi1> to vector<1x16xi32>
    %236 = arith.sitofp %235 : vector<1x16xi32> to vector<1x16xf32>
    %237 = arith.mulf %16, %236 : vector<1x16xf32>
    %c1 = arith.constant 1 : index
    %c0_97 = arith.constant 0 : index
    %c0_98 = arith.constant 0 : index
    %238 = vector.load %arg4[%c1, %c0_97, %c0_98] : memref<3x128x128xf32, #tpu.memory_space<vmem>>, vector<1x128x128xf32>
    %239 = vector.shape_cast %238 : vector<1x128x128xf32> to vector<128x128xf32>
    %cst_99 = arith.constant dense<0.000000e+00> : vector<16x128xf32>
    %240 = tpu.matmul %216, %239, %cst_99 {dimension_numbers = #tpu.dot_dimension_numbers<[1], [0], [0], [1], [0, 0, 1, 1], [], []>} : vector<16x128xf32>, vector<128x128xf32>, vector<16x128xf32> -> vector<16x128xf32>
    %cst_100 = arith.constant dense<0.000000e+00> : vector<16x128xf32>
    %241 = tpu.matmul %233, %240, %cst_100 {dimension_numbers = #tpu.dot_dimension_numbers<[1], [0], [0], [1], [0, 0, 1, 1], [], []>} : vector<16x16xf32>, vector<16x128xf32>, vector<16x128xf32> -> vector<16x128xf32>
    %c1_101 = arith.constant 1 : index
    %c0_102 = arith.constant 0 : index
    %c0_103 = arith.constant 0 : index
    %242 = vector.load %arg5[%c1_101, %c0_102, %c0_103] : memref<3x1x128xf32, #tpu.memory_space<vmem>>, vector<1x1x128xf32>
    %243 = vector.shape_cast %242 : vector<1x1x128xf32> to vector<1x128xf32>
    %244 = vector.broadcast %243 : vector<1x128xf32> to vector<16x128xf32>
    %245 = arith.addf %241, %244 : vector<16x128xf32>
    %cst_104 = arith.constant 0.000000e+00 : f32
    %246 = vector.broadcast %cst_104 : f32 to vector<16x128xf32>
    %247 = arith.maximumf %245, %246 : vector<16x128xf32>
    %248 = arith.addf %247, %216 : vector<16x128xf32>
    %249 = arith.mulf %248, %248 : vector<16x128xf32>
    %cst_105 = arith.constant dense<0.000000e+00> : vector<16xf32>
    %250 = vector.multi_reduction <add>, %249, %cst_105 [1] : vector<16x128xf32> to vector<16xf32>
    %251 = vector.shape_cast %250 : vector<16xf32> to vector<16x1xf32>
    %cst_106 = arith.constant 1.000000e-24 : f32
    %252 = vector.broadcast %cst_106 : f32 to vector<16x1xf32>
    %253 = arith.maximumf %251, %252 : vector<16x1xf32>
    %254 = math.rsqrt %253 : vector<16x1xf32>
    %255 = vector.broadcast %254 : vector<16x1xf32> to vector<16x128xf32>
    %256 = arith.mulf %248, %255 : vector<16x128xf32>
    %c1_107 = arith.constant 1 : index
    %c0_108 = arith.constant 0 : index
    %c0_109 = arith.constant 0 : index
    %257 = vector.load %arg6[%c1_107, %c0_108, %c0_109] : memref<3x128x128xf32, #tpu.memory_space<vmem>>, vector<1x128x128xf32>
    %258 = vector.shape_cast %257 : vector<1x128x128xf32> to vector<128x128xf32>
    %cst_110 = arith.constant dense<0.000000e+00> : vector<16x128xf32>
    %259 = tpu.matmul %256, %258, %cst_110 {dimension_numbers = #tpu.dot_dimension_numbers<[1], [0], [0], [1], [0, 0, 1, 1], [], []>} : vector<16x128xf32>, vector<128x128xf32>, vector<16x128xf32> -> vector<16x128xf32>
    %c1_111 = arith.constant 1 : index
    %c0_112 = arith.constant 0 : index
    %c0_113 = arith.constant 0 : index
    %260 = vector.load %arg7[%c1_111, %c0_112, %c0_113] : memref<3x1x128xf32, #tpu.memory_space<vmem>>, vector<1x1x128xf32>
    %261 = vector.shape_cast %260 : vector<1x1x128xf32> to vector<1x128xf32>
    %262 = vector.broadcast %261 : vector<1x128xf32> to vector<16x128xf32>
    %263 = arith.addf %259, %262 : vector<16x128xf32>
    %c1_114 = arith.constant 1 : index
    %c0_115 = arith.constant 0 : index
    %c0_116 = arith.constant 0 : index
    %264 = vector.load %arg8[%c1_114, %c0_115, %c0_116] : memref<3x1x128xf32, #tpu.memory_space<vmem>>, vector<1x1x128xf32>
    %265 = vector.shape_cast %264 : vector<1x1x128xf32> to vector<1x128xf32>
    %266 = vector.broadcast %265 : vector<1x128xf32> to vector<16x128xf32>
    %267 = arith.mulf %263, %266 : vector<16x128xf32>
    %cst_117 = arith.constant dense<0.000000e+00> : vector<16xf32>
    %268 = vector.multi_reduction <add>, %267, %cst_117 [1] : vector<16x128xf32> to vector<16xf32>
    %269 = vector.shape_cast %268 : vector<16xf32> to vector<16x1xf32>
    %c1_118 = arith.constant 1 : index
    %c0_119 = arith.constant 0 : index
    %c0_120 = arith.constant 0 : index
    %270 = vector.load %arg9[%c1_118, %c0_119, %c0_120] : memref<3x1x128xf32, #tpu.memory_space<vmem>>, vector<1x1x128xf32>
    %271 = vector.shape_cast %270 : vector<1x1x128xf32> to vector<1x128xf32>
    %272 = vector.broadcast %271 : vector<1x128xf32> to vector<16x128xf32>
    %273 = arith.mulf %263, %272 : vector<16x128xf32>
    %cst_121 = arith.constant dense<0.000000e+00> : vector<16xf32>
    %274 = vector.multi_reduction <add>, %273, %cst_121 [1] : vector<16x128xf32> to vector<16xf32>
    %275 = vector.shape_cast %274 : vector<16xf32> to vector<16x1xf32>
    %276 = tpu.transpose %275, [1, 0] : vector<16x1xf32> -> vector<1x16xf32>
    %277 = vector.broadcast %269 : vector<16x1xf32> to vector<16x16xf32>
    %278 = vector.broadcast %276 : vector<1x16xf32> to vector<16x16xf32>
    %279 = arith.addf %277, %278 : vector<16x16xf32>
    %cst_122 = arith.constant 5.000000e-01 : f32
    %280 = vector.broadcast %cst_122 : f32 to vector<16x16xf32>
    %281 = arith.mulf %280, %279 : vector<16x16xf32>
    %282 = math.tanh %281 : vector<16x16xf32>
    %cst_123 = arith.constant 1.000000e+00 : f32
    %283 = vector.broadcast %cst_123 : f32 to vector<16x16xf32>
    %284 = arith.addf %282, %283 : vector<16x16xf32>
    %cst_124 = arith.constant 5.000000e-01 : f32
    %285 = vector.broadcast %cst_124 : f32 to vector<16x16xf32>
    %286 = arith.mulf %285, %284 : vector<16x16xf32>
    %cst_125 = arith.constant 0.000000e+00 : f32
    %287 = vector.broadcast %cst_125 : f32 to vector<16x16xf32>
    %288 = arith.cmpf ogt, %222, %287 : vector<16x16xf32>
    %cst_126 = arith.constant 0.000000e+00 : f32
    %289 = vector.broadcast %cst_126 : f32 to vector<16x16xf32>
    %290 = arith.select %288, %286, %289 : vector<16x16xi1>, vector<16x16xf32>
    %291 = tpu.transpose %290, [1, 0] : vector<16x16xf32> -> vector<16x16xf32>
    %292 = arith.addf %290, %291 : vector<16x16xf32>
    %cst_127 = arith.constant 5.000000e-01 : f32
    %293 = vector.broadcast %cst_127 : f32 to vector<16x16xf32>
    %294 = arith.mulf %293, %292 : vector<16x16xf32>
    %295 = arith.cmpi eq, %3, %4 : vector<16x16xi32>
    %cst_128 = arith.constant 1.000000e+00 : f32
    %296 = vector.broadcast %cst_128 : f32 to vector<16x16xf32>
    %297 = arith.select %295, %296, %294 : vector<16x16xi1>, vector<16x16xf32>
    %cst_129 = arith.constant dense<0.000000e+00> : vector<16x128xf32>
    %298 = tpu.matmul %297, %15, %cst_129 {dimension_numbers = #tpu.dot_dimension_numbers<[1], [0], [0], [1], [0, 0, 1, 1], [], []>} : vector<16x16xf32>, vector<16x128xf32>, vector<16x128xf32> -> vector<16x128xf32>
    %c1_130 = arith.constant 1 : index
    %c0_131 = arith.constant 0 : index
    %c0_132 = arith.constant 0 : index
    %299 = vector.load %arg19[%c1_130, %c0_131, %c0_132] : memref<3x16x128xf32, #tpu.memory_space<vmem>>, vector<1x16x128xf32>
    %300 = vector.shape_cast %299 : vector<1x16x128xf32> to vector<16x128xf32>
    %301 = vector.shape_cast %298 : vector<16x128xf32> to vector<1x16x128xf32>
    tpu.vector_store %arg19[%c1_130, %c0_131, %c0_132], %301 {strides = array<i32>} : memref<3x16x128xf32, #tpu.memory_space<vmem>>, vector<1x16x128xf32>,
    %cst_133 = arith.constant 0.000000e+00 : f32
    %302 = vector.broadcast %cst_133 : f32 to vector<16x16xf32>
    %303 = arith.cmpf ogt, %297, %302 : vector<16x16xf32>
    %cst_134 = arith.constant 0.000000e+00 : f32
    %304 = vector.broadcast %cst_134 : f32 to vector<1x16xf32>
    %305 = arith.cmpf ogt, %237, %304 : vector<1x16xf32>
    %306 = tpu.transpose %237, [1, 0] : vector<1x16xf32> -> vector<16x1xf32>
    %cst_135 = arith.constant 0.000000e+00 : f32
    %307 = vector.broadcast %cst_135 : f32 to vector<16x1xf32>
    %308 = arith.cmpf ogt, %306, %307 : vector<16x1xf32>
    %309 = vector.broadcast %305 : vector<1x16xi1> to vector<16x16xi1>
    %310 = vector.broadcast %308 : vector<16x1xi1> to vector<16x16xi1>
    %311 = arith.andi %309, %310 : vector<16x16xi1>
    %312 = arith.andi %303, %311 : vector<16x16xi1>
    %313 = arith.extui %312 : vector<16x16xi1> to vector<16x16xi32>
    %314 = arith.sitofp %313 : vector<16x16xi32> to vector<16x16xf32>
    %cst_136 = arith.constant 0x7F800000 : f32
    %315 = vector.broadcast %cst_136 : f32 to vector<16x16xf32>
    %316 = arith.select %312, %297, %315 : vector<16x16xi1>, vector<16x16xf32>
    %c0_137 = arith.constant 0 : index
    %c0_138 = arith.constant 0 : index
    %317 = vector.load %arg20[%c0_137, %c0_138] : memref<16x16xf32, #tpu.memory_space<vmem>>, vector<16x16xf32>
    tpu.vector_store %arg20[%c0_137, %c0_138], %316 {strides = array<i32>} : memref<16x16xf32, #tpu.memory_space<vmem>>, vector<16x16xf32>,
    %cst_139 = arith.constant 0.000000e+00 : f32
    %318 = vector.broadcast %cst_139 : f32 to vector<16x16xf32>
    %c0_i32_140 = arith.constant 0 : i32
    %c16_i32_141 = arith.constant 16 : i32
    %319 = arith.addi %c0_i32_140, %c16_i32_141 : i32
    %c1_i32_142 = arith.constant 1 : i32
    %320 = scf.for %arg21 = %c0_i32_140 to %319 step %c1_i32_142 iter_args(%arg22 = %318) -> (vector<16x16xf32>)  : i32 {
      %810 = arith.index_cast %arg21 : i32 to index
      %c0_361 = arith.constant 0 : index
      %811 = vector.load %arg20[%810, %c0_361] : memref<16x16xf32, #tpu.memory_space<vmem>>, vector<1x16xf32>
      %812 = vector.extract_strided_slice %811 {offsets = [0, 0], sizes = [1, 1], strides = [1, 1]} : vector<1x16xf32> to vector<1x1xf32>
      %813 = vector.broadcast %812 : vector<1x1xf32> to vector<16x16xf32>
      %814 = arith.cmpf oge, %316, %813 : vector<16x16xf32>
      %815 = arith.extui %814 : vector<16x16xi1> to vector<16x16xi32>
      %816 = arith.sitofp %815 : vector<16x16xi32> to vector<16x16xf32>
      %817 = arith.addf %arg22, %816 : vector<16x16xf32>
      %818 = vector.extract_strided_slice %811 {offsets = [0, 1], sizes = [1, 1], strides = [1, 1]} : vector<1x16xf32> to vector<1x1xf32>
      %819 = vector.broadcast %818 : vector<1x1xf32> to vector<16x16xf32>
      %820 = arith.cmpf oge, %316, %819 : vector<16x16xf32>
      %821 = arith.extui %820 : vector<16x16xi1> to vector<16x16xi32>
      %822 = arith.sitofp %821 : vector<16x16xi32> to vector<16x16xf32>
      %823 = arith.addf %817, %822 : vector<16x16xf32>
      %824 = vector.extract_strided_slice %811 {offsets = [0, 2], sizes = [1, 1], strides = [1, 1]} : vector<1x16xf32> to vector<1x1xf32>
      %825 = vector.broadcast %824 : vector<1x1xf32> to vector<16x16xf32>
      %826 = arith.cmpf oge, %316, %825 : vector<16x16xf32>
      %827 = arith.extui %826 : vector<16x16xi1> to vector<16x16xi32>
      %828 = arith.sitofp %827 : vector<16x16xi32> to vector<16x16xf32>
      %829 = arith.addf %823, %828 : vector<16x16xf32>
      %830 = vector.extract_strided_slice %811 {offsets = [0, 3], sizes = [1, 1], strides = [1, 1]} : vector<1x16xf32> to vector<1x1xf32>
      %831 = vector.broadcast %830 : vector<1x1xf32> to vector<16x16xf32>
      %832 = arith.cmpf oge, %316, %831 : vector<16x16xf32>
      %833 = arith.extui %832 : vector<16x16xi1> to vector<16x16xi32>
      %834 = arith.sitofp %833 : vector<16x16xi32> to vector<16x16xf32>
      %835 = arith.addf %829, %834 : vector<16x16xf32>
      %836 = vector.extract_strided_slice %811 {offsets = [0, 4], sizes = [1, 1], strides = [1, 1]} : vector<1x16xf32> to vector<1x1xf32>
      %837 = vector.broadcast %836 : vector<1x1xf32> to vector<16x16xf32>
      %838 = arith.cmpf oge, %316, %837 : vector<16x16xf32>
      %839 = arith.extui %838 : vector<16x16xi1> to vector<16x16xi32>
      %840 = arith.sitofp %839 : vector<16x16xi32> to vector<16x16xf32>
      %841 = arith.addf %835, %840 : vector<16x16xf32>
      %842 = vector.extract_strided_slice %811 {offsets = [0, 5], sizes = [1, 1], strides = [1, 1]} : vector<1x16xf32> to vector<1x1xf32>
      %843 = vector.broadcast %842 : vector<1x1xf32> to vector<16x16xf32>
      %844 = arith.cmpf oge, %316, %843 : vector<16x16xf32>
      %845 = arith.extui %844 : vector<16x16xi1> to vector<16x16xi32>
      %846 = arith.sitofp %845 : vector<16x16xi32> to vector<16x16xf32>
      %847 = arith.addf %841, %846 : vector<16x16xf32>
      %848 = vector.extract_strided_slice %811 {offsets = [0, 6], sizes = [1, 1], strides = [1, 1]} : vector<1x16xf32> to vector<1x1xf32>
      %849 = vector.broadcast %848 : vector<1x1xf32> to vector<16x16xf32>
      %850 = arith.cmpf oge, %316, %849 : vector<16x16xf32>
      %851 = arith.extui %850 : vector<16x16xi1> to vector<16x16xi32>
      %852 = arith.sitofp %851 : vector<16x16xi32> to vector<16x16xf32>
      %853 = arith.addf %847, %852 : vector<16x16xf32>
      %854 = vector.extract_strided_slice %811 {offsets = [0, 7], sizes = [1, 1], strides = [1, 1]} : vector<1x16xf32> to vector<1x1xf32>
      %855 = vector.broadcast %854 : vector<1x1xf32> to vector<16x16xf32>
      %856 = arith.cmpf oge, %316, %855 : vector<16x16xf32>
      %857 = arith.extui %856 : vector<16x16xi1> to vector<16x16xi32>
      %858 = arith.sitofp %857 : vector<16x16xi32> to vector<16x16xf32>
      %859 = arith.addf %853, %858 : vector<16x16xf32>
      %860 = vector.extract_strided_slice %811 {offsets = [0, 8], sizes = [1, 1], strides = [1, 1]} : vector<1x16xf32> to vector<1x1xf32>
      %861 = vector.broadcast %860 : vector<1x1xf32> to vector<16x16xf32>
      %862 = arith.cmpf oge, %316, %861 : vector<16x16xf32>
      %863 = arith.extui %862 : vector<16x16xi1> to vector<16x16xi32>
      %864 = arith.sitofp %863 : vector<16x16xi32> to vector<16x16xf32>
      %865 = arith.addf %859, %864 : vector<16x16xf32>
      %866 = vector.extract_strided_slice %811 {offsets = [0, 9], sizes = [1, 1], strides = [1, 1]} : vector<1x16xf32> to vector<1x1xf32>
      %867 = vector.broadcast %866 : vector<1x1xf32> to vector<16x16xf32>
      %868 = arith.cmpf oge, %316, %867 : vector<16x16xf32>
      %869 = arith.extui %868 : vector<16x16xi1> to vector<16x16xi32>
      %870 = arith.sitofp %869 : vector<16x16xi32> to vector<16x16xf32>
      %871 = arith.addf %865, %870 : vector<16x16xf32>
      %872 = vector.extract_strided_slice %811 {offsets = [0, 10], sizes = [1, 1], strides = [1, 1]} : vector<1x16xf32> to vector<1x1xf32>
      %873 = vector.broadcast %872 : vector<1x1xf32> to vector<16x16xf32>
      %874 = arith.cmpf oge, %316, %873 : vector<16x16xf32>
      %875 = arith.extui %874 : vector<16x16xi1> to vector<16x16xi32>
      %876 = arith.sitofp %875 : vector<16x16xi32> to vector<16x16xf32>
      %877 = arith.addf %871, %876 : vector<16x16xf32>
      %878 = vector.extract_strided_slice %811 {offsets = [0, 11], sizes = [1, 1], strides = [1, 1]} : vector<1x16xf32> to vector<1x1xf32>
      %879 = vector.broadcast %878 : vector<1x1xf32> to vector<16x16xf32>
      %880 = arith.cmpf oge, %316, %879 : vector<16x16xf32>
      %881 = arith.extui %880 : vector<16x16xi1> to vector<16x16xi32>
      %882 = arith.sitofp %881 : vector<16x16xi32> to vector<16x16xf32>
      %883 = arith.addf %877, %882 : vector<16x16xf32>
      %884 = vector.extract_strided_slice %811 {offsets = [0, 12], sizes = [1, 1], strides = [1, 1]} : vector<1x16xf32> to vector<1x1xf32>
      %885 = vector.broadcast %884 : vector<1x1xf32> to vector<16x16xf32>
      %886 = arith.cmpf oge, %316, %885 : vector<16x16xf32>
      %887 = arith.extui %886 : vector<16x16xi1> to vector<16x16xi32>
      %888 = arith.sitofp %887 : vector<16x16xi32> to vector<16x16xf32>
      %889 = arith.addf %883, %888 : vector<16x16xf32>
      %890 = vector.extract_strided_slice %811 {offsets = [0, 13], sizes = [1, 1], strides = [1, 1]} : vector<1x16xf32> to vector<1x1xf32>
      %891 = vector.broadcast %890 : vector<1x1xf32> to vector<16x16xf32>
      %892 = arith.cmpf oge, %316, %891 : vector<16x16xf32>
      %893 = arith.extui %892 : vector<16x16xi1> to vector<16x16xi32>
      %894 = arith.sitofp %893 : vector<16x16xi32> to vector<16x16xf32>
      %895 = arith.addf %889, %894 : vector<16x16xf32>
      %896 = vector.extract_strided_slice %811 {offsets = [0, 14], sizes = [1, 1], strides = [1, 1]} : vector<1x16xf32> to vector<1x1xf32>
      %897 = vector.broadcast %896 : vector<1x1xf32> to vector<16x16xf32>
      %898 = arith.cmpf oge, %316, %897 : vector<16x16xf32>
      %899 = arith.extui %898 : vector<16x16xi1> to vector<16x16xi32>
      %900 = arith.sitofp %899 : vector<16x16xi32> to vector<16x16xf32>
      %901 = arith.addf %895, %900 : vector<16x16xf32>
      %902 = vector.extract_strided_slice %811 {offsets = [0, 15], sizes = [1, 1], strides = [1, 1]} : vector<1x16xf32> to vector<1x1xf32>
      %903 = vector.broadcast %902 : vector<1x1xf32> to vector<16x16xf32>
      %904 = arith.cmpf oge, %316, %903 : vector<16x16xf32>
      %905 = arith.extui %904 : vector<16x16xi1> to vector<16x16xi32>
      %906 = arith.sitofp %905 : vector<16x16xi32> to vector<16x16xf32>
      %907 = arith.addf %901, %906 : vector<16x16xf32>
      scf.yield %907 : vector<16x16xf32>
    }
    %c16_i32_143 = arith.constant 16 : i32
    %cst_144 = arith.constant dense<0.000000e+00> : vector<16xf32>
    %321 = vector.multi_reduction <add>, %314, %cst_144 [1] : vector<16x16xf32> to vector<16xf32>
    %322 = vector.shape_cast %321 : vector<16xf32> to vector<16x1xf32>
    %cst_145 = arith.constant dense<0.000000e+00> : vector<1xf32>
    %323 = vector.multi_reduction <add>, %322, %cst_145 [0] : vector<16x1xf32> to vector<1xf32>
    %324 = vector.shape_cast %323 : vector<1xf32> to vector<1x1xf32>
    %cst_146 = arith.constant 1.000000e+00 : f32
    %325 = vector.broadcast %cst_146 : f32 to vector<1x1xf32>
    %326 = arith.subf %324, %325 : vector<1x1xf32>
    %cst_147 = arith.constant 6.000000e+01 : f32
    %327 = vector.broadcast %cst_147 : f32 to vector<1x1xf32>
    %328 = arith.mulf %327, %326 : vector<1x1xf32>
    %cst_148 = arith.constant 1.000000e+02 : f32
    %329 = vector.broadcast %cst_148 : f32 to vector<1x1xf32>
    %330 = arith.divf %328, %329 : vector<1x1xf32>
    %331 = math.floor %330 : vector<1x1xf32>
    %332 = arith.subf %330, %331 : vector<1x1xf32>
    %cst_149 = arith.constant 1.000000e+00 : f32
    %333 = vector.broadcast %cst_149 : f32 to vector<1x1xf32>
    %334 = arith.addf %331, %333 : vector<1x1xf32>
    %cst_150 = arith.constant 1.000000e+00 : f32
    %335 = vector.broadcast %cst_150 : f32 to vector<1x1xf32>
    %336 = arith.subf %324, %335 : vector<1x1xf32>
    %337 = arith.minimumf %334, %336 : vector<1x1xf32>
    %cst_151 = arith.constant 1.000000e+00 : f32
    %338 = vector.broadcast %cst_151 : f32 to vector<1x1xf32>
    %339 = arith.addf %331, %338 : vector<1x1xf32>
    %340 = vector.broadcast %339 : vector<1x1xf32> to vector<16x16xf32>
    %341 = arith.cmpf oge, %320, %340 : vector<16x16xf32>
    %342 = arith.andi %312, %341 : vector<16x16xi1>
    %cst_152 = arith.constant 0x7F800000 : f32
    %343 = vector.broadcast %cst_152 : f32 to vector<16x16xf32>
    %344 = arith.select %342, %316, %343 : vector<16x16xi1>, vector<16x16xf32>
    %cst_153 = arith.constant dense<0x7F800000> : vector<16xf32>
    %345 = vector.multi_reduction <minimumf>, %344, %cst_153 [1] : vector<16x16xf32> to vector<16xf32>
    %346 = vector.shape_cast %345 : vector<16xf32> to vector<16x1xf32>
    %cst_154 = arith.constant dense<0x7F800000> : vector<1xf32>
    %347 = vector.multi_reduction <minimumf>, %346, %cst_154 [0] : vector<16x1xf32> to vector<1xf32>
    %348 = vector.shape_cast %347 : vector<1xf32> to vector<1x1xf32>
    %cst_155 = arith.constant 1.000000e+00 : f32
    %349 = vector.broadcast %cst_155 : f32 to vector<1x1xf32>
    %350 = arith.addf %337, %349 : vector<1x1xf32>
    %351 = vector.broadcast %350 : vector<1x1xf32> to vector<16x16xf32>
    %352 = arith.cmpf oge, %320, %351 : vector<16x16xf32>
    %353 = arith.andi %312, %352 : vector<16x16xi1>
    %cst_156 = arith.constant 0x7F800000 : f32
    %354 = vector.broadcast %cst_156 : f32 to vector<16x16xf32>
    %355 = arith.select %353, %316, %354 : vector<16x16xi1>, vector<16x16xf32>
    %cst_157 = arith.constant dense<0x7F800000> : vector<16xf32>
    %356 = vector.multi_reduction <minimumf>, %355, %cst_157 [1] : vector<16x16xf32> to vector<16xf32>
    %357 = vector.shape_cast %356 : vector<16xf32> to vector<16x1xf32>
    %cst_158 = arith.constant dense<0x7F800000> : vector<1xf32>
    %358 = vector.multi_reduction <minimumf>, %357, %cst_158 [0] : vector<16x1xf32> to vector<1xf32>
    %359 = vector.shape_cast %358 : vector<1xf32> to vector<1x1xf32>
    %cst_159 = arith.constant 1.000000e+00 : f32
    %360 = vector.broadcast %cst_159 : f32 to vector<1x1xf32>
    %361 = arith.subf %360, %332 : vector<1x1xf32>
    %362 = arith.mulf %361, %348 : vector<1x1xf32>
    %363 = arith.mulf %332, %359 : vector<1x1xf32>
    %364 = arith.addf %362, %363 : vector<1x1xf32>
    %365 = vector.broadcast %364 : vector<1x1xf32> to vector<16x16xf32>
    %366 = arith.cmpf oge, %297, %365 : vector<16x16xf32>
    %367 = arith.extui %366 : vector<16x16xi1> to vector<16x16xi32>
    %368 = arith.sitofp %367 : vector<16x16xi32> to vector<16x16xf32>
    %369 = arith.mulf %297, %368 : vector<16x16xf32>
    %cst_160 = arith.constant 0.000000e+00 : f32
    %370 = vector.broadcast %cst_160 : f32 to vector<16x16xf32>
    %371 = arith.cmpf ogt, %369, %370 : vector<16x16xf32>
    %372 = arith.extui %371 : vector<16x16xi1> to vector<16x16xi32>
    %373 = arith.sitofp %372 : vector<16x16xi32> to vector<16x16xf32>
    %cst_161 = arith.constant dense<0.000000e+00> : vector<16xf32>
    %374 = vector.multi_reduction <add>, %373, %cst_161 [1] : vector<16x16xf32> to vector<16xf32>
    %375 = vector.shape_cast %374 : vector<16xf32> to vector<16x1xf32>
    %cst_162 = arith.constant 1.000000e+00 : f32
    %376 = vector.broadcast %cst_162 : f32 to vector<16x1xf32>
    %377 = arith.maximumf %375, %376 : vector<16x1xf32>
    %378 = tpu.reciprocal %377 : vector<16x1xf32> -> vector<16x1xf32>
    %379 = vector.broadcast %378 : vector<16x1xf32> to vector<16x16xf32>
    %380 = arith.mulf %369, %379 : vector<16x16xf32>
    %cst_163 = arith.constant 0.000000e+00 : f32
    %381 = vector.broadcast %cst_163 : f32 to vector<16x16xf32>
    %382 = arith.cmpf ogt, %369, %381 : vector<16x16xf32>
    %383 = arith.extui %382 : vector<16x16xi1> to vector<16x16xi32>
    %384 = arith.sitofp %383 : vector<16x16xi32> to vector<16x16xf32>
    %cst_164 = arith.constant dense<0.000000e+00> : vector<16x16xf32>
    %385 = tpu.matmul %384, %384, %cst_164 {dimension_numbers = #tpu.dot_dimension_numbers<[1], [0], [0], [1], [0, 0, 1, 1], [], []>} : vector<16x16xf32>, vector<16x16xf32>, vector<16x16xf32> -> vector<16x16xf32>
    %cst_165 = arith.constant 0.000000e+00 : f32
    %386 = vector.broadcast %cst_165 : f32 to vector<16x16xf32>
    %387 = arith.cmpf ogt, %385, %386 : vector<16x16xf32>
    %388 = arith.extui %387 : vector<16x16xi1> to vector<16x16xi32>
    %389 = arith.sitofp %388 : vector<16x16xi32> to vector<16x16xf32>
    %cst_166 = arith.constant dense<0.000000e+00> : vector<16x16xf32>
    %390 = tpu.matmul %389, %389, %cst_166 {dimension_numbers = #tpu.dot_dimension_numbers<[1], [0], [0], [1], [0, 0, 1, 1], [], []>} : vector<16x16xf32>, vector<16x16xf32>, vector<16x16xf32> -> vector<16x16xf32>
    %cst_167 = arith.constant 0.000000e+00 : f32
    %391 = vector.broadcast %cst_167 : f32 to vector<16x16xf32>
    %392 = arith.cmpf ogt, %390, %391 : vector<16x16xf32>
    %393 = arith.extui %392 : vector<16x16xi1> to vector<16x16xi32>
    %394 = arith.sitofp %393 : vector<16x16xi32> to vector<16x16xf32>
    %cst_168 = arith.constant dense<0.000000e+00> : vector<16x16xf32>
    %395 = tpu.matmul %394, %394, %cst_168 {dimension_numbers = #tpu.dot_dimension_numbers<[1], [0], [0], [1], [0, 0, 1, 1], [], []>} : vector<16x16xf32>, vector<16x16xf32>, vector<16x16xf32> -> vector<16x16xf32>
    %cst_169 = arith.constant 0.000000e+00 : f32
    %396 = vector.broadcast %cst_169 : f32 to vector<16x16xf32>
    %397 = arith.cmpf ogt, %395, %396 : vector<16x16xf32>
    %398 = arith.extui %397 : vector<16x16xi1> to vector<16x16xi32>
    %399 = arith.sitofp %398 : vector<16x16xi32> to vector<16x16xf32>
    %cst_170 = arith.constant dense<0.000000e+00> : vector<16x16xf32>
    %400 = tpu.matmul %399, %399, %cst_170 {dimension_numbers = #tpu.dot_dimension_numbers<[1], [0], [0], [1], [0, 0, 1, 1], [], []>} : vector<16x16xf32>, vector<16x16xf32>, vector<16x16xf32> -> vector<16x16xf32>
    %cst_171 = arith.constant 0.000000e+00 : f32
    %401 = vector.broadcast %cst_171 : f32 to vector<16x16xf32>
    %402 = arith.cmpf ogt, %400, %401 : vector<16x16xf32>
    %403 = arith.extui %402 : vector<16x16xi1> to vector<16x16xi32>
    %404 = arith.sitofp %403 : vector<16x16xi32> to vector<16x16xf32>
    %cst_172 = arith.constant 0.000000e+00 : f32
    %405 = vector.broadcast %cst_172 : f32 to vector<16x16xf32>
    %406 = arith.cmpf ogt, %404, %405 : vector<16x16xf32>
    %cst_173 = arith.constant 1.000000e+09 : f32
    %407 = vector.broadcast %cst_173 : f32 to vector<16x16xf32>
    %408 = arith.select %406, %9, %407 : vector<16x16xi1>, vector<16x16xf32>
    %cst_174 = arith.constant dense<0x7F800000> : vector<16xf32>
    %409 = vector.multi_reduction <minimumf>, %408, %cst_174 [1] : vector<16x16xf32> to vector<16xf32>
    %410 = vector.shape_cast %409 : vector<16xf32> to vector<16x1xf32>
    %cst_175 = arith.constant 0.000000e+00 : f32
    %411 = vector.broadcast %cst_175 : f32 to vector<16x16xf32>
    %412 = arith.cmpf ogt, %404, %411 : vector<16x16xf32>
    %cst_176 = arith.constant 1.000000e+09 : f32
    %413 = vector.broadcast %cst_176 : f32 to vector<16x16xf32>
    %414 = arith.select %412, %8, %413 : vector<16x16xi1>, vector<16x16xf32>
    %cst_177 = arith.constant dense<0x7F800000> : vector<16xf32>
    %415 = vector.multi_reduction <minimumf>, %414, %cst_177 [0] : vector<16x16xf32> to vector<16xf32>
    %416 = vector.shape_cast %415 : vector<16xf32> to vector<1x16xf32>
    %417 = vector.broadcast %416 : vector<1x16xf32> to vector<16x16xf32>
    %418 = arith.cmpf oeq, %8, %417 : vector<16x16xf32>
    %419 = arith.extui %418 : vector<16x16xi1> to vector<16x16xi32>
    %420 = arith.sitofp %419 : vector<16x16xi32> to vector<16x16xf32>
    %421 = vector.broadcast %410 : vector<16x1xf32> to vector<16x16xf32>
    %422 = arith.cmpf oeq, %9, %421 : vector<16x16xf32>
    %423 = arith.extui %422 : vector<16x16xi1> to vector<16x16xi32>
    %424 = arith.sitofp %423 : vector<16x16xi32> to vector<16x16xf32>
    %cst_178 = arith.constant dense<0.000000e+00> : vector<16x128xf32>
    %425 = tpu.matmul %420, %15, %cst_178 {dimension_numbers = #tpu.dot_dimension_numbers<[1], [0], [0], [1], [0, 0, 1, 1], [], []>} : vector<16x16xf32>, vector<16x128xf32>, vector<16x128xf32> -> vector<16x128xf32>
    %c1_179 = arith.constant 1 : index
    %c0_180 = arith.constant 0 : index
    %c0_181 = arith.constant 0 : index
    %426 = vector.load %arg18[%c1_179, %c0_180, %c0_181] : memref<3x16x128xf32, #tpu.memory_space<vmem>>, vector<1x16x128xf32>
    %427 = vector.shape_cast %426 : vector<1x16x128xf32> to vector<16x128xf32>
    %428 = vector.shape_cast %425 : vector<16x128xf32> to vector<1x16x128xf32>
    tpu.vector_store %arg18[%c1_179, %c0_180, %c0_181], %428 {strides = array<i32>} : memref<3x16x128xf32, #tpu.memory_space<vmem>>, vector<1x16x128xf32>,
    %cst_182 = arith.constant dense<0.000000e+00> : vector<16x128xf32>
    %429 = tpu.matmul %380, %256, %cst_182 {dimension_numbers = #tpu.dot_dimension_numbers<[1], [0], [0], [1], [0, 0, 1, 1], [], []>} : vector<16x16xf32>, vector<16x128xf32>, vector<16x128xf32> -> vector<16x128xf32>
    %cst_183 = arith.constant dense<0.000000e+00> : vector<16x128xf32>
    %430 = tpu.matmul %420, %429, %cst_183 {dimension_numbers = #tpu.dot_dimension_numbers<[1], [0], [0], [1], [0, 0, 1, 1], [], []>} : vector<16x16xf32>, vector<16x128xf32>, vector<16x128xf32> -> vector<16x128xf32>
    %431 = arith.mulf %430, %430 : vector<16x128xf32>
    %cst_184 = arith.constant dense<0.000000e+00> : vector<16xf32>
    %432 = vector.multi_reduction <add>, %431, %cst_184 [1] : vector<16x128xf32> to vector<16xf32>
    %433 = vector.shape_cast %432 : vector<16xf32> to vector<16x1xf32>
    %cst_185 = arith.constant 1.000000e-24 : f32
    %434 = vector.broadcast %cst_185 : f32 to vector<16x1xf32>
    %435 = arith.maximumf %433, %434 : vector<16x1xf32>
    %436 = math.rsqrt %435 : vector<16x1xf32>
    %437 = vector.broadcast %436 : vector<16x1xf32> to vector<16x128xf32>
    %438 = arith.mulf %430, %437 : vector<16x128xf32>
    %cst_186 = arith.constant dense<0.000000e+00> : vector<16x16xf32>
    %439 = tpu.matmul %420, %222, %cst_186 {dimension_numbers = #tpu.dot_dimension_numbers<[1], [0], [0], [1], [0, 0, 1, 1], [], []>} : vector<16x16xf32>, vector<16x16xf32>, vector<16x16xf32> -> vector<16x16xf32>
    %cst_187 = arith.constant dense<0.000000e+00> : vector<16x16xf32>
    %440 = tpu.matmul %439, %424, %cst_187 {dimension_numbers = #tpu.dot_dimension_numbers<[1], [0], [0], [1], [0, 0, 1, 1], [], []>} : vector<16x16xf32>, vector<16x16xf32>, vector<16x16xf32> -> vector<16x16xf32>
    %441 = tpu.transpose %440, [1, 0] : vector<16x16xf32> -> vector<16x16xf32>
    %442 = arith.addf %440, %441 : vector<16x16xf32>
    %cst_188 = arith.constant 5.000000e-01 : f32
    %443 = vector.broadcast %cst_188 : f32 to vector<16x16xf32>
    %444 = arith.mulf %443, %442 : vector<16x16xf32>
    %445 = arith.addf %444, %7 : vector<16x16xf32>
    %cst_189 = arith.constant dense<0.000000e+00> : vector<16xf32>
    %446 = vector.multi_reduction <add>, %445, %cst_189 [0] : vector<16x16xf32> to vector<16xf32>
    %447 = vector.shape_cast %446 : vector<16xf32> to vector<1x16xf32>
    %cst_190 = arith.constant 9.99999996E-13 : f32
    %448 = vector.broadcast %cst_190 : f32 to vector<1x16xf32>
    %449 = arith.maximumf %447, %448 : vector<1x16xf32>
    %450 = math.rsqrt %449 : vector<1x16xf32>
    %451 = vector.broadcast %450 : vector<1x16xf32> to vector<16x16xf32>
    %452 = arith.mulf %445, %451 : vector<16x16xf32>
    %453 = tpu.transpose %450, [1, 0] : vector<1x16xf32> -> vector<16x1xf32>
    %454 = vector.broadcast %453 : vector<16x1xf32> to vector<16x16xf32>
    %455 = arith.mulf %452, %454 : vector<16x16xf32>
    %456 = arith.cmpf oeq, %416, %10 : vector<1x16xf32>
    %457 = arith.extui %456 : vector<1x16xi1> to vector<1x16xi32>
    %458 = arith.sitofp %457 : vector<1x16xi32> to vector<1x16xf32>
    %459 = arith.mulf %237, %458 : vector<1x16xf32>
    %c2 = arith.constant 2 : index
    %c0_191 = arith.constant 0 : index
    %c0_192 = arith.constant 0 : index
    %460 = vector.load %arg4[%c2, %c0_191, %c0_192] : memref<3x128x128xf32, #tpu.memory_space<vmem>>, vector<1x128x128xf32>
    %461 = vector.shape_cast %460 : vector<1x128x128xf32> to vector<128x128xf32>
    %cst_193 = arith.constant dense<0.000000e+00> : vector<16x128xf32>
    %462 = tpu.matmul %438, %461, %cst_193 {dimension_numbers = #tpu.dot_dimension_numbers<[1], [0], [0], [1], [0, 0, 1, 1], [], []>} : vector<16x128xf32>, vector<128x128xf32>, vector<16x128xf32> -> vector<16x128xf32>
    %cst_194 = arith.constant dense<0.000000e+00> : vector<16x128xf32>
    %463 = tpu.matmul %455, %462, %cst_194 {dimension_numbers = #tpu.dot_dimension_numbers<[1], [0], [0], [1], [0, 0, 1, 1], [], []>} : vector<16x16xf32>, vector<16x128xf32>, vector<16x128xf32> -> vector<16x128xf32>
    %c2_195 = arith.constant 2 : index
    %c0_196 = arith.constant 0 : index
    %c0_197 = arith.constant 0 : index
    %464 = vector.load %arg5[%c2_195, %c0_196, %c0_197] : memref<3x1x128xf32, #tpu.memory_space<vmem>>, vector<1x1x128xf32>
    %465 = vector.shape_cast %464 : vector<1x1x128xf32> to vector<1x128xf32>
    %466 = vector.broadcast %465 : vector<1x128xf32> to vector<16x128xf32>
    %467 = arith.addf %463, %466 : vector<16x128xf32>
    %cst_198 = arith.constant 0.000000e+00 : f32
    %468 = vector.broadcast %cst_198 : f32 to vector<16x128xf32>
    %469 = arith.maximumf %467, %468 : vector<16x128xf32>
    %470 = arith.addf %469, %438 : vector<16x128xf32>
    %471 = arith.mulf %470, %470 : vector<16x128xf32>
    %cst_199 = arith.constant dense<0.000000e+00> : vector<16xf32>
    %472 = vector.multi_reduction <add>, %471, %cst_199 [1] : vector<16x128xf32> to vector<16xf32>
    %473 = vector.shape_cast %472 : vector<16xf32> to vector<16x1xf32>
    %cst_200 = arith.constant 1.000000e-24 : f32
    %474 = vector.broadcast %cst_200 : f32 to vector<16x1xf32>
    %475 = arith.maximumf %473, %474 : vector<16x1xf32>
    %476 = math.rsqrt %475 : vector<16x1xf32>
    %477 = vector.broadcast %476 : vector<16x1xf32> to vector<16x128xf32>
    %478 = arith.mulf %470, %477 : vector<16x128xf32>
    %c2_201 = arith.constant 2 : index
    %c0_202 = arith.constant 0 : index
    %c0_203 = arith.constant 0 : index
    %479 = vector.load %arg6[%c2_201, %c0_202, %c0_203] : memref<3x128x128xf32, #tpu.memory_space<vmem>>, vector<1x128x128xf32>
    %480 = vector.shape_cast %479 : vector<1x128x128xf32> to vector<128x128xf32>
    %cst_204 = arith.constant dense<0.000000e+00> : vector<16x128xf32>
    %481 = tpu.matmul %478, %480, %cst_204 {dimension_numbers = #tpu.dot_dimension_numbers<[1], [0], [0], [1], [0, 0, 1, 1], [], []>} : vector<16x128xf32>, vector<128x128xf32>, vector<16x128xf32> -> vector<16x128xf32>
    %c2_205 = arith.constant 2 : index
    %c0_206 = arith.constant 0 : index
    %c0_207 = arith.constant 0 : index
    %482 = vector.load %arg7[%c2_205, %c0_206, %c0_207] : memref<3x1x128xf32, #tpu.memory_space<vmem>>, vector<1x1x128xf32>
    %483 = vector.shape_cast %482 : vector<1x1x128xf32> to vector<1x128xf32>
    %484 = vector.broadcast %483 : vector<1x128xf32> to vector<16x128xf32>
    %485 = arith.addf %481, %484 : vector<16x128xf32>
    %c2_208 = arith.constant 2 : index
    %c0_209 = arith.constant 0 : index
    %c0_210 = arith.constant 0 : index
    %486 = vector.load %arg8[%c2_208, %c0_209, %c0_210] : memref<3x1x128xf32, #tpu.memory_space<vmem>>, vector<1x1x128xf32>
    %487 = vector.shape_cast %486 : vector<1x1x128xf32> to vector<1x128xf32>
    %488 = vector.broadcast %487 : vector<1x128xf32> to vector<16x128xf32>
    %489 = arith.mulf %485, %488 : vector<16x128xf32>
    %cst_211 = arith.constant dense<0.000000e+00> : vector<16xf32>
    %490 = vector.multi_reduction <add>, %489, %cst_211 [1] : vector<16x128xf32> to vector<16xf32>
    %491 = vector.shape_cast %490 : vector<16xf32> to vector<16x1xf32>
    %c2_212 = arith.constant 2 : index
    %c0_213 = arith.constant 0 : index
    %c0_214 = arith.constant 0 : index
    %492 = vector.load %arg9[%c2_212, %c0_213, %c0_214] : memref<3x1x128xf32, #tpu.memory_space<vmem>>, vector<1x1x128xf32>
    %493 = vector.shape_cast %492 : vector<1x1x128xf32> to vector<1x128xf32>
    %494 = vector.broadcast %493 : vector<1x128xf32> to vector<16x128xf32>
    %495 = arith.mulf %485, %494 : vector<16x128xf32>
    %cst_215 = arith.constant dense<0.000000e+00> : vector<16xf32>
    %496 = vector.multi_reduction <add>, %495, %cst_215 [1] : vector<16x128xf32> to vector<16xf32>
    %497 = vector.shape_cast %496 : vector<16xf32> to vector<16x1xf32>
    %498 = tpu.transpose %497, [1, 0] : vector<16x1xf32> -> vector<1x16xf32>
    %499 = vector.broadcast %491 : vector<16x1xf32> to vector<16x16xf32>
    %500 = vector.broadcast %498 : vector<1x16xf32> to vector<16x16xf32>
    %501 = arith.addf %499, %500 : vector<16x16xf32>
    %cst_216 = arith.constant 5.000000e-01 : f32
    %502 = vector.broadcast %cst_216 : f32 to vector<16x16xf32>
    %503 = arith.mulf %502, %501 : vector<16x16xf32>
    %504 = math.tanh %503 : vector<16x16xf32>
    %cst_217 = arith.constant 1.000000e+00 : f32
    %505 = vector.broadcast %cst_217 : f32 to vector<16x16xf32>
    %506 = arith.addf %504, %505 : vector<16x16xf32>
    %cst_218 = arith.constant 5.000000e-01 : f32
    %507 = vector.broadcast %cst_218 : f32 to vector<16x16xf32>
    %508 = arith.mulf %507, %506 : vector<16x16xf32>
    %cst_219 = arith.constant 0.000000e+00 : f32
    %509 = vector.broadcast %cst_219 : f32 to vector<16x16xf32>
    %510 = arith.cmpf ogt, %444, %509 : vector<16x16xf32>
    %cst_220 = arith.constant 0.000000e+00 : f32
    %511 = vector.broadcast %cst_220 : f32 to vector<16x16xf32>
    %512 = arith.select %510, %508, %511 : vector<16x16xi1>, vector<16x16xf32>
    %513 = tpu.transpose %512, [1, 0] : vector<16x16xf32> -> vector<16x16xf32>
    %514 = arith.addf %512, %513 : vector<16x16xf32>
    %cst_221 = arith.constant 5.000000e-01 : f32
    %515 = vector.broadcast %cst_221 : f32 to vector<16x16xf32>
    %516 = arith.mulf %515, %514 : vector<16x16xf32>
    %517 = arith.cmpi eq, %3, %4 : vector<16x16xi32>
    %cst_222 = arith.constant 1.000000e+00 : f32
    %518 = vector.broadcast %cst_222 : f32 to vector<16x16xf32>
    %519 = arith.select %517, %518, %516 : vector<16x16xi1>, vector<16x16xf32>
    %cst_223 = arith.constant dense<0.000000e+00> : vector<16x128xf32>
    %520 = tpu.matmul %519, %15, %cst_223 {dimension_numbers = #tpu.dot_dimension_numbers<[1], [0], [0], [1], [0, 0, 1, 1], [], []>} : vector<16x16xf32>, vector<16x128xf32>, vector<16x128xf32> -> vector<16x128xf32>
    %c2_224 = arith.constant 2 : index
    %c0_225 = arith.constant 0 : index
    %c0_226 = arith.constant 0 : index
    %521 = vector.load %arg19[%c2_224, %c0_225, %c0_226] : memref<3x16x128xf32, #tpu.memory_space<vmem>>, vector<1x16x128xf32>
    %522 = vector.shape_cast %521 : vector<1x16x128xf32> to vector<16x128xf32>
    %523 = vector.shape_cast %520 : vector<16x128xf32> to vector<1x16x128xf32>
    tpu.vector_store %arg19[%c2_224, %c0_225, %c0_226], %523 {strides = array<i32>} : memref<3x16x128xf32, #tpu.memory_space<vmem>>, vector<1x16x128xf32>,
    %cst_227 = arith.constant 0.000000e+00 : f32
    %524 = vector.broadcast %cst_227 : f32 to vector<16x16xf32>
    %525 = arith.cmpf ogt, %519, %524 : vector<16x16xf32>
    %cst_228 = arith.constant 0.000000e+00 : f32
    %526 = vector.broadcast %cst_228 : f32 to vector<1x16xf32>
    %527 = arith.cmpf ogt, %459, %526 : vector<1x16xf32>
    %528 = tpu.transpose %459, [1, 0] : vector<1x16xf32> -> vector<16x1xf32>
    %cst_229 = arith.constant 0.000000e+00 : f32
    %529 = vector.broadcast %cst_229 : f32 to vector<16x1xf32>
    %530 = arith.cmpf ogt, %528, %529 : vector<16x1xf32>
    %531 = vector.broadcast %527 : vector<1x16xi1> to vector<16x16xi1>
    %532 = vector.broadcast %530 : vector<16x1xi1> to vector<16x16xi1>
    %533 = arith.andi %531, %532 : vector<16x16xi1>
    %534 = arith.andi %525, %533 : vector<16x16xi1>
    %535 = arith.extui %534 : vector<16x16xi1> to vector<16x16xi32>
    %536 = arith.sitofp %535 : vector<16x16xi32> to vector<16x16xf32>
    %cst_230 = arith.constant 0x7F800000 : f32
    %537 = vector.broadcast %cst_230 : f32 to vector<16x16xf32>
    %538 = arith.select %534, %519, %537 : vector<16x16xi1>, vector<16x16xf32>
    %c0_231 = arith.constant 0 : index
    %c0_232 = arith.constant 0 : index
    %539 = vector.load %arg20[%c0_231, %c0_232] : memref<16x16xf32, #tpu.memory_space<vmem>>, vector<16x16xf32>
    tpu.vector_store %arg20[%c0_231, %c0_232], %538 {strides = array<i32>} : memref<16x16xf32, #tpu.memory_space<vmem>>, vector<16x16xf32>,
    %cst_233 = arith.constant 0.000000e+00 : f32
    %540 = vector.broadcast %cst_233 : f32 to vector<16x16xf32>
    %c0_i32_234 = arith.constant 0 : i32
    %c16_i32_235 = arith.constant 16 : i32
    %541 = arith.addi %c0_i32_234, %c16_i32_235 : i32
    %c1_i32_236 = arith.constant 1 : i32
    %542 = scf.for %arg21 = %c0_i32_234 to %541 step %c1_i32_236 iter_args(%arg22 = %540) -> (vector<16x16xf32>)  : i32 {
      %810 = arith.index_cast %arg21 : i32 to index
      %c0_361 = arith.constant 0 : index
      %811 = vector.load %arg20[%810, %c0_361] : memref<16x16xf32, #tpu.memory_space<vmem>>, vector<1x16xf32>
      %812 = vector.extract_strided_slice %811 {offsets = [0, 0], sizes = [1, 1], strides = [1, 1]} : vector<1x16xf32> to vector<1x1xf32>
      %813 = vector.broadcast %812 : vector<1x1xf32> to vector<16x16xf32>
      %814 = arith.cmpf oge, %538, %813 : vector<16x16xf32>
      %815 = arith.extui %814 : vector<16x16xi1> to vector<16x16xi32>
      %816 = arith.sitofp %815 : vector<16x16xi32> to vector<16x16xf32>
      %817 = arith.addf %arg22, %816 : vector<16x16xf32>
      %818 = vector.extract_strided_slice %811 {offsets = [0, 1], sizes = [1, 1], strides = [1, 1]} : vector<1x16xf32> to vector<1x1xf32>
      %819 = vector.broadcast %818 : vector<1x1xf32> to vector<16x16xf32>
      %820 = arith.cmpf oge, %538, %819 : vector<16x16xf32>
      %821 = arith.extui %820 : vector<16x16xi1> to vector<16x16xi32>
      %822 = arith.sitofp %821 : vector<16x16xi32> to vector<16x16xf32>
      %823 = arith.addf %817, %822 : vector<16x16xf32>
      %824 = vector.extract_strided_slice %811 {offsets = [0, 2], sizes = [1, 1], strides = [1, 1]} : vector<1x16xf32> to vector<1x1xf32>
      %825 = vector.broadcast %824 : vector<1x1xf32> to vector<16x16xf32>
      %826 = arith.cmpf oge, %538, %825 : vector<16x16xf32>
      %827 = arith.extui %826 : vector<16x16xi1> to vector<16x16xi32>
      %828 = arith.sitofp %827 : vector<16x16xi32> to vector<16x16xf32>
      %829 = arith.addf %823, %828 : vector<16x16xf32>
      %830 = vector.extract_strided_slice %811 {offsets = [0, 3], sizes = [1, 1], strides = [1, 1]} : vector<1x16xf32> to vector<1x1xf32>
      %831 = vector.broadcast %830 : vector<1x1xf32> to vector<16x16xf32>
      %832 = arith.cmpf oge, %538, %831 : vector<16x16xf32>
      %833 = arith.extui %832 : vector<16x16xi1> to vector<16x16xi32>
      %834 = arith.sitofp %833 : vector<16x16xi32> to vector<16x16xf32>
      %835 = arith.addf %829, %834 : vector<16x16xf32>
      %836 = vector.extract_strided_slice %811 {offsets = [0, 4], sizes = [1, 1], strides = [1, 1]} : vector<1x16xf32> to vector<1x1xf32>
      %837 = vector.broadcast %836 : vector<1x1xf32> to vector<16x16xf32>
      %838 = arith.cmpf oge, %538, %837 : vector<16x16xf32>
      %839 = arith.extui %838 : vector<16x16xi1> to vector<16x16xi32>
      %840 = arith.sitofp %839 : vector<16x16xi32> to vector<16x16xf32>
      %841 = arith.addf %835, %840 : vector<16x16xf32>
      %842 = vector.extract_strided_slice %811 {offsets = [0, 5], sizes = [1, 1], strides = [1, 1]} : vector<1x16xf32> to vector<1x1xf32>
      %843 = vector.broadcast %842 : vector<1x1xf32> to vector<16x16xf32>
      %844 = arith.cmpf oge, %538, %843 : vector<16x16xf32>
      %845 = arith.extui %844 : vector<16x16xi1> to vector<16x16xi32>
      %846 = arith.sitofp %845 : vector<16x16xi32> to vector<16x16xf32>
      %847 = arith.addf %841, %846 : vector<16x16xf32>
      %848 = vector.extract_strided_slice %811 {offsets = [0, 6], sizes = [1, 1], strides = [1, 1]} : vector<1x16xf32> to vector<1x1xf32>
      %849 = vector.broadcast %848 : vector<1x1xf32> to vector<16x16xf32>
      %850 = arith.cmpf oge, %538, %849 : vector<16x16xf32>
      %851 = arith.extui %850 : vector<16x16xi1> to vector<16x16xi32>
      %852 = arith.sitofp %851 : vector<16x16xi32> to vector<16x16xf32>
      %853 = arith.addf %847, %852 : vector<16x16xf32>
      %854 = vector.extract_strided_slice %811 {offsets = [0, 7], sizes = [1, 1], strides = [1, 1]} : vector<1x16xf32> to vector<1x1xf32>
      %855 = vector.broadcast %854 : vector<1x1xf32> to vector<16x16xf32>
      %856 = arith.cmpf oge, %538, %855 : vector<16x16xf32>
      %857 = arith.extui %856 : vector<16x16xi1> to vector<16x16xi32>
      %858 = arith.sitofp %857 : vector<16x16xi32> to vector<16x16xf32>
      %859 = arith.addf %853, %858 : vector<16x16xf32>
      %860 = vector.extract_strided_slice %811 {offsets = [0, 8], sizes = [1, 1], strides = [1, 1]} : vector<1x16xf32> to vector<1x1xf32>
      %861 = vector.broadcast %860 : vector<1x1xf32> to vector<16x16xf32>
      %862 = arith.cmpf oge, %538, %861 : vector<16x16xf32>
      %863 = arith.extui %862 : vector<16x16xi1> to vector<16x16xi32>
      %864 = arith.sitofp %863 : vector<16x16xi32> to vector<16x16xf32>
      %865 = arith.addf %859, %864 : vector<16x16xf32>
      %866 = vector.extract_strided_slice %811 {offsets = [0, 9], sizes = [1, 1], strides = [1, 1]} : vector<1x16xf32> to vector<1x1xf32>
      %867 = vector.broadcast %866 : vector<1x1xf32> to vector<16x16xf32>
      %868 = arith.cmpf oge, %538, %867 : vector<16x16xf32>
      %869 = arith.extui %868 : vector<16x16xi1> to vector<16x16xi32>
      %870 = arith.sitofp %869 : vector<16x16xi32> to vector<16x16xf32>
      %871 = arith.addf %865, %870 : vector<16x16xf32>
      %872 = vector.extract_strided_slice %811 {offsets = [0, 10], sizes = [1, 1], strides = [1, 1]} : vector<1x16xf32> to vector<1x1xf32>
      %873 = vector.broadcast %872 : vector<1x1xf32> to vector<16x16xf32>
      %874 = arith.cmpf oge, %538, %873 : vector<16x16xf32>
      %875 = arith.extui %874 : vector<16x16xi1> to vector<16x16xi32>
      %876 = arith.sitofp %875 : vector<16x16xi32> to vector<16x16xf32>
      %877 = arith.addf %871, %876 : vector<16x16xf32>
      %878 = vector.extract_strided_slice %811 {offsets = [0, 11], sizes = [1, 1], strides = [1, 1]} : vector<1x16xf32> to vector<1x1xf32>
      %879 = vector.broadcast %878 : vector<1x1xf32> to vector<16x16xf32>
      %880 = arith.cmpf oge, %538, %879 : vector<16x16xf32>
      %881 = arith.extui %880 : vector<16x16xi1> to vector<16x16xi32>
      %882 = arith.sitofp %881 : vector<16x16xi32> to vector<16x16xf32>
      %883 = arith.addf %877, %882 : vector<16x16xf32>
      %884 = vector.extract_strided_slice %811 {offsets = [0, 12], sizes = [1, 1], strides = [1, 1]} : vector<1x16xf32> to vector<1x1xf32>
      %885 = vector.broadcast %884 : vector<1x1xf32> to vector<16x16xf32>
      %886 = arith.cmpf oge, %538, %885 : vector<16x16xf32>
      %887 = arith.extui %886 : vector<16x16xi1> to vector<16x16xi32>
      %888 = arith.sitofp %887 : vector<16x16xi32> to vector<16x16xf32>
      %889 = arith.addf %883, %888 : vector<16x16xf32>
      %890 = vector.extract_strided_slice %811 {offsets = [0, 13], sizes = [1, 1], strides = [1, 1]} : vector<1x16xf32> to vector<1x1xf32>
      %891 = vector.broadcast %890 : vector<1x1xf32> to vector<16x16xf32>
      %892 = arith.cmpf oge, %538, %891 : vector<16x16xf32>
      %893 = arith.extui %892 : vector<16x16xi1> to vector<16x16xi32>
      %894 = arith.sitofp %893 : vector<16x16xi32> to vector<16x16xf32>
      %895 = arith.addf %889, %894 : vector<16x16xf32>
      %896 = vector.extract_strided_slice %811 {offsets = [0, 14], sizes = [1, 1], strides = [1, 1]} : vector<1x16xf32> to vector<1x1xf32>
      %897 = vector.broadcast %896 : vector<1x1xf32> to vector<16x16xf32>
      %898 = arith.cmpf oge, %538, %897 : vector<16x16xf32>
      %899 = arith.extui %898 : vector<16x16xi1> to vector<16x16xi32>
      %900 = arith.sitofp %899 : vector<16x16xi32> to vector<16x16xf32>
      %901 = arith.addf %895, %900 : vector<16x16xf32>
      %902 = vector.extract_strided_slice %811 {offsets = [0, 15], sizes = [1, 1], strides = [1, 1]} : vector<1x16xf32> to vector<1x1xf32>
      %903 = vector.broadcast %902 : vector<1x1xf32> to vector<16x16xf32>
      %904 = arith.cmpf oge, %538, %903 : vector<16x16xf32>
      %905 = arith.extui %904 : vector<16x16xi1> to vector<16x16xi32>
      %906 = arith.sitofp %905 : vector<16x16xi32> to vector<16x16xf32>
      %907 = arith.addf %901, %906 : vector<16x16xf32>
      scf.yield %907 : vector<16x16xf32>
    }
    %c16_i32_237 = arith.constant 16 : i32
    %cst_238 = arith.constant dense<0.000000e+00> : vector<16xf32>
    %543 = vector.multi_reduction <add>, %536, %cst_238 [1] : vector<16x16xf32> to vector<16xf32>
    %544 = vector.shape_cast %543 : vector<16xf32> to vector<16x1xf32>
    %cst_239 = arith.constant dense<0.000000e+00> : vector<1xf32>
    %545 = vector.multi_reduction <add>, %544, %cst_239 [0] : vector<16x1xf32> to vector<1xf32>
    %546 = vector.shape_cast %545 : vector<1xf32> to vector<1x1xf32>
    %cst_240 = arith.constant 1.000000e+00 : f32
    %547 = vector.broadcast %cst_240 : f32 to vector<1x1xf32>
    %548 = arith.subf %546, %547 : vector<1x1xf32>
    %cst_241 = arith.constant 6.000000e+01 : f32
    %549 = vector.broadcast %cst_241 : f32 to vector<1x1xf32>
    %550 = arith.mulf %549, %548 : vector<1x1xf32>
    %cst_242 = arith.constant 1.000000e+02 : f32
    %551 = vector.broadcast %cst_242 : f32 to vector<1x1xf32>
    %552 = arith.divf %550, %551 : vector<1x1xf32>
    %553 = math.floor %552 : vector<1x1xf32>
    %554 = arith.subf %552, %553 : vector<1x1xf32>
    %cst_243 = arith.constant 1.000000e+00 : f32
    %555 = vector.broadcast %cst_243 : f32 to vector<1x1xf32>
    %556 = arith.addf %553, %555 : vector<1x1xf32>
    %cst_244 = arith.constant 1.000000e+00 : f32
    %557 = vector.broadcast %cst_244 : f32 to vector<1x1xf32>
    %558 = arith.subf %546, %557 : vector<1x1xf32>
    %559 = arith.minimumf %556, %558 : vector<1x1xf32>
    %cst_245 = arith.constant 1.000000e+00 : f32
    %560 = vector.broadcast %cst_245 : f32 to vector<1x1xf32>
    %561 = arith.addf %553, %560 : vector<1x1xf32>
    %562 = vector.broadcast %561 : vector<1x1xf32> to vector<16x16xf32>
    %563 = arith.cmpf oge, %542, %562 : vector<16x16xf32>
    %564 = arith.andi %534, %563 : vector<16x16xi1>
    %cst_246 = arith.constant 0x7F800000 : f32
    %565 = vector.broadcast %cst_246 : f32 to vector<16x16xf32>
    %566 = arith.select %564, %538, %565 : vector<16x16xi1>, vector<16x16xf32>
    %cst_247 = arith.constant dense<0x7F800000> : vector<16xf32>
    %567 = vector.multi_reduction <minimumf>, %566, %cst_247 [1] : vector<16x16xf32> to vector<16xf32>
    %568 = vector.shape_cast %567 : vector<16xf32> to vector<16x1xf32>
    %cst_248 = arith.constant dense<0x7F800000> : vector<1xf32>
    %569 = vector.multi_reduction <minimumf>, %568, %cst_248 [0] : vector<16x1xf32> to vector<1xf32>
    %570 = vector.shape_cast %569 : vector<1xf32> to vector<1x1xf32>
    %cst_249 = arith.constant 1.000000e+00 : f32
    %571 = vector.broadcast %cst_249 : f32 to vector<1x1xf32>
    %572 = arith.addf %559, %571 : vector<1x1xf32>
    %573 = vector.broadcast %572 : vector<1x1xf32> to vector<16x16xf32>
    %574 = arith.cmpf oge, %542, %573 : vector<16x16xf32>
    %575 = arith.andi %534, %574 : vector<16x16xi1>
    %cst_250 = arith.constant 0x7F800000 : f32
    %576 = vector.broadcast %cst_250 : f32 to vector<16x16xf32>
    %577 = arith.select %575, %538, %576 : vector<16x16xi1>, vector<16x16xf32>
    %cst_251 = arith.constant dense<0x7F800000> : vector<16xf32>
    %578 = vector.multi_reduction <minimumf>, %577, %cst_251 [1] : vector<16x16xf32> to vector<16xf32>
    %579 = vector.shape_cast %578 : vector<16xf32> to vector<16x1xf32>
    %cst_252 = arith.constant dense<0x7F800000> : vector<1xf32>
    %580 = vector.multi_reduction <minimumf>, %579, %cst_252 [0] : vector<16x1xf32> to vector<1xf32>
    %581 = vector.shape_cast %580 : vector<1xf32> to vector<1x1xf32>
    %cst_253 = arith.constant 1.000000e+00 : f32
    %582 = vector.broadcast %cst_253 : f32 to vector<1x1xf32>
    %583 = arith.subf %582, %554 : vector<1x1xf32>
    %584 = arith.mulf %583, %570 : vector<1x1xf32>
    %585 = arith.mulf %554, %581 : vector<1x1xf32>
    %586 = arith.addf %584, %585 : vector<1x1xf32>
    %587 = vector.broadcast %586 : vector<1x1xf32> to vector<16x16xf32>
    %588 = arith.cmpf oge, %519, %587 : vector<16x16xf32>
    %589 = arith.extui %588 : vector<16x16xi1> to vector<16x16xi32>
    %590 = arith.sitofp %589 : vector<16x16xi32> to vector<16x16xf32>
    %591 = arith.mulf %519, %590 : vector<16x16xf32>
    %cst_254 = arith.constant 0.000000e+00 : f32
    %592 = vector.broadcast %cst_254 : f32 to vector<16x16xf32>
    %593 = arith.cmpf ogt, %591, %592 : vector<16x16xf32>
    %594 = arith.extui %593 : vector<16x16xi1> to vector<16x16xi32>
    %595 = arith.sitofp %594 : vector<16x16xi32> to vector<16x16xf32>
    %cst_255 = arith.constant dense<0.000000e+00> : vector<16xf32>
    %596 = vector.multi_reduction <add>, %595, %cst_255 [1] : vector<16x16xf32> to vector<16xf32>
    %597 = vector.shape_cast %596 : vector<16xf32> to vector<16x1xf32>
    %cst_256 = arith.constant 1.000000e+00 : f32
    %598 = vector.broadcast %cst_256 : f32 to vector<16x1xf32>
    %599 = arith.maximumf %597, %598 : vector<16x1xf32>
    %600 = tpu.reciprocal %599 : vector<16x1xf32> -> vector<16x1xf32>
    %601 = vector.broadcast %600 : vector<16x1xf32> to vector<16x16xf32>
    %602 = arith.mulf %591, %601 : vector<16x16xf32>
    %cst_257 = arith.constant 0.000000e+00 : f32
    %603 = vector.broadcast %cst_257 : f32 to vector<16x16xf32>
    %604 = arith.cmpf ogt, %591, %603 : vector<16x16xf32>
    %605 = arith.extui %604 : vector<16x16xi1> to vector<16x16xi32>
    %606 = arith.sitofp %605 : vector<16x16xi32> to vector<16x16xf32>
    %cst_258 = arith.constant dense<0.000000e+00> : vector<16x16xf32>
    %607 = tpu.matmul %606, %606, %cst_258 {dimension_numbers = #tpu.dot_dimension_numbers<[1], [0], [0], [1], [0, 0, 1, 1], [], []>} : vector<16x16xf32>, vector<16x16xf32>, vector<16x16xf32> -> vector<16x16xf32>
    %cst_259 = arith.constant 0.000000e+00 : f32
    %608 = vector.broadcast %cst_259 : f32 to vector<16x16xf32>
    %609 = arith.cmpf ogt, %607, %608 : vector<16x16xf32>
    %610 = arith.extui %609 : vector<16x16xi1> to vector<16x16xi32>
    %611 = arith.sitofp %610 : vector<16x16xi32> to vector<16x16xf32>
    %cst_260 = arith.constant dense<0.000000e+00> : vector<16x16xf32>
    %612 = tpu.matmul %611, %611, %cst_260 {dimension_numbers = #tpu.dot_dimension_numbers<[1], [0], [0], [1], [0, 0, 1, 1], [], []>} : vector<16x16xf32>, vector<16x16xf32>, vector<16x16xf32> -> vector<16x16xf32>
    %cst_261 = arith.constant 0.000000e+00 : f32
    %613 = vector.broadcast %cst_261 : f32 to vector<16x16xf32>
    %614 = arith.cmpf ogt, %612, %613 : vector<16x16xf32>
    %615 = arith.extui %614 : vector<16x16xi1> to vector<16x16xi32>
    %616 = arith.sitofp %615 : vector<16x16xi32> to vector<16x16xf32>
    %cst_262 = arith.constant dense<0.000000e+00> : vector<16x16xf32>
    %617 = tpu.matmul %616, %616, %cst_262 {dimension_numbers = #tpu.dot_dimension_numbers<[1], [0], [0], [1], [0, 0, 1, 1], [], []>} : vector<16x16xf32>, vector<16x16xf32>, vector<16x16xf32> -> vector<16x16xf32>
    %cst_263 = arith.constant 0.000000e+00 : f32
    %618 = vector.broadcast %cst_263 : f32 to vector<16x16xf32>
    %619 = arith.cmpf ogt, %617, %618 : vector<16x16xf32>
    %620 = arith.extui %619 : vector<16x16xi1> to vector<16x16xi32>
    %621 = arith.sitofp %620 : vector<16x16xi32> to vector<16x16xf32>
    %cst_264 = arith.constant dense<0.000000e+00> : vector<16x16xf32>
    %622 = tpu.matmul %621, %621, %cst_264 {dimension_numbers = #tpu.dot_dimension_numbers<[1], [0], [0], [1], [0, 0, 1, 1], [], []>} : vector<16x16xf32>, vector<16x16xf32>, vector<16x16xf32> -> vector<16x16xf32>
    %cst_265 = arith.constant 0.000000e+00 : f32
    %623 = vector.broadcast %cst_265 : f32 to vector<16x16xf32>
    %624 = arith.cmpf ogt, %622, %623 : vector<16x16xf32>
    %625 = arith.extui %624 : vector<16x16xi1> to vector<16x16xi32>
    %626 = arith.sitofp %625 : vector<16x16xi32> to vector<16x16xf32>
    %cst_266 = arith.constant 0.000000e+00 : f32
    %627 = vector.broadcast %cst_266 : f32 to vector<16x16xf32>
    %628 = arith.cmpf ogt, %626, %627 : vector<16x16xf32>
    %cst_267 = arith.constant 1.000000e+09 : f32
    %629 = vector.broadcast %cst_267 : f32 to vector<16x16xf32>
    %630 = arith.select %628, %9, %629 : vector<16x16xi1>, vector<16x16xf32>
    %cst_268 = arith.constant dense<0x7F800000> : vector<16xf32>
    %631 = vector.multi_reduction <minimumf>, %630, %cst_268 [1] : vector<16x16xf32> to vector<16xf32>
    %632 = vector.shape_cast %631 : vector<16xf32> to vector<16x1xf32>
    %cst_269 = arith.constant 0.000000e+00 : f32
    %633 = vector.broadcast %cst_269 : f32 to vector<16x16xf32>
    %634 = arith.cmpf ogt, %626, %633 : vector<16x16xf32>
    %cst_270 = arith.constant 1.000000e+09 : f32
    %635 = vector.broadcast %cst_270 : f32 to vector<16x16xf32>
    %636 = arith.select %634, %8, %635 : vector<16x16xi1>, vector<16x16xf32>
    %cst_271 = arith.constant dense<0x7F800000> : vector<16xf32>
    %637 = vector.multi_reduction <minimumf>, %636, %cst_271 [0] : vector<16x16xf32> to vector<16xf32>
    %638 = vector.shape_cast %637 : vector<16xf32> to vector<1x16xf32>
    %639 = vector.broadcast %638 : vector<1x16xf32> to vector<16x16xf32>
    %640 = arith.cmpf oeq, %8, %639 : vector<16x16xf32>
    %641 = arith.extui %640 : vector<16x16xi1> to vector<16x16xi32>
    %642 = arith.sitofp %641 : vector<16x16xi32> to vector<16x16xf32>
    %643 = vector.broadcast %632 : vector<16x1xf32> to vector<16x16xf32>
    %644 = arith.cmpf oeq, %9, %643 : vector<16x16xf32>
    %645 = arith.extui %644 : vector<16x16xi1> to vector<16x16xi32>
    %646 = arith.sitofp %645 : vector<16x16xi32> to vector<16x16xf32>
    %cst_272 = arith.constant dense<0.000000e+00> : vector<16x128xf32>
    %647 = tpu.matmul %642, %15, %cst_272 {dimension_numbers = #tpu.dot_dimension_numbers<[1], [0], [0], [1], [0, 0, 1, 1], [], []>} : vector<16x16xf32>, vector<16x128xf32>, vector<16x128xf32> -> vector<16x128xf32>
    %c2_273 = arith.constant 2 : index
    %c0_274 = arith.constant 0 : index
    %c0_275 = arith.constant 0 : index
    %648 = vector.load %arg18[%c2_273, %c0_274, %c0_275] : memref<3x16x128xf32, #tpu.memory_space<vmem>>, vector<1x16x128xf32>
    %649 = vector.shape_cast %648 : vector<1x16x128xf32> to vector<16x128xf32>
    %650 = vector.shape_cast %647 : vector<16x128xf32> to vector<1x16x128xf32>
    tpu.vector_store %arg18[%c2_273, %c0_274, %c0_275], %650 {strides = array<i32>} : memref<3x16x128xf32, #tpu.memory_space<vmem>>, vector<1x16x128xf32>,
    %cst_276 = arith.constant dense<0.000000e+00> : vector<16x128xf32>
    %651 = tpu.matmul %602, %478, %cst_276 {dimension_numbers = #tpu.dot_dimension_numbers<[1], [0], [0], [1], [0, 0, 1, 1], [], []>} : vector<16x16xf32>, vector<16x128xf32>, vector<16x128xf32> -> vector<16x128xf32>
    %cst_277 = arith.constant dense<0.000000e+00> : vector<16x128xf32>
    %652 = tpu.matmul %642, %651, %cst_277 {dimension_numbers = #tpu.dot_dimension_numbers<[1], [0], [0], [1], [0, 0, 1, 1], [], []>} : vector<16x16xf32>, vector<16x128xf32>, vector<16x128xf32> -> vector<16x128xf32>
    %653 = arith.mulf %652, %652 : vector<16x128xf32>
    %cst_278 = arith.constant dense<0.000000e+00> : vector<16xf32>
    %654 = vector.multi_reduction <add>, %653, %cst_278 [1] : vector<16x128xf32> to vector<16xf32>
    %655 = vector.shape_cast %654 : vector<16xf32> to vector<16x1xf32>
    %cst_279 = arith.constant 1.000000e-24 : f32
    %656 = vector.broadcast %cst_279 : f32 to vector<16x1xf32>
    %657 = arith.maximumf %655, %656 : vector<16x1xf32>
    %658 = math.rsqrt %657 : vector<16x1xf32>
    %659 = vector.broadcast %658 : vector<16x1xf32> to vector<16x128xf32>
    %660 = arith.mulf %652, %659 : vector<16x128xf32>
    %cst_280 = arith.constant dense<0.000000e+00> : vector<16x16xf32>
    %661 = tpu.matmul %642, %444, %cst_280 {dimension_numbers = #tpu.dot_dimension_numbers<[1], [0], [0], [1], [0, 0, 1, 1], [], []>} : vector<16x16xf32>, vector<16x16xf32>, vector<16x16xf32> -> vector<16x16xf32>
    %cst_281 = arith.constant dense<0.000000e+00> : vector<16x16xf32>
    %662 = tpu.matmul %661, %646, %cst_281 {dimension_numbers = #tpu.dot_dimension_numbers<[1], [0], [0], [1], [0, 0, 1, 1], [], []>} : vector<16x16xf32>, vector<16x16xf32>, vector<16x16xf32> -> vector<16x16xf32>
    %663 = tpu.transpose %662, [1, 0] : vector<16x16xf32> -> vector<16x16xf32>
    %664 = arith.addf %662, %663 : vector<16x16xf32>
    %cst_282 = arith.constant 5.000000e-01 : f32
    %665 = vector.broadcast %cst_282 : f32 to vector<16x16xf32>
    %666 = arith.mulf %665, %664 : vector<16x16xf32>
    %667 = arith.addf %666, %7 : vector<16x16xf32>
    %cst_283 = arith.constant dense<0.000000e+00> : vector<16xf32>
    %668 = vector.multi_reduction <add>, %667, %cst_283 [0] : vector<16x16xf32> to vector<16xf32>
    %669 = vector.shape_cast %668 : vector<16xf32> to vector<1x16xf32>
    %cst_284 = arith.constant 9.99999996E-13 : f32
    %670 = vector.broadcast %cst_284 : f32 to vector<1x16xf32>
    %671 = arith.maximumf %669, %670 : vector<1x16xf32>
    %672 = math.rsqrt %671 : vector<1x16xf32>
    %673 = vector.broadcast %672 : vector<1x16xf32> to vector<16x16xf32>
    %674 = arith.mulf %667, %673 : vector<16x16xf32>
    %675 = tpu.transpose %672, [1, 0] : vector<1x16xf32> -> vector<16x1xf32>
    %676 = vector.broadcast %675 : vector<16x1xf32> to vector<16x16xf32>
    %677 = arith.mulf %674, %676 : vector<16x16xf32>
    %c0_285 = arith.constant 0 : index
    %c0_286 = arith.constant 0 : index
    %678 = vector.load %arg10[%c0_285, %c0_286] : memref<128x128xf32, #tpu.memory_space<vmem>>, vector<128x128xf32>
    %cst_287 = arith.constant dense<0.000000e+00> : vector<16x128xf32>
    %679 = tpu.matmul %660, %678, %cst_287 {dimension_numbers = #tpu.dot_dimension_numbers<[1], [0], [0], [1], [0, 0, 1, 1], [], []>} : vector<16x128xf32>, vector<128x128xf32>, vector<16x128xf32> -> vector<16x128xf32>
    %cst_288 = arith.constant dense<0.000000e+00> : vector<16x128xf32>
    %680 = tpu.matmul %677, %679, %cst_288 {dimension_numbers = #tpu.dot_dimension_numbers<[1], [0], [0], [1], [0, 0, 1, 1], [], []>} : vector<16x16xf32>, vector<16x128xf32>, vector<16x128xf32> -> vector<16x128xf32>
    %c0_289 = arith.constant 0 : index
    %c0_290 = arith.constant 0 : index
    %681 = vector.load %arg11[%c0_289, %c0_290] : memref<1x128xf32, #tpu.memory_space<vmem>>, vector<1x128xf32>
    %682 = vector.broadcast %681 : vector<1x128xf32> to vector<16x128xf32>
    %683 = arith.addf %680, %682 : vector<16x128xf32>
    %cst_291 = arith.constant 0.000000e+00 : f32
    %684 = vector.broadcast %cst_291 : f32 to vector<16x128xf32>
    %685 = arith.cmpf ogt, %683, %684 : vector<16x128xf32>
    %cst_292 = arith.constant 0.000000e+00 : f32
    %686 = vector.broadcast %cst_292 : f32 to vector<16x128xf32>
    %687 = arith.minimumf %683, %686 : vector<16x128xf32>
    %688 = math.exp %687 : vector<16x128xf32>
    %cst_293 = arith.constant 1.000000e+00 : f32
    %689 = vector.broadcast %cst_293 : f32 to vector<16x128xf32>
    %690 = arith.subf %688, %689 : vector<16x128xf32>
    %691 = arith.select %685, %683, %690 : vector<16x128xi1>, vector<16x128xf32>
    %692 = arith.mulf %691, %691 : vector<16x128xf32>
    %cst_294 = arith.constant dense<0.000000e+00> : vector<16xf32>
    %693 = vector.multi_reduction <add>, %692, %cst_294 [1] : vector<16x128xf32> to vector<16xf32>
    %694 = vector.shape_cast %693 : vector<16xf32> to vector<16x1xf32>
    %cst_295 = arith.constant 1.000000e-24 : f32
    %695 = vector.broadcast %cst_295 : f32 to vector<16x1xf32>
    %696 = arith.maximumf %694, %695 : vector<16x1xf32>
    %697 = math.rsqrt %696 : vector<16x1xf32>
    %698 = vector.broadcast %697 : vector<16x1xf32> to vector<16x128xf32>
    %699 = arith.mulf %691, %698 : vector<16x128xf32>
    %cst_296 = arith.constant dense<0.000000e+00> : vector<16x128xf32>
    %700 = tpu.matmul %646, %699, %cst_296 {dimension_numbers = #tpu.dot_dimension_numbers<[1], [0], [0], [1], [0, 0, 1, 1], [], []>} : vector<16x16xf32>, vector<16x128xf32>, vector<16x128xf32> -> vector<16x128xf32>
    %c0_297 = arith.constant 0 : index
    %c0_298 = arith.constant 0 : index
    %c0_299 = arith.constant 0 : index
    %701 = vector.load %arg12[%c0_297, %c0_298, %c0_299] : memref<3x128x128xf32, #tpu.memory_space<vmem>>, vector<1x128x128xf32>
    %702 = vector.shape_cast %701 : vector<1x128x128xf32> to vector<128x128xf32>
    %cst_300 = arith.constant dense<0.000000e+00> : vector<16x128xf32>
    %703 = tpu.matmul %700, %702, %cst_300 {dimension_numbers = #tpu.dot_dimension_numbers<[1], [0], [0], [1], [0, 0, 1, 1], [], []>} : vector<16x128xf32>, vector<128x128xf32>, vector<16x128xf32> -> vector<16x128xf32>
    %c0_301 = arith.constant 0 : index
    %c0_302 = arith.constant 0 : index
    %c0_303 = arith.constant 0 : index
    %704 = vector.load %arg13[%c0_301, %c0_302, %c0_303] : memref<3x128x128xf32, #tpu.memory_space<vmem>>, vector<1x128x128xf32>
    %705 = vector.shape_cast %704 : vector<1x128x128xf32> to vector<128x128xf32>
    %cst_304 = arith.constant dense<0.000000e+00> : vector<16x128xf32>
    %706 = tpu.matmul %478, %705, %cst_304 {dimension_numbers = #tpu.dot_dimension_numbers<[1], [0], [0], [1], [0, 0, 1, 1], [], []>} : vector<16x128xf32>, vector<128x128xf32>, vector<16x128xf32> -> vector<16x128xf32>
    %707 = arith.addf %703, %706 : vector<16x128xf32>
    %cst_305 = arith.constant dense<0.000000e+00> : vector<16x128xf32>
    %708 = tpu.matmul %455, %707, %cst_305 {dimension_numbers = #tpu.dot_dimension_numbers<[1], [0], [0], [1], [0, 0, 1, 1], [], []>} : vector<16x16xf32>, vector<16x128xf32>, vector<16x128xf32> -> vector<16x128xf32>
    %c0_306 = arith.constant 0 : index
    %c0_307 = arith.constant 0 : index
    %c0_308 = arith.constant 0 : index
    %709 = vector.load %arg14[%c0_306, %c0_307, %c0_308] : memref<3x1x128xf32, #tpu.memory_space<vmem>>, vector<1x1x128xf32>
    %710 = vector.shape_cast %709 : vector<1x1x128xf32> to vector<1x128xf32>
    %711 = vector.broadcast %710 : vector<1x128xf32> to vector<16x128xf32>
    %712 = arith.addf %708, %711 : vector<16x128xf32>
    %cst_309 = arith.constant 0.000000e+00 : f32
    %713 = vector.broadcast %cst_309 : f32 to vector<16x128xf32>
    %714 = arith.cmpf ogt, %712, %713 : vector<16x128xf32>
    %cst_310 = arith.constant 0.000000e+00 : f32
    %715 = vector.broadcast %cst_310 : f32 to vector<16x128xf32>
    %716 = arith.minimumf %712, %715 : vector<16x128xf32>
    %717 = math.exp %716 : vector<16x128xf32>
    %cst_311 = arith.constant 1.000000e+00 : f32
    %718 = vector.broadcast %cst_311 : f32 to vector<16x128xf32>
    %719 = arith.subf %717, %718 : vector<16x128xf32>
    %720 = arith.select %714, %712, %719 : vector<16x128xi1>, vector<16x128xf32>
    %721 = arith.mulf %720, %720 : vector<16x128xf32>
    %cst_312 = arith.constant dense<0.000000e+00> : vector<16xf32>
    %722 = vector.multi_reduction <add>, %721, %cst_312 [1] : vector<16x128xf32> to vector<16xf32>
    %723 = vector.shape_cast %722 : vector<16xf32> to vector<16x1xf32>
    %cst_313 = arith.constant 1.000000e-24 : f32
    %724 = vector.broadcast %cst_313 : f32 to vector<16x1xf32>
    %725 = arith.maximumf %723, %724 : vector<16x1xf32>
    %726 = math.rsqrt %725 : vector<16x1xf32>
    %727 = vector.broadcast %726 : vector<16x1xf32> to vector<16x128xf32>
    %728 = arith.mulf %720, %727 : vector<16x128xf32>
    %cst_314 = arith.constant dense<0.000000e+00> : vector<16x128xf32>
    %729 = tpu.matmul %424, %728, %cst_314 {dimension_numbers = #tpu.dot_dimension_numbers<[1], [0], [0], [1], [0, 0, 1, 1], [], []>} : vector<16x16xf32>, vector<16x128xf32>, vector<16x128xf32> -> vector<16x128xf32>
    %c1_315 = arith.constant 1 : index
    %c0_316 = arith.constant 0 : index
    %c0_317 = arith.constant 0 : index
    %730 = vector.load %arg12[%c1_315, %c0_316, %c0_317] : memref<3x128x128xf32, #tpu.memory_space<vmem>>, vector<1x128x128xf32>
    %731 = vector.shape_cast %730 : vector<1x128x128xf32> to vector<128x128xf32>
    %cst_318 = arith.constant dense<0.000000e+00> : vector<16x128xf32>
    %732 = tpu.matmul %729, %731, %cst_318 {dimension_numbers = #tpu.dot_dimension_numbers<[1], [0], [0], [1], [0, 0, 1, 1], [], []>} : vector<16x128xf32>, vector<128x128xf32>, vector<16x128xf32> -> vector<16x128xf32>
    %c1_319 = arith.constant 1 : index
    %c0_320 = arith.constant 0 : index
    %c0_321 = arith.constant 0 : index
    %733 = vector.load %arg13[%c1_319, %c0_320, %c0_321] : memref<3x128x128xf32, #tpu.memory_space<vmem>>, vector<1x128x128xf32>
    %734 = vector.shape_cast %733 : vector<1x128x128xf32> to vector<128x128xf32>
    %cst_322 = arith.constant dense<0.000000e+00> : vector<16x128xf32>
    %735 = tpu.matmul %256, %734, %cst_322 {dimension_numbers = #tpu.dot_dimension_numbers<[1], [0], [0], [1], [0, 0, 1, 1], [], []>} : vector<16x128xf32>, vector<128x128xf32>, vector<16x128xf32> -> vector<16x128xf32>
    %736 = arith.addf %732, %735 : vector<16x128xf32>
    %cst_323 = arith.constant dense<0.000000e+00> : vector<16x128xf32>
    %737 = tpu.matmul %233, %736, %cst_323 {dimension_numbers = #tpu.dot_dimension_numbers<[1], [0], [0], [1], [0, 0, 1, 1], [], []>} : vector<16x16xf32>, vector<16x128xf32>, vector<16x128xf32> -> vector<16x128xf32>
    %c1_324 = arith.constant 1 : index
    %c0_325 = arith.constant 0 : index
    %c0_326 = arith.constant 0 : index
    %738 = vector.load %arg14[%c1_324, %c0_325, %c0_326] : memref<3x1x128xf32, #tpu.memory_space<vmem>>, vector<1x1x128xf32>
    %739 = vector.shape_cast %738 : vector<1x1x128xf32> to vector<1x128xf32>
    %740 = vector.broadcast %739 : vector<1x128xf32> to vector<16x128xf32>
    %741 = arith.addf %737, %740 : vector<16x128xf32>
    %cst_327 = arith.constant 0.000000e+00 : f32
    %742 = vector.broadcast %cst_327 : f32 to vector<16x128xf32>
    %743 = arith.cmpf ogt, %741, %742 : vector<16x128xf32>
    %cst_328 = arith.constant 0.000000e+00 : f32
    %744 = vector.broadcast %cst_328 : f32 to vector<16x128xf32>
    %745 = arith.minimumf %741, %744 : vector<16x128xf32>
    %746 = math.exp %745 : vector<16x128xf32>
    %cst_329 = arith.constant 1.000000e+00 : f32
    %747 = vector.broadcast %cst_329 : f32 to vector<16x128xf32>
    %748 = arith.subf %746, %747 : vector<16x128xf32>
    %749 = arith.select %743, %741, %748 : vector<16x128xi1>, vector<16x128xf32>
    %750 = arith.mulf %749, %749 : vector<16x128xf32>
    %cst_330 = arith.constant dense<0.000000e+00> : vector<16xf32>
    %751 = vector.multi_reduction <add>, %750, %cst_330 [1] : vector<16x128xf32> to vector<16xf32>
    %752 = vector.shape_cast %751 : vector<16xf32> to vector<16x1xf32>
    %cst_331 = arith.constant 1.000000e-24 : f32
    %753 = vector.broadcast %cst_331 : f32 to vector<16x1xf32>
    %754 = arith.maximumf %752, %753 : vector<16x1xf32>
    %755 = math.rsqrt %754 : vector<16x1xf32>
    %756 = vector.broadcast %755 : vector<16x1xf32> to vector<16x128xf32>
    %757 = arith.mulf %749, %756 : vector<16x128xf32>
    %cst_332 = arith.constant dense<0.000000e+00> : vector<16x128xf32>
    %758 = tpu.matmul %202, %757, %cst_332 {dimension_numbers = #tpu.dot_dimension_numbers<[1], [0], [0], [1], [0, 0, 1, 1], [], []>} : vector<16x16xf32>, vector<16x128xf32>, vector<16x128xf32> -> vector<16x128xf32>
    %c2_333 = arith.constant 2 : index
    %c0_334 = arith.constant 0 : index
    %c0_335 = arith.constant 0 : index
    %759 = vector.load %arg12[%c2_333, %c0_334, %c0_335] : memref<3x128x128xf32, #tpu.memory_space<vmem>>, vector<1x128x128xf32>
    %760 = vector.shape_cast %759 : vector<1x128x128xf32> to vector<128x128xf32>
    %cst_336 = arith.constant dense<0.000000e+00> : vector<16x128xf32>
    %761 = tpu.matmul %758, %760, %cst_336 {dimension_numbers = #tpu.dot_dimension_numbers<[1], [0], [0], [1], [0, 0, 1, 1], [], []>} : vector<16x128xf32>, vector<128x128xf32>, vector<16x128xf32> -> vector<16x128xf32>
    %c2_337 = arith.constant 2 : index
    %c0_338 = arith.constant 0 : index
    %c0_339 = arith.constant 0 : index
    %762 = vector.load %arg13[%c2_337, %c0_338, %c0_339] : memref<3x128x128xf32, #tpu.memory_space<vmem>>, vector<1x128x128xf32>
    %763 = vector.shape_cast %762 : vector<1x128x128xf32> to vector<128x128xf32>
    %cst_340 = arith.constant dense<0.000000e+00> : vector<16x128xf32>
    %764 = tpu.matmul %34, %763, %cst_340 {dimension_numbers = #tpu.dot_dimension_numbers<[1], [0], [0], [1], [0, 0, 1, 1], [], []>} : vector<16x128xf32>, vector<128x128xf32>, vector<16x128xf32> -> vector<16x128xf32>
    %765 = arith.addf %761, %764 : vector<16x128xf32>
    %cst_341 = arith.constant dense<0.000000e+00> : vector<16x128xf32>
    %766 = tpu.matmul %2, %765, %cst_341 {dimension_numbers = #tpu.dot_dimension_numbers<[1], [0], [0], [1], [0, 0, 1, 1], [], []>} : vector<16x16xf32>, vector<16x128xf32>, vector<16x128xf32> -> vector<16x128xf32>
    %c2_342 = arith.constant 2 : index
    %c0_343 = arith.constant 0 : index
    %c0_344 = arith.constant 0 : index
    %767 = vector.load %arg14[%c2_342, %c0_343, %c0_344] : memref<3x1x128xf32, #tpu.memory_space<vmem>>, vector<1x1x128xf32>
    %768 = vector.shape_cast %767 : vector<1x1x128xf32> to vector<1x128xf32>
    %769 = vector.broadcast %768 : vector<1x128xf32> to vector<16x128xf32>
    %770 = arith.addf %766, %769 : vector<16x128xf32>
    %cst_345 = arith.constant 0.000000e+00 : f32
    %771 = vector.broadcast %cst_345 : f32 to vector<16x128xf32>
    %772 = arith.cmpf ogt, %770, %771 : vector<16x128xf32>
    %cst_346 = arith.constant 0.000000e+00 : f32
    %773 = vector.broadcast %cst_346 : f32 to vector<16x128xf32>
    %774 = arith.minimumf %770, %773 : vector<16x128xf32>
    %775 = math.exp %774 : vector<16x128xf32>
    %cst_347 = arith.constant 1.000000e+00 : f32
    %776 = vector.broadcast %cst_347 : f32 to vector<16x128xf32>
    %777 = arith.subf %775, %776 : vector<16x128xf32>
    %778 = arith.select %772, %770, %777 : vector<16x128xi1>, vector<16x128xf32>
    %779 = arith.mulf %778, %778 : vector<16x128xf32>
    %cst_348 = arith.constant dense<0.000000e+00> : vector<16xf32>
    %780 = vector.multi_reduction <add>, %779, %cst_348 [1] : vector<16x128xf32> to vector<16xf32>
    %781 = vector.shape_cast %780 : vector<16xf32> to vector<16x1xf32>
    %cst_349 = arith.constant 1.000000e-24 : f32
    %782 = vector.broadcast %cst_349 : f32 to vector<16x1xf32>
    %783 = arith.maximumf %781, %782 : vector<16x1xf32>
    %784 = math.rsqrt %783 : vector<16x1xf32>
    %785 = vector.broadcast %784 : vector<16x1xf32> to vector<16x128xf32>
    %786 = arith.mulf %778, %785 : vector<16x128xf32>
    %c0_350 = arith.constant 0 : index
    %c0_351 = arith.constant 0 : index
    %787 = vector.load %arg15[%c0_350, %c0_351] : memref<128x128xf32, #tpu.memory_space<vmem>>, vector<128x128xf32>
    %cst_352 = arith.constant dense<0.000000e+00> : vector<16x128xf32>
    %788 = tpu.matmul %786, %787, %cst_352 {dimension_numbers = #tpu.dot_dimension_numbers<[1], [0], [0], [1], [0, 0, 1, 1], [], []>} : vector<16x128xf32>, vector<128x128xf32>, vector<16x128xf32> -> vector<16x128xf32>
    %cst_353 = arith.constant dense<0.000000e+00> : vector<16x128xf32>
    %789 = tpu.matmul %2, %788, %cst_353 {dimension_numbers = #tpu.dot_dimension_numbers<[1], [0], [0], [1], [0, 0, 1, 1], [], []>} : vector<16x16xf32>, vector<16x128xf32>, vector<16x128xf32> -> vector<16x128xf32>
    %c0_354 = arith.constant 0 : index
    %c0_355 = arith.constant 0 : index
    %790 = vector.load %arg16[%c0_354, %c0_355] : memref<1x128xf32, #tpu.memory_space<vmem>>, vector<1x128xf32>
    %791 = vector.broadcast %790 : vector<1x128xf32> to vector<16x128xf32>
    %792 = arith.addf %789, %791 : vector<16x128xf32>
    %793 = tpu.iota {dimensions = array<i32: 1>} : vector<16x128xi32>
    %c4_i32 = arith.constant 4 : i32
    %794 = vector.broadcast %c4_i32 : i32 to vector<16x128xi32>
    %795 = arith.cmpi slt, %793, %794 : vector<16x128xi32>
    %cst_356 = arith.constant -1.000000e+30 : f32
    %796 = vector.broadcast %cst_356 : f32 to vector<16x128xf32>
    %797 = arith.select %795, %792, %796 : vector<16x128xi1>, vector<16x128xf32>
    %cst_357 = arith.constant dense<0xFF800000> : vector<16xf32>
    %798 = vector.multi_reduction <maximumf>, %797, %cst_357 [1] : vector<16x128xf32> to vector<16xf32>
    %799 = vector.shape_cast %798 : vector<16xf32> to vector<16x1xf32>
    %800 = vector.broadcast %799 : vector<16x1xf32> to vector<16x128xf32>
    %801 = arith.subf %797, %800 : vector<16x128xf32>
    %802 = math.exp %801 : vector<16x128xf32>
    %cst_358 = arith.constant dense<0.000000e+00> : vector<16xf32>
    %803 = vector.multi_reduction <add>, %802, %cst_358 [1] : vector<16x128xf32> to vector<16xf32>
    %804 = vector.shape_cast %803 : vector<16xf32> to vector<16x1xf32>
    %805 = math.log %804 : vector<16x1xf32>
    %806 = arith.addf %799, %805 : vector<16x1xf32>
    %807 = vector.broadcast %806 : vector<16x1xf32> to vector<16x128xf32>
    %808 = arith.subf %797, %807 : vector<16x128xf32>
    %c0_359 = arith.constant 0 : index
    %c0_360 = arith.constant 0 : index
    %809 = vector.load %arg17[%c0_359, %c0_360] : memref<16x128xf32, #tpu.memory_space<vmem>>, vector<16x128xf32>
    tpu.vector_store %arg17[%c0_359, %c0_360], %808 {strides = array<i32>} : memref<16x128xf32, #tpu.memory_space<vmem>>, vector<16x128xf32>,
    return
  }
  func.func @transform_0(%arg0: i32) -> (i32, i32) {
    %c0_i32 = arith.constant 0 : i32
    %c0_i32_0 = arith.constant 0 : i32
    %c0_i32_1 = arith.constant 0 : i32
    return %c0_i32, %c0_i32_0 : i32, i32
  }
  func.func @transform_1(%arg0: i32) -> (i32, i32) {
    %c0_i32 = arith.constant 0 : i32
    %c0_i32_0 = arith.constant 0 : i32
    %c0_i32_1 = arith.constant 0 : i32
    return %c0_i32, %c0_i32_0 : i32, i32
  }
  func.func @transform_2(%arg0: i32) -> (i32, i32) {
    %c0_i32 = arith.constant 0 : i32
    %c0_i32_0 = arith.constant 0 : i32
    %c0_i32_1 = arith.constant 0 : i32
    return %c0_i32, %c0_i32_0 : i32, i32
  }
  func.func @transform_3(%arg0: i32) -> (i32, i32, i32) {
    %c0_i32 = arith.constant 0 : i32
    %c0_i32_0 = arith.constant 0 : i32
    %c0_i32_1 = arith.constant 0 : i32
    %c0_i32_2 = arith.constant 0 : i32
    return %c0_i32, %c0_i32_0, %c0_i32_1 : i32, i32, i32
  }
  func.func @transform_4(%arg0: i32) -> (i32, i32, i32) {
    %c0_i32 = arith.constant 0 : i32
    %c0_i32_0 = arith.constant 0 : i32
    %c0_i32_1 = arith.constant 0 : i32
    %c0_i32_2 = arith.constant 0 : i32
    return %c0_i32, %c0_i32_0, %c0_i32_1 : i32, i32, i32
  }
  func.func @transform_5(%arg0: i32) -> (i32, i32, i32) {
    %c0_i32 = arith.constant 0 : i32
    %c0_i32_0 = arith.constant 0 : i32
    %c0_i32_1 = arith.constant 0 : i32
    %c0_i32_2 = arith.constant 0 : i32
    return %c0_i32, %c0_i32_0, %c0_i32_1 : i32, i32, i32
  }
  func.func @transform_6(%arg0: i32) -> (i32, i32, i32) {
    %c0_i32 = arith.constant 0 : i32
    %c0_i32_0 = arith.constant 0 : i32
    %c0_i32_1 = arith.constant 0 : i32
    %c0_i32_2 = arith.constant 0 : i32
    return %c0_i32, %c0_i32_0, %c0_i32_1 : i32, i32, i32
  }
  func.func @transform_7(%arg0: i32) -> (i32, i32, i32) {
    %c0_i32 = arith.constant 0 : i32
    %c0_i32_0 = arith.constant 0 : i32
    %c0_i32_1 = arith.constant 0 : i32
    %c0_i32_2 = arith.constant 0 : i32
    return %c0_i32, %c0_i32_0, %c0_i32_1 : i32, i32, i32
  }
  func.func @transform_8(%arg0: i32) -> (i32, i32, i32) {
    %c0_i32 = arith.constant 0 : i32
    %c0_i32_0 = arith.constant 0 : i32
    %c0_i32_1 = arith.constant 0 : i32
    %c0_i32_2 = arith.constant 0 : i32
    return %c0_i32, %c0_i32_0, %c0_i32_1 : i32, i32, i32
  }
  func.func @transform_9(%arg0: i32) -> (i32, i32) {
    %c0_i32 = arith.constant 0 : i32
    %c0_i32_0 = arith.constant 0 : i32
    %c0_i32_1 = arith.constant 0 : i32
    return %c0_i32, %c0_i32_0 : i32, i32
  }
  func.func @transform_10(%arg0: i32) -> (i32, i32) {
    %c0_i32 = arith.constant 0 : i32
    %c0_i32_0 = arith.constant 0 : i32
    %c0_i32_1 = arith.constant 0 : i32
    return %c0_i32, %c0_i32_0 : i32, i32
  }
  func.func @transform_11(%arg0: i32) -> (i32, i32, i32) {
    %c0_i32 = arith.constant 0 : i32
    %c0_i32_0 = arith.constant 0 : i32
    %c0_i32_1 = arith.constant 0 : i32
    %c0_i32_2 = arith.constant 0 : i32
    return %c0_i32, %c0_i32_0, %c0_i32_1 : i32, i32, i32
  }
  func.func @transform_12(%arg0: i32) -> (i32, i32, i32) {
    %c0_i32 = arith.constant 0 : i32
    %c0_i32_0 = arith.constant 0 : i32
    %c0_i32_1 = arith.constant 0 : i32
    %c0_i32_2 = arith.constant 0 : i32
    return %c0_i32, %c0_i32_0, %c0_i32_1 : i32, i32, i32
  }
  func.func @transform_13(%arg0: i32) -> (i32, i32, i32) {
    %c0_i32 = arith.constant 0 : i32
    %c0_i32_0 = arith.constant 0 : i32
    %c0_i32_1 = arith.constant 0 : i32
    %c0_i32_2 = arith.constant 0 : i32
    return %c0_i32, %c0_i32_0, %c0_i32_1 : i32, i32, i32
  }
  func.func @transform_14(%arg0: i32) -> (i32, i32) {
    %c0_i32 = arith.constant 0 : i32
    %c0_i32_0 = arith.constant 0 : i32
    %c0_i32_1 = arith.constant 0 : i32
    return %c0_i32, %c0_i32_0 : i32, i32
  }
  func.func @transform_15(%arg0: i32) -> (i32, i32) {
    %c0_i32 = arith.constant 0 : i32
    %c0_i32_0 = arith.constant 0 : i32
    %c0_i32_1 = arith.constant 0 : i32
    return %c0_i32, %c0_i32_0 : i32, i32
  }
  func.func @transform_16(%arg0: i32) -> (i32, i32) {
    %c0_i32 = arith.constant 0 : i32
    %c0_i32_0 = arith.constant 0 : i32
    %c0_i32_1 = arith.constant 0 : i32
    return %c0_i32, %c0_i32_0 : i32, i32
  }
  func.func @transform_17(%arg0: i32) -> (i32, i32, i32) {
    %c0_i32 = arith.constant 0 : i32
    %c0_i32_0 = arith.constant 0 : i32
    %c0_i32_1 = arith.constant 0 : i32
    %c0_i32_2 = arith.constant 0 : i32
    return %c0_i32, %c0_i32_0, %c0_i32_1 : i32, i32, i32
  }
  func.func @transform_18(%arg0: i32) -> (i32, i32, i32) {
    %c0_i32 = arith.constant 0 : i32
    %c0_i32_0 = arith.constant 0 : i32
    %c0_i32_1 = arith.constant 0 : i32
    %c0_i32_2 = arith.constant 0 : i32
    return %c0_i32, %c0_i32_0, %c0_i32_1 : i32, i32, i32
  }
}

</mosaic_0001>

<llo_original>
// kernel: edgecut_forward.1
$region0: #{edgecut_forward.1}
  #allocation0 [shape = 'u32[]', space=smem, size = 0x4, offset = 0x4, fixed_abs, tag = 'smem constant byte address 0x4 - core index']
  #allocation1 [shape = 'u32[144,128]{1,0:T(1,128)}', space=vmem, size = 0x12000, scoped, tag = 'internal scratch']
  #allocation2 [shape = 'f32[16,16]{1,0:T(8,128)}', space=vmem, size = 0x2000, scoped, tag = 'scratch operand']
  %s0 = inlined_call_operand.vmem [shape: f32[16,128], index: 0, kind: input, shape index: {}]
  %s1 = inlined_call_operand.vmem [shape: f32[16,16], index: 1, kind: input, shape index: {}]
  %s2 = inlined_call_operand.vmem [shape: f32[16,16], index: 2, kind: input, shape index: {}]
  %s3 = inlined_call_operand.hbm [shape: f32[3,128,128], index: 3, kind: input, shape index: {}]
  %s4 = inlined_call_operand.vmem [shape: f32[3,1,128], index: 4, kind: input, shape index: {}]
  %s5 = inlined_call_operand.hbm [shape: f32[3,128,128], index: 5, kind: input, shape index: {}]
  %s6 = inlined_call_operand.vmem [shape: f32[3,1,128], index: 6, kind: input, shape index: {}]
  %s7 = inlined_call_operand.vmem [shape: f32[3,1,128], index: 7, kind: input, shape index: {}]
  %s8 = inlined_call_operand.vmem [shape: f32[3,1,128], index: 8, kind: input, shape index: {}]
  %s9 = inlined_call_operand.hbm [shape: f32[128,128], index: 9, kind: input, shape index: {}]
  %s10 = inlined_call_operand.vmem [shape: f32[1,128], index: 10, kind: input, shape index: {}]
  %s11 = inlined_call_operand.hbm [shape: f32[3,128,128], index: 11, kind: input, shape index: {}]
  %s12 = inlined_call_operand.hbm [shape: f32[3,128,128], index: 12, kind: input, shape index: {}]
  %s13 = inlined_call_operand.vmem [shape: f32[3,1,128], index: 13, kind: input, shape index: {}]
  %s14 = inlined_call_operand.hbm [shape: f32[128,128], index: 14, kind: input, shape index: {}]
  %s15 = inlined_call_operand.vmem [shape: f32[1,128], index: 15, kind: input, shape index: {}]
  %s16 = inlined_call_operand.vmem [shape: f32[16,128], index: 16, kind: output, shape index: {0}]
  %s17 = inlined_call_operand.vmem [shape: f32[3,16,128], index: 17, kind: output, shape index: {1}]
  %s18 = inlined_call_operand.vmem [shape: f32[3,16,128], index: 18, kind: output, shape index: {2}]
  %19 = xla_tuple %s16, %s17, %s18
  %s20 = sld [smem:[#allocation0]]
  $region135: #{edgecut_forward.1} parent=0
    _
  %s22 = ssub.s32 1, %s20
  %s23 = scalar_select 0, %s22, %s20
  $region1: #{edgecut_forward.1} parent=0
    #allocation3 [shape = 'u8[196608]{0}', space=vmem, size = 0x30000, scoped, tag = 'input window, operand 3, single buffered']
    #allocation4 [shape = 's32[1]{0}', space=sflag, size = 0x4, scoped, tag = 'scoped memory for edgecut_forward.1']
    #allocation5 [shape = 'u8[196608]{0}', space=vmem, size = 0x30000, scoped, tag = 'input window, operand 5, single buffered']
    #allocation6 [shape = 's32[1]{0}', space=sflag, size = 0x4, scoped, tag = 'scoped memory for edgecut_forward.1']
    #allocation7 [shape = 'u8[65536]{0}', space=vmem, size = 0x10000, scoped, tag = 'input window, operand 9, single buffered']
    #allocation8 [shape = 'u8[196608]{0}', space=vmem, size = 0x30000, scoped, tag = 'input window, operand 11, single buffered']
    #allocation9 [shape = 's32[1]{0}', space=sflag, size = 0x4, scoped, tag = 'scoped memory for edgecut_forward.1']
    #allocation10 [shape = 'u8[196608]{0}', space=vmem, size = 0x30000, scoped, tag = 'input window, operand 12, single buffered']
    #allocation11 [shape = 'u8[65536]{0}', space=vmem, size = 0x10000, scoped, tag = 'input window, operand 14, single buffered']
    #allocation12 [shape = 's32[1]{0}', space=sflag, size = 0x4, scoped, tag = 'scoped memory for edgecut_forward.1']
    %24 = vsyncpa [#allocation4], 0
    %25 = vsyncpa [#allocation6], 0
    %26 = vsyncpa [#allocation9], 0
    %27 = vsyncpa [#allocation12], 0
    // Predicated region
    $region2: #{edgecut_forward.1} parent=1 // pred_check
      _
    $region3: #{edgecut_forward.1} parent=1 // pred_check_branch
      %29 = sbr.rel (0) target = $region5
    $region4: #{edgecut_forward.1} parent=1 // pred_region
      _
    $region5: #{edgecut_forward.1} parent=1 // pred_fallthru
      _
    // Predicated region
    $region6: #{edgecut_forward.1} parent=1 // pred_check
      _
    $region7: #{edgecut_forward.1} parent=1 // pred_check_branch
      %31 = sbr.rel (0) target = $region9
    $region8: #{edgecut_forward.1} parent=1 // pred_region
      _
    $region9: #{edgecut_forward.1} parent=1 // pred_fallthru
      _
    // Predicated region
    $region10: #{edgecut_forward.1} parent=1 // pred_check
      _
    $region11: #{edgecut_forward.1} parent=1 // pred_check_branch
      %33 = sbr.rel (0) target = $region13
    $region12: #{edgecut_forward.1} parent=1 // pred_region
      _
    $region13: #{edgecut_forward.1} parent=1 // pred_fallthru
      _
    // Predicated region
    $region14: #{edgecut_forward.1} parent=1 // pred_check
      _
    $region15: #{edgecut_forward.1} parent=1 // pred_check_branch
      %35 = sbr.rel (0) target = $region17
    $region16: #{edgecut_forward.1} parent=1 // pred_region
      %s37 = ssub.s32 6144, 6144
      %38 = vsyncadd [#allocation4], %s37
      %s39 = sshll.u32 [#allocation3], 4
      %s40 = int_to_ptr.vmem [resolvable:$true] %s39
      %45 = dma.hbm_to_vmem [thread:$0]  %s3, 6144, %s40, [#allocation4], 128, 128, 8
    $region17: #{edgecut_forward.1} parent=1 // pred_fallthru
      _
    // Predicated region
    $region18: #{edgecut_forward.1} parent=1 // pred_check
      _
    $region19: #{edgecut_forward.1} parent=1 // pred_check_branch
      %47 = sbr.rel (0) target = $region21
    $region20: #{edgecut_forward.1} parent=1 // pred_region
      _
    $region21: #{edgecut_forward.1} parent=1 // pred_fallthru
      _
    // Predicated region
    $region22: #{edgecut_forward.1} parent=1 // pred_check
      _
    $region23: #{edgecut_forward.1} parent=1 // pred_check_branch
      %49 = sbr.rel (0) target = $region25
    $region24: #{edgecut_forward.1} parent=1 // pred_region
      %s51 = ssub.s32 6144, 6144
      %52 = vsyncadd [#allocation6], %s51
      %s53 = sshll.u32 [#allocation5], 4
      %s54 = int_to_ptr.vmem [resolvable:$true] %s53
      %59 = dma.hbm_to_vmem [thread:$0]  %s5, 6144, %s54, [#allocation6], 128, 128, 8
    $region25: #{edgecut_forward.1} parent=1 // pred_fallthru
      _
    // Predicated region
    $region26: #{edgecut_forward.1} parent=1 // pred_check
      _
    $region27: #{edgecut_forward.1} parent=1 // pred_check_branch
      %61 = sbr.rel (0) target = $region29
    $region28: #{edgecut_forward.1} parent=1 // pred_region
      _
    $region29: #{edgecut_forward.1} parent=1 // pred_fallthru
      _
    // Predicated region
    $region30: #{edgecut_forward.1} parent=1 // pred_check
      _
    $region31: #{edgecut_forward.1} parent=1 // pred_check_branch
      %63 = sbr.rel (0) target = $region33
    $region32: #{edgecut_forward.1} parent=1 // pred_region
      _
    $region33: #{edgecut_forward.1} parent=1 // pred_fallthru
      _
    // Predicated region
    $region34: #{edgecut_forward.1} parent=1 // pred_check
      _
    $region35: #{edgecut_forward.1} parent=1 // pred_check_branch
      %65 = sbr.rel (0) target = $region37
    $region36: #{edgecut_forward.1} parent=1 // pred_region
      _
    $region37: #{edgecut_forward.1} parent=1 // pred_fallthru
      _
    // Predicated region
    $region38: #{edgecut_forward.1} parent=1 // pred_check
      _
    $region39: #{edgecut_forward.1} parent=1 // pred_check_branch
      %67 = sbr.rel (0) target = $region41
    $region40: #{edgecut_forward.1} parent=1 // pred_region
      %s69 = ssub.s32 2048, 2048
      %70 = vsyncadd [#allocation6], %s69
      %s71 = sshll.u32 [#allocation7], 4
      %s72 = int_to_ptr.vmem [resolvable:$true] %s71
      %77 = dma.hbm_to_vmem [thread:$0]  %s9, 2048, %s72, [#allocation6], 128, 128, 8
    $region41: #{edgecut_forward.1} parent=1 // pred_fallthru
      _
    // Predicated region
    $region42: #{edgecut_forward.1} parent=1 // pred_check
      _
    $region43: #{edgecut_forward.1} parent=1 // pred_check_branch
      %79 = sbr.rel (0) target = $region45
    $region44: #{edgecut_forward.1} parent=1 // pred_region
      _
    $region45: #{edgecut_forward.1} parent=1 // pred_fallthru
      _
    // Predicated region
    $region46: #{edgecut_forward.1} parent=1 // pred_check
      _
    $region47: #{edgecut_forward.1} parent=1 // pred_check_branch
      %81 = sbr.rel (0) target = $region49
    $region48: #{edgecut_forward.1} parent=1 // pred_region
      %s83 = ssub.s32 6144, 6144
      %84 = vsyncadd [#allocation9], %s83
      %s85 = sshll.u32 [#allocation8], 4
      %s86 = int_to_ptr.vmem [resolvable:$true] %s85
      %91 = dma.hbm_to_vmem [thread:$0]  %s11, 6144, %s86, [#allocation9], 128, 128, 8
    $region49: #{edgecut_forward.1} parent=1 // pred_fallthru
      _
    // Predicated region
    $region50: #{edgecut_forward.1} parent=1 // pred_check
      _
    $region51: #{edgecut_forward.1} parent=1 // pred_check_branch
      %93 = sbr.rel (0) target = $region53
    $region52: #{edgecut_forward.1} parent=1 // pred_region
      %s95 = ssub.s32 6144, 6144
      %96 = vsyncadd [#allocation9], %s95
      %s97 = sshll.u32 [#allocation10], 4
      %s98 = int_to_ptr.vmem [resolvable:$true] %s97
      %103 = dma.hbm_to_vmem [thread:$0]  %s12, 6144, %s98, [#allocation9], 128, 128, 8
    $region53: #{edgecut_forward.1} parent=1 // pred_fallthru
      _
    // Predicated region
    $region54: #{edgecut_forward.1} parent=1 // pred_check
      _
    $region55: #{edgecut_forward.1} parent=1 // pred_check_branch
      %105 = sbr.rel (0) target = $region57
    $region56: #{edgecut_forward.1} parent=1 // pred_region
      _
    $region57: #{edgecut_forward.1} parent=1 // pred_fallthru
      _
    // Predicated region
    $region58: #{edgecut_forward.1} parent=1 // pred_check
      _
    $region59: #{edgecut_forward.1} parent=1 // pred_check_branch
      %107 = sbr.rel (0) target = $region61
    $region60: #{edgecut_forward.1} parent=1 // pred_region
      %s109 = ssub.s32 2048, 2048
      %110 = vsyncadd [#allocation12], %s109
      %s111 = sshll.u32 [#allocation11], 4
      %s112 = int_to_ptr.vmem [resolvable:$true] %s111
      %117 = dma.hbm_to_vmem [thread:$0]  %s14, 2048, %s112, [#allocation12], 128, 128, 8
    $region61: #{edgecut_forward.1} parent=1 // pred_fallthru
      _
    // Predicated region
    $region62: #{edgecut_forward.1} parent=1 // pred_check
      _
    $region63: #{edgecut_forward.1} parent=1 // pred_check_branch
      %119 = sbr.rel (0) target = $region65
    $region64: #{edgecut_forward.1} parent=1 // pred_region
      _
    $region65: #{edgecut_forward.1} parent=1 // pred_fallthru
      _
    // Predicated region
    $region66: #{edgecut_forward.1} parent=1 // pred_check
      _
    $region67: #{edgecut_forward.1} parent=1 // pred_check_branch
      %121 = sbr.rel (0) target = $region69
    $region68: #{edgecut_forward.1} parent=1 // pred_region
      %122 = dma.done [#allocation4], 6144
    $region69: #{edgecut_forward.1} parent=1 // pred_fallthru
      _
    // Predicated region
    $region70: #{edgecut_forward.1} parent=1 // pred_check
      _
    $region71: #{edgecut_forward.1} parent=1 // pred_check_branch
      %124 = sbr.rel (0) target = $region73
    $region72: #{edgecut_forward.1} parent=1 // pred_region
      %125 = dma.done [#allocation6], 6144
    $region73: #{edgecut_forward.1} parent=1 // pred_fallthru
      _
    // Predicated region
    $region74: #{edgecut_forward.1} parent=1 // pred_check
      _
    $region75: #{edgecut_forward.1} parent=1 // pred_check_branch
      %127 = sbr.rel (0) target = $region77
    $region76: #{edgecut_forward.1} parent=1 // pred_region
      %128 = dma.done [#allocation6], 2048
    $region77: #{edgecut_forward.1} parent=1 // pred_fallthru
      _
    // Predicated region
    $region78: #{edgecut_forward.1} parent=1 // pred_check
      _
    $region79: #{edgecut_forward.1} parent=1 // pred_check_branch
      %130 = sbr.rel (0) target = $region81
    $region80: #{edgecut_forward.1} parent=1 // pred_region
      %131 = dma.done [#allocation9], 6144
    $region81: #{edgecut_forward.1} parent=1 // pred_fallthru
      _
    // Predicated region
    $region82: #{edgecut_forward.1} parent=1 // pred_check
      _
    $region83: #{edgecut_forward.1} parent=1 // pred_check_branch
      %133 = sbr.rel (0) target = $region85
    $region84: #{edgecut_forward.1} parent=1 // pred_region
      %134 = dma.done [#allocation9], 6144
    $region85: #{edgecut_forward.1} parent=1 // pred_fallthru
      _
    // Predicated region
    $region86: #{edgecut_forward.1} parent=1 // pred_check
      _
    $region87: #{edgecut_forward.1} parent=1 // pred_check_branch
      %136 = sbr.rel (0) target = $region89
    $region88: #{edgecut_forward.1} parent=1 // pred_region
      %137 = dma.done [#allocation12], 2048
    $region89: #{edgecut_forward.1} parent=1 // pred_fallthru
      _
    %v138 = vld [vmem:[%s0] sm:$0xff]
    %v139 = vld [vmem:[%s0 + $0x8] sm:$0xff]
    %v140 = vld [vmem:[%s1] sm:$0xff]
    %v141 = vld [vmem:[%s1 + $0x8] sm:$0xff]
    %v142 = vld [vmem:[%s2] sm:$0xff]
    %v143 = vld [vmem:[%s2 + $0x8] sm:$0xff]
    %v144 = vlaneseq
    %v145 = vshrl.u32 %v144, 7
    %v146 = vadd.s32 %v145, 8
    %v147 = vlaneseq
    %v148 = vand.u32 %v147, 127
    %vm149 = vcmp.eq.s32.totalorder %v145, %v148
    %vm150 = vcmp.eq.s32.totalorder %v146, %v148
    %v151 = vsel %vm149, 1, 0
    %v152 = vsel %vm150, 1, 0
    %v153 = vcvt.s32.f32 %v151
    %v154 = vcvt.s32.f32 %v152
    %v155 = vcvt.s32.f32 %v145
    %v156 = vcvt.s32.f32 %v146
    %v157 = vcvt.s32.f32 %v148
    %v158 = vld [vmem:[#allocation3] sm:$0xff]
    %v159 = vld [vmem:[#allocation3 + $0x8] sm:$0xff]
    %v160 = vld [vmem:[#allocation3 + $0x10] sm:$0xff]
    %v161 = vld [vmem:[#allocation3 + $0x18] sm:$0xff]
    %v162 = vld [vmem:[#allocation3 + $0x20] sm:$0xff]
    %v163 = vld [vmem:[#allocation3 + $0x28] sm:$0xff]
    %v164 = vld [vmem:[#allocation3 + $0x30] sm:$0xff]
    %v165 = vld [vmem:[#allocation3 + $0x38] sm:$0xff]
    %v166 = vld [vmem:[#allocation3 + $0x40] sm:$0xff]
    %v167 = vld [vmem:[#allocation3 + $0x48] sm:$0xff]
    %v168 = vld [vmem:[#allocation3 + $0x50] sm:$0xff]
    %v169 = vld [vmem:[#allocation3 + $0x58] sm:$0xff]
    %v170 = vld [vmem:[#allocation3 + $0x60] sm:$0xff]
    %v171 = vld [vmem:[#allocation3 + $0x68] sm:$0xff]
    %v172 = vld [vmem:[#allocation3 + $0x70] sm:$0xff]
    %v173 = vld [vmem:[#allocation3 + $0x78] sm:$0xff]
    %174 = vmatprep.subr.mxu0 0.0
    %175 = vmatpush1.msra.mxu0 %v173
    %176 = vmatprep.subr.mxu0 0.0
    %177 = vmatpush1.msra.mxu0 %v172
    %178 = vmatprep.subr.mxu0 0.0
    %179 = vmatpush1.msra.mxu0 %v171
    %180 = vmatprep.subr.mxu0 0.0
    %181 = vmatpush1.msra.mxu0 %v170
    %182 = vmatprep.subr.mxu0 0.0
    %183 = vmatpush1.msra.mxu0 %v169
    %184 = vmatprep.subr.mxu0 0.0
    %185 = vmatpush1.msra.mxu0 %v168
    %186 = vmatprep.subr.mxu0 0.0
    %187 = vmatpush1.msra.mxu0 %v167
    %188 = vmatprep.subr.mxu0 0.0
    %189 = vmatpush1.msra.mxu0 %v166
    %190 = vmatprep.subr.mxu0 0.0
    %191 = vmatpush1.msra.mxu0 %v165
    %192 = vmatprep.subr.mxu0 0.0
    %193 = vmatpush1.msra.mxu0 %v164
    %194 = vmatprep.subr.mxu0 0.0
    %195 = vmatpush1.msra.mxu0 %v163
    %196 = vmatprep.subr.mxu0 0.0
    %197 = vmatpush1.msra.mxu0 %v162
    %198 = vmatprep.subr.mxu0 0.0
    %199 = vmatpush1.msra.mxu0 %v161
    %200 = vmatprep.subr.mxu0 0.0
    %201 = vmatpush1.msra.mxu0 %v160
    %202 = vmatprep.subr.mxu0 0.0
    %203 = vmatpush1.msra.mxu0 %v159
    %204 = vmatprep.subr.mxu0 0.0
    %205 = vmatpush1.msra.mxu0 %v158
    %206 = vmatprep.subr.mxu0 0.0
    %207 = vmatpush2.msra.mxu0 0.0
    %208 = vmatprep.subr.mxu0 0.0
    %209 = vmatpush2.msra.mxu0 0.0
    %210 = vmatprep.subr.mxu0 0.0
    %211 = vmatpush2.msra.mxu0 0.0
    %212 = vmatprep.subr.mxu0 0.0
    %213 = vmatpush2.msra.mxu0 0.0
    %214 = vmatprep.subr.mxu0 0.0
    %215 = vmatpush2.msra.mxu0 0.0
    %216 = vmatprep.subr.mxu0 0.0
    %217 = vmatpush2.msra.mxu0 0.0
    %218 = vmatprep.subr.mxu0 0.0
    %219 = vmatpush2.msra.mxu0 0.0
    %220 = vmatprep.subr.mxu0 0.0
    %221 = vmatpush2.msra.mxu0 0.0
    %222 = vmatprep.subr.mxu0 0.0
    %223 = vmatpush2.msra.mxu0 0.0
    %224 = vmatprep.subr.mxu0 0.0
    %225 = vmatpush2.msra.mxu0 0.0
    %226 = vmatprep.subr.mxu0 0.0
    %227 = vmatpush2.msra.mxu0 0.0
    %228 = vmatprep.subr.mxu0 0.0
    %229 = vmatpush2.msra.mxu0 0.0
    %230 = vmatprep.subr.mxu0 0.0
    %231 = vmatpush2.msra.mxu0 0.0
    %232 = vmatprep.subr.mxu0 0.0
    %233 = vmatpush2.msra.mxu0 0.0
    %234 = vmatprep.subr.mxu0 0.0
    %235 = vmatpush2.msra.mxu0 0.0
    %236 = vmatprep.subr.mxu0 0.0
    %237 = vmatpush2.msra.mxu0 0.0
    %238 = vmatprep.mubr.f32.mxu0 0.0
    %239 = vmatmul.mubr.f32.gmra.mxu0 %v138
    %v240 = vpop.f32.mrf.mxu0
    %v241 = vadd.f32 0.0, %v240
    %v242 = vpop.f32.mrf.mxu0
    %243 = vmatprep.mubr.f32.mxu0 0.0
    %244 = vmatmul.mubr.f32.gmra.mxu0 %v139
    %v245 = vpop.f32.mrf.mxu0
    %v246 = vadd.f32 0.0, %v245
    %v247 = vpop.f32.mrf.mxu0
    %248 = vdwg.mxu0
    %v249 = vld [vmem:[%s4] sm:$0x1]
    %v251 = vlaneseq
    %v252 = vshrl.u32 %v251, 7
    %v253 = vsub.s32 0, %v252
    %v254 = vrot.slane %v249, %v253
    %vm256 = vcmask 130048
    %v258 = vsel %vm256, %v142, 0
    %v261 = vsel %vm256, %v143, 0
    %263 = vmatprep.subr.mxu0 0.0
    %264 = vmatpush1.msra.mxu0 0.0
    %265 = vmatprep.subr.mxu0 0.0
    %266 = vmatpush1.msra.mxu0 0.0
    %267 = vmatprep.subr.mxu0 0.0
    %268 = vmatpush1.msra.mxu0 0.0
    %269 = vmatprep.subr.mxu0 0.0
    %270 = vmatpush1.msra.mxu0 0.0
    %271 = vmatprep.subr.mxu0 0.0
    %272 = vmatpush1.msra.mxu0 0.0
    %273 = vmatprep.subr.mxu0 0.0
    %274 = vmatpush1.msra.mxu0 0.0
    %275 = vmatprep.subr.mxu0 0.0
    %276 = vmatpush1.msra.mxu0 0.0
    %277 = vmatprep.subr.mxu0 0.0
    %278 = vmatpush1.msra.mxu0 0.0
    %279 = vmatprep.subr.mxu0 0.0
    %280 = vmatpush1.msra.mxu0 0.0
    %281 = vmatprep.subr.mxu0 0.0
    %282 = vmatpush1.msra.mxu0 0.0
    %283 = vmatprep.subr.mxu0 0.0
    %284 = vmatpush1.msra.mxu0 0.0
    %285 = vmatprep.subr.mxu0 0.0
    %286 = vmatpush1.msra.mxu0 0.0
    %287 = vmatprep.subr.mxu0 0.0
    %288 = vmatpush1.msra.mxu0 0.0
    %289 = vmatprep.subr.mxu0 0.0
    %290 = vmatpush1.msra.mxu0 0.0
    %291 = vmatprep.subr.mxu0 0.0
    %292 = vmatpush1.msra.mxu0 %v246
    %293 = vmatprep.subr.mxu0 0.0
    %294 = vmatpush1.msra.mxu0 %v241
    %295 = vmatprep.subr.mxu0 0.0
    %296 = vmatpush2.msra.mxu0 0.0
    %297 = vmatprep.subr.mxu0 0.0
    %298 = vmatpush2.msra.mxu0 0.0
    %299 = vmatprep.subr.mxu0 0.0
    %300 = vmatpush2.msra.mxu0 0.0
    %301 = vmatprep.subr.mxu0 0.0
    %302 = vmatpush2.msra.mxu0 0.0
    %303 = vmatprep.subr.mxu0 0.0
    %304 = vmatpush2.msra.mxu0 0.0
    %305 = vmatprep.subr.mxu0 0.0
    %306 = vmatpush2.msra.mxu0 0.0
    %307 = vmatprep.subr.mxu0 0.0
    %308 = vmatpush2.msra.mxu0 0.0
    %309 = vmatprep.subr.mxu0 0.0
    %310 = vmatpush2.msra.mxu0 0.0
    %311 = vmatprep.subr.mxu0 0.0
    %312 = vmatpush2.msra.mxu0 0.0
    %313 = vmatprep.subr.mxu0 0.0
    %314 = vmatpush2.msra.mxu0 0.0
    %315 = vmatprep.subr.mxu0 0.0
    %316 = vmatpush2.msra.mxu0 0.0
    %317 = vmatprep.subr.mxu0 0.0
    %318 = vmatpush2.msra.mxu0 0.0
    %319 = vmatprep.subr.mxu0 0.0
    %320 = vmatpush2.msra.mxu0 0.0
    %321 = vmatprep.subr.mxu0 0.0
    %322 = vmatpush2.msra.mxu0 0.0
    %323 = vmatprep.subr.mxu0 0.0
    %324 = vmatpush2.msra.mxu0 0.0
    %325 = vmatprep.subr.mxu0 0.0
    %326 = vmatpush2.msra.mxu0 0.0
    %327 = vmatprep.mubr.f32.mxu0 0.0
    %328 = vmatmul.mubr.f32.gmra.mxu0 %v258
    %v329 = vpop.f32.mrf.mxu0
    %v330 = vadd.f32 %v254, %v329
    %v331 = vpop.f32.mrf.mxu0
    %332 = vmatprep.mubr.f32.mxu0 0.0
    %333 = vmatmul.mubr.f32.gmra.mxu0 %v261
    %v334 = vpop.f32.mrf.mxu0
    %v335 = vadd.f32 %v254, %v334
    %v336 = vpop.f32.mrf.mxu0
    %337 = vdwg.mxu0
    %v338 = vmax.f32 %v330, 0.0
    %v339 = vmax.f32 %v335, 0.0
    %v340 = vmul.f32 %v338, %v338
    %v341 = vmul.f32 %v339, %v339
    %342 = vadd.xlane.f32.xlu0 %v340
    %v343 = vpop.xlane.xlu0 %342
    %344 = vadd.xlane.f32.xlu0 %v341
    %v345 = vpop.xlane.xlu0 %344
    %v346 = vmax.f32 %v343, 1e-24
    %v347 = vmax.f32 %v345, 1e-24
    %v348 = vrsqrt.pop %v346
    %v349 = vrsqrt.pop %v347
    %v350 = vmul.f32 %v338, %v348
    %v351 = vmul.f32 %v339, %v349
    %v352 = vld [vmem:[#allocation5] sm:$0xff]
    %v353 = vld [vmem:[#allocation5 + $0x8] sm:$0xff]
    %v354 = vld [vmem:[#allocation5 + $0x10] sm:$0xff]
    %v355 = vld [vmem:[#allocation5 + $0x18] sm:$0xff]
    %v356 = vld [vmem:[#allocation5 + $0x20] sm:$0xff]
    %v357 = vld [vmem:[#allocation5 + $0x28] sm:$0xff]
    %v358 = vld [vmem:[#allocation5 + $0x30] sm:$0xff]
    %v359 = vld [vmem:[#allocation5 + $0x38] sm:$0xff]
    %v360 = vld [vmem:[#allocation5 + $0x40] sm:$0xff]
    %v361 = vld [vmem:[#allocation5 + $0x48] sm:$0xff]
    %v362 = vld [vmem:[#allocation5 + $0x50] sm:$0xff]
    %v363 = vld [vmem:[#allocation5 + $0x58] sm:$0xff]
    %v364 = vld [vmem:[#allocation5 + $0x60] sm:$0xff]
    %v365 = vld [vmem:[#allocation5 + $0x68] sm:$0xff]
    %v366 = vld [vmem:[#allocation5 + $0x70] sm:$0xff]
    %v367 = vld [vmem:[#allocation5 + $0x78] sm:$0xff]
    %v368 = vld [vmem:[%s6] sm:$0x1]
    %v370 = vlaneseq
    %v371 = vshrl.u32 %v370, 7
    %v372 = vsub.s32 0, %v371
    %v373 = vrot.slane %v368, %v372
    %375 = vmatprep.subr.mxu0 0.0
    %376 = vmatpush1.msra.mxu0 %v367
    %377 = vmatprep.subr.mxu0 0.0
    %378 = vmatpush1.msra.mxu0 %v366
    %379 = vmatprep.subr.mxu0 0.0
    %380 = vmatpush1.msra.mxu0 %v365
    %381 = vmatprep.subr.mxu0 0.0
    %382 = vmatpush1.msra.mxu0 %v364
    %383 = vmatprep.subr.mxu0 0.0
    %384 = vmatpush1.msra.mxu0 %v363
    %385 = vmatprep.subr.mxu0 0.0
    %386 = vmatpush1.msra.mxu0 %v362
    %387 = vmatprep.subr.mxu0 0.0
    %388 = vmatpush1.msra.mxu0 %v361
    %389 = vmatprep.subr.mxu0 0.0
    %390 = vmatpush1.msra.mxu0 %v360
    %391 = vmatprep.subr.mxu0 0.0
    %392 = vmatpush1.msra.mxu0 %v359
    %393 = vmatprep.subr.mxu0 0.0
    %394 = vmatpush1.msra.mxu0 %v358
    %395 = vmatprep.subr.mxu0 0.0
    %396 = vmatpush1.msra.mxu0 %v357
    %397 = vmatprep.subr.mxu0 0.0
    %398 = vmatpush1.msra.mxu0 %v356
    %399 = vmatprep.subr.mxu0 0.0
    %400 = vmatpush1.msra.mxu0 %v355
    %401 = vmatprep.subr.mxu0 0.0
    %402 = vmatpush1.msra.mxu0 %v354
    %403 = vmatprep.subr.mxu0 0.0
    %404 = vmatpush1.msra.mxu0 %v353
    %405 = vmatprep.subr.mxu0 0.0
    %406 = vmatpush1.msra.mxu0 %v352
    %407 = vmatprep.subr.mxu0 0.0
    %408 = vmatpush2.msra.mxu0 0.0
    %409 = vmatprep.subr.mxu0 0.0
    %410 = vmatpush2.msra.mxu0 0.0
    %411 = vmatprep.subr.mxu0 0.0
    %412 = vmatpush2.msra.mxu0 0.0
    %413 = vmatprep.subr.mxu0 0.0
    %414 = vmatpush2.msra.mxu0 0.0
    %415 = vmatprep.subr.mxu0 0.0
    %416 = vmatpush2.msra.mxu0 0.0
    %417 = vmatprep.subr.mxu0 0.0
    %418 = vmatpush2.msra.mxu0 0.0
    %419 = vmatprep.subr.mxu0 0.0
    %420 = vmatpush2.msra.mxu0 0.0
    %421 = vmatprep.subr.mxu0 0.0
    %422 = vmatpush2.msra.mxu0 0.0
    %423 = vmatprep.subr.mxu0 0.0
    %424 = vmatpush2.msra.mxu0 0.0
    %425 = vmatprep.subr.mxu0 0.0
    %426 = vmatpush2.msra.mxu0 0.0
    %427 = vmatprep.subr.mxu0 0.0
    %428 = vmatpush2.msra.mxu0 0.0
    %429 = vmatprep.subr.mxu0 0.0
    %430 = vmatpush2.msra.mxu0 0.0
    %431 = vmatprep.subr.mxu0 0.0
    %432 = vmatpush2.msra.mxu0 0.0
    %433 = vmatprep.subr.mxu0 0.0
    %434 = vmatpush2.msra.mxu0 0.0
    %435 = vmatprep.subr.mxu0 0.0
    %436 = vmatpush2.msra.mxu0 0.0
    %437 = vmatprep.subr.mxu0 0.0
    %438 = vmatpush2.msra.mxu0 0.0
    %439 = vmatprep.mubr.f32.mxu0 0.0
    %440 = vmatmul.mubr.f32.gmra.mxu0 %v350
    %v441 = vpop.f32.mrf.mxu0
    %v442 = vadd.f32 %v373, %v441
    %v443 = vpop.f32.mrf.mxu0
    %444 = vmatprep.mubr.f32.mxu0 0.0
    %445 = vmatmul.mubr.f32.gmra.mxu0 %v351
    %v446 = vpop.f32.mrf.mxu0
    %v447 = vadd.f32 %v373, %v446
    %v448 = vpop.f32.mrf.mxu0
    %449 = vdwg.mxu0
    %v450 = vld [vmem:[%s7] sm:$0x1]
    %v452 = vlaneseq
    %v453 = vshrl.u32 %v452, 7
    %v454 = vsub.s32 0, %v453
    %v455 = vrot.slane %v450, %v454
    %v457 = vmul.f32 %v442, %v455
    %v458 = vmul.f32 %v447, %v455
    %459 = vadd.xlane.f32.xlu0 %v457
    %v460 = vpop.xlane.xlu0 %459
    %461 = vadd.xlane.f32.xlu0 %v458
    %v462 = vpop.xlane.xlu0 %461
    %v463 = vld [vmem:[%s8] sm:$0x1]
    %v465 = vlaneseq
    %v466 = vshrl.u32 %v465, 7
    %v467 = vsub.s32 0, %v466
    %v468 = vrot.slane %v463, %v467
    %v470 = vmul.f32 %v442, %v468
    %v471 = vmul.f32 %v447, %v468
    %472 = vadd.xlane.f32.xlu0 %v470
    %v473 = vpop.xlane.xlu0 %472
    %474 = vadd.xlane.f32.xlu0 %v471
    %v475 = vpop.xlane.xlu0 %474
    %476 = vxpose.xlu0.b32.start [1/16] %v473, 128
    %477 = vxpose.xlu0.b32.cont [2/16] %v475, 128
    %478 = vxpose.xlu0.b32.cont [3/16] 0.0, 128
    %479 = vxpose.xlu0.b32.cont [4/16] 0.0, 128
    %480 = vxpose.xlu0.b32.cont [5/16] 0.0, 128
    %481 = vxpose.xlu0.b32.cont [6/16] 0.0, 128
    %482 = vxpose.xlu0.b32.cont [7/16] 0.0, 128
    %483 = vxpose.xlu0.b32.cont [8/16] 0.0, 128
    %484 = vxpose.xlu0.b32.cont [9/16] 0.0, 128
    %485 = vxpose.xlu0.b32.cont [10/16] 0.0, 128
    %486 = vxpose.xlu0.b32.cont [11/16] 0.0, 128
    %487 = vxpose.xlu0.b32.cont [12/16] 0.0, 128
    %488 = vxpose.xlu0.b32.cont [13/16] 0.0, 128
    %489 = vxpose.xlu0.b32.cont [14/16] 0.0, 128
    %490 = vxpose.xlu0.b32.cont [15/16] 0.0, 128
    %491 = vxpose.xlu0.b32.end [16/16] 0.0, 128
    %v492 = vpop.trf.xlu0
    %v493 = vpop.trf.xlu0
    %v494 = vpop.trf.xlu0
    %v495 = vpop.trf.xlu0
    %v496 = vpop.trf.xlu0
    %v497 = vpop.trf.xlu0
    %v498 = vpop.trf.xlu0
    %v499 = vpop.trf.xlu0
    %v500 = vpop.trf.xlu0
    %v501 = vpop.trf.xlu0
    %v502 = vpop.trf.xlu0
    %v503 = vpop.trf.xlu0
    %v504 = vpop.trf.xlu0
    %v505 = vpop.trf.xlu0
    %v506 = vpop.trf.xlu0
    %v507 = vpop.trf.xlu0
    %v508 = vlaneseq
    %v509 = vshrl.u32 %v508, 7
    %v510 = vsub.s32 0, %v509
    %v511 = vrot.slane %v492, %v510
    %v512 = vadd.f32 %v460, %v511
    %v513 = vadd.f32 %v462, %v511
    %v514 = vmul.f32 %v512, 0.5
    %v515 = vmul.f32 %v513, 0.5
    %v516 = vtanh.pop %v514
    %v517 = vtanh.pop %v515
    %v518 = vadd.f32 %v516, 1.0
    %v519 = vadd.f32 %v517, 1.0
    %v520 = vmul.f32 %v518, 0.5
    %v521 = vmul.f32 %v519, 0.5
    %vm522 = vcmp.gt.f32.partialorder %v140, 0.0
    %vm523 = vcmp.gt.f32.partialorder %v141, 0.0
    %v524 = vsel %vm522, %v520, 0.0
    %v525 = vsel %vm523, %v521, 0.0
    %526 = vxpose.xlu0.b32.start [1/16] %v524, 128
    %527 = vxpose.xlu0.b32.cont [2/16] %v525, 128
    %528 = vxpose.xlu0.b32.cont [3/16] 0.0, 128
    %529 = vxpose.xlu0.b32.cont [4/16] 0.0, 128
    %530 = vxpose.xlu0.b32.cont [5/16] 0.0, 128
    %531 = vxpose.xlu0.b32.cont [6/16] 0.0, 128
    %532 = vxpose.xlu0.b32.cont [7/16] 0.0, 128
    %533 = vxpose.xlu0.b32.cont [8/16] 0.0, 128
    %534 = vxpose.xlu0.b32.cont [9/16] 0.0, 128
    %535 = vxpose.xlu0.b32.cont [10/16] 0.0, 128
    %536 = vxpose.xlu0.b32.cont [11/16] 0.0, 128
    %537 = vxpose.xlu0.b32.cont [12/16] 0.0, 128
    %538 = vxpose.xlu0.b32.cont [13/16] 0.0, 128
    %539 = vxpose.xlu0.b32.cont [14/16] 0.0, 128
    %540 = vxpose.xlu0.b32.cont [15/16] 0.0, 128
    %541 = vxpose.xlu0.b32.end [16/16] 0.0, 128
    %v542 = vpop.trf.xlu0
    %v543 = vpop.trf.xlu0
    %v544 = vpop.trf.xlu0
    %v545 = vpop.trf.xlu0
    %v546 = vpop.trf.xlu0
    %v547 = vpop.trf.xlu0
    %v548 = vpop.trf.xlu0
    %v549 = vpop.trf.xlu0
    %v550 = vpop.trf.xlu0
    %v551 = vpop.trf.xlu0
    %v552 = vpop.trf.xlu0
    %v553 = vpop.trf.xlu0
    %v554 = vpop.trf.xlu0
    %v555 = vpop.trf.xlu0
    %v556 = vpop.trf.xlu0
    %v557 = vpop.trf.xlu0
    %v558 = vadd.f32 %v524, %v542
    %v559 = vadd.f32 %v525, %v543
    %v560 = vmul.f32 %v558, 0.5
    %v561 = vmul.f32 %v559, 0.5
    %v562 = vsel %vm149, 1.0, %v560
    %v563 = vsel %vm150, 1.0, %v561
    %v565 = vsel %vm256, %v562, 0
    %v568 = vsel %vm256, %v563, 0
    %570 = vmatprep.subr.mxu0 0.0
    %571 = vmatpush1.msra.mxu0 0.0
    %572 = vmatprep.subr.mxu0 0.0
    %573 = vmatpush1.msra.mxu0 0.0
    %574 = vmatprep.subr.mxu0 0.0
    %575 = vmatpush1.msra.mxu0 0.0
    %576 = vmatprep.subr.mxu0 0.0
    %577 = vmatpush1.msra.mxu0 0.0
    %578 = vmatprep.subr.mxu0 0.0
    %579 = vmatpush1.msra.mxu0 0.0
    %580 = vmatprep.subr.mxu0 0.0
    %581 = vmatpush1.msra.mxu0 0.0
    %582 = vmatprep.subr.mxu0 0.0
    %583 = vmatpush1.msra.mxu0 0.0
    %584 = vmatprep.subr.mxu0 0.0
    %585 = vmatpush1.msra.mxu0 0.0
    %586 = vmatprep.subr.mxu0 0.0
    %587 = vmatpush1.msra.mxu0 0.0
    %588 = vmatprep.subr.mxu0 0.0
    %589 = vmatpush1.msra.mxu0 0.0
    %590 = vmatprep.subr.mxu0 0.0
    %591 = vmatpush1.msra.mxu0 0.0
    %592 = vmatprep.subr.mxu0 0.0
    %593 = vmatpush1.msra.mxu0 0.0
    %594 = vmatprep.subr.mxu0 0.0
    %595 = vmatpush1.msra.mxu0 0.0
    %596 = vmatprep.subr.mxu0 0.0
    %597 = vmatpush1.msra.mxu0 0.0
    %598 = vmatprep.subr.mxu0 0.0
    %599 = vmatpush1.msra.mxu0 %v154
    %600 = vmatprep.subr.mxu0 0.0
    %601 = vmatpush1.msra.mxu0 %v153
    %602 = vmatprep.subr.mxu0 0.0
    %603 = vmatpush2.msra.mxu0 0.0
    %604 = vmatprep.subr.mxu0 0.0
    %605 = vmatpush2.msra.mxu0 0.0
    %606 = vmatprep.subr.mxu0 0.0
    %607 = vmatpush2.msra.mxu0 0.0
    %608 = vmatprep.subr.mxu0 0.0
    %609 = vmatpush2.msra.mxu0 0.0
    %610 = vmatprep.subr.mxu0 0.0
    %611 = vmatpush2.msra.mxu0 0.0
    %612 = vmatprep.subr.mxu0 0.0
    %613 = vmatpush2.msra.mxu0 0.0
    %614 = vmatprep.subr.mxu0 0.0
    %615 = vmatpush2.msra.mxu0 0.0
    %616 = vmatprep.subr.mxu0 0.0
    %617 = vmatpush2.msra.mxu0 0.0
    %618 = vmatprep.subr.mxu0 0.0
    %619 = vmatpush2.msra.mxu0 0.0
    %620 = vmatprep.subr.mxu0 0.0
    %621 = vmatpush2.msra.mxu0 0.0
    %622 = vmatprep.subr.mxu0 0.0
    %623 = vmatpush2.msra.mxu0 0.0
    %624 = vmatprep.subr.mxu0 0.0
    %625 = vmatpush2.msra.mxu0 0.0
    %626 = vmatprep.subr.mxu0 0.0
    %627 = vmatpush2.msra.mxu0 0.0
    %628 = vmatprep.subr.mxu0 0.0
    %629 = vmatpush2.msra.mxu0 0.0
    %630 = vmatprep.subr.mxu0 0.0
    %631 = vmatpush2.msra.mxu0 0.0
    %632 = vmatprep.subr.mxu0 0.0
    %633 = vmatpush2.msra.mxu0 0.0
    %634 = vmatprep.mubr.f32.mxu0 0.0
    %635 = vmatmul.mubr.f32.gmra.mxu0 %v565
    %v636 = vpop.f32.mrf.mxu0
    %v637 = vadd.f32 0.0, %v636
    %v638 = vpop.f32.mrf.mxu0
    %639 = vmatprep.mubr.f32.mxu0 0.0
    %640 = vmatmul.mubr.f32.gmra.mxu0 %v568
    %v641 = vpop.f32.mrf.mxu0
    %v642 = vadd.f32 0.0, %v641
    %v643 = vpop.f32.mrf.mxu0
    %644 = vdwg.mxu0
    %645 = vst [vmem:[%s18] sm:$0xff] %v637
    %646 = vst [vmem:[%s18 + $0x8] sm:$0xff] %v642
    %vm647 = vcmp.gt.f32.partialorder %v562, 0.0
    %vm648 = vcmp.gt.f32.partialorder %v563, 0.0
    %vm649 = vcmp.gt.f32.partialorder 1.0, 0.0
    %650 = vxpose.xlu0.b32.start [1/16] 1.0, 128
    %651 = vxpose.xlu0.b32.cont [2/16] 0.0, 128
    %652 = vxpose.xlu0.b32.cont [3/16] 0.0, 128
    %653 = vxpose.xlu0.b32.cont [4/16] 0.0, 128
    %654 = vxpose.xlu0.b32.cont [5/16] 0.0, 128
    %655 = vxpose.xlu0.b32.cont [6/16] 0.0, 128
    %656 = vxpose.xlu0.b32.cont [7/16] 0.0, 128
    %657 = vxpose.xlu0.b32.cont [8/16] 0.0, 128
    %658 = vxpose.xlu0.b32.cont [9/16] 0.0, 128
    %659 = vxpose.xlu0.b32.cont [10/16] 0.0, 128
    %660 = vxpose.xlu0.b32.cont [11/16] 0.0, 128
    %661 = vxpose.xlu0.b32.cont [12/16] 0.0, 128
    %662 = vxpose.xlu0.b32.cont [13/16] 0.0, 128
    %663 = vxpose.xlu0.b32.cont [14/16] 0.0, 128
    %664 = vxpose.xlu0.b32.cont [15/16] 0.0, 128
    %665 = vxpose.xlu0.b32.end [16/16] 0.0, 128
    %v666 = vpop.trf.xlu0
    %v667 = vpop.trf.xlu0
    %v668 = vpop.trf.xlu0
    %v669 = vpop.trf.xlu0
    %v670 = vpop.trf.xlu0
    %v671 = vpop.trf.xlu0
    %v672 = vpop.trf.xlu0
    %v673 = vpop.trf.xlu0
    %v674 = vpop.trf.xlu0
    %v675 = vpop.trf.xlu0
    %v676 = vpop.trf.xlu0
    %v677 = vpop.trf.xlu0
    %v678 = vpop.trf.xlu0
    %v679 = vpop.trf.xlu0
    %v680 = vpop.trf.xlu0
    %v681 = vpop.trf.xlu0
    %vm682 = vcmp.gt.f32.partialorder %v666, 0.0
    %vm683 = vcmp.gt.f32.partialorder %v667, 0.0
    %v684 = vsel %vm649, 1, 0
    %vm685 = vcmp.eq.s32.totalorder %v684, 1
    %v686 = vsel %vm682, 1, 0
    %v687 = vsel %vm683, 1, 0
    %688 = vset.pattern.permute.xlu0 0
    %689 = vperm.xlu0 %688, %v686
    %v690 = vpop.permute.xlu0 %689
    %691 = vset.pattern.permute.xlu0 0
    %692 = vperm.xlu0 %691, %v687
    %v693 = vpop.permute.xlu0 %692
    %vm694 = vcmp.eq.s32.totalorder %v690, 1
    %vm695 = vcmp.eq.s32.totalorder %v693, 1
    %vm696 = vmand %vm685, %vm694
    %vm697 = vmand %vm685, %vm695
    %vm698 = vmand %vm647, %vm696
    %vm699 = vmand %vm648, %vm697
    %v700 = vsel %vm698, 1, 0
    %v701 = vsel %vm699, 1, 0
    %v702 = vcvt.s32.f32 %v700
    %v703 = vcvt.s32.f32 %v701
    %v704 = vsel %vm698, %v562, inf
    %v705 = vsel %vm699, %v563, inf
    %706 = vst.msk [vmem:[#allocation2] sm:$0xff] %vm256, %v704
    %707 = vst.msk [vmem:[#allocation2 + $0x8] sm:$0xff] %vm256, %v705
    loop: start=0, step=1, limit=16
    $region90: #{edgecut_forward.1} parent=1 // loop_pre_header
      _
    $region91: #{edgecut_forward.1} parent=1 // loop_header
      %s709 = sphi 0, %s713
      %p710 = scmp.ge.s32.totalorder %s709, 16
      %v714 = vphi 0.0, %v923
      %v715 = vphi 0.0, %v924
    $region92: #{edgecut_forward.1} parent=1 // loop_header_branch
      %712 = sbr.rel (%p710) target = $region96
    $region93: #{edgecut_forward.1} parent=1 // loop_body
      %s716 = scalar_lea.vmem [#allocation2], %s709
      %v717 = vld [vmem:[%s716] sm:$0x1]
      %s719 = vtos %v717
      %v720 = vstv %s719
      %vm722 = vcmp.ge.f32.partialorder %v704, %v720
      %vm723 = vcmp.ge.f32.partialorder %v705, %v720
      %v724 = vsel %vm722, 1, 0
      %v725 = vsel %vm723, 1, 0
      %v726 = vcvt.s32.f32 %v724
      %v727 = vcvt.s32.f32 %v725
      %v728 = vadd.f32 %v714, %v726
      %v729 = vadd.f32 %v715, %v727
      %730 = vrot.lane.b32.xlu0 %v717, 127
      %v731 = vpop.permute.xlu0 %730
      %s732 = vtos %v731
      %v733 = vstv %s732
      %vm735 = vcmp.ge.f32.partialorder %v704, %v733
      %vm736 = vcmp.ge.f32.partialorder %v705, %v733
      %v737 = vsel %vm735, 1, 0
      %v738 = vsel %vm736, 1, 0
      %v739 = vcvt.s32.f32 %v737
      %v740 = vcvt.s32.f32 %v738
      %v741 = vadd.f32 %v728, %v739
      %v742 = vadd.f32 %v729, %v740
      %743 = vrot.lane.b32.xlu0 %v717, 126
      %v744 = vpop.permute.xlu0 %743
      %s745 = vtos %v744
      %v746 = vstv %s745
      %vm748 = vcmp.ge.f32.partialorder %v704, %v746
      %vm749 = vcmp.ge.f32.partialorder %v705, %v746
      %v750 = vsel %vm748, 1, 0
      %v751 = vsel %vm749, 1, 0
      %v752 = vcvt.s32.f32 %v750
      %v753 = vcvt.s32.f32 %v751
      %v754 = vadd.f32 %v741, %v752
      %v755 = vadd.f32 %v742, %v753
      %756 = vrot.lane.b32.xlu0 %v717, 125
      %v757 = vpop.permute.xlu0 %756
      %s758 = vtos %v757
      %v759 = vstv %s758
      %vm761 = vcmp.ge.f32.partialorder %v704, %v759
      %vm762 = vcmp.ge.f32.partialorder %v705, %v759
      %v763 = vsel %vm761, 1, 0
      %v764 = vsel %vm762, 1, 0
      %v765 = vcvt.s32.f32 %v763
      %v766 = vcvt.s32.f32 %v764
      %v767 = vadd.f32 %v754, %v765
      %v768 = vadd.f32 %v755, %v766
      %769 = vrot.lane.b32.xlu0 %v717, 124
      %v770 = vpop.permute.xlu0 %769
      %s771 = vtos %v770
      %v772 = vstv %s771
      %vm774 = vcmp.ge.f32.partialorder %v704, %v772
      %vm775 = vcmp.ge.f32.partialorder %v705, %v772
      %v776 = vsel %vm774, 1, 0
      %v777 = vsel %vm775, 1, 0
      %v778 = vcvt.s32.f32 %v776
      %v779 = vcvt.s32.f32 %v777
      %v780 = vadd.f32 %v767, %v778
      %v781 = vadd.f32 %v768, %v779
      %782 = vrot.lane.b32.xlu0 %v717, 123
      %v783 = vpop.permute.xlu0 %782
      %s784 = vtos %v783
      %v785 = vstv %s784
      %vm787 = vcmp.ge.f32.partialorder %v704, %v785
      %vm788 = vcmp.ge.f32.partialorder %v705, %v785
      %v789 = vsel %vm787, 1, 0
      %v790 = vsel %vm788, 1, 0
      %v791 = vcvt.s32.f32 %v789
      %v792 = vcvt.s32.f32 %v790
      %v793 = vadd.f32 %v780, %v791
      %v794 = vadd.f32 %v781, %v792
      %795 = vrot.lane.b32.xlu0 %v717, 122
      %v796 = vpop.permute.xlu0 %795
      %s797 = vtos %v796
      %v798 = vstv %s797
      %vm800 = vcmp.ge.f32.partialorder %v704, %v798
      %vm801 = vcmp.ge.f32.partialorder %v705, %v798
      %v802 = vsel %vm800, 1, 0
      %v803 = vsel %vm801, 1, 0
      %v804 = vcvt.s32.f32 %v802
      %v805 = vcvt.s32.f32 %v803
      %v806 = vadd.f32 %v793, %v804
      %v807 = vadd.f32 %v794, %v805
      %808 = vrot.lane.b32.xlu0 %v717, 121
      %v809 = vpop.permute.xlu0 %808
      %s810 = vtos %v809
      %v811 = vstv %s810
      %vm813 = vcmp.ge.f32.partialorder %v704, %v811
      %vm814 = vcmp.ge.f32.partialorder %v705, %v811
      %v815 = vsel %vm813, 1, 0
      %v816 = vsel %vm814, 1, 0
      %v817 = vcvt.s32.f32 %v815
      %v818 = vcvt.s32.f32 %v816
      %v819 = vadd.f32 %v806, %v817
      %v820 = vadd.f32 %v807, %v818
      %821 = vrot.lane.b32.xlu0 %v717, 120
      %v822 = vpop.permute.xlu0 %821
      %s823 = vtos %v822
      %v824 = vstv %s823
      %vm826 = vcmp.ge.f32.partialorder %v704, %v824
      %vm827 = vcmp.ge.f32.partialorder %v705, %v824
      %v828 = vsel %vm826, 1, 0
      %v829 = vsel %vm827, 1, 0
      %v830 = vcvt.s32.f32 %v828
      %v831 = vcvt.s32.f32 %v829
      %v832 = vadd.f32 %v819, %v830
      %v833 = vadd.f32 %v820, %v831
      %834 = vrot.lane.b32.xlu0 %v717, 119
      %v835 = vpop.permute.xlu0 %834
      %s836 = vtos %v835
      %v837 = vstv %s836
      %vm839 = vcmp.ge.f32.partialorder %v704, %v837
      %vm840 = vcmp.ge.f32.partialorder %v705, %v837
      %v841 = vsel %vm839, 1, 0
      %v842 = vsel %vm840, 1, 0
      %v843 = vcvt.s32.f32 %v841
      %v844 = vcvt.s32.f32 %v842
      %v845 = vadd.f32 %v832, %v843
      %v846 = vadd.f32 %v833, %v844
      %847 = vrot.lane.b32.xlu0 %v717, 118
      %v848 = vpop.permute.xlu0 %847
      %s849 = vtos %v848
      %v850 = vstv %s849
      %vm852 = vcmp.ge.f32.partialorder %v704, %v850
      %vm853 = vcmp.ge.f32.partialorder %v705, %v850
      %v854 = vsel %vm852, 1, 0
      %v855 = vsel %vm853, 1, 0
      %v856 = vcvt.s32.f32 %v854
      %v857 = vcvt.s32.f32 %v855
      %v858 = vadd.f32 %v845, %v856
      %v859 = vadd.f32 %v846, %v857
      %860 = vrot.lane.b32.xlu0 %v717, 117
      %v861 = vpop.permute.xlu0 %860
      %s862 = vtos %v861
      %v863 = vstv %s862
      %vm865 = vcmp.ge.f32.partialorder %v704, %v863
      %vm866 = vcmp.ge.f32.partialorder %v705, %v863
      %v867 = vsel %vm865, 1, 0
      %v868 = vsel %vm866, 1, 0
      %v869 = vcvt.s32.f32 %v867
      %v870 = vcvt.s32.f32 %v868
      %v871 = vadd.f32 %v858, %v869
      %v872 = vadd.f32 %v859, %v870
      %873 = vrot.lane.b32.xlu0 %v717, 116
      %v874 = vpop.permute.xlu0 %873
      %s875 = vtos %v874
      %v876 = vstv %s875
      %vm878 = vcmp.ge.f32.partialorder %v704, %v876
      %vm879 = vcmp.ge.f32.partialorder %v705, %v876
      %v880 = vsel %vm878, 1, 0
      %v881 = vsel %vm879, 1, 0
      %v882 = vcvt.s32.f32 %v880
      %v883 = vcvt.s32.f32 %v881
      %v884 = vadd.f32 %v871, %v882
      %v885 = vadd.f32 %v872, %v883
      %886 = vrot.lane.b32.xlu0 %v717, 115
      %v887 = vpop.permute.xlu0 %886
      %s888 = vtos %v887
      %v889 = vstv %s888
      %vm891 = vcmp.ge.f32.partialorder %v704, %v889
      %vm892 = vcmp.ge.f32.partialorder %v705, %v889
      %v893 = vsel %vm891, 1, 0
      %v894 = vsel %vm892, 1, 0
      %v895 = vcvt.s32.f32 %v893
      %v896 = vcvt.s32.f32 %v894
      %v897 = vadd.f32 %v884, %v895
      %v898 = vadd.f32 %v885, %v896
      %899 = vrot.lane.b32.xlu0 %v717, 114
      %v900 = vpop.permute.xlu0 %899
      %s901 = vtos %v900
      %v902 = vstv %s901
      %vm904 = vcmp.ge.f32.partialorder %v704, %v902
      %vm905 = vcmp.ge.f32.partialorder %v705, %v902
      %v906 = vsel %vm904, 1, 0
      %v907 = vsel %vm905, 1, 0
      %v908 = vcvt.s32.f32 %v906
      %v909 = vcvt.s32.f32 %v907
      %v910 = vadd.f32 %v897, %v908
      %v911 = vadd.f32 %v898, %v909
      %912 = vrot.lane.b32.xlu0 %v717, 113
      %v913 = vpop.permute.xlu0 %912
      %s914 = vtos %v913
      %v915 = vstv %s914
      %vm917 = vcmp.ge.f32.partialorder %v704, %v915
      %vm918 = vcmp.ge.f32.partialorder %v705, %v915
      %v919 = vsel %vm917, 1, 0
      %v920 = vsel %vm918, 1, 0
      %v921 = vcvt.s32.f32 %v919
      %v922 = vcvt.s32.f32 %v920
      %v923 = vadd.f32 %v910, %v921
      %v924 = vadd.f32 %v911, %v922
    $region94: #{edgecut_forward.1} parent=1 // loop_footer
      %s713 = sadd.s32 1, %s709
    $region95: #{edgecut_forward.1} parent=1 // loop_footer_branch
      %708 = sbr.rel target = $region91
    $region96: #{edgecut_forward.1} parent=1 // loop_exit
      _
    %v925 = vsel %vm256, %v702, 0.0
    %926 = vadd.xlane.f32.xlu0 %v925
    %v927 = vpop.xlane.xlu0 %926
    %v928 = vsel %vm256, %v703, 0.0
    %929 = vadd.xlane.f32.xlu0 %v928
    %v930 = vpop.xlane.xlu0 %929
    %v931 = vadd.f32 %v927, %v930
    %v932 = vrot.slane %v931, 4
    %v933 = vadd.f32 %v931, %v932
    %v934 = vrot.slane %v933, 2
    %v935 = vadd.f32 %v933, %v934
    %v936 = vrot.slane %v935, 1
    %v937 = vadd.f32 %v935, %v936
    %v938 = vsub.f32 %v937, 1.0
    %v939 = vmul.f32 %v938, 60.0
    %v940 = vrcp.pop 100.0
    %v941 = vmul.f32 %v939, %v940
    %v942 = vfloor.f32 %v941
    %v943 = vsub.f32 %v941, %v942
    %v944 = vadd.f32 %v942, 1.0
    %v945 = vmin.f32 %v944, %v938
    %vm946 = vcmp.ge.f32.partialorder %v714, %v944
    %vm947 = vcmp.ge.f32.partialorder %v715, %v944
    %vm948 = vmand %vm698, %vm946
    %vm949 = vmand %vm699, %vm947
    %v950 = vsel %vm948, %v704, inf
    %v951 = vsel %vm949, %v705, inf
    %v952 = vsel %vm256, %v950, inf
    %953 = vmin.xlane.f32.xlu0 %v952
    %v954 = vpop.xlane.xlu0 %953
    %v955 = vsel %vm256, %v951, inf
    %956 = vmin.xlane.f32.xlu0 %v955
    %v957 = vpop.xlane.xlu0 %956
    %v958 = vmin.f32 %v954, %v957
    %v959 = vrot.slane %v958, 4
    %v960 = vmin.f32 %v958, %v959
    %v961 = vrot.slane %v960, 2
    %v962 = vmin.f32 %v960, %v961
    %v963 = vrot.slane %v962, 1
    %v964 = vmin.f32 %v962, %v963
    %v965 = vadd.f32 %v945, 1.0
    %vm966 = vcmp.ge.f32.partialorder %v714, %v965
    %vm967 = vcmp.ge.f32.partialorder %v715, %v965
    %vm968 = vmand %vm698, %vm966
    %vm969 = vmand %vm699, %vm967
    %v970 = vsel %vm968, %v704, inf
    %v971 = vsel %vm969, %v705, inf
    %v972 = vsel %vm256, %v970, inf
    %973 = vmin.xlane.f32.xlu0 %v972
    %v974 = vpop.xlane.xlu0 %973
    %v975 = vsel %vm256, %v971, inf
    %976 = vmin.xlane.f32.xlu0 %v975
    %v977 = vpop.xlane.xlu0 %976
    %v978 = vmin.f32 %v974, %v977
    %v979 = vrot.slane %v978, 4
    %v980 = vmin.f32 %v978, %v979
    %v981 = vrot.slane %v980, 2
    %v982 = vmin.f32 %v980, %v981
    %v983 = vrot.slane %v982, 1
    %v984 = vmin.f32 %v982, %v983
    %v985 = vsub.f32 1.0, %v943
    %v986 = vmul.f32 %v985, %v964
    %v987 = vmul.f32 %v943, %v984
    %v988 = vadd.f32 %v986, %v987
    %vm989 = vcmp.ge.f32.partialorder %v562, %v988
    %vm990 = vcmp.ge.f32.partialorder %v563, %v988
    %v991 = vsel %vm989, 1, 0
    %v992 = vsel %vm990, 1, 0
    %v993 = vcvt.s32.f32 %v991
    %v994 = vcvt.s32.f32 %v992
    %v995 = vmul.f32 %v562, %v993
    %v996 = vmul.f32 %v563, %v994
    %vm997 = vcmp.gt.f32.partialorder %v995, 0.0
    %vm998 = vcmp.gt.f32.partialorder %v996, 0.0
    %v999 = vsel %vm997, 1, 0
    %v1000 = vsel %vm998, 1, 0
    %v1001 = vcvt.s32.f32 %v999
    %v1002 = vcvt.s32.f32 %v1000
    %v1003 = vsel %vm256, %v1001, 0.0
    %1004 = vadd.xlane.f32.xlu0 %v1003
    %v1005 = vpop.xlane.xlu0 %1004
    %v1006 = vsel %vm256, %v1002, 0.0
    %1007 = vadd.xlane.f32.xlu0 %v1006
    %v1008 = vpop.xlane.xlu0 %1007
    %v1009 = vmax.f32 %v1005, 1.0
    %v1010 = vmax.f32 %v1008, 1.0
    %v1011 = vrcp.pop %v1009
    %v1012 = vrcp.pop %v1010
    %v1013 = vmul.f32 %v995, %v1011
    %v1014 = vmul.f32 %v996, %v1012
    %v1016 = vsel %vm256, %v1001, 0
    %v1019 = vsel %vm256, %v1002, 0
    %1021 = vmatprep.subr.mxu0 0.0
    %1022 = vmatpush1.msra.mxu0 0.0
    %1023 = vmatprep.subr.mxu0 0.0
    %1024 = vmatpush1.msra.mxu0 0.0
    %1025 = vmatprep.subr.mxu0 0.0
    %1026 = vmatpush1.msra.mxu0 0.0
    %1027 = vmatprep.subr.mxu0 0.0
    %1028 = vmatpush1.msra.mxu0 0.0
    %1029 = vmatprep.subr.mxu0 0.0
    %1030 = vmatpush1.msra.mxu0 0.0
    %1031 = vmatprep.subr.mxu0 0.0
    %1032 = vmatpush1.msra.mxu0 0.0
    %1033 = vmatprep.subr.mxu0 0.0
    %1034 = vmatpush1.msra.mxu0 0.0
    %1035 = vmatprep.subr.mxu0 0.0
    %1036 = vmatpush1.msra.mxu0 0.0
    %1037 = vmatprep.subr.mxu0 0.0
    %1038 = vmatpush1.msra.mxu0 0.0
    %1039 = vmatprep.subr.mxu0 0.0
    %1040 = vmatpush1.msra.mxu0 0.0
    %1041 = vmatprep.subr.mxu0 0.0
    %1042 = vmatpush1.msra.mxu0 0.0
    %1043 = vmatprep.subr.mxu0 0.0
    %1044 = vmatpush1.msra.mxu0 0.0
    %1045 = vmatprep.subr.mxu0 0.0
    %1046 = vmatpush1.msra.mxu0 0.0
    %1047 = vmatprep.subr.mxu0 0.0
    %1048 = vmatpush1.msra.mxu0 0.0
    %1049 = vmatprep.subr.mxu0 0.0
    %1050 = vmatpush1.msra.mxu0 %v1002
    %1051 = vmatprep.subr.mxu0 0.0
    %1052 = vmatpush1.msra.mxu0 %v1001
    %1053 = vmatprep.subr.mxu0 0.0
    %1054 = vmatpush2.msra.mxu0 0.0
    %1055 = vmatprep.subr.mxu0 0.0
    %1056 = vmatpush2.msra.mxu0 0.0
    %1057 = vmatprep.subr.mxu0 0.0
    %1058 = vmatpush2.msra.mxu0 0.0
    %1059 = vmatprep.subr.mxu0 0.0
    %1060 = vmatpush2.msra.mxu0 0.0
    %1061 = vmatprep.subr.mxu0 0.0
    %1062 = vmatpush2.msra.mxu0 0.0
    %1063 = vmatprep.subr.mxu0 0.0
    %1064 = vmatpush2.msra.mxu0 0.0
    %1065 = vmatprep.subr.mxu0 0.0
    %1066 = vmatpush2.msra.mxu0 0.0
    %1067 = vmatprep.subr.mxu0 0.0
    %1068 = vmatpush2.msra.mxu0 0.0
    %1069 = vmatprep.subr.mxu0 0.0
    %1070 = vmatpush2.msra.mxu0 0.0
    %1071 = vmatprep.subr.mxu0 0.0
    %1072 = vmatpush2.msra.mxu0 0.0
    %1073 = vmatprep.subr.mxu0 0.0
    %1074 = vmatpush2.msra.mxu0 0.0
    %1075 = vmatprep.subr.mxu0 0.0
    %1076 = vmatpush2.msra.mxu0 0.0
    %1077 = vmatprep.subr.mxu0 0.0
    %1078 = vmatpush2.msra.mxu0 0.0
    %1079 = vmatprep.subr.mxu0 0.0
    %1080 = vmatpush2.msra.mxu0 0.0
    %1081 = vmatprep.subr.mxu0 0.0
    %1082 = vmatpush2.msra.mxu0 0.0
    %1083 = vmatprep.subr.mxu0 0.0
    %1084 = vmatpush2.msra.mxu0 0.0
    %1085 = vmatprep.mubr.f32.mxu0 0.0
    %1086 = vmatmul.mubr.f32.gmra.mxu0 %v1016
    %v1087 = vpop.f32.mrf.mxu0
    %v1088 = vadd.f32 0.0, %v1087
    %v1089 = vpop.f32.mrf.mxu0
    %1090 = vmatprep.mubr.f32.mxu0 0.0
    %1091 = vmatmul.mubr.f32.gmra.mxu0 %v1019
    %v1092 = vpop.f32.mrf.mxu0
    %v1093 = vadd.f32 0.0, %v1092
    %v1094 = vpop.f32.mrf.mxu0
    %1095 = vdwg.mxu0
    %vm1096 = vcmp.gt.f32.partialorder %v1088, 0.0
    %vm1097 = vcmp.gt.f32.partialorder %v1093, 0.0
    %v1098 = vsel %vm1096, 1, 0
    %v1099 = vsel %vm1097, 1, 0
    %v1100 = vcvt.s32.f32 %v1098
    %v1101 = vcvt.s32.f32 %v1099
    %v1103 = vsel %vm256, %v1100, 0
    %v1106 = vsel %vm256, %v1101, 0
    %1108 = vmatprep.subr.mxu0 0.0
    %1109 = vmatpush1.msra.mxu0 0.0
    %1110 = vmatprep.subr.mxu0 0.0
    %1111 = vmatpush1.msra.mxu0 0.0
    %1112 = vmatprep.subr.mxu0 0.0
    %1113 = vmatpush1.msra.mxu0 0.0
    %1114 = vmatprep.subr.mxu0 0.0
    %1115 = vmatpush1.msra.mxu0 0.0
    %1116 = vmatprep.subr.mxu0 0.0
    %1117 = vmatpush1.msra.mxu0 0.0
    %1118 = vmatprep.subr.mxu0 0.0
    %1119 = vmatpush1.msra.mxu0 0.0
    %1120 = vmatprep.subr.mxu0 0.0
    %1121 = vmatpush1.msra.mxu0 0.0
    %1122 = vmatprep.subr.mxu0 0.0
    %1123 = vmatpush1.msra.mxu0 0.0
    %1124 = vmatprep.subr.mxu0 0.0
    %1125 = vmatpush1.msra.mxu0 0.0
    %1126 = vmatprep.subr.mxu0 0.0
    %1127 = vmatpush1.msra.mxu0 0.0
    %1128 = vmatprep.subr.mxu0 0.0
    %1129 = vmatpush1.msra.mxu0 0.0
    %1130 = vmatprep.subr.mxu0 0.0
    %1131 = vmatpush1.msra.mxu0 0.0
    %1132 = vmatprep.subr.mxu0 0.0
    %1133 = vmatpush1.msra.mxu0 0.0
    %1134 = vmatprep.subr.mxu0 0.0
    %1135 = vmatpush1.msra.mxu0 0.0
    %1136 = vmatprep.subr.mxu0 0.0
    %1137 = vmatpush1.msra.mxu0 %v1101
    %1138 = vmatprep.subr.mxu0 0.0
    %1139 = vmatpush1.msra.mxu0 %v1100
    %1140 = vmatprep.subr.mxu0 0.0
    %1141 = vmatpush2.msra.mxu0 0.0
    %1142 = vmatprep.subr.mxu0 0.0
    %1143 = vmatpush2.msra.mxu0 0.0
    %1144 = vmatprep.subr.mxu0 0.0
    %1145 = vmatpush2.msra.mxu0 0.0
    %1146 = vmatprep.subr.mxu0 0.0
    %1147 = vmatpush2.msra.mxu0 0.0
    %1148 = vmatprep.subr.mxu0 0.0
    %1149 = vmatpush2.msra.mxu0 0.0
    %1150 = vmatprep.subr.mxu0 0.0
    %1151 = vmatpush2.msra.mxu0 0.0
    %1152 = vmatprep.subr.mxu0 0.0
    %1153 = vmatpush2.msra.mxu0 0.0
    %1154 = vmatprep.subr.mxu0 0.0
    %1155 = vmatpush2.msra.mxu0 0.0
    %1156 = vmatprep.subr.mxu0 0.0
    %1157 = vmatpush2.msra.mxu0 0.0
    %1158 = vmatprep.subr.mxu0 0.0
    %1159 = vmatpush2.msra.mxu0 0.0
    %1160 = vmatprep.subr.mxu0 0.0
    %1161 = vmatpush2.msra.mxu0 0.0
    %1162 = vmatprep.subr.mxu0 0.0
    %1163 = vmatpush2.msra.mxu0 0.0
    %1164 = vmatprep.subr.mxu0 0.0
    %1165 = vmatpush2.msra.mxu0 0.0
    %1166 = vmatprep.subr.mxu0 0.0
    %1167 = vmatpush2.msra.mxu0 0.0
    %1168 = vmatprep.subr.mxu0 0.0
    %1169 = vmatpush2.msra.mxu0 0.0
    %1170 = vmatprep.subr.mxu0 0.0
    %1171 = vmatpush2.msra.mxu0 0.0
    %1172 = vmatprep.mubr.f32.mxu0 0.0
    %1173 = vmatmul.mubr.f32.gmra.mxu0 %v1103
    %v1174 = vpop.f32.mrf.mxu0
    %v1175 = vadd.f32 0.0, %v1174
    %v1176 = vpop.f32.mrf.mxu0
    %1177 = vmatprep.mubr.f32.mxu0 0.0
    %1178 = vmatmul.mubr.f32.gmra.mxu0 %v1106
    %v1179 = vpop.f32.mrf.mxu0
    %v1180 = vadd.f32 0.0, %v1179
    %v1181 = vpop.f32.mrf.mxu0
    %1182 = vdwg.mxu0
    %vm1183 = vcmp.gt.f32.partialorder %v1175, 0.0
    %vm1184 = vcmp.gt.f32.partialorder %v1180, 0.0
    %v1185 = vsel %vm1183, 1, 0
    %v1186 = vsel %vm1184, 1, 0
    %v1187 = vcvt.s32.f32 %v1185
    %v1188 = vcvt.s32.f32 %v1186
    %v1190 = vsel %vm256, %v1187, 0
    %v1193 = vsel %vm256, %v1188, 0
    %1195 = vmatprep.subr.mxu0 0.0
    %1196 = vmatpush1.msra.mxu0 0.0
    %1197 = vmatprep.subr.mxu0 0.0
    %1198 = vmatpush1.msra.mxu0 0.0
    %1199 = vmatprep.subr.mxu0 0.0
    %1200 = vmatpush1.msra.mxu0 0.0
    %1201 = vmatprep.subr.mxu0 0.0
    %1202 = vmatpush1.msra.mxu0 0.0
    %1203 = vmatprep.subr.mxu0 0.0
    %1204 = vmatpush1.msra.mxu0 0.0
    %1205 = vmatprep.subr.mxu0 0.0
    %1206 = vmatpush1.msra.mxu0 0.0
    %1207 = vmatprep.subr.mxu0 0.0
    %1208 = vmatpush1.msra.mxu0 0.0
    %1209 = vmatprep.subr.mxu0 0.0
    %1210 = vmatpush1.msra.mxu0 0.0
    %1211 = vmatprep.subr.mxu0 0.0
    %1212 = vmatpush1.msra.mxu0 0.0
    %1213 = vmatprep.subr.mxu0 0.0
    %1214 = vmatpush1.msra.mxu0 0.0
    %1215 = vmatprep.subr.mxu0 0.0
    %1216 = vmatpush1.msra.mxu0 0.0
    %1217 = vmatprep.subr.mxu0 0.0
    %1218 = vmatpush1.msra.mxu0 0.0
    %1219 = vmatprep.subr.mxu0 0.0
    %1220 = vmatpush1.msra.mxu0 0.0
    %1221 = vmatprep.subr.mxu0 0.0
    %1222 = vmatpush1.msra.mxu0 0.0
    %1223 = vmatprep.subr.mxu0 0.0
    %1224 = vmatpush1.msra.mxu0 %v1188
    %1225 = vmatprep.subr.mxu0 0.0
    %1226 = vmatpush1.msra.mxu0 %v1187
    %1227 = vmatprep.subr.mxu0 0.0
    %1228 = vmatpush2.msra.mxu0 0.0
    %1229 = vmatprep.subr.mxu0 0.0
    %1230 = vmatpush2.msra.mxu0 0.0
    %1231 = vmatprep.subr.mxu0 0.0
    %1232 = vmatpush2.msra.mxu0 0.0
    %1233 = vmatprep.subr.mxu0 0.0
    %1234 = vmatpush2.msra.mxu0 0.0
    %1235 = vmatprep.subr.mxu0 0.0
    %1236 = vmatpush2.msra.mxu0 0.0
    %1237 = vmatprep.subr.mxu0 0.0
    %1238 = vmatpush2.msra.mxu0 0.0
    %1239 = vmatprep.subr.mxu0 0.0
    %1240 = vmatpush2.msra.mxu0 0.0
    %1241 = vmatprep.subr.mxu0 0.0
    %1242 = vmatpush2.msra.mxu0 0.0
    %1243 = vmatprep.subr.mxu0 0.0
    %1244 = vmatpush2.msra.mxu0 0.0
    %1245 = vmatprep.subr.mxu0 0.0
    %1246 = vmatpush2.msra.mxu0 0.0
    %1247 = vmatprep.subr.mxu0 0.0
    %1248 = vmatpush2.msra.mxu0 0.0
    %1249 = vmatprep.subr.mxu0 0.0
    %1250 = vmatpush2.msra.mxu0 0.0
    %1251 = vmatprep.subr.mxu0 0.0
    %1252 = vmatpush2.msra.mxu0 0.0
    %1253 = vmatprep.subr.mxu0 0.0
    %1254 = vmatpush2.msra.mxu0 0.0
    %1255 = vmatprep.subr.mxu0 0.0
    %1256 = vmatpush2.msra.mxu0 0.0
    %1257 = vmatprep.subr.mxu0 0.0
    %1258 = vmatpush2.msra.mxu0 0.0
    %1259 = vmatprep.mubr.f32.mxu0 0.0
    %1260 = vmatmul.mubr.f32.gmra.mxu0 %v1190
    %v1261 = vpop.f32.mrf.mxu0
    %v1262 = vadd.f32 0.0, %v1261
    %v1263 = vpop.f32.mrf.mxu0
    %1264 = vmatprep.mubr.f32.mxu0 0.0
    %1265 = vmatmul.mubr.f32.gmra.mxu0 %v1193
    %v1266 = vpop.f32.mrf.mxu0
    %v1267 = vadd.f32 0.0, %v1266
    %v1268 = vpop.f32.mrf.mxu0
    %1269 = vdwg.mxu0
    %vm1270 = vcmp.gt.f32.partialorder %v1262, 0.0
    %vm1271 = vcmp.gt.f32.partialorder %v1267, 0.0
    %v1272 = vsel %vm1270, 1, 0
    %v1273 = vsel %vm1271, 1, 0
    %v1274 = vcvt.s32.f32 %v1272
    %v1275 = vcvt.s32.f32 %v1273
    %v1277 = vsel %vm256, %v1274, 0
    %v1280 = vsel %vm256, %v1275, 0
    %1282 = vmatprep.subr.mxu0 0.0
    %1283 = vmatpush1.msra.mxu0 0.0
    %1284 = vmatprep.subr.mxu0 0.0
    %1285 = vmatpush1.msra.mxu0 0.0
    %1286 = vmatprep.subr.mxu0 0.0
    %1287 = vmatpush1.msra.mxu0 0.0
    %1288 = vmatprep.subr.mxu0 0.0
    %1289 = vmatpush1.msra.mxu0 0.0
    %1290 = vmatprep.subr.mxu0 0.0
    %1291 = vmatpush1.msra.mxu0 0.0
    %1292 = vmatprep.subr.mxu0 0.0
    %1293 = vmatpush1.msra.mxu0 0.0
    %1294 = vmatprep.subr.mxu0 0.0
    %1295 = vmatpush1.msra.mxu0 0.0
    %1296 = vmatprep.subr.mxu0 0.0
    %1297 = vmatpush1.msra.mxu0 0.0
    %1298 = vmatprep.subr.mxu0 0.0
    %1299 = vmatpush1.msra.mxu0 0.0
    %1300 = vmatprep.subr.mxu0 0.0
    %1301 = vmatpush1.msra.mxu0 0.0
    %1302 = vmatprep.subr.mxu0 0.0
    %1303 = vmatpush1.msra.mxu0 0.0
    %1304 = vmatprep.subr.mxu0 0.0
    %1305 = vmatpush1.msra.mxu0 0.0
    %1306 = vmatprep.subr.mxu0 0.0
    %1307 = vmatpush1.msra.mxu0 0.0
    %1308 = vmatprep.subr.mxu0 0.0
    %1309 = vmatpush1.msra.mxu0 0.0
    %1310 = vmatprep.subr.mxu0 0.0
    %1311 = vmatpush1.msra.mxu0 %v1275
    %1312 = vmatprep.subr.mxu0 0.0
    %1313 = vmatpush1.msra.mxu0 %v1274
    %1314 = vmatprep.subr.mxu0 0.0
    %1315 = vmatpush2.msra.mxu0 0.0
    %1316 = vmatprep.subr.mxu0 0.0
    %1317 = vmatpush2.msra.mxu0 0.0
    %1318 = vmatprep.subr.mxu0 0.0
    %1319 = vmatpush2.msra.mxu0 0.0
    %1320 = vmatprep.subr.mxu0 0.0
    %1321 = vmatpush2.msra.mxu0 0.0
    %1322 = vmatprep.subr.mxu0 0.0
    %1323 = vmatpush2.msra.mxu0 0.0
    %1324 = vmatprep.subr.mxu0 0.0
    %1325 = vmatpush2.msra.mxu0 0.0
    %1326 = vmatprep.subr.mxu0 0.0
    %1327 = vmatpush2.msra.mxu0 0.0
    %1328 = vmatprep.subr.mxu0 0.0
    %1329 = vmatpush2.msra.mxu0 0.0
    %1330 = vmatprep.subr.mxu0 0.0
    %1331 = vmatpush2.msra.mxu0 0.0
    %1332 = vmatprep.subr.mxu0 0.0
    %1333 = vmatpush2.msra.mxu0 0.0
    %1334 = vmatprep.subr.mxu0 0.0
    %1335 = vmatpush2.msra.mxu0 0.0
    %1336 = vmatprep.subr.mxu0 0.0
    %1337 = vmatpush2.msra.mxu0 0.0
    %1338 = vmatprep.subr.mxu0 0.0
    %1339 = vmatpush2.msra.mxu0 0.0
    %1340 = vmatprep.subr.mxu0 0.0
    %1341 = vmatpush2.msra.mxu0 0.0
    %1342 = vmatprep.subr.mxu0 0.0
    %1343 = vmatpush2.msra.mxu0 0.0
    %1344 = vmatprep.subr.mxu0 0.0
    %1345 = vmatpush2.msra.mxu0 0.0
    %1346 = vmatprep.mubr.f32.mxu0 0.0
    %1347 = vmatmul.mubr.f32.gmra.mxu0 %v1277
    %v1348 = vpop.f32.mrf.mxu0
    %v1349 = vadd.f32 0.0, %v1348
    %v1350 = vpop.f32.mrf.mxu0
    %1351 = vmatprep.mubr.f32.mxu0 0.0
    %1352 = vmatmul.mubr.f32.gmra.mxu0 %v1280
    %v1353 = vpop.f32.mrf.mxu0
    %v1354 = vadd.f32 0.0, %v1353
    %v1355 = vpop.f32.mrf.mxu0
    %1356 = vdwg.mxu0
    %vm1357 = vcmp.gt.f32.partialorder %v1349, 0.0
    %vm1358 = vcmp.gt.f32.partialorder %v1354, 0.0
    %v1359 = vsel %vm1357, 1, 0
    %v1360 = vsel %vm1358, 1, 0
    %v1361 = vcvt.s32.f32 %v1359
    %v1362 = vcvt.s32.f32 %v1360
    %vm1363 = vcmp.gt.f32.partialorder %v1361, 0.0
    %vm1364 = vcmp.gt.f32.partialorder %v1362, 0.0
    %v1365 = vsel %vm1363, %v157, 1e+09
    %v1366 = vsel %vm1364, %v157, 1e+09
    %v1367 = vsel %vm256, %v1365, inf
    %1368 = vmin.xlane.f32.xlu0 %v1367
    %v1369 = vpop.xlane.xlu0 %1368
    %v1370 = vsel %vm256, %v1366, inf
    %1371 = vmin.xlane.f32.xlu0 %v1370
    %v1372 = vpop.xlane.xlu0 %1371
    %v1373 = vsel %vm1363, %v155, 1e+09
    %v1374 = vsel %vm1364, %v156, 1e+09
    %v1375 = vsel %vm256, %v1373, inf
    %v1376 = vsel %vm256, %v1374, inf
    %v1377 = vmin.f32 %v1375, %v1376
    %v1378 = vrot.slane %v1377, 4
    %v1379 = vmin.f32 %v1377, %v1378
    %v1380 = vrot.slane %v1379, 2
    %v1381 = vmin.f32 %v1379, %v1380
    %v1382 = vrot.slane %v1381, 1
    %v1383 = vmin.f32 %v1381, %v1382
    %vm1384 = vcmp.eq.f32.partialorder %v155, %v1383
    %vm1385 = vcmp.eq.f32.partialorder %v156, %v1383
    %v1386 = vsel %vm1384, 1, 0
    %v1387 = vsel %vm1385, 1, 0
    %v1388 = vcvt.s32.f32 %v1386
    %v1389 = vcvt.s32.f32 %v1387
    %vm1390 = vcmp.eq.f32.partialorder %v157, %v1369
    %vm1391 = vcmp.eq.f32.partialorder %v157, %v1372
    %v1392 = vsel %vm1390, 1, 0
    %v1393 = vsel %vm1391, 1, 0
    %v1394 = vcvt.s32.f32 %v1392
    %v1395 = vcvt.s32.f32 %v1393
    %v1397 = vsel %vm256, %v1388, 0
    %v1400 = vsel %vm256, %v1389, 0
    %1402 = vmatprep.subr.mxu0 0.0
    %1403 = vmatpush1.msra.mxu0 0.0
    %1404 = vmatprep.subr.mxu0 0.0
    %1405 = vmatpush1.msra.mxu0 0.0
    %1406 = vmatprep.subr.mxu0 0.0
    %1407 = vmatpush1.msra.mxu0 0.0
    %1408 = vmatprep.subr.mxu0 0.0
    %1409 = vmatpush1.msra.mxu0 0.0
    %1410 = vmatprep.subr.mxu0 0.0
    %1411 = vmatpush1.msra.mxu0 0.0
    %1412 = vmatprep.subr.mxu0 0.0
    %1413 = vmatpush1.msra.mxu0 0.0
    %1414 = vmatprep.subr.mxu0 0.0
    %1415 = vmatpush1.msra.mxu0 0.0
    %1416 = vmatprep.subr.mxu0 0.0
    %1417 = vmatpush1.msra.mxu0 0.0
    %1418 = vmatprep.subr.mxu0 0.0
    %1419 = vmatpush1.msra.mxu0 0.0
    %1420 = vmatprep.subr.mxu0 0.0
    %1421 = vmatpush1.msra.mxu0 0.0
    %1422 = vmatprep.subr.mxu0 0.0
    %1423 = vmatpush1.msra.mxu0 0.0
    %1424 = vmatprep.subr.mxu0 0.0
    %1425 = vmatpush1.msra.mxu0 0.0
    %1426 = vmatprep.subr.mxu0 0.0
    %1427 = vmatpush1.msra.mxu0 0.0
    %1428 = vmatprep.subr.mxu0 0.0
    %1429 = vmatpush1.msra.mxu0 0.0
    %1430 = vmatprep.subr.mxu0 0.0
    %1431 = vmatpush1.msra.mxu0 %v154
    %1432 = vmatprep.subr.mxu0 0.0
    %1433 = vmatpush1.msra.mxu0 %v153
    %1434 = vmatprep.subr.mxu0 0.0
    %1435 = vmatpush2.msra.mxu0 0.0
    %1436 = vmatprep.subr.mxu0 0.0
    %1437 = vmatpush2.msra.mxu0 0.0
    %1438 = vmatprep.subr.mxu0 0.0
    %1439 = vmatpush2.msra.mxu0 0.0
    %1440 = vmatprep.subr.mxu0 0.0
    %1441 = vmatpush2.msra.mxu0 0.0
    %1442 = vmatprep.subr.mxu0 0.0
    %1443 = vmatpush2.msra.mxu0 0.0
    %1444 = vmatprep.subr.mxu0 0.0
    %1445 = vmatpush2.msra.mxu0 0.0
    %1446 = vmatprep.subr.mxu0 0.0
    %1447 = vmatpush2.msra.mxu0 0.0
    %1448 = vmatprep.subr.mxu0 0.0
    %1449 = vmatpush2.msra.mxu0 0.0
    %1450 = vmatprep.subr.mxu0 0.0
    %1451 = vmatpush2.msra.mxu0 0.0
    %1452 = vmatprep.subr.mxu0 0.0
    %1453 = vmatpush2.msra.mxu0 0.0
    %1454 = vmatprep.subr.mxu0 0.0
    %1455 = vmatpush2.msra.mxu0 0.0
    %1456 = vmatprep.subr.mxu0 0.0
    %1457 = vmatpush2.msra.mxu0 0.0
    %1458 = vmatprep.subr.mxu0 0.0
    %1459 = vmatpush2.msra.mxu0 0.0
    %1460 = vmatprep.subr.mxu0 0.0
    %1461 = vmatpush2.msra.mxu0 0.0
    %1462 = vmatprep.subr.mxu0 0.0
    %1463 = vmatpush2.msra.mxu0 0.0
    %1464 = vmatprep.subr.mxu0 0.0
    %1465 = vmatpush2.msra.mxu0 0.0
    %1466 = vmatprep.mubr.f32.mxu0 0.0
    %1467 = vmatmul.mubr.f32.gmra.mxu0 %v1397
    %v1468 = vpop.f32.mrf.mxu0
    %v1469 = vadd.f32 0.0, %v1468
    %v1470 = vpop.f32.mrf.mxu0
    %1471 = vmatprep.mubr.f32.mxu0 0.0
    %1472 = vmatmul.mubr.f32.gmra.mxu0 %v1400
    %v1473 = vpop.f32.mrf.mxu0
    %v1474 = vadd.f32 0.0, %v1473
    %v1475 = vpop.f32.mrf.mxu0
    %1476 = vdwg.mxu0
    %1477 = vst [vmem:[%s17] sm:$0xff] %v1469
    %1478 = vst [vmem:[%s17 + $0x8] sm:$0xff] %v1474
    %v1480 = vsel %vm256, %v1013, 0
    %v1483 = vsel %vm256, %v1014, 0
    %1485 = vmatprep.subr.mxu0 0.0
    %1486 = vmatpush1.msra.mxu0 0.0
    %1487 = vmatprep.subr.mxu0 0.0
    %1488 = vmatpush1.msra.mxu0 0.0
    %1489 = vmatprep.subr.mxu0 0.0
    %1490 = vmatpush1.msra.mxu0 0.0
    %1491 = vmatprep.subr.mxu0 0.0
    %1492 = vmatpush1.msra.mxu0 0.0
    %1493 = vmatprep.subr.mxu0 0.0
    %1494 = vmatpush1.msra.mxu0 0.0
    %1495 = vmatprep.subr.mxu0 0.0
    %1496 = vmatpush1.msra.mxu0 0.0
    %1497 = vmatprep.subr.mxu0 0.0
    %1498 = vmatpush1.msra.mxu0 0.0
    %1499 = vmatprep.subr.mxu0 0.0
    %1500 = vmatpush1.msra.mxu0 0.0
    %1501 = vmatprep.subr.mxu0 0.0
    %1502 = vmatpush1.msra.mxu0 0.0
    %1503 = vmatprep.subr.mxu0 0.0
    %1504 = vmatpush1.msra.mxu0 0.0
    %1505 = vmatprep.subr.mxu0 0.0
    %1506 = vmatpush1.msra.mxu0 0.0
    %1507 = vmatprep.subr.mxu0 0.0
    %1508 = vmatpush1.msra.mxu0 0.0
    %1509 = vmatprep.subr.mxu0 0.0
    %1510 = vmatpush1.msra.mxu0 0.0
    %1511 = vmatprep.subr.mxu0 0.0
    %1512 = vmatpush1.msra.mxu0 0.0
    %1513 = vmatprep.subr.mxu0 0.0
    %1514 = vmatpush1.msra.mxu0 %v351
    %1515 = vmatprep.subr.mxu0 0.0
    %1516 = vmatpush1.msra.mxu0 %v350
    %1517 = vmatprep.subr.mxu0 0.0
    %1518 = vmatpush2.msra.mxu0 0.0
    %1519 = vmatprep.subr.mxu0 0.0
    %1520 = vmatpush2.msra.mxu0 0.0
    %1521 = vmatprep.subr.mxu0 0.0
    %1522 = vmatpush2.msra.mxu0 0.0
    %1523 = vmatprep.subr.mxu0 0.0
    %1524 = vmatpush2.msra.mxu0 0.0
    %1525 = vmatprep.subr.mxu0 0.0
    %1526 = vmatpush2.msra.mxu0 0.0
    %1527 = vmatprep.subr.mxu0 0.0
    %1528 = vmatpush2.msra.mxu0 0.0
    %1529 = vmatprep.subr.mxu0 0.0
    %1530 = vmatpush2.msra.mxu0 0.0
    %1531 = vmatprep.subr.mxu0 0.0
    %1532 = vmatpush2.msra.mxu0 0.0
    %1533 = vmatprep.subr.mxu0 0.0
    %1534 = vmatpush2.msra.mxu0 0.0
    %1535 = vmatprep.subr.mxu0 0.0
    %1536 = vmatpush2.msra.mxu0 0.0
    %1537 = vmatprep.subr.mxu0 0.0
    %1538 = vmatpush2.msra.mxu0 0.0
    %1539 = vmatprep.subr.mxu0 0.0
    %1540 = vmatpush2.msra.mxu0 0.0
    %1541 = vmatprep.subr.mxu0 0.0
    %1542 = vmatpush2.msra.mxu0 0.0
    %1543 = vmatprep.subr.mxu0 0.0
    %1544 = vmatpush2.msra.mxu0 0.0
    %1545 = vmatprep.subr.mxu0 0.0
    %1546 = vmatpush2.msra.mxu0 0.0
    %1547 = vmatprep.subr.mxu0 0.0
    %1548 = vmatpush2.msra.mxu0 0.0
    %1549 = vmatprep.mubr.f32.mxu0 0.0
    %1550 = vmatmul.mubr.f32.gmra.mxu0 %v1480
    %v1551 = vpop.f32.mrf.mxu0
    %v1552 = vadd.f32 0.0, %v1551
    %v1553 = vpop.f32.mrf.mxu0
    %1554 = vmatprep.mubr.f32.mxu0 0.0
    %1555 = vmatmul.mubr.f32.gmra.mxu0 %v1483
    %v1556 = vpop.f32.mrf.mxu0
    %v1557 = vadd.f32 0.0, %v1556
    %v1558 = vpop.f32.mrf.mxu0
    %1559 = vdwg.mxu0
    %1560 = vmatprep.subr.mxu0 0.0
    %1561 = vmatpush1.msra.mxu0 0.0
    %1562 = vmatprep.subr.mxu0 0.0
    %1563 = vmatpush1.msra.mxu0 0.0
    %1564 = vmatprep.subr.mxu0 0.0
    %1565 = vmatpush1.msra.mxu0 0.0
    %1566 = vmatprep.subr.mxu0 0.0
    %1567 = vmatpush1.msra.mxu0 0.0
    %1568 = vmatprep.subr.mxu0 0.0
    %1569 = vmatpush1.msra.mxu0 0.0
    %1570 = vmatprep.subr.mxu0 0.0
    %1571 = vmatpush1.msra.mxu0 0.0
    %1572 = vmatprep.subr.mxu0 0.0
    %1573 = vmatpush1.msra.mxu0 0.0
    %1574 = vmatprep.subr.mxu0 0.0
    %1575 = vmatpush1.msra.mxu0 0.0
    %1576 = vmatprep.subr.mxu0 0.0
    %1577 = vmatpush1.msra.mxu0 0.0
    %1578 = vmatprep.subr.mxu0 0.0
    %1579 = vmatpush1.msra.mxu0 0.0
    %1580 = vmatprep.subr.mxu0 0.0
    %1581 = vmatpush1.msra.mxu0 0.0
    %1582 = vmatprep.subr.mxu0 0.0
    %1583 = vmatpush1.msra.mxu0 0.0
    %1584 = vmatprep.subr.mxu0 0.0
    %1585 = vmatpush1.msra.mxu0 0.0
    %1586 = vmatprep.subr.mxu0 0.0
    %1587 = vmatpush1.msra.mxu0 0.0
    %1588 = vmatprep.subr.mxu0 0.0
    %1589 = vmatpush1.msra.mxu0 %v1557
    %1590 = vmatprep.subr.mxu0 0.0
    %1591 = vmatpush1.msra.mxu0 %v1552
    %1592 = vmatprep.subr.mxu0 0.0
    %1593 = vmatpush2.msra.mxu0 0.0
    %1594 = vmatprep.subr.mxu0 0.0
    %1595 = vmatpush2.msra.mxu0 0.0
    %1596 = vmatprep.subr.mxu0 0.0
    %1597 = vmatpush2.msra.mxu0 0.0
    %1598 = vmatprep.subr.mxu0 0.0
    %1599 = vmatpush2.msra.mxu0 0.0
    %1600 = vmatprep.subr.mxu0 0.0
    %1601 = vmatpush2.msra.mxu0 0.0
    %1602 = vmatprep.subr.mxu0 0.0
    %1603 = vmatpush2.msra.mxu0 0.0
    %1604 = vmatprep.subr.mxu0 0.0
    %1605 = vmatpush2.msra.mxu0 0.0
    %1606 = vmatprep.subr.mxu0 0.0
    %1607 = vmatpush2.msra.mxu0 0.0
    %1608 = vmatprep.subr.mxu0 0.0
    %1609 = vmatpush2.msra.mxu0 0.0
    %1610 = vmatprep.subr.mxu0 0.0
    %1611 = vmatpush2.msra.mxu0 0.0
    %1612 = vmatprep.subr.mxu0 0.0
    %1613 = vmatpush2.msra.mxu0 0.0
    %1614 = vmatprep.subr.mxu0 0.0
    %1615 = vmatpush2.msra.mxu0 0.0
    %1616 = vmatprep.subr.mxu0 0.0
    %1617 = vmatpush2.msra.mxu0 0.0
    %1618 = vmatprep.subr.mxu0 0.0
    %1619 = vmatpush2.msra.mxu0 0.0
    %1620 = vmatprep.subr.mxu0 0.0
    %1621 = vmatpush2.msra.mxu0 0.0
    %1622 = vmatprep.subr.mxu0 0.0
    %1623 = vmatpush2.msra.mxu0 0.0
    %1624 = vmatprep.mubr.f32.mxu0 0.0
    %1625 = vmatmul.mubr.f32.gmra.mxu0 %v1397
    %v1626 = vpop.f32.mrf.mxu0
    %v1627 = vadd.f32 0.0, %v1626
    %v1628 = vpop.f32.mrf.mxu0
    %1629 = vmatprep.mubr.f32.mxu0 0.0
    %1630 = vmatmul.mubr.f32.gmra.mxu0 %v1400
    %v1631 = vpop.f32.mrf.mxu0
    %v1632 = vadd.f32 0.0, %v1631
    %v1633 = vpop.f32.mrf.mxu0
    %1634 = vdwg.mxu0
    %v1635 = vmul.f32 %v1627, %v1627
    %v1636 = vmul.f32 %v1632, %v1632
    %1637 = vadd.xlane.f32.xlu0 %v1635
    %v1638 = vpop.xlane.xlu0 %1637
    %1639 = vadd.xlane.f32.xlu0 %v1636
    %v1640 = vpop.xlane.xlu0 %1639
    %v1641 = vmax.f32 %v1638, 1e-24
    %v1642 = vmax.f32 %v1640, 1e-24
    %v1643 = vrsqrt.pop %v1641
    %v1644 = vrsqrt.pop %v1642
    %v1645 = vmul.f32 %v1627, %v1643
    %v1646 = vmul.f32 %v1632, %v1644
    %1647 = vmatprep.subr.mxu0 0.0
    %1648 = vmatpush1.msra.mxu0 0.0
    %1649 = vmatprep.subr.mxu0 0.0
    %1650 = vmatpush1.msra.mxu0 0.0
    %1651 = vmatprep.subr.mxu0 0.0
    %1652 = vmatpush1.msra.mxu0 0.0
    %1653 = vmatprep.subr.mxu0 0.0
    %1654 = vmatpush1.msra.mxu0 0.0
    %1655 = vmatprep.subr.mxu0 0.0
    %1656 = vmatpush1.msra.mxu0 0.0
    %1657 = vmatprep.subr.mxu0 0.0
    %1658 = vmatpush1.msra.mxu0 0.0
    %1659 = vmatprep.subr.mxu0 0.0
    %1660 = vmatpush1.msra.mxu0 0.0
    %1661 = vmatprep.subr.mxu0 0.0
    %1662 = vmatpush1.msra.mxu0 0.0
    %1663 = vmatprep.subr.mxu0 0.0
    %1664 = vmatpush1.msra.mxu0 0.0
    %1665 = vmatprep.subr.mxu0 0.0
    %1666 = vmatpush1.msra.mxu0 0.0
    %1667 = vmatprep.subr.mxu0 0.0
    %1668 = vmatpush1.msra.mxu0 0.0
    %1669 = vmatprep.subr.mxu0 0.0
    %1670 = vmatpush1.msra.mxu0 0.0
    %1671 = vmatprep.subr.mxu0 0.0
    %1672 = vmatpush1.msra.mxu0 0.0
    %1673 = vmatprep.subr.mxu0 0.0
    %1674 = vmatpush1.msra.mxu0 0.0
    %1675 = vmatprep.subr.mxu0 0.0
    %1676 = vmatpush1.msra.mxu0 %v141
    %1677 = vmatprep.subr.mxu0 0.0
    %1678 = vmatpush1.msra.mxu0 %v140
    %1679 = vmatprep.subr.mxu0 0.0
    %1680 = vmatpush2.msra.mxu0 0.0
    %1681 = vmatprep.subr.mxu0 0.0
    %1682 = vmatpush2.msra.mxu0 0.0
    %1683 = vmatprep.subr.mxu0 0.0
    %1684 = vmatpush2.msra.mxu0 0.0
    %1685 = vmatprep.subr.mxu0 0.0
    %1686 = vmatpush2.msra.mxu0 0.0
    %1687 = vmatprep.subr.mxu0 0.0
    %1688 = vmatpush2.msra.mxu0 0.0
    %1689 = vmatprep.subr.mxu0 0.0
    %1690 = vmatpush2.msra.mxu0 0.0
    %1691 = vmatprep.subr.mxu0 0.0
    %1692 = vmatpush2.msra.mxu0 0.0
    %1693 = vmatprep.subr.mxu0 0.0
    %1694 = vmatpush2.msra.mxu0 0.0
    %1695 = vmatprep.subr.mxu0 0.0
    %1696 = vmatpush2.msra.mxu0 0.0
    %1697 = vmatprep.subr.mxu0 0.0
    %1698 = vmatpush2.msra.mxu0 0.0
    %1699 = vmatprep.subr.mxu0 0.0
    %1700 = vmatpush2.msra.mxu0 0.0
    %1701 = vmatprep.subr.mxu0 0.0
    %1702 = vmatpush2.msra.mxu0 0.0
    %1703 = vmatprep.subr.mxu0 0.0
    %1704 = vmatpush2.msra.mxu0 0.0
    %1705 = vmatprep.subr.mxu0 0.0
    %1706 = vmatpush2.msra.mxu0 0.0
    %1707 = vmatprep.subr.mxu0 0.0
    %1708 = vmatpush2.msra.mxu0 0.0
    %1709 = vmatprep.subr.mxu0 0.0
    %1710 = vmatpush2.msra.mxu0 0.0
    %1711 = vmatprep.mubr.f32.mxu0 0.0
    %1712 = vmatmul.mubr.f32.gmra.mxu0 %v1397
    %v1713 = vpop.f32.mrf.mxu0
    %v1714 = vadd.f32 0.0, %v1713
    %v1715 = vpop.f32.mrf.mxu0
    %1716 = vmatprep.mubr.f32.mxu0 0.0
    %1717 = vmatmul.mubr.f32.gmra.mxu0 %v1400
    %v1718 = vpop.f32.mrf.mxu0
    %v1719 = vadd.f32 0.0, %v1718
    %v1720 = vpop.f32.mrf.mxu0
    %1721 = vdwg.mxu0
    %v1723 = vsel %vm256, %v1714, 0
    %v1726 = vsel %vm256, %v1719, 0
    %1728 = vmatprep.subr.mxu0 0.0
    %1729 = vmatpush1.msra.mxu0 0.0
    %1730 = vmatprep.subr.mxu0 0.0
    %1731 = vmatpush1.msra.mxu0 0.0
    %1732 = vmatprep.subr.mxu0 0.0
    %1733 = vmatpush1.msra.mxu0 0.0
    %1734 = vmatprep.subr.mxu0 0.0
    %1735 = vmatpush1.msra.mxu0 0.0
    %1736 = vmatprep.subr.mxu0 0.0
    %1737 = vmatpush1.msra.mxu0 0.0
    %1738 = vmatprep.subr.mxu0 0.0
    %1739 = vmatpush1.msra.mxu0 0.0
    %1740 = vmatprep.subr.mxu0 0.0
    %1741 = vmatpush1.msra.mxu0 0.0
    %1742 = vmatprep.subr.mxu0 0.0
    %1743 = vmatpush1.msra.mxu0 0.0
    %1744 = vmatprep.subr.mxu0 0.0
    %1745 = vmatpush1.msra.mxu0 0.0
    %1746 = vmatprep.subr.mxu0 0.0
    %1747 = vmatpush1.msra.mxu0 0.0
    %1748 = vmatprep.subr.mxu0 0.0
    %1749 = vmatpush1.msra.mxu0 0.0
    %1750 = vmatprep.subr.mxu0 0.0
    %1751 = vmatpush1.msra.mxu0 0.0
    %1752 = vmatprep.subr.mxu0 0.0
    %1753 = vmatpush1.msra.mxu0 0.0
    %1754 = vmatprep.subr.mxu0 0.0
    %1755 = vmatpush1.msra.mxu0 0.0
    %1756 = vmatprep.subr.mxu0 0.0
    %1757 = vmatpush1.msra.mxu0 %v1395
    %1758 = vmatprep.subr.mxu0 0.0
    %1759 = vmatpush1.msra.mxu0 %v1394
    %1760 = vmatprep.subr.mxu0 0.0
    %1761 = vmatpush2.msra.mxu0 0.0
    %1762 = vmatprep.subr.mxu0 0.0
    %1763 = vmatpush2.msra.mxu0 0.0
    %1764 = vmatprep.subr.mxu0 0.0
    %1765 = vmatpush2.msra.mxu0 0.0
    %1766 = vmatprep.subr.mxu0 0.0
    %1767 = vmatpush2.msra.mxu0 0.0
    %1768 = vmatprep.subr.mxu0 0.0
    %1769 = vmatpush2.msra.mxu0 0.0
    %1770 = vmatprep.subr.mxu0 0.0
    %1771 = vmatpush2.msra.mxu0 0.0
    %1772 = vmatprep.subr.mxu0 0.0
    %1773 = vmatpush2.msra.mxu0 0.0
    %1774 = vmatprep.subr.mxu0 0.0
    %1775 = vmatpush2.msra.mxu0 0.0
    %1776 = vmatprep.subr.mxu0 0.0
    %1777 = vmatpush2.msra.mxu0 0.0
    %1778 = vmatprep.subr.mxu0 0.0
    %1779 = vmatpush2.msra.mxu0 0.0
    %1780 = vmatprep.subr.mxu0 0.0
    %1781 = vmatpush2.msra.mxu0 0.0
    %1782 = vmatprep.subr.mxu0 0.0
    %1783 = vmatpush2.msra.mxu0 0.0
    %1784 = vmatprep.subr.mxu0 0.0
    %1785 = vmatpush2.msra.mxu0 0.0
    %1786 = vmatprep.subr.mxu0 0.0
    %1787 = vmatpush2.msra.mxu0 0.0
    %1788 = vmatprep.subr.mxu0 0.0
    %1789 = vmatpush2.msra.mxu0 0.0
    %1790 = vmatprep.subr.mxu0 0.0
    %1791 = vmatpush2.msra.mxu0 0.0
    %1792 = vmatprep.mubr.f32.mxu0 0.0
    %1793 = vmatmul.mubr.f32.gmra.mxu0 %v1723
    %v1794 = vpop.f32.mrf.mxu0
    %v1795 = vadd.f32 0.0, %v1794
    %v1796 = vpop.f32.mrf.mxu0
    %1797 = vmatprep.mubr.f32.mxu0 0.0
    %1798 = vmatmul.mubr.f32.gmra.mxu0 %v1726
    %v1799 = vpop.f32.mrf.mxu0
    %v1800 = vadd.f32 0.0, %v1799
    %v1801 = vpop.f32.mrf.mxu0
    %1802 = vdwg.mxu0
    %1803 = vxpose.xlu0.b32.start [1/16] %v1795, 128
    %1804 = vxpose.xlu0.b32.cont [2/16] %v1800, 128
    %1805 = vxpose.xlu0.b32.cont [3/16] 0.0, 128
    %1806 = vxpose.xlu0.b32.cont [4/16] 0.0, 128
    %1807 = vxpose.xlu0.b32.cont [5/16] 0.0, 128
    %1808 = vxpose.xlu0.b32.cont [6/16] 0.0, 128
    %1809 = vxpose.xlu0.b32.cont [7/16] 0.0, 128
    %1810 = vxpose.xlu0.b32.cont [8/16] 0.0, 128
    %1811 = vxpose.xlu0.b32.cont [9/16] 0.0, 128
    %1812 = vxpose.xlu0.b32.cont [10/16] 0.0, 128
    %1813 = vxpose.xlu0.b32.cont [11/16] 0.0, 128
    %1814 = vxpose.xlu0.b32.cont [12/16] 0.0, 128
    %1815 = vxpose.xlu0.b32.cont [13/16] 0.0, 128
    %1816 = vxpose.xlu0.b32.cont [14/16] 0.0, 128
    %1817 = vxpose.xlu0.b32.cont [15/16] 0.0, 128
    %1818 = vxpose.xlu0.b32.end [16/16] 0.0, 128
    %v1819 = vpop.trf.xlu0
    %v1820 = vpop.trf.xlu0
    %v1821 = vpop.trf.xlu0
    %v1822 = vpop.trf.xlu0
    %v1823 = vpop.trf.xlu0
    %v1824 = vpop.trf.xlu0
    %v1825 = vpop.trf.xlu0
    %v1826 = vpop.trf.xlu0
    %v1827 = vpop.trf.xlu0
    %v1828 = vpop.trf.xlu0
    %v1829 = vpop.trf.xlu0
    %v1830 = vpop.trf.xlu0
    %v1831 = vpop.trf.xlu0
    %v1832 = vpop.trf.xlu0
    %v1833 = vpop.trf.xlu0
    %v1834 = vpop.trf.xlu0
    %v1835 = vadd.f32 %v1795, %v1819
    %v1836 = vadd.f32 %v1800, %v1820
    %v1837 = vmul.f32 %v1835, 0.5
    %v1838 = vmul.f32 %v1836, 0.5
    %v1839 = vadd.f32 %v1837, %v153
    %v1840 = vadd.f32 %v1838, %v154
    %v1841 = vsel %vm256, %v1839, 0.0
    %v1842 = vsel %vm256, %v1840, 0.0
    %v1843 = vadd.f32 %v1841, %v1842
    %v1844 = vrot.slane %v1843, 4
    %v1845 = vadd.f32 %v1843, %v1844
    %v1846 = vrot.slane %v1845, 2
    %v1847 = vadd.f32 %v1845, %v1846
    %v1848 = vrot.slane %v1847, 1
    %v1849 = vadd.f32 %v1847, %v1848
    %v1850 = vmax.f32 %v1849, 1e-12
    %v1851 = vrsqrt.pop %v1850
    %v1852 = vmul.f32 %v1839, %v1851
    %v1853 = vmul.f32 %v1840, %v1851
    %1854 = vxpose.xlu0.b32.start [1/16] %v1851, 128
    %1855 = vxpose.xlu0.b32.cont [2/16] 0.0, 128
    %1856 = vxpose.xlu0.b32.cont [3/16] 0.0, 128
    %1857 = vxpose.xlu0.b32.cont [4/16] 0.0, 128
    %1858 = vxpose.xlu0.b32.cont [5/16] 0.0, 128
    %1859 = vxpose.xlu0.b32.cont [6/16] 0.0, 128
    %1860 = vxpose.xlu0.b32.cont [7/16] 0.0, 128
    %1861 = vxpose.xlu0.b32.cont [8/16] 0.0, 128
    %1862 = vxpose.xlu0.b32.cont [9/16] 0.0, 128
    %1863 = vxpose.xlu0.b32.cont [10/16] 0.0, 128
    %1864 = vxpose.xlu0.b32.cont [11/16] 0.0, 128
    %1865 = vxpose.xlu0.b32.cont [12/16] 0.0, 128
    %1866 = vxpose.xlu0.b32.cont [13/16] 0.0, 128
    %1867 = vxpose.xlu0.b32.cont [14/16] 0.0, 128
    %1868 = vxpose.xlu0.b32.cont [15/16] 0.0, 128
    %1869 = vxpose.xlu0.b32.end [16/16] 0.0, 128
    %v1870 = vpop.trf.xlu0
    %v1871 = vpop.trf.xlu0
    %v1872 = vpop.trf.xlu0
    %v1873 = vpop.trf.xlu0
    %v1874 = vpop.trf.xlu0
    %v1875 = vpop.trf.xlu0
    %v1876 = vpop.trf.xlu0
    %v1877 = vpop.trf.xlu0
    %v1878 = vpop.trf.xlu0
    %v1879 = vpop.trf.xlu0
    %v1880 = vpop.trf.xlu0
    %v1881 = vpop.trf.xlu0
    %v1882 = vpop.trf.xlu0
    %v1883 = vpop.trf.xlu0
    %v1884 = vpop.trf.xlu0
    %v1885 = vpop.trf.xlu0
    %1887 = vset.pattern.permute.xlu0 0
    %1888 = vperm.xlu0 %1887, %v1870
    %v1889 = vpop.permute.xlu0 %1888
    %1892 = vset.pattern.permute.xlu0 0
    %1893 = vperm.xlu0 %1892, %v1871
    %v1894 = vpop.permute.xlu0 %1893
    %v1896 = vmul.f32 %v1852, %v1889
    %v1897 = vmul.f32 %v1853, %v1894
    %vm1898 = vcmp.eq.f32.partialorder %v1383, %v157
    %v1899 = vsel %vm1898, 1, 0
    %v1900 = vcvt.s32.f32 %v1899
    %s1901 = scalar_lea.vmem [#allocation3], 128
    %v1902 = vld [vmem:[%s1901] sm:$0xff]
    %v1903 = vld [vmem:[%s1901 + $0x8] sm:$0xff]
    %v1904 = vld [vmem:[%s1901 + $0x10] sm:$0xff]
    %v1905 = vld [vmem:[%s1901 + $0x18] sm:$0xff]
    %v1906 = vld [vmem:[%s1901 + $0x20] sm:$0xff]
    %v1907 = vld [vmem:[%s1901 + $0x28] sm:$0xff]
    %v1908 = vld [vmem:[%s1901 + $0x30] sm:$0xff]
    %v1909 = vld [vmem:[%s1901 + $0x38] sm:$0xff]
    %v1910 = vld [vmem:[%s1901 + $0x40] sm:$0xff]
    %v1911 = vld [vmem:[%s1901 + $0x48] sm:$0xff]
    %v1912 = vld [vmem:[%s1901 + $0x50] sm:$0xff]
    %v1913 = vld [vmem:[%s1901 + $0x58] sm:$0xff]
    %v1914 = vld [vmem:[%s1901 + $0x60] sm:$0xff]
    %v1915 = vld [vmem:[%s1901 + $0x68] sm:$0xff]
    %v1916 = vld [vmem:[%s1901 + $0x70] sm:$0xff]
    %v1917 = vld [vmem:[%s1901 + $0x78] sm:$0xff]
    %1918 = vmatprep.subr.mxu0 0.0
    %1919 = vmatpush1.msra.mxu0 %v1917
    %1920 = vmatprep.subr.mxu0 0.0
    %1921 = vmatpush1.msra.mxu0 %v1916
    %1922 = vmatprep.subr.mxu0 0.0
    %1923 = vmatpush1.msra.mxu0 %v1915
    %1924 = vmatprep.subr.mxu0 0.0
    %1925 = vmatpush1.msra.mxu0 %v1914
    %1926 = vmatprep.subr.mxu0 0.0
    %1927 = vmatpush1.msra.mxu0 %v1913
    %1928 = vmatprep.subr.mxu0 0.0
    %1929 = vmatpush1.msra.mxu0 %v1912
    %1930 = vmatprep.subr.mxu0 0.0
    %1931 = vmatpush1.msra.mxu0 %v1911
    %1932 = vmatprep.subr.mxu0 0.0
    %1933 = vmatpush1.msra.mxu0 %v1910
    %1934 = vmatprep.subr.mxu0 0.0
    %1935 = vmatpush1.msra.mxu0 %v1909
    %1936 = vmatprep.subr.mxu0 0.0
    %1937 = vmatpush1.msra.mxu0 %v1908
    %1938 = vmatprep.subr.mxu0 0.0
    %1939 = vmatpush1.msra.mxu0 %v1907
    %1940 = vmatprep.subr.mxu0 0.0
    %1941 = vmatpush1.msra.mxu0 %v1906
    %1942 = vmatprep.subr.mxu0 0.0
    %1943 = vmatpush1.msra.mxu0 %v1905
    %1944 = vmatprep.subr.mxu0 0.0
    %1945 = vmatpush1.msra.mxu0 %v1904
    %1946 = vmatprep.subr.mxu0 0.0
    %1947 = vmatpush1.msra.mxu0 %v1903
    %1948 = vmatprep.subr.mxu0 0.0
    %1949 = vmatpush1.msra.mxu0 %v1902
    %1950 = vmatprep.subr.mxu0 0.0
    %1951 = vmatpush2.msra.mxu0 0.0
    %1952 = vmatprep.subr.mxu0 0.0
    %1953 = vmatpush2.msra.mxu0 0.0
    %1954 = vmatprep.subr.mxu0 0.0
    %1955 = vmatpush2.msra.mxu0 0.0
    %1956 = vmatprep.subr.mxu0 0.0
    %1957 = vmatpush2.msra.mxu0 0.0
    %1958 = vmatprep.subr.mxu0 0.0
    %1959 = vmatpush2.msra.mxu0 0.0
    %1960 = vmatprep.subr.mxu0 0.0
    %1961 = vmatpush2.msra.mxu0 0.0
    %1962 = vmatprep.subr.mxu0 0.0
    %1963 = vmatpush2.msra.mxu0 0.0
    %1964 = vmatprep.subr.mxu0 0.0
    %1965 = vmatpush2.msra.mxu0 0.0
    %1966 = vmatprep.subr.mxu0 0.0
    %1967 = vmatpush2.msra.mxu0 0.0
    %1968 = vmatprep.subr.mxu0 0.0
    %1969 = vmatpush2.msra.mxu0 0.0
    %1970 = vmatprep.subr.mxu0 0.0
    %1971 = vmatpush2.msra.mxu0 0.0
    %1972 = vmatprep.subr.mxu0 0.0
    %1973 = vmatpush2.msra.mxu0 0.0
    %1974 = vmatprep.subr.mxu0 0.0
    %1975 = vmatpush2.msra.mxu0 0.0
    %1976 = vmatprep.subr.mxu0 0.0
    %1977 = vmatpush2.msra.mxu0 0.0
    %1978 = vmatprep.subr.mxu0 0.0
    %1979 = vmatpush2.msra.mxu0 0.0
    %1980 = vmatprep.subr.mxu0 0.0
    %1981 = vmatpush2.msra.mxu0 0.0
    %1982 = vmatprep.mubr.f32.mxu0 0.0
    %1983 = vmatmul.mubr.f32.gmra.mxu0 %v1645
    %v1984 = vpop.f32.mrf.mxu0
    %v1985 = vadd.f32 0.0, %v1984
    %v1986 = vpop.f32.mrf.mxu0
    %1987 = vmatprep.mubr.f32.mxu0 0.0
    %1988 = vmatmul.mubr.f32.gmra.mxu0 %v1646
    %v1989 = vpop.f32.mrf.mxu0
    %v1990 = vadd.f32 0.0, %v1989
    %v1991 = vpop.f32.mrf.mxu0
    %1992 = vdwg.mxu0
    %s1993 = scalar_lea.vmem %s4, 1
    %v1994 = vld [vmem:[%s1993] sm:$0x1]
    %v1996 = vlaneseq
    %v1997 = vshrl.u32 %v1996, 7
    %v1998 = vsub.s32 0, %v1997
    %v1999 = vrot.slane %v1994, %v1998
    %v2002 = vsel %vm256, %v1896, 0
    %v2005 = vsel %vm256, %v1897, 0
    %2007 = vmatprep.subr.mxu0 0.0
    %2008 = vmatpush1.msra.mxu0 0.0
    %2009 = vmatprep.subr.mxu0 0.0
    %2010 = vmatpush1.msra.mxu0 0.0
    %2011 = vmatprep.subr.mxu0 0.0
    %2012 = vmatpush1.msra.mxu0 0.0
    %2013 = vmatprep.subr.mxu0 0.0
    %2014 = vmatpush1.msra.mxu0 0.0
    %2015 = vmatprep.subr.mxu0 0.0
    %2016 = vmatpush1.msra.mxu0 0.0
    %2017 = vmatprep.subr.mxu0 0.0
    %2018 = vmatpush1.msra.mxu0 0.0
    %2019 = vmatprep.subr.mxu0 0.0
    %2020 = vmatpush1.msra.mxu0 0.0
    %2021 = vmatprep.subr.mxu0 0.0
    %2022 = vmatpush1.msra.mxu0 0.0
    %2023 = vmatprep.subr.mxu0 0.0
    %2024 = vmatpush1.msra.mxu0 0.0
    %2025 = vmatprep.subr.mxu0 0.0
    %2026 = vmatpush1.msra.mxu0 0.0
    %2027 = vmatprep.subr.mxu0 0.0
    %2028 = vmatpush1.msra.mxu0 0.0
    %2029 = vmatprep.subr.mxu0 0.0
    %2030 = vmatpush1.msra.mxu0 0.0
    %2031 = vmatprep.subr.mxu0 0.0
    %2032 = vmatpush1.msra.mxu0 0.0
    %2033 = vmatprep.subr.mxu0 0.0
    %2034 = vmatpush1.msra.mxu0 0.0
    %2035 = vmatprep.subr.mxu0 0.0
    %2036 = vmatpush1.msra.mxu0 %v1990
    %2037 = vmatprep.subr.mxu0 0.0
    %2038 = vmatpush1.msra.mxu0 %v1985
    %2039 = vmatprep.subr.mxu0 0.0
    %2040 = vmatpush2.msra.mxu0 0.0
    %2041 = vmatprep.subr.mxu0 0.0
    %2042 = vmatpush2.msra.mxu0 0.0
    %2043 = vmatprep.subr.mxu0 0.0
    %2044 = vmatpush2.msra.mxu0 0.0
    %2045 = vmatprep.subr.mxu0 0.0
    %2046 = vmatpush2.msra.mxu0 0.0
    %2047 = vmatprep.subr.mxu0 0.0
    %2048 = vmatpush2.msra.mxu0 0.0
    %2049 = vmatprep.subr.mxu0 0.0
    %2050 = vmatpush2.msra.mxu0 0.0
    %2051 = vmatprep.subr.mxu0 0.0
    %2052 = vmatpush2.msra.mxu0 0.0
    %2053 = vmatprep.subr.mxu0 0.0
    %2054 = vmatpush2.msra.mxu0 0.0
    %2055 = vmatprep.subr.mxu0 0.0
    %2056 = vmatpush2.msra.mxu0 0.0
    %2057 = vmatprep.subr.mxu0 0.0
    %2058 = vmatpush2.msra.mxu0 0.0
    %2059 = vmatprep.subr.mxu0 0.0
    %2060 = vmatpush2.msra.mxu0 0.0
    %2061 = vmatprep.subr.mxu0 0.0
    %2062 = vmatpush2.msra.mxu0 0.0
    %2063 = vmatprep.subr.mxu0 0.0
    %2064 = vmatpush2.msra.mxu0 0.0
    %2065 = vmatprep.subr.mxu0 0.0
    %2066 = vmatpush2.msra.mxu0 0.0
    %2067 = vmatprep.subr.mxu0 0.0
    %2068 = vmatpush2.msra.mxu0 0.0
    %2069 = vmatprep.subr.mxu0 0.0
    %2070 = vmatpush2.msra.mxu0 0.0
    %2071 = vmatprep.mubr.f32.mxu0 0.0
    %2072 = vmatmul.mubr.f32.gmra.mxu0 %v2002
    %v2073 = vpop.f32.mrf.mxu0
    %v2074 = vadd.f32 %v1999, %v2073
    %v2075 = vpop.f32.mrf.mxu0
    %2076 = vmatprep.mubr.f32.mxu0 0.0
    %2077 = vmatmul.mubr.f32.gmra.mxu0 %v2005
    %v2078 = vpop.f32.mrf.mxu0
    %v2079 = vadd.f32 %v1999, %v2078
    %v2080 = vpop.f32.mrf.mxu0
    %2081 = vdwg.mxu0
    %v2082 = vmax.f32 %v2074, 0.0
    %v2083 = vmax.f32 %v2079, 0.0
    %v2084 = vadd.f32 %v2082, %v1645
    %v2085 = vadd.f32 %v2083, %v1646
    %v2086 = vmul.f32 %v2084, %v2084
    %v2087 = vmul.f32 %v2085, %v2085
    %2088 = vadd.xlane.f32.xlu0 %v2086
    %v2089 = vpop.xlane.xlu0 %2088
    %2090 = vadd.xlane.f32.xlu0 %v2087
    %v2091 = vpop.xlane.xlu0 %2090
    %v2092 = vmax.f32 %v2089, 1e-24
    %v2093 = vmax.f32 %v2091, 1e-24
    %v2094 = vrsqrt.pop %v2092
    %v2095 = vrsqrt.pop %v2093
    %v2096 = vmul.f32 %v2084, %v2094
    %v2097 = vmul.f32 %v2085, %v2095
    %s2098 = scalar_lea.vmem [#allocation5], 128
    %v2099 = vld [vmem:[%s2098] sm:$0xff]
    %v2100 = vld [vmem:[%s2098 + $0x8] sm:$0xff]
    %v2101 = vld [vmem:[%s2098 + $0x10] sm:$0xff]
    %v2102 = vld [vmem:[%s2098 + $0x18] sm:$0xff]
    %v2103 = vld [vmem:[%s2098 + $0x20] sm:$0xff]
    %v2104 = vld [vmem:[%s2098 + $0x28] sm:$0xff]
    %v2105 = vld [vmem:[%s2098 + $0x30] sm:$0xff]
    %v2106 = vld [vmem:[%s2098 + $0x38] sm:$0xff]
    %v2107 = vld [vmem:[%s2098 + $0x40] sm:$0xff]
    %v2108 = vld [vmem:[%s2098 + $0x48] sm:$0xff]
    %v2109 = vld [vmem:[%s2098 + $0x50] sm:$0xff]
    %v2110 = vld [vmem:[%s2098 + $0x58] sm:$0xff]
    %v2111 = vld [vmem:[%s2098 + $0x60] sm:$0xff]
    %v2112 = vld [vmem:[%s2098 + $0x68] sm:$0xff]
    %v2113 = vld [vmem:[%s2098 + $0x70] sm:$0xff]
    %v2114 = vld [vmem:[%s2098 + $0x78] sm:$0xff]
    %s2115 = scalar_lea.vmem %s6, 1
    %v2116 = vld [vmem:[%s2115] sm:$0x1]
    %v2118 = vlaneseq
    %v2119 = vshrl.u32 %v2118, 7
    %v2120 = vsub.s32 0, %v2119
    %v2121 = vrot.slane %v2116, %v2120
    %2123 = vmatprep.subr.mxu0 0.0
    %2124 = vmatpush1.msra.mxu0 %v2114
    %2125 = vmatprep.subr.mxu0 0.0
    %2126 = vmatpush1.msra.mxu0 %v2113
    %2127 = vmatprep.subr.mxu0 0.0
    %2128 = vmatpush1.msra.mxu0 %v2112
    %2129 = vmatprep.subr.mxu0 0.0
    %2130 = vmatpush1.msra.mxu0 %v2111
    %2131 = vmatprep.subr.mxu0 0.0
    %2132 = vmatpush1.msra.mxu0 %v2110
    %2133 = vmatprep.subr.mxu0 0.0
    %2134 = vmatpush1.msra.mxu0 %v2109
    %2135 = vmatprep.subr.mxu0 0.0
    %2136 = vmatpush1.msra.mxu0 %v2108
    %2137 = vmatprep.subr.mxu0 0.0
    %2138 = vmatpush1.msra.mxu0 %v2107
    %2139 = vmatprep.subr.mxu0 0.0
    %2140 = vmatpush1.msra.mxu0 %v2106
    %2141 = vmatprep.subr.mxu0 0.0
    %2142 = vmatpush1.msra.mxu0 %v2105
    %2143 = vmatprep.subr.mxu0 0.0
    %2144 = vmatpush1.msra.mxu0 %v2104
    %2145 = vmatprep.subr.mxu0 0.0
    %2146 = vmatpush1.msra.mxu0 %v2103
    %2147 = vmatprep.subr.mxu0 0.0
    %2148 = vmatpush1.msra.mxu0 %v2102
    %2149 = vmatprep.subr.mxu0 0.0
    %2150 = vmatpush1.msra.mxu0 %v2101
    %2151 = vmatprep.subr.mxu0 0.0
    %2152 = vmatpush1.msra.mxu0 %v2100
    %2153 = vmatprep.subr.mxu0 0.0
    %2154 = vmatpush1.msra.mxu0 %v2099
    %2155 = vmatprep.subr.mxu0 0.0
    %2156 = vmatpush2.msra.mxu0 0.0
    %2157 = vmatprep.subr.mxu0 0.0
    %2158 = vmatpush2.msra.mxu0 0.0
    %2159 = vmatprep.subr.mxu0 0.0
    %2160 = vmatpush2.msra.mxu0 0.0
    %2161 = vmatprep.subr.mxu0 0.0
    %2162 = vmatpush2.msra.mxu0 0.0
    %2163 = vmatprep.subr.mxu0 0.0
    %2164 = vmatpush2.msra.mxu0 0.0
    %2165 = vmatprep.subr.mxu0 0.0
    %2166 = vmatpush2.msra.mxu0 0.0
    %2167 = vmatprep.subr.mxu0 0.0
    %2168 = vmatpush2.msra.mxu0 0.0
    %2169 = vmatprep.subr.mxu0 0.0
    %2170 = vmatpush2.msra.mxu0 0.0
    %2171 = vmatprep.subr.mxu0 0.0
    %2172 = vmatpush2.msra.mxu0 0.0
    %2173 = vmatprep.subr.mxu0 0.0
    %2174 = vmatpush2.msra.mxu0 0.0
    %2175 = vmatprep.subr.mxu0 0.0
    %2176 = vmatpush2.msra.mxu0 0.0
    %2177 = vmatprep.subr.mxu0 0.0
    %2178 = vmatpush2.msra.mxu0 0.0
    %2179 = vmatprep.subr.mxu0 0.0
    %2180 = vmatpush2.msra.mxu0 0.0
    %2181 = vmatprep.subr.mxu0 0.0
    %2182 = vmatpush2.msra.mxu0 0.0
    %2183 = vmatprep.subr.mxu0 0.0
    %2184 = vmatpush2.msra.mxu0 0.0
    %2185 = vmatprep.subr.mxu0 0.0
    %2186 = vmatpush2.msra.mxu0 0.0
    %2187 = vmatprep.mubr.f32.mxu0 0.0
    %2188 = vmatmul.mubr.f32.gmra.mxu0 %v2096
    %v2189 = vpop.f32.mrf.mxu0
    %v2190 = vadd.f32 %v2121, %v2189
    %v2191 = vpop.f32.mrf.mxu0
    %2192 = vmatprep.mubr.f32.mxu0 0.0
    %2193 = vmatmul.mubr.f32.gmra.mxu0 %v2097
    %v2194 = vpop.f32.mrf.mxu0
    %v2195 = vadd.f32 %v2121, %v2194
    %v2196 = vpop.f32.mrf.mxu0
    %2197 = vdwg.mxu0
    %s2198 = scalar_lea.vmem %s7, 1
    %v2199 = vld [vmem:[%s2198] sm:$0x1]
    %v2201 = vlaneseq
    %v2202 = vshrl.u32 %v2201, 7
    %v2203 = vsub.s32 0, %v2202
    %v2204 = vrot.slane %v2199, %v2203
    %v2206 = vmul.f32 %v2190, %v2204
    %v2207 = vmul.f32 %v2195, %v2204
    %2208 = vadd.xlane.f32.xlu0 %v2206
    %v2209 = vpop.xlane.xlu0 %2208
    %2210 = vadd.xlane.f32.xlu0 %v2207
    %v2211 = vpop.xlane.xlu0 %2210
    %s2212 = scalar_lea.vmem %s8, 1
    %v2213 = vld [vmem:[%s2212] sm:$0x1]
    %v2215 = vlaneseq
    %v2216 = vshrl.u32 %v2215, 7
    %v2217 = vsub.s32 0, %v2216
    %v2218 = vrot.slane %v2213, %v2217
    %v2220 = vmul.f32 %v2190, %v2218
    %v2221 = vmul.f32 %v2195, %v2218
    %2222 = vadd.xlane.f32.xlu0 %v2220
    %v2223 = vpop.xlane.xlu0 %2222
    %2224 = vadd.xlane.f32.xlu0 %v2221
    %v2225 = vpop.xlane.xlu0 %2224
    %2226 = vxpose.xlu0.b32.start [1/16] %v2223, 128
    %2227 = vxpose.xlu0.b32.cont [2/16] %v2225, 128
    %2228 = vxpose.xlu0.b32.cont [3/16] 0.0, 128
    %2229 = vxpose.xlu0.b32.cont [4/16] 0.0, 128
    %2230 = vxpose.xlu0.b32.cont [5/16] 0.0, 128
    %2231 = vxpose.xlu0.b32.cont [6/16] 0.0, 128
    %2232 = vxpose.xlu0.b32.cont [7/16] 0.0, 128
    %2233 = vxpose.xlu0.b32.cont [8/16] 0.0, 128
    %2234 = vxpose.xlu0.b32.cont [9/16] 0.0, 128
    %2235 = vxpose.xlu0.b32.cont [10/16] 0.0, 128
    %2236 = vxpose.xlu0.b32.cont [11/16] 0.0, 128
    %2237 = vxpose.xlu0.b32.cont [12/16] 0.0, 128
    %2238 = vxpose.xlu0.b32.cont [13/16] 0.0, 128
    %2239 = vxpose.xlu0.b32.cont [14/16] 0.0, 128
    %2240 = vxpose.xlu0.b32.cont [15/16] 0.0, 128
    %2241 = vxpose.xlu0.b32.end [16/16] 0.0, 128
    %v2242 = vpop.trf.xlu0
    %v2243 = vpop.trf.xlu0
    %v2244 = vpop.trf.xlu0
    %v2245 = vpop.trf.xlu0
    %v2246 = vpop.trf.xlu0
    %v2247 = vpop.trf.xlu0
    %v2248 = vpop.trf.xlu0
    %v2249 = vpop.trf.xlu0
    %v2250 = vpop.trf.xlu0
    %v2251 = vpop.trf.xlu0
    %v2252 = vpop.trf.xlu0
    %v2253 = vpop.trf.xlu0
    %v2254 = vpop.trf.xlu0
    %v2255 = vpop.trf.xlu0
    %v2256 = vpop.trf.xlu0
    %v2257 = vpop.trf.xlu0
    %v2258 = vlaneseq
    %v2259 = vshrl.u32 %v2258, 7
    %v2260 = vsub.s32 0, %v2259
    %v2261 = vrot.slane %v2242, %v2260
    %v2262 = vadd.f32 %v2209, %v2261
    %v2263 = vadd.f32 %v2211, %v2261
    %v2264 = vmul.f32 %v2262, 0.5
    %v2265 = vmul.f32 %v2263, 0.5
    %v2266 = vtanh.pop %v2264
    %v2267 = vtanh.pop %v2265
    %v2268 = vadd.f32 %v2266, 1.0
    %v2269 = vadd.f32 %v2267, 1.0
    %v2270 = vmul.f32 %v2268, 0.5
    %v2271 = vmul.f32 %v2269, 0.5
    %vm2272 = vcmp.gt.f32.partialorder %v1837, 0.0
    %vm2273 = vcmp.gt.f32.partialorder %v1838, 0.0
    %v2274 = vsel %vm2272, %v2270, 0.0
    %v2275 = vsel %vm2273, %v2271, 0.0
    %2276 = vxpose.xlu0.b32.start [1/16] %v2274, 128
    %2277 = vxpose.xlu0.b32.cont [2/16] %v2275, 128
    %2278 = vxpose.xlu0.b32.cont [3/16] 0.0, 128
    %2279 = vxpose.xlu0.b32.cont [4/16] 0.0, 128
    %2280 = vxpose.xlu0.b32.cont [5/16] 0.0, 128
    %2281 = vxpose.xlu0.b32.cont [6/16] 0.0, 128
    %2282 = vxpose.xlu0.b32.cont [7/16] 0.0, 128
    %2283 = vxpose.xlu0.b32.cont [8/16] 0.0, 128
    %2284 = vxpose.xlu0.b32.cont [9/16] 0.0, 128
    %2285 = vxpose.xlu0.b32.cont [10/16] 0.0, 128
    %2286 = vxpose.xlu0.b32.cont [11/16] 0.0, 128
    %2287 = vxpose.xlu0.b32.cont [12/16] 0.0, 128
    %2288 = vxpose.xlu0.b32.cont [13/16] 0.0, 128
    %2289 = vxpose.xlu0.b32.cont [14/16] 0.0, 128
    %2290 = vxpose.xlu0.b32.cont [15/16] 0.0, 128
    %2291 = vxpose.xlu0.b32.end [16/16] 0.0, 128
    %v2292 = vpop.trf.xlu0
    %v2293 = vpop.trf.xlu0
    %v2294 = vpop.trf.xlu0
    %v2295 = vpop.trf.xlu0
    %v2296 = vpop.trf.xlu0
    %v2297 = vpop.trf.xlu0
    %v2298 = vpop.trf.xlu0
    %v2299 = vpop.trf.xlu0
    %v2300 = vpop.trf.xlu0
    %v2301 = vpop.trf.xlu0
    %v2302 = vpop.trf.xlu0
    %v2303 = vpop.trf.xlu0
    %v2304 = vpop.trf.xlu0
    %v2305 = vpop.trf.xlu0
    %v2306 = vpop.trf.xlu0
    %v2307 = vpop.trf.xlu0
    %v2308 = vadd.f32 %v2274, %v2292
    %v2309 = vadd.f32 %v2275, %v2293
    %v2310 = vmul.f32 %v2308, 0.5
    %v2311 = vmul.f32 %v2309, 0.5
    %v2312 = vsel %vm149, 1.0, %v2310
    %v2313 = vsel %vm150, 1.0, %v2311
    %v2315 = vsel %vm256, %v2312, 0
    %v2318 = vsel %vm256, %v2313, 0
    %2320 = vmatprep.subr.mxu0 0.0
    %2321 = vmatpush1.msra.mxu0 0.0
    %2322 = vmatprep.subr.mxu0 0.0
    %2323 = vmatpush1.msra.mxu0 0.0
    %2324 = vmatprep.subr.mxu0 0.0
    %2325 = vmatpush1.msra.mxu0 0.0
    %2326 = vmatprep.subr.mxu0 0.0
    %2327 = vmatpush1.msra.mxu0 0.0
    %2328 = vmatprep.subr.mxu0 0.0
    %2329 = vmatpush1.msra.mxu0 0.0
    %2330 = vmatprep.subr.mxu0 0.0
    %2331 = vmatpush1.msra.mxu0 0.0
    %2332 = vmatprep.subr.mxu0 0.0
    %2333 = vmatpush1.msra.mxu0 0.0
    %2334 = vmatprep.subr.mxu0 0.0
    %2335 = vmatpush1.msra.mxu0 0.0
    %2336 = vmatprep.subr.mxu0 0.0
    %2337 = vmatpush1.msra.mxu0 0.0
    %2338 = vmatprep.subr.mxu0 0.0
    %2339 = vmatpush1.msra.mxu0 0.0
    %2340 = vmatprep.subr.mxu0 0.0
    %2341 = vmatpush1.msra.mxu0 0.0
    %2342 = vmatprep.subr.mxu0 0.0
    %2343 = vmatpush1.msra.mxu0 0.0
    %2344 = vmatprep.subr.mxu0 0.0
    %2345 = vmatpush1.msra.mxu0 0.0
    %2346 = vmatprep.subr.mxu0 0.0
    %2347 = vmatpush1.msra.mxu0 0.0
    %2348 = vmatprep.subr.mxu0 0.0
    %2349 = vmatpush1.msra.mxu0 %v154
    %2350 = vmatprep.subr.mxu0 0.0
    %2351 = vmatpush1.msra.mxu0 %v153
    %2352 = vmatprep.subr.mxu0 0.0
    %2353 = vmatpush2.msra.mxu0 0.0
    %2354 = vmatprep.subr.mxu0 0.0
    %2355 = vmatpush2.msra.mxu0 0.0
    %2356 = vmatprep.subr.mxu0 0.0
    %2357 = vmatpush2.msra.mxu0 0.0
    %2358 = vmatprep.subr.mxu0 0.0
    %2359 = vmatpush2.msra.mxu0 0.0
    %2360 = vmatprep.subr.mxu0 0.0
    %2361 = vmatpush2.msra.mxu0 0.0
    %2362 = vmatprep.subr.mxu0 0.0
    %2363 = vmatpush2.msra.mxu0 0.0
    %2364 = vmatprep.subr.mxu0 0.0
    %2365 = vmatpush2.msra.mxu0 0.0
    %2366 = vmatprep.subr.mxu0 0.0
    %2367 = vmatpush2.msra.mxu0 0.0
    %2368 = vmatprep.subr.mxu0 0.0
    %2369 = vmatpush2.msra.mxu0 0.0
    %2370 = vmatprep.subr.mxu0 0.0
    %2371 = vmatpush2.msra.mxu0 0.0
    %2372 = vmatprep.subr.mxu0 0.0
    %2373 = vmatpush2.msra.mxu0 0.0
    %2374 = vmatprep.subr.mxu0 0.0
    %2375 = vmatpush2.msra.mxu0 0.0
    %2376 = vmatprep.subr.mxu0 0.0
    %2377 = vmatpush2.msra.mxu0 0.0
    %2378 = vmatprep.subr.mxu0 0.0
    %2379 = vmatpush2.msra.mxu0 0.0
    %2380 = vmatprep.subr.mxu0 0.0
    %2381 = vmatpush2.msra.mxu0 0.0
    %2382 = vmatprep.subr.mxu0 0.0
    %2383 = vmatpush2.msra.mxu0 0.0
    %2384 = vmatprep.mubr.f32.mxu0 0.0
    %2385 = vmatmul.mubr.f32.gmra.mxu0 %v2315
    %v2386 = vpop.f32.mrf.mxu0
    %v2387 = vadd.f32 0.0, %v2386
    %v2388 = vpop.f32.mrf.mxu0
    %2389 = vmatprep.mubr.f32.mxu0 0.0
    %2390 = vmatmul.mubr.f32.gmra.mxu0 %v2318
    %v2391 = vpop.f32.mrf.mxu0
    %v2392 = vadd.f32 0.0, %v2391
    %v2393 = vpop.f32.mrf.mxu0
    %2394 = vdwg.mxu0
    %s2395 = scalar_lea.vmem %s18, 16
    %2396 = vst [vmem:[%s2395] sm:$0xff] %v2387
    %2397 = vst [vmem:[%s2395 + $0x8] sm:$0xff] %v2392
    %vm2398 = vcmp.gt.f32.partialorder %v2312, 0.0
    %vm2399 = vcmp.gt.f32.partialorder %v2313, 0.0
    %vm2400 = vcmp.gt.f32.partialorder %v1900, 0.0
    %2401 = vxpose.xlu0.b32.start [1/16] %v1900, 128
    %2402 = vxpose.xlu0.b32.cont [2/16] 0.0, 128
    %2403 = vxpose.xlu0.b32.cont [3/16] 0.0, 128
    %2404 = vxpose.xlu0.b32.cont [4/16] 0.0, 128
    %2405 = vxpose.xlu0.b32.cont [5/16] 0.0, 128
    %2406 = vxpose.xlu0.b32.cont [6/16] 0.0, 128
    %2407 = vxpose.xlu0.b32.cont [7/16] 0.0, 128
    %2408 = vxpose.xlu0.b32.cont [8/16] 0.0, 128
    %2409 = vxpose.xlu0.b32.cont [9/16] 0.0, 128
    %2410 = vxpose.xlu0.b32.cont [10/16] 0.0, 128
    %2411 = vxpose.xlu0.b32.cont [11/16] 0.0, 128
    %2412 = vxpose.xlu0.b32.cont [12/16] 0.0, 128
    %2413 = vxpose.xlu0.b32.cont [13/16] 0.0, 128
    %2414 = vxpose.xlu0.b32.cont [14/16] 0.0, 128
    %2415 = vxpose.xlu0.b32.cont [15/16] 0.0, 128
    %2416 = vxpose.xlu0.b32.end [16/16] 0.0, 128
    %v2417 = vpop.trf.xlu0
    %v2418 = vpop.trf.xlu0
    %v2419 = vpop.trf.xlu0
    %v2420 = vpop.trf.xlu0
    %v2421 = vpop.trf.xlu0
    %v2422 = vpop.trf.xlu0
    %v2423 = vpop.trf.xlu0
    %v2424 = vpop.trf.xlu0
    %v2425 = vpop.trf.xlu0
    %v2426 = vpop.trf.xlu0
    %v2427 = vpop.trf.xlu0
    %v2428 = vpop.trf.xlu0
    %v2429 = vpop.trf.xlu0
    %v2430 = vpop.trf.xlu0
    %v2431 = vpop.trf.xlu0
    %v2432 = vpop.trf.xlu0
    %vm2433 = vcmp.gt.f32.partialorder %v2417, 0.0
    %vm2434 = vcmp.gt.f32.partialorder %v2418, 0.0
    %v2435 = vsel %vm2400, 1, 0
    %vm2436 = vcmp.eq.s32.totalorder %v2435, 1
    %v2437 = vsel %vm2433, 1, 0
    %v2438 = vsel %vm2434, 1, 0
    %2439 = vset.pattern.permute.xlu0 0
    %2440 = vperm.xlu0 %2439, %v2437
    %v2441 = vpop.permute.xlu0 %2440
    %2442 = vset.pattern.permute.xlu0 0
    %2443 = vperm.xlu0 %2442, %v2438
    %v2444 = vpop.permute.xlu0 %2443
    %vm2445 = vcmp.eq.s32.totalorder %v2441, 1
    %vm2446 = vcmp.eq.s32.totalorder %v2444, 1
    %vm2447 = vmand %vm2436, %vm2445
    %vm2448 = vmand %vm2436, %vm2446
    %vm2449 = vmand %vm2398, %vm2447
    %vm2450 = vmand %vm2399, %vm2448
    %v2451 = vsel %vm2449, 1, 0
    %v2452 = vsel %vm2450, 1, 0
    %v2453 = vcvt.s32.f32 %v2451
    %v2454 = vcvt.s32.f32 %v2452
    %v2455 = vsel %vm2449, %v2312, inf
    %v2456 = vsel %vm2450, %v2313, inf
    %2457 = vst.msk [vmem:[#allocation2] sm:$0xff] %vm256, %v2455
    %2458 = vst.msk [vmem:[#allocation2 + $0x8] sm:$0xff] %vm256, %v2456
    loop: start=0, step=1, limit=16
    $region97: #{edgecut_forward.1} parent=1 // loop_pre_header
      _
    $region98: #{edgecut_forward.1} parent=1 // loop_header
      %s2460 = sphi 0, %s2464
      %p2461 = scmp.ge.s32.totalorder %s2460, 16
      %v2465 = vphi 0.0, %v2674
      %v2466 = vphi 0.0, %v2675
    $region99: #{edgecut_forward.1} parent=1 // loop_header_branch
      %2463 = sbr.rel (%p2461) target = $region103
    $region100: #{edgecut_forward.1} parent=1 // loop_body
      %s2467 = scalar_lea.vmem [#allocation2], %s2460
      %v2468 = vld [vmem:[%s2467] sm:$0x1]
      %s2470 = vtos %v2468
      %v2471 = vstv %s2470
      %vm2473 = vcmp.ge.f32.partialorder %v2455, %v2471
      %vm2474 = vcmp.ge.f32.partialorder %v2456, %v2471
      %v2475 = vsel %vm2473, 1, 0
      %v2476 = vsel %vm2474, 1, 0
      %v2477 = vcvt.s32.f32 %v2475
      %v2478 = vcvt.s32.f32 %v2476
      %v2479 = vadd.f32 %v2465, %v2477
      %v2480 = vadd.f32 %v2466, %v2478
      %2481 = vrot.lane.b32.xlu0 %v2468, 127
      %v2482 = vpop.permute.xlu0 %2481
      %s2483 = vtos %v2482
      %v2484 = vstv %s2483
      %vm2486 = vcmp.ge.f32.partialorder %v2455, %v2484
      %vm2487 = vcmp.ge.f32.partialorder %v2456, %v2484
      %v2488 = vsel %vm2486, 1, 0
      %v2489 = vsel %vm2487, 1, 0
      %v2490 = vcvt.s32.f32 %v2488
      %v2491 = vcvt.s32.f32 %v2489
      %v2492 = vadd.f32 %v2479, %v2490
      %v2493 = vadd.f32 %v2480, %v2491
      %2494 = vrot.lane.b32.xlu0 %v2468, 126
      %v2495 = vpop.permute.xlu0 %2494
      %s2496 = vtos %v2495
      %v2497 = vstv %s2496
      %vm2499 = vcmp.ge.f32.partialorder %v2455, %v2497
      %vm2500 = vcmp.ge.f32.partialorder %v2456, %v2497
      %v2501 = vsel %vm2499, 1, 0
      %v2502 = vsel %vm2500, 1, 0
      %v2503 = vcvt.s32.f32 %v2501
      %v2504 = vcvt.s32.f32 %v2502
      %v2505 = vadd.f32 %v2492, %v2503
      %v2506 = vadd.f32 %v2493, %v2504
      %2507 = vrot.lane.b32.xlu0 %v2468, 125
      %v2508 = vpop.permute.xlu0 %2507
      %s2509 = vtos %v2508
      %v2510 = vstv %s2509
      %vm2512 = vcmp.ge.f32.partialorder %v2455, %v2510
      %vm2513 = vcmp.ge.f32.partialorder %v2456, %v2510
      %v2514 = vsel %vm2512, 1, 0
      %v2515 = vsel %vm2513, 1, 0
      %v2516 = vcvt.s32.f32 %v2514
      %v2517 = vcvt.s32.f32 %v2515
      %v2518 = vadd.f32 %v2505, %v2516
      %v2519 = vadd.f32 %v2506, %v2517
      %2520 = vrot.lane.b32.xlu0 %v2468, 124
      %v2521 = vpop.permute.xlu0 %2520
      %s2522 = vtos %v2521
      %v2523 = vstv %s2522
      %vm2525 = vcmp.ge.f32.partialorder %v2455, %v2523
      %vm2526 = vcmp.ge.f32.partialorder %v2456, %v2523
      %v2527 = vsel %vm2525, 1, 0
      %v2528 = vsel %vm2526, 1, 0
      %v2529 = vcvt.s32.f32 %v2527
      %v2530 = vcvt.s32.f32 %v2528
      %v2531 = vadd.f32 %v2518, %v2529
      %v2532 = vadd.f32 %v2519, %v2530
      %2533 = vrot.lane.b32.xlu0 %v2468, 123
      %v2534 = vpop.permute.xlu0 %2533
      %s2535 = vtos %v2534
      %v2536 = vstv %s2535
      %vm2538 = vcmp.ge.f32.partialorder %v2455, %v2536
      %vm2539 = vcmp.ge.f32.partialorder %v2456, %v2536
      %v2540 = vsel %vm2538, 1, 0
      %v2541 = vsel %vm2539, 1, 0
      %v2542 = vcvt.s32.f32 %v2540
      %v2543 = vcvt.s32.f32 %v2541
      %v2544 = vadd.f32 %v2531, %v2542
      %v2545 = vadd.f32 %v2532, %v2543
      %2546 = vrot.lane.b32.xlu0 %v2468, 122
      %v2547 = vpop.permute.xlu0 %2546
      %s2548 = vtos %v2547
      %v2549 = vstv %s2548
      %vm2551 = vcmp.ge.f32.partialorder %v2455, %v2549
      %vm2552 = vcmp.ge.f32.partialorder %v2456, %v2549
      %v2553 = vsel %vm2551, 1, 0
      %v2554 = vsel %vm2552, 1, 0
      %v2555 = vcvt.s32.f32 %v2553
      %v2556 = vcvt.s32.f32 %v2554
      %v2557 = vadd.f32 %v2544, %v2555
      %v2558 = vadd.f32 %v2545, %v2556
      %2559 = vrot.lane.b32.xlu0 %v2468, 121
      %v2560 = vpop.permute.xlu0 %2559
      %s2561 = vtos %v2560
      %v2562 = vstv %s2561
      %vm2564 = vcmp.ge.f32.partialorder %v2455, %v2562
      %vm2565 = vcmp.ge.f32.partialorder %v2456, %v2562
      %v2566 = vsel %vm2564, 1, 0
      %v2567 = vsel %vm2565, 1, 0
      %v2568 = vcvt.s32.f32 %v2566
      %v2569 = vcvt.s32.f32 %v2567
      %v2570 = vadd.f32 %v2557, %v2568
      %v2571 = vadd.f32 %v2558, %v2569
      %2572 = vrot.lane.b32.xlu0 %v2468, 120
      %v2573 = vpop.permute.xlu0 %2572
      %s2574 = vtos %v2573
      %v2575 = vstv %s2574
      %vm2577 = vcmp.ge.f32.partialorder %v2455, %v2575
      %vm2578 = vcmp.ge.f32.partialorder %v2456, %v2575
      %v2579 = vsel %vm2577, 1, 0
      %v2580 = vsel %vm2578, 1, 0
      %v2581 = vcvt.s32.f32 %v2579
      %v2582 = vcvt.s32.f32 %v2580
      %v2583 = vadd.f32 %v2570, %v2581
      %v2584 = vadd.f32 %v2571, %v2582
      %2585 = vrot.lane.b32.xlu0 %v2468, 119
      %v2586 = vpop.permute.xlu0 %2585
      %s2587 = vtos %v2586
      %v2588 = vstv %s2587
      %vm2590 = vcmp.ge.f32.partialorder %v2455, %v2588
      %vm2591 = vcmp.ge.f32.partialorder %v2456, %v2588
      %v2592 = vsel %vm2590, 1, 0
      %v2593 = vsel %vm2591, 1, 0
      %v2594 = vcvt.s32.f32 %v2592
      %v2595 = vcvt.s32.f32 %v2593
      %v2596 = vadd.f32 %v2583, %v2594
      %v2597 = vadd.f32 %v2584, %v2595
      %2598 = vrot.lane.b32.xlu0 %v2468, 118
      %v2599 = vpop.permute.xlu0 %2598
      %s2600 = vtos %v2599
      %v2601 = vstv %s2600
      %vm2603 = vcmp.ge.f32.partialorder %v2455, %v2601
      %vm2604 = vcmp.ge.f32.partialorder %v2456, %v2601
      %v2605 = vsel %vm2603, 1, 0
      %v2606 = vsel %vm2604, 1, 0
      %v2607 = vcvt.s32.f32 %v2605
      %v2608 = vcvt.s32.f32 %v2606
      %v2609 = vadd.f32 %v2596, %v2607
      %v2610 = vadd.f32 %v2597, %v2608
      %2611 = vrot.lane.b32.xlu0 %v2468, 117
      %v2612 = vpop.permute.xlu0 %2611
      %s2613 = vtos %v2612
      %v2614 = vstv %s2613
      %vm2616 = vcmp.ge.f32.partialorder %v2455, %v2614
      %vm2617 = vcmp.ge.f32.partialorder %v2456, %v2614
      %v2618 = vsel %vm2616, 1, 0
      %v2619 = vsel %vm2617, 1, 0
      %v2620 = vcvt.s32.f32 %v2618
      %v2621 = vcvt.s32.f32 %v2619
      %v2622 = vadd.f32 %v2609, %v2620
      %v2623 = vadd.f32 %v2610, %v2621
      %2624 = vrot.lane.b32.xlu0 %v2468, 116
      %v2625 = vpop.permute.xlu0 %2624
      %s2626 = vtos %v2625
      %v2627 = vstv %s2626
      %vm2629 = vcmp.ge.f32.partialorder %v2455, %v2627
      %vm2630 = vcmp.ge.f32.partialorder %v2456, %v2627
      %v2631 = vsel %vm2629, 1, 0
      %v2632 = vsel %vm2630, 1, 0
      %v2633 = vcvt.s32.f32 %v2631
      %v2634 = vcvt.s32.f32 %v2632
      %v2635 = vadd.f32 %v2622, %v2633
      %v2636 = vadd.f32 %v2623, %v2634
      %2637 = vrot.lane.b32.xlu0 %v2468, 115
      %v2638 = vpop.permute.xlu0 %2637
      %s2639 = vtos %v2638
      %v2640 = vstv %s2639
      %vm2642 = vcmp.ge.f32.partialorder %v2455, %v2640
      %vm2643 = vcmp.ge.f32.partialorder %v2456, %v2640
      %v2644 = vsel %vm2642, 1, 0
      %v2645 = vsel %vm2643, 1, 0
      %v2646 = vcvt.s32.f32 %v2644
      %v2647 = vcvt.s32.f32 %v2645
      %v2648 = vadd.f32 %v2635, %v2646
      %v2649 = vadd.f32 %v2636, %v2647
      %2650 = vrot.lane.b32.xlu0 %v2468, 114
      %v2651 = vpop.permute.xlu0 %2650
      %s2652 = vtos %v2651
      %v2653 = vstv %s2652
      %vm2655 = vcmp.ge.f32.partialorder %v2455, %v2653
      %vm2656 = vcmp.ge.f32.partialorder %v2456, %v2653
      %v2657 = vsel %vm2655, 1, 0
      %v2658 = vsel %vm2656, 1, 0
      %v2659 = vcvt.s32.f32 %v2657
      %v2660 = vcvt.s32.f32 %v2658
      %v2661 = vadd.f32 %v2648, %v2659
      %v2662 = vadd.f32 %v2649, %v2660
      %2663 = vrot.lane.b32.xlu0 %v2468, 113
      %v2664 = vpop.permute.xlu0 %2663
      %s2665 = vtos %v2664
      %v2666 = vstv %s2665
      %vm2668 = vcmp.ge.f32.partialorder %v2455, %v2666
      %vm2669 = vcmp.ge.f32.partialorder %v2456, %v2666
      %v2670 = vsel %vm2668, 1, 0
      %v2671 = vsel %vm2669, 1, 0
      %v2672 = vcvt.s32.f32 %v2670
      %v2673 = vcvt.s32.f32 %v2671
      %v2674 = vadd.f32 %v2661, %v2672
      %v2675 = vadd.f32 %v2662, %v2673
    $region101: #{edgecut_forward.1} parent=1 // loop_footer
      %s2464 = sadd.s32 1, %s2460
    $region102: #{edgecut_forward.1} parent=1 // loop_footer_branch
      %2459 = sbr.rel target = $region98
    $region103: #{edgecut_forward.1} parent=1 // loop_exit
      _
    %v2676 = vsel %vm256, %v2453, 0.0
    %2677 = vadd.xlane.f32.xlu0 %v2676
    %v2678 = vpop.xlane.xlu0 %2677
    %v2679 = vsel %vm256, %v2454, 0.0
    %2680 = vadd.xlane.f32.xlu0 %v2679
    %v2681 = vpop.xlane.xlu0 %2680
    %v2682 = vadd.f32 %v2678, %v2681
    %v2683 = vrot.slane %v2682, 4
    %v2684 = vadd.f32 %v2682, %v2683
    %v2685 = vrot.slane %v2684, 2
    %v2686 = vadd.f32 %v2684, %v2685
    %v2687 = vrot.slane %v2686, 1
    %v2688 = vadd.f32 %v2686, %v2687
    %v2689 = vsub.f32 %v2688, 1.0
    %v2690 = vmul.f32 %v2689, 60.0
    %v2691 = vmul.f32 %v2690, %v940
    %v2692 = vfloor.f32 %v2691
    %v2693 = vsub.f32 %v2691, %v2692
    %v2694 = vadd.f32 %v2692, 1.0
    %v2695 = vmin.f32 %v2694, %v2689
    %vm2696 = vcmp.ge.f32.partialorder %v2465, %v2694
    %vm2697 = vcmp.ge.f32.partialorder %v2466, %v2694
    %vm2698 = vmand %vm2449, %vm2696
    %vm2699 = vmand %vm2450, %vm2697
    %v2700 = vsel %vm2698, %v2455, inf
    %v2701 = vsel %vm2699, %v2456, inf
    %v2702 = vsel %vm256, %v2700, inf
    %2703 = vmin.xlane.f32.xlu0 %v2702
    %v2704 = vpop.xlane.xlu0 %2703
    %v2705 = vsel %vm256, %v2701, inf
    %2706 = vmin.xlane.f32.xlu0 %v2705
    %v2707 = vpop.xlane.xlu0 %2706
    %v2708 = vmin.f32 %v2704, %v2707
    %v2709 = vrot.slane %v2708, 4
    %v2710 = vmin.f32 %v2708, %v2709
    %v2711 = vrot.slane %v2710, 2
    %v2712 = vmin.f32 %v2710, %v2711
    %v2713 = vrot.slane %v2712, 1
    %v2714 = vmin.f32 %v2712, %v2713
    %v2715 = vadd.f32 %v2695, 1.0
    %vm2716 = vcmp.ge.f32.partialorder %v2465, %v2715
    %vm2717 = vcmp.ge.f32.partialorder %v2466, %v2715
    %vm2718 = vmand %vm2449, %vm2716
    %vm2719 = vmand %vm2450, %vm2717
    %v2720 = vsel %vm2718, %v2455, inf
    %v2721 = vsel %vm2719, %v2456, inf
    %v2722 = vsel %vm256, %v2720, inf
    %2723 = vmin.xlane.f32.xlu0 %v2722
    %v2724 = vpop.xlane.xlu0 %2723
    %v2725 = vsel %vm256, %v2721, inf
    %2726 = vmin.xlane.f32.xlu0 %v2725
    %v2727 = vpop.xlane.xlu0 %2726
    %v2728 = vmin.f32 %v2724, %v2727
    %v2729 = vrot.slane %v2728, 4
    %v2730 = vmin.f32 %v2728, %v2729
    %v2731 = vrot.slane %v2730, 2
    %v2732 = vmin.f32 %v2730, %v2731
    %v2733 = vrot.slane %v2732, 1
    %v2734 = vmin.f32 %v2732, %v2733
    %v2735 = vsub.f32 1.0, %v2693
    %v2736 = vmul.f32 %v2735, %v2714
    %v2737 = vmul.f32 %v2693, %v2734
    %v2738 = vadd.f32 %v2736, %v2737
    %vm2739 = vcmp.ge.f32.partialorder %v2312, %v2738
    %vm2740 = vcmp.ge.f32.partialorder %v2313, %v2738
    %v2741 = vsel %vm2739, 1, 0
    %v2742 = vsel %vm2740, 1, 0
    %v2743 = vcvt.s32.f32 %v2741
    %v2744 = vcvt.s32.f32 %v2742
    %v2745 = vmul.f32 %v2312, %v2743
    %v2746 = vmul.f32 %v2313, %v2744
    %vm2747 = vcmp.gt.f32.partialorder %v2745, 0.0
    %vm2748 = vcmp.gt.f32.partialorder %v2746, 0.0
    %v2749 = vsel %vm2747, 1, 0
    %v2750 = vsel %vm2748, 1, 0
    %v2751 = vcvt.s32.f32 %v2749
    %v2752 = vcvt.s32.f32 %v2750
    %v2753 = vsel %vm256, %v2751, 0.0
    %2754 = vadd.xlane.f32.xlu0 %v2753
    %v2755 = vpop.xlane.xlu0 %2754
    %v2756 = vsel %vm256, %v2752, 0.0
    %2757 = vadd.xlane.f32.xlu0 %v2756
    %v2758 = vpop.xlane.xlu0 %2757
    %v2759 = vmax.f32 %v2755, 1.0
    %v2760 = vmax.f32 %v2758, 1.0
    %v2761 = vrcp.pop %v2759
    %v2762 = vrcp.pop %v2760
    %v2763 = vmul.f32 %v2745, %v2761
    %v2764 = vmul.f32 %v2746, %v2762
    %v2766 = vsel %vm256, %v2751, 0
    %v2769 = vsel %vm256, %v2752, 0
    %2771 = vmatprep.subr.mxu0 0.0
    %2772 = vmatpush1.msra.mxu0 0.0
    %2773 = vmatprep.subr.mxu0 0.0
    %2774 = vmatpush1.msra.mxu0 0.0
    %2775 = vmatprep.subr.mxu0 0.0
    %2776 = vmatpush1.msra.mxu0 0.0
    %2777 = vmatprep.subr.mxu0 0.0
    %2778 = vmatpush1.msra.mxu0 0.0
    %2779 = vmatprep.subr.mxu0 0.0
    %2780 = vmatpush1.msra.mxu0 0.0
    %2781 = vmatprep.subr.mxu0 0.0
    %2782 = vmatpush1.msra.mxu0 0.0
    %2783 = vmatprep.subr.mxu0 0.0
    %2784 = vmatpush1.msra.mxu0 0.0
    %2785 = vmatprep.subr.mxu0 0.0
    %2786 = vmatpush1.msra.mxu0 0.0
    %2787 = vmatprep.subr.mxu0 0.0
    %2788 = vmatpush1.msra.mxu0 0.0
    %2789 = vmatprep.subr.mxu0 0.0
    %2790 = vmatpush1.msra.mxu0 0.0
    %2791 = vmatprep.subr.mxu0 0.0
    %2792 = vmatpush1.msra.mxu0 0.0
    %2793 = vmatprep.subr.mxu0 0.0
    %2794 = vmatpush1.msra.mxu0 0.0
    %2795 = vmatprep.subr.mxu0 0.0
    %2796 = vmatpush1.msra.mxu0 0.0
    %2797 = vmatprep.subr.mxu0 0.0
    %2798 = vmatpush1.msra.mxu0 0.0
    %2799 = vmatprep.subr.mxu0 0.0
    %2800 = vmatpush1.msra.mxu0 %v2752
    %2801 = vmatprep.subr.mxu0 0.0
    %2802 = vmatpush1.msra.mxu0 %v2751
    %2803 = vmatprep.subr.mxu0 0.0
    %2804 = vmatpush2.msra.mxu0 0.0
    %2805 = vmatprep.subr.mxu0 0.0
    %2806 = vmatpush2.msra.mxu0 0.0
    %2807 = vmatprep.subr.mxu0 0.0
    %2808 = vmatpush2.msra.mxu0 0.0
    %2809 = vmatprep.subr.mxu0 0.0
    %2810 = vmatpush2.msra.mxu0 0.0
    %2811 = vmatprep.subr.mxu0 0.0
    %2812 = vmatpush2.msra.mxu0 0.0
    %2813 = vmatprep.subr.mxu0 0.0
    %2814 = vmatpush2.msra.mxu0 0.0
    %2815 = vmatprep.subr.mxu0 0.0
    %2816 = vmatpush2.msra.mxu0 0.0
    %2817 = vmatprep.subr.mxu0 0.0
    %2818 = vmatpush2.msra.mxu0 0.0
    %2819 = vmatprep.subr.mxu0 0.0
    %2820 = vmatpush2.msra.mxu0 0.0
    %2821 = vmatprep.subr.mxu0 0.0
    %2822 = vmatpush2.msra.mxu0 0.0
    %2823 = vmatprep.subr.mxu0 0.0
    %2824 = vmatpush2.msra.mxu0 0.0
    %2825 = vmatprep.subr.mxu0 0.0
    %2826 = vmatpush2.msra.mxu0 0.0
    %2827 = vmatprep.subr.mxu0 0.0
    %2828 = vmatpush2.msra.mxu0 0.0
    %2829 = vmatprep.subr.mxu0 0.0
    %2830 = vmatpush2.msra.mxu0 0.0
    %2831 = vmatprep.subr.mxu0 0.0
    %2832 = vmatpush2.msra.mxu0 0.0
    %2833 = vmatprep.subr.mxu0 0.0
    %2834 = vmatpush2.msra.mxu0 0.0
    %2835 = vmatprep.mubr.f32.mxu0 0.0
    %2836 = vmatmul.mubr.f32.gmra.mxu0 %v2766
    %v2837 = vpop.f32.mrf.mxu0
    %v2838 = vadd.f32 0.0, %v2837
    %v2839 = vpop.f32.mrf.mxu0
    %2840 = vmatprep.mubr.f32.mxu0 0.0
    %2841 = vmatmul.mubr.f32.gmra.mxu0 %v2769
    %v2842 = vpop.f32.mrf.mxu0
    %v2843 = vadd.f32 0.0, %v2842
    %v2844 = vpop.f32.mrf.mxu0
    %2845 = vdwg.mxu0
    %vm2846 = vcmp.gt.f32.partialorder %v2838, 0.0
    %vm2847 = vcmp.gt.f32.partialorder %v2843, 0.0
    %v2848 = vsel %vm2846, 1, 0
    %v2849 = vsel %vm2847, 1, 0
    %v2850 = vcvt.s32.f32 %v2848
    %v2851 = vcvt.s32.f32 %v2849
    %v2853 = vsel %vm256, %v2850, 0
    %v2856 = vsel %vm256, %v2851, 0
    %2858 = vmatprep.subr.mxu0 0.0
    %2859 = vmatpush1.msra.mxu0 0.0
    %2860 = vmatprep.subr.mxu0 0.0
    %2861 = vmatpush1.msra.mxu0 0.0
    %2862 = vmatprep.subr.mxu0 0.0
    %2863 = vmatpush1.msra.mxu0 0.0
    %2864 = vmatprep.subr.mxu0 0.0
    %2865 = vmatpush1.msra.mxu0 0.0
    %2866 = vmatprep.subr.mxu0 0.0
    %2867 = vmatpush1.msra.mxu0 0.0
    %2868 = vmatprep.subr.mxu0 0.0
    %2869 = vmatpush1.msra.mxu0 0.0
    %2870 = vmatprep.subr.mxu0 0.0
    %2871 = vmatpush1.msra.mxu0 0.0
    %2872 = vmatprep.subr.mxu0 0.0
    %2873 = vmatpush1.msra.mxu0 0.0
    %2874 = vmatprep.subr.mxu0 0.0
    %2875 = vmatpush1.msra.mxu0 0.0
    %2876 = vmatprep.subr.mxu0 0.0
    %2877 = vmatpush1.msra.mxu0 0.0
    %2878 = vmatprep.subr.mxu0 0.0
    %2879 = vmatpush1.msra.mxu0 0.0
    %2880 = vmatprep.subr.mxu0 0.0
    %2881 = vmatpush1.msra.mxu0 0.0
    %2882 = vmatprep.subr.mxu0 0.0
    %2883 = vmatpush1.msra.mxu0 0.0
    %2884 = vmatprep.subr.mxu0 0.0
    %2885 = vmatpush1.msra.mxu0 0.0
    %2886 = vmatprep.subr.mxu0 0.0
    %2887 = vmatpush1.msra.mxu0 %v2851
    %2888 = vmatprep.subr.mxu0 0.0
    %2889 = vmatpush1.msra.mxu0 %v2850
    %2890 = vmatprep.subr.mxu0 0.0
    %2891 = vmatpush2.msra.mxu0 0.0
    %2892 = vmatprep.subr.mxu0 0.0
    %2893 = vmatpush2.msra.mxu0 0.0
    %2894 = vmatprep.subr.mxu0 0.0
    %2895 = vmatpush2.msra.mxu0 0.0
    %2896 = vmatprep.subr.mxu0 0.0
    %2897 = vmatpush2.msra.mxu0 0.0
    %2898 = vmatprep.subr.mxu0 0.0
    %2899 = vmatpush2.msra.mxu0 0.0
    %2900 = vmatprep.subr.mxu0 0.0
    %2901 = vmatpush2.msra.mxu0 0.0
    %2902 = vmatprep.subr.mxu0 0.0
    %2903 = vmatpush2.msra.mxu0 0.0
    %2904 = vmatprep.subr.mxu0 0.0
    %2905 = vmatpush2.msra.mxu0 0.0
    %2906 = vmatprep.subr.mxu0 0.0
    %2907 = vmatpush2.msra.mxu0 0.0
    %2908 = vmatprep.subr.mxu0 0.0
    %2909 = vmatpush2.msra.mxu0 0.0
    %2910 = vmatprep.subr.mxu0 0.0
    %2911 = vmatpush2.msra.mxu0 0.0
    %2912 = vmatprep.subr.mxu0 0.0
    %2913 = vmatpush2.msra.mxu0 0.0
    %2914 = vmatprep.subr.mxu0 0.0
    %2915 = vmatpush2.msra.mxu0 0.0
    %2916 = vmatprep.subr.mxu0 0.0
    %2917 = vmatpush2.msra.mxu0 0.0
    %2918 = vmatprep.subr.mxu0 0.0
    %2919 = vmatpush2.msra.mxu0 0.0
    %2920 = vmatprep.subr.mxu0 0.0
    %2921 = vmatpush2.msra.mxu0 0.0
    %2922 = vmatprep.mubr.f32.mxu0 0.0
    %2923 = vmatmul.mubr.f32.gmra.mxu0 %v2853
    %v2924 = vpop.f32.mrf.mxu0
    %v2925 = vadd.f32 0.0, %v2924
    %v2926 = vpop.f32.mrf.mxu0
    %2927 = vmatprep.mubr.f32.mxu0 0.0
    %2928 = vmatmul.mubr.f32.gmra.mxu0 %v2856
    %v2929 = vpop.f32.mrf.mxu0
    %v2930 = vadd.f32 0.0, %v2929
    %v2931 = vpop.f32.mrf.mxu0
    %2932 = vdwg.mxu0
    %vm2933 = vcmp.gt.f32.partialorder %v2925, 0.0
    %vm2934 = vcmp.gt.f32.partialorder %v2930, 0.0
    %v2935 = vsel %vm2933, 1, 0
    %v2936 = vsel %vm2934, 1, 0
    %v2937 = vcvt.s32.f32 %v2935
    %v2938 = vcvt.s32.f32 %v2936
    %v2940 = vsel %vm256, %v2937, 0
    %v2943 = vsel %vm256, %v2938, 0
    %2945 = vmatprep.subr.mxu0 0.0
    %2946 = vmatpush1.msra.mxu0 0.0
    %2947 = vmatprep.subr.mxu0 0.0
    %2948 = vmatpush1.msra.mxu0 0.0
    %2949 = vmatprep.subr.mxu0 0.0
    %2950 = vmatpush1.msra.mxu0 0.0
    %2951 = vmatprep.subr.mxu0 0.0
    %2952 = vmatpush1.msra.mxu0 0.0
    %2953 = vmatprep.subr.mxu0 0.0
    %2954 = vmatpush1.msra.mxu0 0.0
    %2955 = vmatprep.subr.mxu0 0.0
    %2956 = vmatpush1.msra.mxu0 0.0
    %2957 = vmatprep.subr.mxu0 0.0
    %2958 = vmatpush1.msra.mxu0 0.0
    %2959 = vmatprep.subr.mxu0 0.0
    %2960 = vmatpush1.msra.mxu0 0.0
    %2961 = vmatprep.subr.mxu0 0.0
    %2962 = vmatpush1.msra.mxu0 0.0
    %2963 = vmatprep.subr.mxu0 0.0
    %2964 = vmatpush1.msra.mxu0 0.0
    %2965 = vmatprep.subr.mxu0 0.0
    %2966 = vmatpush1.msra.mxu0 0.0
    %2967 = vmatprep.subr.mxu0 0.0
    %2968 = vmatpush1.msra.mxu0 0.0
    %2969 = vmatprep.subr.mxu0 0.0
    %2970 = vmatpush1.msra.mxu0 0.0
    %2971 = vmatprep.subr.mxu0 0.0
    %2972 = vmatpush1.msra.mxu0 0.0
    %2973 = vmatprep.subr.mxu0 0.0
    %2974 = vmatpush1.msra.mxu0 %v2938
    %2975 = vmatprep.subr.mxu0 0.0
    %2976 = vmatpush1.msra.mxu0 %v2937
    %2977 = vmatprep.subr.mxu0 0.0
    %2978 = vmatpush2.msra.mxu0 0.0
    %2979 = vmatprep.subr.mxu0 0.0
    %2980 = vmatpush2.msra.mxu0 0.0
    %2981 = vmatprep.subr.mxu0 0.0
    %2982 = vmatpush2.msra.mxu0 0.0
    %2983 = vmatprep.subr.mxu0 0.0
    %2984 = vmatpush2.msra.mxu0 0.0
    %2985 = vmatprep.subr.mxu0 0.0
    %2986 = vmatpush2.msra.mxu0 0.0
    %2987 = vmatprep.subr.mxu0 0.0
    %2988 = vmatpush2.msra.mxu0 0.0
    %2989 = vmatprep.subr.mxu0 0.0
    %2990 = vmatpush2.msra.mxu0 0.0
    %2991 = vmatprep.subr.mxu0 0.0
    %2992 = vmatpush2.msra.mxu0 0.0
    %2993 = vmatprep.subr.mxu0 0.0
    %2994 = vmatpush2.msra.mxu0 0.0
    %2995 = vmatprep.subr.mxu0 0.0
    %2996 = vmatpush2.msra.mxu0 0.0
    %2997 = vmatprep.subr.mxu0 0.0
    %2998 = vmatpush2.msra.mxu0 0.0
    %2999 = vmatprep.subr.mxu0 0.0
    %3000 = vmatpush2.msra.mxu0 0.0
    %3001 = vmatprep.subr.mxu0 0.0
    %3002 = vmatpush2.msra.mxu0 0.0
    %3003 = vmatprep.subr.mxu0 0.0
    %3004 = vmatpush2.msra.mxu0 0.0
    %3005 = vmatprep.subr.mxu0 0.0
    %3006 = vmatpush2.msra.mxu0 0.0
    %3007 = vmatprep.subr.mxu0 0.0
    %3008 = vmatpush2.msra.mxu0 0.0
    %3009 = vmatprep.mubr.f32.mxu0 0.0
    %3010 = vmatmul.mubr.f32.gmra.mxu0 %v2940
    %v3011 = vpop.f32.mrf.mxu0
    %v3012 = vadd.f32 0.0, %v3011
    %v3013 = vpop.f32.mrf.mxu0
    %3014 = vmatprep.mubr.f32.mxu0 0.0
    %3015 = vmatmul.mubr.f32.gmra.mxu0 %v2943
    %v3016 = vpop.f32.mrf.mxu0
    %v3017 = vadd.f32 0.0, %v3016
    %v3018 = vpop.f32.mrf.mxu0
    %3019 = vdwg.mxu0
    %vm3020 = vcmp.gt.f32.partialorder %v3012, 0.0
    %vm3021 = vcmp.gt.f32.partialorder %v3017, 0.0
    %v3022 = vsel %vm3020, 1, 0
    %v3023 = vsel %vm3021, 1, 0
    %v3024 = vcvt.s32.f32 %v3022
    %v3025 = vcvt.s32.f32 %v3023
    %v3027 = vsel %vm256, %v3024, 0
    %v3030 = vsel %vm256, %v3025, 0
    %3032 = vmatprep.subr.mxu0 0.0
    %3033 = vmatpush1.msra.mxu0 0.0
    %3034 = vmatprep.subr.mxu0 0.0
    %3035 = vmatpush1.msra.mxu0 0.0
    %3036 = vmatprep.subr.mxu0 0.0
    %3037 = vmatpush1.msra.mxu0 0.0
    %3038 = vmatprep.subr.mxu0 0.0
    %3039 = vmatpush1.msra.mxu0 0.0
    %3040 = vmatprep.subr.mxu0 0.0
    %3041 = vmatpush1.msra.mxu0 0.0
    %3042 = vmatprep.subr.mxu0 0.0
    %3043 = vmatpush1.msra.mxu0 0.0
    %3044 = vmatprep.subr.mxu0 0.0
    %3045 = vmatpush1.msra.mxu0 0.0
    %3046 = vmatprep.subr.mxu0 0.0
    %3047 = vmatpush1.msra.mxu0 0.0
    %3048 = vmatprep.subr.mxu0 0.0
    %3049 = vmatpush1.msra.mxu0 0.0
    %3050 = vmatprep.subr.mxu0 0.0
    %3051 = vmatpush1.msra.mxu0 0.0
    %3052 = vmatprep.subr.mxu0 0.0
    %3053 = vmatpush1.msra.mxu0 0.0
    %3054 = vmatprep.subr.mxu0 0.0
    %3055 = vmatpush1.msra.mxu0 0.0
    %3056 = vmatprep.subr.mxu0 0.0
    %3057 = vmatpush1.msra.mxu0 0.0
    %3058 = vmatprep.subr.mxu0 0.0
    %3059 = vmatpush1.msra.mxu0 0.0
    %3060 = vmatprep.subr.mxu0 0.0
    %3061 = vmatpush1.msra.mxu0 %v3025
    %3062 = vmatprep.subr.mxu0 0.0
    %3063 = vmatpush1.msra.mxu0 %v3024
    %3064 = vmatprep.subr.mxu0 0.0
    %3065 = vmatpush2.msra.mxu0 0.0
    %3066 = vmatprep.subr.mxu0 0.0
    %3067 = vmatpush2.msra.mxu0 0.0
    %3068 = vmatprep.subr.mxu0 0.0
    %3069 = vmatpush2.msra.mxu0 0.0
    %3070 = vmatprep.subr.mxu0 0.0
    %3071 = vmatpush2.msra.mxu0 0.0
    %3072 = vmatprep.subr.mxu0 0.0
    %3073 = vmatpush2.msra.mxu0 0.0
    %3074 = vmatprep.subr.mxu0 0.0
    %3075 = vmatpush2.msra.mxu0 0.0
    %3076 = vmatprep.subr.mxu0 0.0
    %3077 = vmatpush2.msra.mxu0 0.0
    %3078 = vmatprep.subr.mxu0 0.0
    %3079 = vmatpush2.msra.mxu0 0.0
    %3080 = vmatprep.subr.mxu0 0.0
    %3081 = vmatpush2.msra.mxu0 0.0
    %3082 = vmatprep.subr.mxu0 0.0
    %3083 = vmatpush2.msra.mxu0 0.0
    %3084 = vmatprep.subr.mxu0 0.0
    %3085 = vmatpush2.msra.mxu0 0.0
    %3086 = vmatprep.subr.mxu0 0.0
    %3087 = vmatpush2.msra.mxu0 0.0
    %3088 = vmatprep.subr.mxu0 0.0
    %3089 = vmatpush2.msra.mxu0 0.0
    %3090 = vmatprep.subr.mxu0 0.0
    %3091 = vmatpush2.msra.mxu0 0.0
    %3092 = vmatprep.subr.mxu0 0.0
    %3093 = vmatpush2.msra.mxu0 0.0
    %3094 = vmatprep.subr.mxu0 0.0
    %3095 = vmatpush2.msra.mxu0 0.0
    %3096 = vmatprep.mubr.f32.mxu0 0.0
    %3097 = vmatmul.mubr.f32.gmra.mxu0 %v3027
    %v3098 = vpop.f32.mrf.mxu0
    %v3099 = vadd.f32 0.0, %v3098
    %v3100 = vpop.f32.mrf.mxu0
    %3101 = vmatprep.mubr.f32.mxu0 0.0
    %3102 = vmatmul.mubr.f32.gmra.mxu0 %v3030
    %v3103 = vpop.f32.mrf.mxu0
    %v3104 = vadd.f32 0.0, %v3103
    %v3105 = vpop.f32.mrf.mxu0
    %3106 = vdwg.mxu0
    %vm3107 = vcmp.gt.f32.partialorder %v3099, 0.0
    %vm3108 = vcmp.gt.f32.partialorder %v3104, 0.0
    %v3109 = vsel %vm3107, 1, 0
    %v3110 = vsel %vm3108, 1, 0
    %v3111 = vcvt.s32.f32 %v3109
    %v3112 = vcvt.s32.f32 %v3110
    %vm3113 = vcmp.gt.f32.partialorder %v3111, 0.0
    %vm3114 = vcmp.gt.f32.partialorder %v3112, 0.0
    %v3115 = vsel %vm3113, %v157, 1e+09
    %v3116 = vsel %vm3114, %v157, 1e+09
    %v3117 = vsel %vm256, %v3115, inf
    %3118 = vmin.xlane.f32.xlu0 %v3117
    %v3119 = vpop.xlane.xlu0 %3118
    %v3120 = vsel %vm256, %v3116, inf
    %3121 = vmin.xlane.f32.xlu0 %v3120
    %v3122 = vpop.xlane.xlu0 %3121
    %v3123 = vsel %vm3113, %v155, 1e+09
    %v3124 = vsel %vm3114, %v156, 1e+09
    %v3125 = vsel %vm256, %v3123, inf
    %v3126 = vsel %vm256, %v3124, inf
    %v3127 = vmin.f32 %v3125, %v3126
    %v3128 = vrot.slane %v3127, 4
    %v3129 = vmin.f32 %v3127, %v3128
    %v3130 = vrot.slane %v3129, 2
    %v3131 = vmin.f32 %v3129, %v3130
    %v3132 = vrot.slane %v3131, 1
    %v3133 = vmin.f32 %v3131, %v3132
    %vm3134 = vcmp.eq.f32.partialorder %v155, %v3133
    %vm3135 = vcmp.eq.f32.partialorder %v156, %v3133
    %v3136 = vsel %vm3134, 1, 0
    %v3137 = vsel %vm3135, 1, 0
    %v3138 = vcvt.s32.f32 %v3136
    %v3139 = vcvt.s32.f32 %v3137
    %vm3140 = vcmp.eq.f32.partialorder %v157, %v3119
    %vm3141 = vcmp.eq.f32.partialorder %v157, %v3122
    %v3142 = vsel %vm3140, 1, 0
    %v3143 = vsel %vm3141, 1, 0
    %v3144 = vcvt.s32.f32 %v3142
    %v3145 = vcvt.s32.f32 %v3143
    %v3147 = vsel %vm256, %v3138, 0
    %v3150 = vsel %vm256, %v3139, 0
    %3152 = vmatprep.subr.mxu0 0.0
    %3153 = vmatpush1.msra.mxu0 0.0
    %3154 = vmatprep.subr.mxu0 0.0
    %3155 = vmatpush1.msra.mxu0 0.0
    %3156 = vmatprep.subr.mxu0 0.0
    %3157 = vmatpush1.msra.mxu0 0.0
    %3158 = vmatprep.subr.mxu0 0.0
    %3159 = vmatpush1.msra.mxu0 0.0
    %3160 = vmatprep.subr.mxu0 0.0
    %3161 = vmatpush1.msra.mxu0 0.0
    %3162 = vmatprep.subr.mxu0 0.0
    %3163 = vmatpush1.msra.mxu0 0.0
    %3164 = vmatprep.subr.mxu0 0.0
    %3165 = vmatpush1.msra.mxu0 0.0
    %3166 = vmatprep.subr.mxu0 0.0
    %3167 = vmatpush1.msra.mxu0 0.0
    %3168 = vmatprep.subr.mxu0 0.0
    %3169 = vmatpush1.msra.mxu0 0.0
    %3170 = vmatprep.subr.mxu0 0.0
    %3171 = vmatpush1.msra.mxu0 0.0
    %3172 = vmatprep.subr.mxu0 0.0
    %3173 = vmatpush1.msra.mxu0 0.0
    %3174 = vmatprep.subr.mxu0 0.0
    %3175 = vmatpush1.msra.mxu0 0.0
    %3176 = vmatprep.subr.mxu0 0.0
    %3177 = vmatpush1.msra.mxu0 0.0
    %3178 = vmatprep.subr.mxu0 0.0
    %3179 = vmatpush1.msra.mxu0 0.0
    %3180 = vmatprep.subr.mxu0 0.0
    %3181 = vmatpush1.msra.mxu0 %v154
    %3182 = vmatprep.subr.mxu0 0.0
    %3183 = vmatpush1.msra.mxu0 %v153
    %3184 = vmatprep.subr.mxu0 0.0
    %3185 = vmatpush2.msra.mxu0 0.0
    %3186 = vmatprep.subr.mxu0 0.0
    %3187 = vmatpush2.msra.mxu0 0.0
    %3188 = vmatprep.subr.mxu0 0.0
    %3189 = vmatpush2.msra.mxu0 0.0
    %3190 = vmatprep.subr.mxu0 0.0
    %3191 = vmatpush2.msra.mxu0 0.0
    %3192 = vmatprep.subr.mxu0 0.0
    %3193 = vmatpush2.msra.mxu0 0.0
    %3194 = vmatprep.subr.mxu0 0.0
    %3195 = vmatpush2.msra.mxu0 0.0
    %3196 = vmatprep.subr.mxu0 0.0
    %3197 = vmatpush2.msra.mxu0 0.0
    %3198 = vmatprep.subr.mxu0 0.0
    %3199 = vmatpush2.msra.mxu0 0.0
    %3200 = vmatprep.subr.mxu0 0.0
    %3201 = vmatpush2.msra.mxu0 0.0
    %3202 = vmatprep.subr.mxu0 0.0
    %3203 = vmatpush2.msra.mxu0 0.0
    %3204 = vmatprep.subr.mxu0 0.0
    %3205 = vmatpush2.msra.mxu0 0.0
    %3206 = vmatprep.subr.mxu0 0.0
    %3207 = vmatpush2.msra.mxu0 0.0
    %3208 = vmatprep.subr.mxu0 0.0
    %3209 = vmatpush2.msra.mxu0 0.0
    %3210 = vmatprep.subr.mxu0 0.0
    %3211 = vmatpush2.msra.mxu0 0.0
    %3212 = vmatprep.subr.mxu0 0.0
    %3213 = vmatpush2.msra.mxu0 0.0
    %3214 = vmatprep.subr.mxu0 0.0
    %3215 = vmatpush2.msra.mxu0 0.0
    %3216 = vmatprep.mubr.f32.mxu0 0.0
    %3217 = vmatmul.mubr.f32.gmra.mxu0 %v3147
    %v3218 = vpop.f32.mrf.mxu0
    %v3219 = vadd.f32 0.0, %v3218
    %v3220 = vpop.f32.mrf.mxu0
    %3221 = vmatprep.mubr.f32.mxu0 0.0
    %3222 = vmatmul.mubr.f32.gmra.mxu0 %v3150
    %v3223 = vpop.f32.mrf.mxu0
    %v3224 = vadd.f32 0.0, %v3223
    %v3225 = vpop.f32.mrf.mxu0
    %3226 = vdwg.mxu0
    %s3227 = scalar_lea.vmem %s17, 16
    %3228 = vst [vmem:[%s3227] sm:$0xff] %v3219
    %3229 = vst [vmem:[%s3227 + $0x8] sm:$0xff] %v3224
    %v3231 = vsel %vm256, %v2763, 0
    %v3234 = vsel %vm256, %v2764, 0
    %3236 = vmatprep.subr.mxu0 0.0
    %3237 = vmatpush1.msra.mxu0 0.0
    %3238 = vmatprep.subr.mxu0 0.0
    %3239 = vmatpush1.msra.mxu0 0.0
    %3240 = vmatprep.subr.mxu0 0.0
    %3241 = vmatpush1.msra.mxu0 0.0
    %3242 = vmatprep.subr.mxu0 0.0
    %3243 = vmatpush1.msra.mxu0 0.0
    %3244 = vmatprep.subr.mxu0 0.0
    %3245 = vmatpush1.msra.mxu0 0.0
    %3246 = vmatprep.subr.mxu0 0.0
    %3247 = vmatpush1.msra.mxu0 0.0
    %3248 = vmatprep.subr.mxu0 0.0
    %3249 = vmatpush1.msra.mxu0 0.0
    %3250 = vmatprep.subr.mxu0 0.0
    %3251 = vmatpush1.msra.mxu0 0.0
    %3252 = vmatprep.subr.mxu0 0.0
    %3253 = vmatpush1.msra.mxu0 0.0
    %3254 = vmatprep.subr.mxu0 0.0
    %3255 = vmatpush1.msra.mxu0 0.0
    %3256 = vmatprep.subr.mxu0 0.0
    %3257 = vmatpush1.msra.mxu0 0.0
    %3258 = vmatprep.subr.mxu0 0.0
    %3259 = vmatpush1.msra.mxu0 0.0
    %3260 = vmatprep.subr.mxu0 0.0
    %3261 = vmatpush1.msra.mxu0 0.0
    %3262 = vmatprep.subr.mxu0 0.0
    %3263 = vmatpush1.msra.mxu0 0.0
    %3264 = vmatprep.subr.mxu0 0.0
    %3265 = vmatpush1.msra.mxu0 %v2097
    %3266 = vmatprep.subr.mxu0 0.0
    %3267 = vmatpush1.msra.mxu0 %v2096
    %3268 = vmatprep.subr.mxu0 0.0
    %3269 = vmatpush2.msra.mxu0 0.0
    %3270 = vmatprep.subr.mxu0 0.0
    %3271 = vmatpush2.msra.mxu0 0.0
    %3272 = vmatprep.subr.mxu0 0.0
    %3273 = vmatpush2.msra.mxu0 0.0
    %3274 = vmatprep.subr.mxu0 0.0
    %3275 = vmatpush2.msra.mxu0 0.0
    %3276 = vmatprep.subr.mxu0 0.0
    %3277 = vmatpush2.msra.mxu0 0.0
    %3278 = vmatprep.subr.mxu0 0.0
    %3279 = vmatpush2.msra.mxu0 0.0
    %3280 = vmatprep.subr.mxu0 0.0
    %3281 = vmatpush2.msra.mxu0 0.0
    %3282 = vmatprep.subr.mxu0 0.0
    %3283 = vmatpush2.msra.mxu0 0.0
    %3284 = vmatprep.subr.mxu0 0.0
    %3285 = vmatpush2.msra.mxu0 0.0
    %3286 = vmatprep.subr.mxu0 0.0
    %3287 = vmatpush2.msra.mxu0 0.0
    %3288 = vmatprep.subr.mxu0 0.0
    %3289 = vmatpush2.msra.mxu0 0.0
    %3290 = vmatprep.subr.mxu0 0.0
    %3291 = vmatpush2.msra.mxu0 0.0
    %3292 = vmatprep.subr.mxu0 0.0
    %3293 = vmatpush2.msra.mxu0 0.0
    %3294 = vmatprep.subr.mxu0 0.0
    %3295 = vmatpush2.msra.mxu0 0.0
    %3296 = vmatprep.subr.mxu0 0.0
    %3297 = vmatpush2.msra.mxu0 0.0
    %3298 = vmatprep.subr.mxu0 0.0
    %3299 = vmatpush2.msra.mxu0 0.0
    %3300 = vmatprep.mubr.f32.mxu0 0.0
    %3301 = vmatmul.mubr.f32.gmra.mxu0 %v3231
    %v3302 = vpop.f32.mrf.mxu0
    %v3303 = vadd.f32 0.0, %v3302
    %v3304 = vpop.f32.mrf.mxu0
    %3305 = vmatprep.mubr.f32.mxu0 0.0
    %3306 = vmatmul.mubr.f32.gmra.mxu0 %v3234
    %v3307 = vpop.f32.mrf.mxu0
    %v3308 = vadd.f32 0.0, %v3307
    %v3309 = vpop.f32.mrf.mxu0
    %3310 = vdwg.mxu0
    %3311 = vmatprep.subr.mxu0 0.0
    %3312 = vmatpush1.msra.mxu0 0.0
    %3313 = vmatprep.subr.mxu0 0.0
    %3314 = vmatpush1.msra.mxu0 0.0
    %3315 = vmatprep.subr.mxu0 0.0
    %3316 = vmatpush1.msra.mxu0 0.0
    %3317 = vmatprep.subr.mxu0 0.0
    %3318 = vmatpush1.msra.mxu0 0.0
    %3319 = vmatprep.subr.mxu0 0.0
    %3320 = vmatpush1.msra.mxu0 0.0
    %3321 = vmatprep.subr.mxu0 0.0
    %3322 = vmatpush1.msra.mxu0 0.0
    %3323 = vmatprep.subr.mxu0 0.0
    %3324 = vmatpush1.msra.mxu0 0.0
    %3325 = vmatprep.subr.mxu0 0.0
    %3326 = vmatpush1.msra.mxu0 0.0
    %3327 = vmatprep.subr.mxu0 0.0
    %3328 = vmatpush1.msra.mxu0 0.0
    %3329 = vmatprep.subr.mxu0 0.0
    %3330 = vmatpush1.msra.mxu0 0.0
    %3331 = vmatprep.subr.mxu0 0.0
    %3332 = vmatpush1.msra.mxu0 0.0
    %3333 = vmatprep.subr.mxu0 0.0
    %3334 = vmatpush1.msra.mxu0 0.0
    %3335 = vmatprep.subr.mxu0 0.0
    %3336 = vmatpush1.msra.mxu0 0.0
    %3337 = vmatprep.subr.mxu0 0.0
    %3338 = vmatpush1.msra.mxu0 0.0
    %3339 = vmatprep.subr.mxu0 0.0
    %3340 = vmatpush1.msra.mxu0 %v3308
    %3341 = vmatprep.subr.mxu0 0.0
    %3342 = vmatpush1.msra.mxu0 %v3303
    %3343 = vmatprep.subr.mxu0 0.0
    %3344 = vmatpush2.msra.mxu0 0.0
    %3345 = vmatprep.subr.mxu0 0.0
    %3346 = vmatpush2.msra.mxu0 0.0
    %3347 = vmatprep.subr.mxu0 0.0
    %3348 = vmatpush2.msra.mxu0 0.0
    %3349 = vmatprep.subr.mxu0 0.0
    %3350 = vmatpush2.msra.mxu0 0.0
    %3351 = vmatprep.subr.mxu0 0.0
    %3352 = vmatpush2.msra.mxu0 0.0
    %3353 = vmatprep.subr.mxu0 0.0
    %3354 = vmatpush2.msra.mxu0 0.0
    %3355 = vmatprep.subr.mxu0 0.0
    %3356 = vmatpush2.msra.mxu0 0.0
    %3357 = vmatprep.subr.mxu0 0.0
    %3358 = vmatpush2.msra.mxu0 0.0
    %3359 = vmatprep.subr.mxu0 0.0
    %3360 = vmatpush2.msra.mxu0 0.0
    %3361 = vmatprep.subr.mxu0 0.0
    %3362 = vmatpush2.msra.mxu0 0.0
    %3363 = vmatprep.subr.mxu0 0.0
    %3364 = vmatpush2.msra.mxu0 0.0
    %3365 = vmatprep.subr.mxu0 0.0
    %3366 = vmatpush2.msra.mxu0 0.0
    %3367 = vmatprep.subr.mxu0 0.0
    %3368 = vmatpush2.msra.mxu0 0.0
    %3369 = vmatprep.subr.mxu0 0.0
    %3370 = vmatpush2.msra.mxu0 0.0
    %3371 = vmatprep.subr.mxu0 0.0
    %3372 = vmatpush2.msra.mxu0 0.0
    %3373 = vmatprep.subr.mxu0 0.0
    %3374 = vmatpush2.msra.mxu0 0.0
    %3375 = vmatprep.mubr.f32.mxu0 0.0
    %3376 = vmatmul.mubr.f32.gmra.mxu0 %v3147
    %v3377 = vpop.f32.mrf.mxu0
    %v3378 = vadd.f32 0.0, %v3377
    %v3379 = vpop.f32.mrf.mxu0
    %3380 = vmatprep.mubr.f32.mxu0 0.0
    %3381 = vmatmul.mubr.f32.gmra.mxu0 %v3150
    %v3382 = vpop.f32.mrf.mxu0
    %v3383 = vadd.f32 0.0, %v3382
    %v3384 = vpop.f32.mrf.mxu0
    %3385 = vdwg.mxu0
    %v3386 = vmul.f32 %v3378, %v3378
    %v3387 = vmul.f32 %v3383, %v3383
    %3388 = vadd.xlane.f32.xlu0 %v3386
    %v3389 = vpop.xlane.xlu0 %3388
    %3390 = vadd.xlane.f32.xlu0 %v3387
    %v3391 = vpop.xlane.xlu0 %3390
    %v3392 = vmax.f32 %v3389, 1e-24
    %v3393 = vmax.f32 %v3391, 1e-24
    %v3394 = vrsqrt.pop %v3392
    %v3395 = vrsqrt.pop %v3393
    %v3396 = vmul.f32 %v3378, %v3394
    %v3397 = vmul.f32 %v3383, %v3395
    %3398 = vmatprep.subr.mxu0 0.0
    %3399 = vmatpush1.msra.mxu0 0.0
    %3400 = vmatprep.subr.mxu0 0.0
    %3401 = vmatpush1.msra.mxu0 0.0
    %3402 = vmatprep.subr.mxu0 0.0
    %3403 = vmatpush1.msra.mxu0 0.0
    %3404 = vmatprep.subr.mxu0 0.0
    %3405 = vmatpush1.msra.mxu0 0.0
    %3406 = vmatprep.subr.mxu0 0.0
    %3407 = vmatpush1.msra.mxu0 0.0
    %3408 = vmatprep.subr.mxu0 0.0
    %3409 = vmatpush1.msra.mxu0 0.0
    %3410 = vmatprep.subr.mxu0 0.0
    %3411 = vmatpush1.msra.mxu0 0.0
    %3412 = vmatprep.subr.mxu0 0.0
    %3413 = vmatpush1.msra.mxu0 0.0
    %3414 = vmatprep.subr.mxu0 0.0
    %3415 = vmatpush1.msra.mxu0 0.0
    %3416 = vmatprep.subr.mxu0 0.0
    %3417 = vmatpush1.msra.mxu0 0.0
    %3418 = vmatprep.subr.mxu0 0.0
    %3419 = vmatpush1.msra.mxu0 0.0
    %3420 = vmatprep.subr.mxu0 0.0
    %3421 = vmatpush1.msra.mxu0 0.0
    %3422 = vmatprep.subr.mxu0 0.0
    %3423 = vmatpush1.msra.mxu0 0.0
    %3424 = vmatprep.subr.mxu0 0.0
    %3425 = vmatpush1.msra.mxu0 0.0
    %3426 = vmatprep.subr.mxu0 0.0
    %3427 = vmatpush1.msra.mxu0 %v1838
    %3428 = vmatprep.subr.mxu0 0.0
    %3429 = vmatpush1.msra.mxu0 %v1837
    %3430 = vmatprep.subr.mxu0 0.0
    %3431 = vmatpush2.msra.mxu0 0.0
    %3432 = vmatprep.subr.mxu0 0.0
    %3433 = vmatpush2.msra.mxu0 0.0
    %3434 = vmatprep.subr.mxu0 0.0
    %3435 = vmatpush2.msra.mxu0 0.0
    %3436 = vmatprep.subr.mxu0 0.0
    %3437 = vmatpush2.msra.mxu0 0.0
    %3438 = vmatprep.subr.mxu0 0.0
    %3439 = vmatpush2.msra.mxu0 0.0
    %3440 = vmatprep.subr.mxu0 0.0
    %3441 = vmatpush2.msra.mxu0 0.0
    %3442 = vmatprep.subr.mxu0 0.0
    %3443 = vmatpush2.msra.mxu0 0.0
    %3444 = vmatprep.subr.mxu0 0.0
    %3445 = vmatpush2.msra.mxu0 0.0
    %3446 = vmatprep.subr.mxu0 0.0
    %3447 = vmatpush2.msra.mxu0 0.0
    %3448 = vmatprep.subr.mxu0 0.0
    %3449 = vmatpush2.msra.mxu0 0.0
    %3450 = vmatprep.subr.mxu0 0.0
    %3451 = vmatpush2.msra.mxu0 0.0
    %3452 = vmatprep.subr.mxu0 0.0
    %3453 = vmatpush2.msra.mxu0 0.0
    %3454 = vmatprep.subr.mxu0 0.0
    %3455 = vmatpush2.msra.mxu0 0.0
    %3456 = vmatprep.subr.mxu0 0.0
    %3457 = vmatpush2.msra.mxu0 0.0
    %3458 = vmatprep.subr.mxu0 0.0
    %3459 = vmatpush2.msra.mxu0 0.0
    %3460 = vmatprep.subr.mxu0 0.0
    %3461 = vmatpush2.msra.mxu0 0.0
    %3462 = vmatprep.mubr.f32.mxu0 0.0
    %3463 = vmatmul.mubr.f32.gmra.mxu0 %v3147
    %v3464 = vpop.f32.mrf.mxu0
    %v3465 = vadd.f32 0.0, %v3464
    %v3466 = vpop.f32.mrf.mxu0
    %3467 = vmatprep.mubr.f32.mxu0 0.0
    %3468 = vmatmul.mubr.f32.gmra.mxu0 %v3150
    %v3469 = vpop.f32.mrf.mxu0
    %v3470 = vadd.f32 0.0, %v3469
    %v3471 = vpop.f32.mrf.mxu0
    %3472 = vdwg.mxu0
    %v3474 = vsel %vm256, %v3465, 0
    %v3477 = vsel %vm256, %v3470, 0
    %3479 = vmatprep.subr.mxu0 0.0
    %3480 = vmatpush1.msra.mxu0 0.0
    %3481 = vmatprep.subr.mxu0 0.0
    %3482 = vmatpush1.msra.mxu0 0.0
    %3483 = vmatprep.subr.mxu0 0.0
    %3484 = vmatpush1.msra.mxu0 0.0
    %3485 = vmatprep.subr.mxu0 0.0
    %3486 = vmatpush1.msra.mxu0 0.0
    %3487 = vmatprep.subr.mxu0 0.0
    %3488 = vmatpush1.msra.mxu0 0.0
    %3489 = vmatprep.subr.mxu0 0.0
    %3490 = vmatpush1.msra.mxu0 0.0
    %3491 = vmatprep.subr.mxu0 0.0
    %3492 = vmatpush1.msra.mxu0 0.0
    %3493 = vmatprep.subr.mxu0 0.0
    %3494 = vmatpush1.msra.mxu0 0.0
    %3495 = vmatprep.subr.mxu0 0.0
    %3496 = vmatpush1.msra.mxu0 0.0
    %3497 = vmatprep.subr.mxu0 0.0
    %3498 = vmatpush1.msra.mxu0 0.0
    %3499 = vmatprep.subr.mxu0 0.0
    %3500 = vmatpush1.msra.mxu0 0.0
    %3501 = vmatprep.subr.mxu0 0.0
    %3502 = vmatpush1.msra.mxu0 0.0
    %3503 = vmatprep.subr.mxu0 0.0
    %3504 = vmatpush1.msra.mxu0 0.0
    %3505 = vmatprep.subr.mxu0 0.0
    %3506 = vmatpush1.msra.mxu0 0.0
    %3507 = vmatprep.subr.mxu0 0.0
    %3508 = vmatpush1.msra.mxu0 %v3145
    %3509 = vmatprep.subr.mxu0 0.0
    %3510 = vmatpush1.msra.mxu0 %v3144
    %3511 = vmatprep.subr.mxu0 0.0
    %3512 = vmatpush2.msra.mxu0 0.0
    %3513 = vmatprep.subr.mxu0 0.0
    %3514 = vmatpush2.msra.mxu0 0.0
    %3515 = vmatprep.subr.mxu0 0.0
    %3516 = vmatpush2.msra.mxu0 0.0
    %3517 = vmatprep.subr.mxu0 0.0
    %3518 = vmatpush2.msra.mxu0 0.0
    %3519 = vmatprep.subr.mxu0 0.0
    %3520 = vmatpush2.msra.mxu0 0.0
    %3521 = vmatprep.subr.mxu0 0.0
    %3522 = vmatpush2.msra.mxu0 0.0
    %3523 = vmatprep.subr.mxu0 0.0
    %3524 = vmatpush2.msra.mxu0 0.0
    %3525 = vmatprep.subr.mxu0 0.0
    %3526 = vmatpush2.msra.mxu0 0.0
    %3527 = vmatprep.subr.mxu0 0.0
    %3528 = vmatpush2.msra.mxu0 0.0
    %3529 = vmatprep.subr.mxu0 0.0
    %3530 = vmatpush2.msra.mxu0 0.0
    %3531 = vmatprep.subr.mxu0 0.0
    %3532 = vmatpush2.msra.mxu0 0.0
    %3533 = vmatprep.subr.mxu0 0.0
    %3534 = vmatpush2.msra.mxu0 0.0
    %3535 = vmatprep.subr.mxu0 0.0
    %3536 = vmatpush2.msra.mxu0 0.0
    %3537 = vmatprep.subr.mxu0 0.0
    %3538 = vmatpush2.msra.mxu0 0.0
    %3539 = vmatprep.subr.mxu0 0.0
    %3540 = vmatpush2.msra.mxu0 0.0
    %3541 = vmatprep.subr.mxu0 0.0
    %3542 = vmatpush2.msra.mxu0 0.0
    %3543 = vmatprep.mubr.f32.mxu0 0.0
    %3544 = vmatmul.mubr.f32.gmra.mxu0 %v3474
    %v3545 = vpop.f32.mrf.mxu0
    %v3546 = vadd.f32 0.0, %v3545
    %v3547 = vpop.f32.mrf.mxu0
    %3548 = vmatprep.mubr.f32.mxu0 0.0
    %3549 = vmatmul.mubr.f32.gmra.mxu0 %v3477
    %v3550 = vpop.f32.mrf.mxu0
    %v3551 = vadd.f32 0.0, %v3550
    %v3552 = vpop.f32.mrf.mxu0
    %3553 = vdwg.mxu0
    %3554 = vxpose.xlu0.b32.start [1/16] %v3546, 128
    %3555 = vxpose.xlu0.b32.cont [2/16] %v3551, 128
    %3556 = vxpose.xlu0.b32.cont [3/16] 0.0, 128
    %3557 = vxpose.xlu0.b32.cont [4/16] 0.0, 128
    %3558 = vxpose.xlu0.b32.cont [5/16] 0.0, 128
    %3559 = vxpose.xlu0.b32.cont [6/16] 0.0, 128
    %3560 = vxpose.xlu0.b32.cont [7/16] 0.0, 128
    %3561 = vxpose.xlu0.b32.cont [8/16] 0.0, 128
    %3562 = vxpose.xlu0.b32.cont [9/16] 0.0, 128
    %3563 = vxpose.xlu0.b32.cont [10/16] 0.0, 128
    %3564 = vxpose.xlu0.b32.cont [11/16] 0.0, 128
    %3565 = vxpose.xlu0.b32.cont [12/16] 0.0, 128
    %3566 = vxpose.xlu0.b32.cont [13/16] 0.0, 128
    %3567 = vxpose.xlu0.b32.cont [14/16] 0.0, 128
    %3568 = vxpose.xlu0.b32.cont [15/16] 0.0, 128
    %3569 = vxpose.xlu0.b32.end [16/16] 0.0, 128
    %v3570 = vpop.trf.xlu0
    %v3571 = vpop.trf.xlu0
    %v3572 = vpop.trf.xlu0
    %v3573 = vpop.trf.xlu0
    %v3574 = vpop.trf.xlu0
    %v3575 = vpop.trf.xlu0
    %v3576 = vpop.trf.xlu0
    %v3577 = vpop.trf.xlu0
    %v3578 = vpop.trf.xlu0
    %v3579 = vpop.trf.xlu0
    %v3580 = vpop.trf.xlu0
    %v3581 = vpop.trf.xlu0
    %v3582 = vpop.trf.xlu0
    %v3583 = vpop.trf.xlu0
    %v3584 = vpop.trf.xlu0
    %v3585 = vpop.trf.xlu0
    %v3586 = vadd.f32 %v3546, %v3570
    %v3587 = vadd.f32 %v3551, %v3571
    %v3588 = vmul.f32 %v3586, 0.5
    %v3589 = vmul.f32 %v3587, 0.5
    %v3590 = vadd.f32 %v3588, %v153
    %v3591 = vadd.f32 %v3589, %v154
    %v3592 = vsel %vm256, %v3590, 0.0
    %v3593 = vsel %vm256, %v3591, 0.0
    %v3594 = vadd.f32 %v3592, %v3593
    %v3595 = vrot.slane %v3594, 4
    %v3596 = vadd.f32 %v3594, %v3595
    %v3597 = vrot.slane %v3596, 2
    %v3598 = vadd.f32 %v3596, %v3597
    %v3599 = vrot.slane %v3598, 1
    %v3600 = vadd.f32 %v3598, %v3599
    %v3601 = vmax.f32 %v3600, 1e-12
    %v3602 = vrsqrt.pop %v3601
    %v3603 = vmul.f32 %v3590, %v3602
    %v3604 = vmul.f32 %v3591, %v3602
    %3605 = vxpose.xlu0.b32.start [1/16] %v3602, 128
    %3606 = vxpose.xlu0.b32.cont [2/16] 0.0, 128
    %3607 = vxpose.xlu0.b32.cont [3/16] 0.0, 128
    %3608 = vxpose.xlu0.b32.cont [4/16] 0.0, 128
    %3609 = vxpose.xlu0.b32.cont [5/16] 0.0, 128
    %3610 = vxpose.xlu0.b32.cont [6/16] 0.0, 128
    %3611 = vxpose.xlu0.b32.cont [7/16] 0.0, 128
    %3612 = vxpose.xlu0.b32.cont [8/16] 0.0, 128
    %3613 = vxpose.xlu0.b32.cont [9/16] 0.0, 128
    %3614 = vxpose.xlu0.b32.cont [10/16] 0.0, 128
    %3615 = vxpose.xlu0.b32.cont [11/16] 0.0, 128
    %3616 = vxpose.xlu0.b32.cont [12/16] 0.0, 128
    %3617 = vxpose.xlu0.b32.cont [13/16] 0.0, 128
    %3618 = vxpose.xlu0.b32.cont [14/16] 0.0, 128
    %3619 = vxpose.xlu0.b32.cont [15/16] 0.0, 128
    %3620 = vxpose.xlu0.b32.end [16/16] 0.0, 128
    %v3621 = vpop.trf.xlu0
    %v3622 = vpop.trf.xlu0
    %v3623 = vpop.trf.xlu0
    %v3624 = vpop.trf.xlu0
    %v3625 = vpop.trf.xlu0
    %v3626 = vpop.trf.xlu0
    %v3627 = vpop.trf.xlu0
    %v3628 = vpop.trf.xlu0
    %v3629 = vpop.trf.xlu0
    %v3630 = vpop.trf.xlu0
    %v3631 = vpop.trf.xlu0
    %v3632 = vpop.trf.xlu0
    %v3633 = vpop.trf.xlu0
    %v3634 = vpop.trf.xlu0
    %v3635 = vpop.trf.xlu0
    %v3636 = vpop.trf.xlu0
    %3638 = vset.pattern.permute.xlu0 0
    %3639 = vperm.xlu0 %3638, %v3621
    %v3640 = vpop.permute.xlu0 %3639
    %3643 = vset.pattern.permute.xlu0 0
    %3644 = vperm.xlu0 %3643, %v3622
    %v3645 = vpop.permute.xlu0 %3644
    %v3647 = vmul.f32 %v3603, %v3640
    %v3648 = vmul.f32 %v3604, %v3645
    %vm3649 = vcmp.eq.f32.partialorder %v3133, %v157
    %v3650 = vsel %vm3649, 1, 0
    %v3651 = vcvt.s32.f32 %v3650
    %v3652 = vmul.f32 %v1900, %v3651
    %s3653 = scalar_lea.vmem [#allocation3], 256
    %v3654 = vld [vmem:[%s3653] sm:$0xff]
    %v3655 = vld [vmem:[%s3653 + $0x8] sm:$0xff]
    %v3656 = vld [vmem:[%s3653 + $0x10] sm:$0xff]
    %v3657 = vld [vmem:[%s3653 + $0x18] sm:$0xff]
    %v3658 = vld [vmem:[%s3653 + $0x20] sm:$0xff]
    %v3659 = vld [vmem:[%s3653 + $0x28] sm:$0xff]
    %v3660 = vld [vmem:[%s3653 + $0x30] sm:$0xff]
    %v3661 = vld [vmem:[%s3653 + $0x38] sm:$0xff]
    %v3662 = vld [vmem:[%s3653 + $0x40] sm:$0xff]
    %v3663 = vld [vmem:[%s3653 + $0x48] sm:$0xff]
    %v3664 = vld [vmem:[%s3653 + $0x50] sm:$0xff]
    %v3665 = vld [vmem:[%s3653 + $0x58] sm:$0xff]
    %v3666 = vld [vmem:[%s3653 + $0x60] sm:$0xff]
    %v3667 = vld [vmem:[%s3653 + $0x68] sm:$0xff]
    %v3668 = vld [vmem:[%s3653 + $0x70] sm:$0xff]
    %v3669 = vld [vmem:[%s3653 + $0x78] sm:$0xff]
    %3670 = vmatprep.subr.mxu0 0.0
    %3671 = vmatpush1.msra.mxu0 %v3669
    %3672 = vmatprep.subr.mxu0 0.0
    %3673 = vmatpush1.msra.mxu0 %v3668
    %3674 = vmatprep.subr.mxu0 0.0
    %3675 = vmatpush1.msra.mxu0 %v3667
    %3676 = vmatprep.subr.mxu0 0.0
    %3677 = vmatpush1.msra.mxu0 %v3666
    %3678 = vmatprep.subr.mxu0 0.0
    %3679 = vmatpush1.msra.mxu0 %v3665
    %3680 = vmatprep.subr.mxu0 0.0
    %3681 = vmatpush1.msra.mxu0 %v3664
    %3682 = vmatprep.subr.mxu0 0.0
    %3683 = vmatpush1.msra.mxu0 %v3663
    %3684 = vmatprep.subr.mxu0 0.0
    %3685 = vmatpush1.msra.mxu0 %v3662
    %3686 = vmatprep.subr.mxu0 0.0
    %3687 = vmatpush1.msra.mxu0 %v3661
    %3688 = vmatprep.subr.mxu0 0.0
    %3689 = vmatpush1.msra.mxu0 %v3660
    %3690 = vmatprep.subr.mxu0 0.0
    %3691 = vmatpush1.msra.mxu0 %v3659
    %3692 = vmatprep.subr.mxu0 0.0
    %3693 = vmatpush1.msra.mxu0 %v3658
    %3694 = vmatprep.subr.mxu0 0.0
    %3695 = vmatpush1.msra.mxu0 %v3657
    %3696 = vmatprep.subr.mxu0 0.0
    %3697 = vmatpush1.msra.mxu0 %v3656
    %3698 = vmatprep.subr.mxu0 0.0
    %3699 = vmatpush1.msra.mxu0 %v3655
    %3700 = vmatprep.subr.mxu0 0.0
    %3701 = vmatpush1.msra.mxu0 %v3654
    %3702 = vmatprep.subr.mxu0 0.0
    %3703 = vmatpush2.msra.mxu0 0.0
    %3704 = vmatprep.subr.mxu0 0.0
    %3705 = vmatpush2.msra.mxu0 0.0
    %3706 = vmatprep.subr.mxu0 0.0
    %3707 = vmatpush2.msra.mxu0 0.0
    %3708 = vmatprep.subr.mxu0 0.0
    %3709 = vmatpush2.msra.mxu0 0.0
    %3710 = vmatprep.subr.mxu0 0.0
    %3711 = vmatpush2.msra.mxu0 0.0
    %3712 = vmatprep.subr.mxu0 0.0
    %3713 = vmatpush2.msra.mxu0 0.0
    %3714 = vmatprep.subr.mxu0 0.0
    %3715 = vmatpush2.msra.mxu0 0.0
    %3716 = vmatprep.subr.mxu0 0.0
    %3717 = vmatpush2.msra.mxu0 0.0
    %3718 = vmatprep.subr.mxu0 0.0
    %3719 = vmatpush2.msra.mxu0 0.0
    %3720 = vmatprep.subr.mxu0 0.0
    %3721 = vmatpush2.msra.mxu0 0.0
    %3722 = vmatprep.subr.mxu0 0.0
    %3723 = vmatpush2.msra.mxu0 0.0
    %3724 = vmatprep.subr.mxu0 0.0
    %3725 = vmatpush2.msra.mxu0 0.0
    %3726 = vmatprep.subr.mxu0 0.0
    %3727 = vmatpush2.msra.mxu0 0.0
    %3728 = vmatprep.subr.mxu0 0.0
    %3729 = vmatpush2.msra.mxu0 0.0
    %3730 = vmatprep.subr.mxu0 0.0
    %3731 = vmatpush2.msra.mxu0 0.0
    %3732 = vmatprep.subr.mxu0 0.0
    %3733 = vmatpush2.msra.mxu0 0.0
    %3734 = vmatprep.mubr.f32.mxu0 0.0
    %3735 = vmatmul.mubr.f32.gmra.mxu0 %v3396
    %v3736 = vpop.f32.mrf.mxu0
    %v3737 = vadd.f32 0.0, %v3736
    %v3738 = vpop.f32.mrf.mxu0
    %3739 = vmatprep.mubr.f32.mxu0 0.0
    %3740 = vmatmul.mubr.f32.gmra.mxu0 %v3397
    %v3741 = vpop.f32.mrf.mxu0
    %v3742 = vadd.f32 0.0, %v3741
    %v3743 = vpop.f32.mrf.mxu0
    %3744 = vdwg.mxu0
    %s3745 = scalar_lea.vmem %s4, 2
    %v3746 = vld [vmem:[%s3745] sm:$0x1]
    %v3748 = vlaneseq
    %v3749 = vshrl.u32 %v3748, 7
    %v3750 = vsub.s32 0, %v3749
    %v3751 = vrot.slane %v3746, %v3750
    %v3754 = vsel %vm256, %v3647, 0
    %v3757 = vsel %vm256, %v3648, 0
    %3759 = vmatprep.subr.mxu0 0.0
    %3760 = vmatpush1.msra.mxu0 0.0
    %3761 = vmatprep.subr.mxu0 0.0
    %3762 = vmatpush1.msra.mxu0 0.0
    %3763 = vmatprep.subr.mxu0 0.0
    %3764 = vmatpush1.msra.mxu0 0.0
    %3765 = vmatprep.subr.mxu0 0.0
    %3766 = vmatpush1.msra.mxu0 0.0
    %3767 = vmatprep.subr.mxu0 0.0
    %3768 = vmatpush1.msra.mxu0 0.0
    %3769 = vmatprep.subr.mxu0 0.0
    %3770 = vmatpush1.msra.mxu0 0.0
    %3771 = vmatprep.subr.mxu0 0.0
    %3772 = vmatpush1.msra.mxu0 0.0
    %3773 = vmatprep.subr.mxu0 0.0
    %3774 = vmatpush1.msra.mxu0 0.0
    %3775 = vmatprep.subr.mxu0 0.0
    %3776 = vmatpush1.msra.mxu0 0.0
    %3777 = vmatprep.subr.mxu0 0.0
    %3778 = vmatpush1.msra.mxu0 0.0
    %3779 = vmatprep.subr.mxu0 0.0
    %3780 = vmatpush1.msra.mxu0 0.0
    %3781 = vmatprep.subr.mxu0 0.0
    %3782 = vmatpush1.msra.mxu0 0.0
    %3783 = vmatprep.subr.mxu0 0.0
    %3784 = vmatpush1.msra.mxu0 0.0
    %3785 = vmatprep.subr.mxu0 0.0
    %3786 = vmatpush1.msra.mxu0 0.0
    %3787 = vmatprep.subr.mxu0 0.0
    %3788 = vmatpush1.msra.mxu0 %v3742
    %3789 = vmatprep.subr.mxu0 0.0
    %3790 = vmatpush1.msra.mxu0 %v3737
    %3791 = vmatprep.subr.mxu0 0.0
    %3792 = vmatpush2.msra.mxu0 0.0
    %3793 = vmatprep.subr.mxu0 0.0
    %3794 = vmatpush2.msra.mxu0 0.0
    %3795 = vmatprep.subr.mxu0 0.0
    %3796 = vmatpush2.msra.mxu0 0.0
    %3797 = vmatprep.subr.mxu0 0.0
    %3798 = vmatpush2.msra.mxu0 0.0
    %3799 = vmatprep.subr.mxu0 0.0
    %3800 = vmatpush2.msra.mxu0 0.0
    %3801 = vmatprep.subr.mxu0 0.0
    %3802 = vmatpush2.msra.mxu0 0.0
    %3803 = vmatprep.subr.mxu0 0.0
    %3804 = vmatpush2.msra.mxu0 0.0
    %3805 = vmatprep.subr.mxu0 0.0
    %3806 = vmatpush2.msra.mxu0 0.0
    %3807 = vmatprep.subr.mxu0 0.0
    %3808 = vmatpush2.msra.mxu0 0.0
    %3809 = vmatprep.subr.mxu0 0.0
    %3810 = vmatpush2.msra.mxu0 0.0
    %3811 = vmatprep.subr.mxu0 0.0
    %3812 = vmatpush2.msra.mxu0 0.0
    %3813 = vmatprep.subr.mxu0 0.0
    %3814 = vmatpush2.msra.mxu0 0.0
    %3815 = vmatprep.subr.mxu0 0.0
    %3816 = vmatpush2.msra.mxu0 0.0
    %3817 = vmatprep.subr.mxu0 0.0
    %3818 = vmatpush2.msra.mxu0 0.0
    %3819 = vmatprep.subr.mxu0 0.0
    %3820 = vmatpush2.msra.mxu0 0.0
    %3821 = vmatprep.subr.mxu0 0.0
    %3822 = vmatpush2.msra.mxu0 0.0
    %3823 = vmatprep.mubr.f32.mxu0 0.0
    %3824 = vmatmul.mubr.f32.gmra.mxu0 %v3754
    %v3825 = vpop.f32.mrf.mxu0
    %v3826 = vadd.f32 %v3751, %v3825
    %v3827 = vpop.f32.mrf.mxu0
    %3828 = vmatprep.mubr.f32.mxu0 0.0
    %3829 = vmatmul.mubr.f32.gmra.mxu0 %v3757
    %v3830 = vpop.f32.mrf.mxu0
    %v3831 = vadd.f32 %v3751, %v3830
    %v3832 = vpop.f32.mrf.mxu0
    %3833 = vdwg.mxu0
    %v3834 = vmax.f32 %v3826, 0.0
    %v3835 = vmax.f32 %v3831, 0.0
    %v3836 = vadd.f32 %v3834, %v3396
    %v3837 = vadd.f32 %v3835, %v3397
    %v3838 = vmul.f32 %v3836, %v3836
    %v3839 = vmul.f32 %v3837, %v3837
    %3840 = vadd.xlane.f32.xlu0 %v3838
    %v3841 = vpop.xlane.xlu0 %3840
    %3842 = vadd.xlane.f32.xlu0 %v3839
    %v3843 = vpop.xlane.xlu0 %3842
    %v3844 = vmax.f32 %v3841, 1e-24
    %v3845 = vmax.f32 %v3843, 1e-24
    %v3846 = vrsqrt.pop %v3844
    %v3847 = vrsqrt.pop %v3845
    %v3848 = vmul.f32 %v3836, %v3846
    %v3849 = vmul.f32 %v3837, %v3847
    %s3850 = scalar_lea.vmem [#allocation5], 256
    %v3851 = vld [vmem:[%s3850] sm:$0xff]
    %v3852 = vld [vmem:[%s3850 + $0x8] sm:$0xff]
    %v3853 = vld [vmem:[%s3850 + $0x10] sm:$0xff]
    %v3854 = vld [vmem:[%s3850 + $0x18] sm:$0xff]
    %v3855 = vld [vmem:[%s3850 + $0x20] sm:$0xff]
    %v3856 = vld [vmem:[%s3850 + $0x28] sm:$0xff]
    %v3857 = vld [vmem:[%s3850 + $0x30] sm:$0xff]
    %v3858 = vld [vmem:[%s3850 + $0x38] sm:$0xff]
    %v3859 = vld [vmem:[%s3850 + $0x40] sm:$0xff]
    %v3860 = vld [vmem:[%s3850 + $0x48] sm:$0xff]
    %v3861 = vld [vmem:[%s3850 + $0x50] sm:$0xff]
    %v3862 = vld [vmem:[%s3850 + $0x58] sm:$0xff]
    %v3863 = vld [vmem:[%s3850 + $0x60] sm:$0xff]
    %v3864 = vld [vmem:[%s3850 + $0x68] sm:$0xff]
    %v3865 = vld [vmem:[%s3850 + $0x70] sm:$0xff]
    %v3866 = vld [vmem:[%s3850 + $0x78] sm:$0xff]
    %s3867 = scalar_lea.vmem %s6, 2
    %v3868 = vld [vmem:[%s3867] sm:$0x1]
    %v3870 = vlaneseq
    %v3871 = vshrl.u32 %v3870, 7
    %v3872 = vsub.s32 0, %v3871
    %v3873 = vrot.slane %v3868, %v3872
    %3875 = vmatprep.subr.mxu0 0.0
    %3876 = vmatpush1.msra.mxu0 %v3866
    %3877 = vmatprep.subr.mxu0 0.0
    %3878 = vmatpush1.msra.mxu0 %v3865
    %3879 = vmatprep.subr.mxu0 0.0
    %3880 = vmatpush1.msra.mxu0 %v3864
    %3881 = vmatprep.subr.mxu0 0.0
    %3882 = vmatpush1.msra.mxu0 %v3863
    %3883 = vmatprep.subr.mxu0 0.0
    %3884 = vmatpush1.msra.mxu0 %v3862
    %3885 = vmatprep.subr.mxu0 0.0
    %3886 = vmatpush1.msra.mxu0 %v3861
    %3887 = vmatprep.subr.mxu0 0.0
    %3888 = vmatpush1.msra.mxu0 %v3860
    %3889 = vmatprep.subr.mxu0 0.0
    %3890 = vmatpush1.msra.mxu0 %v3859
    %3891 = vmatprep.subr.mxu0 0.0
    %3892 = vmatpush1.msra.mxu0 %v3858
    %3893 = vmatprep.subr.mxu0 0.0
    %3894 = vmatpush1.msra.mxu0 %v3857
    %3895 = vmatprep.subr.mxu0 0.0
    %3896 = vmatpush1.msra.mxu0 %v3856
    %3897 = vmatprep.subr.mxu0 0.0
    %3898 = vmatpush1.msra.mxu0 %v3855
    %3899 = vmatprep.subr.mxu0 0.0
    %3900 = vmatpush1.msra.mxu0 %v3854
    %3901 = vmatprep.subr.mxu0 0.0
    %3902 = vmatpush1.msra.mxu0 %v3853
    %3903 = vmatprep.subr.mxu0 0.0
    %3904 = vmatpush1.msra.mxu0 %v3852
    %3905 = vmatprep.subr.mxu0 0.0
    %3906 = vmatpush1.msra.mxu0 %v3851
    %3907 = vmatprep.subr.mxu0 0.0
    %3908 = vmatpush2.msra.mxu0 0.0
    %3909 = vmatprep.subr.mxu0 0.0
    %3910 = vmatpush2.msra.mxu0 0.0
    %3911 = vmatprep.subr.mxu0 0.0
    %3912 = vmatpush2.msra.mxu0 0.0
    %3913 = vmatprep.subr.mxu0 0.0
    %3914 = vmatpush2.msra.mxu0 0.0
    %3915 = vmatprep.subr.mxu0 0.0
    %3916 = vmatpush2.msra.mxu0 0.0
    %3917 = vmatprep.subr.mxu0 0.0
    %3918 = vmatpush2.msra.mxu0 0.0
    %3919 = vmatprep.subr.mxu0 0.0
    %3920 = vmatpush2.msra.mxu0 0.0
    %3921 = vmatprep.subr.mxu0 0.0
    %3922 = vmatpush2.msra.mxu0 0.0
    %3923 = vmatprep.subr.mxu0 0.0
    %3924 = vmatpush2.msra.mxu0 0.0
    %3925 = vmatprep.subr.mxu0 0.0
    %3926 = vmatpush2.msra.mxu0 0.0
    %3927 = vmatprep.subr.mxu0 0.0
    %3928 = vmatpush2.msra.mxu0 0.0
    %3929 = vmatprep.subr.mxu0 0.0
    %3930 = vmatpush2.msra.mxu0 0.0
    %3931 = vmatprep.subr.mxu0 0.0
    %3932 = vmatpush2.msra.mxu0 0.0
    %3933 = vmatprep.subr.mxu0 0.0
    %3934 = vmatpush2.msra.mxu0 0.0
    %3935 = vmatprep.subr.mxu0 0.0
    %3936 = vmatpush2.msra.mxu0 0.0
    %3937 = vmatprep.subr.mxu0 0.0
    %3938 = vmatpush2.msra.mxu0 0.0
    %3939 = vmatprep.mubr.f32.mxu0 0.0
    %3940 = vmatmul.mubr.f32.gmra.mxu0 %v3848
    %v3941 = vpop.f32.mrf.mxu0
    %v3942 = vadd.f32 %v3873, %v3941
    %v3943 = vpop.f32.mrf.mxu0
    %3944 = vmatprep.mubr.f32.mxu0 0.0
    %3945 = vmatmul.mubr.f32.gmra.mxu0 %v3849
    %v3946 = vpop.f32.mrf.mxu0
    %v3947 = vadd.f32 %v3873, %v3946
    %v3948 = vpop.f32.mrf.mxu0
    %3949 = vdwg.mxu0
    %s3950 = scalar_lea.vmem %s7, 2
    %v3951 = vld [vmem:[%s3950] sm:$0x1]
    %v3953 = vlaneseq
    %v3954 = vshrl.u32 %v3953, 7
    %v3955 = vsub.s32 0, %v3954
    %v3956 = vrot.slane %v3951, %v3955
    %v3958 = vmul.f32 %v3942, %v3956
    %v3959 = vmul.f32 %v3947, %v3956
    %3960 = vadd.xlane.f32.xlu0 %v3958
    %v3961 = vpop.xlane.xlu0 %3960
    %3962 = vadd.xlane.f32.xlu0 %v3959
    %v3963 = vpop.xlane.xlu0 %3962
    %s3964 = scalar_lea.vmem %s8, 2
    %v3965 = vld [vmem:[%s3964] sm:$0x1]
    %v3967 = vlaneseq
    %v3968 = vshrl.u32 %v3967, 7
    %v3969 = vsub.s32 0, %v3968
    %v3970 = vrot.slane %v3965, %v3969
    %v3972 = vmul.f32 %v3942, %v3970
    %v3973 = vmul.f32 %v3947, %v3970
    %3974 = vadd.xlane.f32.xlu0 %v3972
    %v3975 = vpop.xlane.xlu0 %3974
    %3976 = vadd.xlane.f32.xlu0 %v3973
    %v3977 = vpop.xlane.xlu0 %3976
    %3978 = vxpose.xlu0.b32.start [1/16] %v3975, 128
    %3979 = vxpose.xlu0.b32.cont [2/16] %v3977, 128
    %3980 = vxpose.xlu0.b32.cont [3/16] 0.0, 128
    %3981 = vxpose.xlu0.b32.cont [4/16] 0.0, 128
    %3982 = vxpose.xlu0.b32.cont [5/16] 0.0, 128
    %3983 = vxpose.xlu0.b32.cont [6/16] 0.0, 128
    %3984 = vxpose.xlu0.b32.cont [7/16] 0.0, 128
    %3985 = vxpose.xlu0.b32.cont [8/16] 0.0, 128
    %3986 = vxpose.xlu0.b32.cont [9/16] 0.0, 128
    %3987 = vxpose.xlu0.b32.cont [10/16] 0.0, 128
    %3988 = vxpose.xlu0.b32.cont [11/16] 0.0, 128
    %3989 = vxpose.xlu0.b32.cont [12/16] 0.0, 128
    %3990 = vxpose.xlu0.b32.cont [13/16] 0.0, 128
    %3991 = vxpose.xlu0.b32.cont [14/16] 0.0, 128
    %3992 = vxpose.xlu0.b32.cont [15/16] 0.0, 128
    %3993 = vxpose.xlu0.b32.end [16/16] 0.0, 128
    %v3994 = vpop.trf.xlu0
    %v3995 = vpop.trf.xlu0
    %v3996 = vpop.trf.xlu0
    %v3997 = vpop.trf.xlu0
    %v3998 = vpop.trf.xlu0
    %v3999 = vpop.trf.xlu0
    %v4000 = vpop.trf.xlu0
    %v4001 = vpop.trf.xlu0
    %v4002 = vpop.trf.xlu0
    %v4003 = vpop.trf.xlu0
    %v4004 = vpop.trf.xlu0
    %v4005 = vpop.trf.xlu0
    %v4006 = vpop.trf.xlu0
    %v4007 = vpop.trf.xlu0
    %v4008 = vpop.trf.xlu0
    %v4009 = vpop.trf.xlu0
    %v4010 = vlaneseq
    %v4011 = vshrl.u32 %v4010, 7
    %v4012 = vsub.s32 0, %v4011
    %v4013 = vrot.slane %v3994, %v4012
    %v4014 = vadd.f32 %v3961, %v4013
    %v4015 = vadd.f32 %v3963, %v4013
    %v4016 = vmul.f32 %v4014, 0.5
    %v4017 = vmul.f32 %v4015, 0.5
    %v4018 = vtanh.pop %v4016
    %v4019 = vtanh.pop %v4017
    %v4020 = vadd.f32 %v4018, 1.0
    %v4021 = vadd.f32 %v4019, 1.0
    %v4022 = vmul.f32 %v4020, 0.5
    %v4023 = vmul.f32 %v4021, 0.5
    %vm4024 = vcmp.gt.f32.partialorder %v3588, 0.0
    %vm4025 = vcmp.gt.f32.partialorder %v3589, 0.0
    %v4026 = vsel %vm4024, %v4022, 0.0
    %v4027 = vsel %vm4025, %v4023, 0.0
    %4028 = vxpose.xlu0.b32.start [1/16] %v4026, 128
    %4029 = vxpose.xlu0.b32.cont [2/16] %v4027, 128
    %4030 = vxpose.xlu0.b32.cont [3/16] 0.0, 128
    %4031 = vxpose.xlu0.b32.cont [4/16] 0.0, 128
    %4032 = vxpose.xlu0.b32.cont [5/16] 0.0, 128
    %4033 = vxpose.xlu0.b32.cont [6/16] 0.0, 128
    %4034 = vxpose.xlu0.b32.cont [7/16] 0.0, 128
    %4035 = vxpose.xlu0.b32.cont [8/16] 0.0, 128
    %4036 = vxpose.xlu0.b32.cont [9/16] 0.0, 128
    %4037 = vxpose.xlu0.b32.cont [10/16] 0.0, 128
    %4038 = vxpose.xlu0.b32.cont [11/16] 0.0, 128
    %4039 = vxpose.xlu0.b32.cont [12/16] 0.0, 128
    %4040 = vxpose.xlu0.b32.cont [13/16] 0.0, 128
    %4041 = vxpose.xlu0.b32.cont [14/16] 0.0, 128
    %4042 = vxpose.xlu0.b32.cont [15/16] 0.0, 128
    %4043 = vxpose.xlu0.b32.end [16/16] 0.0, 128
    %v4044 = vpop.trf.xlu0
    %v4045 = vpop.trf.xlu0
    %v4046 = vpop.trf.xlu0
    %v4047 = vpop.trf.xlu0
    %v4048 = vpop.trf.xlu0
    %v4049 = vpop.trf.xlu0
    %v4050 = vpop.trf.xlu0
    %v4051 = vpop.trf.xlu0
    %v4052 = vpop.trf.xlu0
    %v4053 = vpop.trf.xlu0
    %v4054 = vpop.trf.xlu0
    %v4055 = vpop.trf.xlu0
    %v4056 = vpop.trf.xlu0
    %v4057 = vpop.trf.xlu0
    %v4058 = vpop.trf.xlu0
    %v4059 = vpop.trf.xlu0
    %v4060 = vadd.f32 %v4026, %v4044
    %v4061 = vadd.f32 %v4027, %v4045
    %v4062 = vmul.f32 %v4060, 0.5
    %v4063 = vmul.f32 %v4061, 0.5
    %v4064 = vsel %vm149, 1.0, %v4062
    %v4065 = vsel %vm150, 1.0, %v4063
    %v4067 = vsel %vm256, %v4064, 0
    %v4070 = vsel %vm256, %v4065, 0
    %4072 = vmatprep.subr.mxu0 0.0
    %4073 = vmatpush1.msra.mxu0 0.0
    %4074 = vmatprep.subr.mxu0 0.0
    %4075 = vmatpush1.msra.mxu0 0.0
    %4076 = vmatprep.subr.mxu0 0.0
    %4077 = vmatpush1.msra.mxu0 0.0
    %4078 = vmatprep.subr.mxu0 0.0
    %4079 = vmatpush1.msra.mxu0 0.0
    %4080 = vmatprep.subr.mxu0 0.0
    %4081 = vmatpush1.msra.mxu0 0.0
    %4082 = vmatprep.subr.mxu0 0.0
    %4083 = vmatpush1.msra.mxu0 0.0
    %4084 = vmatprep.subr.mxu0 0.0
    %4085 = vmatpush1.msra.mxu0 0.0
    %4086 = vmatprep.subr.mxu0 0.0
    %4087 = vmatpush1.msra.mxu0 0.0
    %4088 = vmatprep.subr.mxu0 0.0
    %4089 = vmatpush1.msra.mxu0 0.0
    %4090 = vmatprep.subr.mxu0 0.0
    %4091 = vmatpush1.msra.mxu0 0.0
    %4092 = vmatprep.subr.mxu0 0.0
    %4093 = vmatpush1.msra.mxu0 0.0
    %4094 = vmatprep.subr.mxu0 0.0
    %4095 = vmatpush1.msra.mxu0 0.0
    %4096 = vmatprep.subr.mxu0 0.0
    %4097 = vmatpush1.msra.mxu0 0.0
    %4098 = vmatprep.subr.mxu0 0.0
    %4099 = vmatpush1.msra.mxu0 0.0
    %4100 = vmatprep.subr.mxu0 0.0
    %4101 = vmatpush1.msra.mxu0 %v154
    %4102 = vmatprep.subr.mxu0 0.0
    %4103 = vmatpush1.msra.mxu0 %v153
    %4104 = vmatprep.subr.mxu0 0.0
    %4105 = vmatpush2.msra.mxu0 0.0
    %4106 = vmatprep.subr.mxu0 0.0
    %4107 = vmatpush2.msra.mxu0 0.0
    %4108 = vmatprep.subr.mxu0 0.0
    %4109 = vmatpush2.msra.mxu0 0.0
    %4110 = vmatprep.subr.mxu0 0.0
    %4111 = vmatpush2.msra.mxu0 0.0
    %4112 = vmatprep.subr.mxu0 0.0
    %4113 = vmatpush2.msra.mxu0 0.0
    %4114 = vmatprep.subr.mxu0 0.0
    %4115 = vmatpush2.msra.mxu0 0.0
    %4116 = vmatprep.subr.mxu0 0.0
    %4117 = vmatpush2.msra.mxu0 0.0
    %4118 = vmatprep.subr.mxu0 0.0
    %4119 = vmatpush2.msra.mxu0 0.0
    %4120 = vmatprep.subr.mxu0 0.0
    %4121 = vmatpush2.msra.mxu0 0.0
    %4122 = vmatprep.subr.mxu0 0.0
    %4123 = vmatpush2.msra.mxu0 0.0
    %4124 = vmatprep.subr.mxu0 0.0
    %4125 = vmatpush2.msra.mxu0 0.0
    %4126 = vmatprep.subr.mxu0 0.0
    %4127 = vmatpush2.msra.mxu0 0.0
    %4128 = vmatprep.subr.mxu0 0.0
    %4129 = vmatpush2.msra.mxu0 0.0
    %4130 = vmatprep.subr.mxu0 0.0
    %4131 = vmatpush2.msra.mxu0 0.0
    %4132 = vmatprep.subr.mxu0 0.0
    %4133 = vmatpush2.msra.mxu0 0.0
    %4134 = vmatprep.subr.mxu0 0.0
    %4135 = vmatpush2.msra.mxu0 0.0
    %4136 = vmatprep.mubr.f32.mxu0 0.0
    %4137 = vmatmul.mubr.f32.gmra.mxu0 %v4067
    %v4138 = vpop.f32.mrf.mxu0
    %v4139 = vadd.f32 0.0, %v4138
    %v4140 = vpop.f32.mrf.mxu0
    %4141 = vmatprep.mubr.f32.mxu0 0.0
    %4142 = vmatmul.mubr.f32.gmra.mxu0 %v4070
    %v4143 = vpop.f32.mrf.mxu0
    %v4144 = vadd.f32 0.0, %v4143
    %v4145 = vpop.f32.mrf.mxu0
    %4146 = vdwg.mxu0
    %s4147 = scalar_lea.vmem %s18, 32
    %4148 = vst [vmem:[%s4147] sm:$0xff] %v4139
    %4149 = vst [vmem:[%s4147 + $0x8] sm:$0xff] %v4144
    %vm4150 = vcmp.gt.f32.partialorder %v4064, 0.0
    %vm4151 = vcmp.gt.f32.partialorder %v4065, 0.0
    %vm4152 = vcmp.gt.f32.partialorder %v3652, 0.0
    %4153 = vxpose.xlu0.b32.start [1/16] %v3652, 128
    %4154 = vxpose.xlu0.b32.cont [2/16] 0.0, 128
    %4155 = vxpose.xlu0.b32.cont [3/16] 0.0, 128
    %4156 = vxpose.xlu0.b32.cont [4/16] 0.0, 128
    %4157 = vxpose.xlu0.b32.cont [5/16] 0.0, 128
    %4158 = vxpose.xlu0.b32.cont [6/16] 0.0, 128
    %4159 = vxpose.xlu0.b32.cont [7/16] 0.0, 128
    %4160 = vxpose.xlu0.b32.cont [8/16] 0.0, 128
    %4161 = vxpose.xlu0.b32.cont [9/16] 0.0, 128
    %4162 = vxpose.xlu0.b32.cont [10/16] 0.0, 128
    %4163 = vxpose.xlu0.b32.cont [11/16] 0.0, 128
    %4164 = vxpose.xlu0.b32.cont [12/16] 0.0, 128
    %4165 = vxpose.xlu0.b32.cont [13/16] 0.0, 128
    %4166 = vxpose.xlu0.b32.cont [14/16] 0.0, 128
    %4167 = vxpose.xlu0.b32.cont [15/16] 0.0, 128
    %4168 = vxpose.xlu0.b32.end [16/16] 0.0, 128
    %v4169 = vpop.trf.xlu0
    %v4170 = vpop.trf.xlu0
    %v4171 = vpop.trf.xlu0
    %v4172 = vpop.trf.xlu0
    %v4173 = vpop.trf.xlu0
    %v4174 = vpop.trf.xlu0
    %v4175 = vpop.trf.xlu0
    %v4176 = vpop.trf.xlu0
    %v4177 = vpop.trf.xlu0
    %v4178 = vpop.trf.xlu0
    %v4179 = vpop.trf.xlu0
    %v4180 = vpop.trf.xlu0
    %v4181 = vpop.trf.xlu0
    %v4182 = vpop.trf.xlu0
    %v4183 = vpop.trf.xlu0
    %v4184 = vpop.trf.xlu0
    %vm4185 = vcmp.gt.f32.partialorder %v4169, 0.0
    %vm4186 = vcmp.gt.f32.partialorder %v4170, 0.0
    %v4187 = vsel %vm4152, 1, 0
    %vm4188 = vcmp.eq.s32.totalorder %v4187, 1
    %v4189 = vsel %vm4185, 1, 0
    %v4190 = vsel %vm4186, 1, 0
    %4191 = vset.pattern.permute.xlu0 0
    %4192 = vperm.xlu0 %4191, %v4189
    %v4193 = vpop.permute.xlu0 %4192
    %4194 = vset.pattern.permute.xlu0 0
    %4195 = vperm.xlu0 %4194, %v4190
    %v4196 = vpop.permute.xlu0 %4195
    %vm4197 = vcmp.eq.s32.totalorder %v4193, 1
    %vm4198 = vcmp.eq.s32.totalorder %v4196, 1
    %vm4199 = vmand %vm4188, %vm4197
    %vm4200 = vmand %vm4188, %vm4198
    %vm4201 = vmand %vm4150, %vm4199
    %vm4202 = vmand %vm4151, %vm4200
    %v4203 = vsel %vm4201, 1, 0
    %v4204 = vsel %vm4202, 1, 0
    %v4205 = vcvt.s32.f32 %v4203
    %v4206 = vcvt.s32.f32 %v4204
    %v4207 = vsel %vm4201, %v4064, inf
    %v4208 = vsel %vm4202, %v4065, inf
    %4209 = vst.msk [vmem:[#allocation2] sm:$0xff] %vm256, %v4207
    %4210 = vst.msk [vmem:[#allocation2 + $0x8] sm:$0xff] %vm256, %v4208
    loop: start=0, step=1, limit=16
    $region104: #{edgecut_forward.1} parent=1 // loop_pre_header
      _
    $region105: #{edgecut_forward.1} parent=1 // loop_header
      %s4212 = sphi 0, %s4216
      %p4213 = scmp.ge.s32.totalorder %s4212, 16
      %v4217 = vphi 0.0, %v4426
      %v4218 = vphi 0.0, %v4427
    $region106: #{edgecut_forward.1} parent=1 // loop_header_branch
      %4215 = sbr.rel (%p4213) target = $region110
    $region107: #{edgecut_forward.1} parent=1 // loop_body
      %s4219 = scalar_lea.vmem [#allocation2], %s4212
      %v4220 = vld [vmem:[%s4219] sm:$0x1]
      %s4222 = vtos %v4220
      %v4223 = vstv %s4222
      %vm4225 = vcmp.ge.f32.partialorder %v4207, %v4223
      %vm4226 = vcmp.ge.f32.partialorder %v4208, %v4223
      %v4227 = vsel %vm4225, 1, 0
      %v4228 = vsel %vm4226, 1, 0
      %v4229 = vcvt.s32.f32 %v4227
      %v4230 = vcvt.s32.f32 %v4228
      %v4231 = vadd.f32 %v4217, %v4229
      %v4232 = vadd.f32 %v4218, %v4230
      %4233 = vrot.lane.b32.xlu0 %v4220, 127
      %v4234 = vpop.permute.xlu0 %4233
      %s4235 = vtos %v4234
      %v4236 = vstv %s4235
      %vm4238 = vcmp.ge.f32.partialorder %v4207, %v4236
      %vm4239 = vcmp.ge.f32.partialorder %v4208, %v4236
      %v4240 = vsel %vm4238, 1, 0
      %v4241 = vsel %vm4239, 1, 0
      %v4242 = vcvt.s32.f32 %v4240
      %v4243 = vcvt.s32.f32 %v4241
      %v4244 = vadd.f32 %v4231, %v4242
      %v4245 = vadd.f32 %v4232, %v4243
      %4246 = vrot.lane.b32.xlu0 %v4220, 126
      %v4247 = vpop.permute.xlu0 %4246
      %s4248 = vtos %v4247
      %v4249 = vstv %s4248
      %vm4251 = vcmp.ge.f32.partialorder %v4207, %v4249
      %vm4252 = vcmp.ge.f32.partialorder %v4208, %v4249
      %v4253 = vsel %vm4251, 1, 0
      %v4254 = vsel %vm4252, 1, 0
      %v4255 = vcvt.s32.f32 %v4253
      %v4256 = vcvt.s32.f32 %v4254
      %v4257 = vadd.f32 %v4244, %v4255
      %v4258 = vadd.f32 %v4245, %v4256
      %4259 = vrot.lane.b32.xlu0 %v4220, 125
      %v4260 = vpop.permute.xlu0 %4259
      %s4261 = vtos %v4260
      %v4262 = vstv %s4261
      %vm4264 = vcmp.ge.f32.partialorder %v4207, %v4262
      %vm4265 = vcmp.ge.f32.partialorder %v4208, %v4262
      %v4266 = vsel %vm4264, 1, 0
      %v4267 = vsel %vm4265, 1, 0
      %v4268 = vcvt.s32.f32 %v4266
      %v4269 = vcvt.s32.f32 %v4267
      %v4270 = vadd.f32 %v4257, %v4268
      %v4271 = vadd.f32 %v4258, %v4269
      %4272 = vrot.lane.b32.xlu0 %v4220, 124
      %v4273 = vpop.permute.xlu0 %4272
      %s4274 = vtos %v4273
      %v4275 = vstv %s4274
      %vm4277 = vcmp.ge.f32.partialorder %v4207, %v4275
      %vm4278 = vcmp.ge.f32.partialorder %v4208, %v4275
      %v4279 = vsel %vm4277, 1, 0
      %v4280 = vsel %vm4278, 1, 0
      %v4281 = vcvt.s32.f32 %v4279
      %v4282 = vcvt.s32.f32 %v4280
      %v4283 = vadd.f32 %v4270, %v4281
      %v4284 = vadd.f32 %v4271, %v4282
      %4285 = vrot.lane.b32.xlu0 %v4220, 123
      %v4286 = vpop.permute.xlu0 %4285
      %s4287 = vtos %v4286
      %v4288 = vstv %s4287
      %vm4290 = vcmp.ge.f32.partialorder %v4207, %v4288
      %vm4291 = vcmp.ge.f32.partialorder %v4208, %v4288
      %v4292 = vsel %vm4290, 1, 0
      %v4293 = vsel %vm4291, 1, 0
      %v4294 = vcvt.s32.f32 %v4292
      %v4295 = vcvt.s32.f32 %v4293
      %v4296 = vadd.f32 %v4283, %v4294
      %v4297 = vadd.f32 %v4284, %v4295
      %4298 = vrot.lane.b32.xlu0 %v4220, 122
      %v4299 = vpop.permute.xlu0 %4298
      %s4300 = vtos %v4299
      %v4301 = vstv %s4300
      %vm4303 = vcmp.ge.f32.partialorder %v4207, %v4301
      %vm4304 = vcmp.ge.f32.partialorder %v4208, %v4301
      %v4305 = vsel %vm4303, 1, 0
      %v4306 = vsel %vm4304, 1, 0
      %v4307 = vcvt.s32.f32 %v4305
      %v4308 = vcvt.s32.f32 %v4306
      %v4309 = vadd.f32 %v4296, %v4307
      %v4310 = vadd.f32 %v4297, %v4308
      %4311 = vrot.lane.b32.xlu0 %v4220, 121
      %v4312 = vpop.permute.xlu0 %4311
      %s4313 = vtos %v4312
      %v4314 = vstv %s4313
      %vm4316 = vcmp.ge.f32.partialorder %v4207, %v4314
      %vm4317 = vcmp.ge.f32.partialorder %v4208, %v4314
      %v4318 = vsel %vm4316, 1, 0
      %v4319 = vsel %vm4317, 1, 0
      %v4320 = vcvt.s32.f32 %v4318
      %v4321 = vcvt.s32.f32 %v4319
      %v4322 = vadd.f32 %v4309, %v4320
      %v4323 = vadd.f32 %v4310, %v4321
      %4324 = vrot.lane.b32.xlu0 %v4220, 120
      %v4325 = vpop.permute.xlu0 %4324
      %s4326 = vtos %v4325
      %v4327 = vstv %s4326
      %vm4329 = vcmp.ge.f32.partialorder %v4207, %v4327
      %vm4330 = vcmp.ge.f32.partialorder %v4208, %v4327
      %v4331 = vsel %vm4329, 1, 0
      %v4332 = vsel %vm4330, 1, 0
      %v4333 = vcvt.s32.f32 %v4331
      %v4334 = vcvt.s32.f32 %v4332
      %v4335 = vadd.f32 %v4322, %v4333
      %v4336 = vadd.f32 %v4323, %v4334
      %4337 = vrot.lane.b32.xlu0 %v4220, 119
      %v4338 = vpop.permute.xlu0 %4337
      %s4339 = vtos %v4338
      %v4340 = vstv %s4339
      %vm4342 = vcmp.ge.f32.partialorder %v4207, %v4340
      %vm4343 = vcmp.ge.f32.partialorder %v4208, %v4340
      %v4344 = vsel %vm4342, 1, 0
      %v4345 = vsel %vm4343, 1, 0
      %v4346 = vcvt.s32.f32 %v4344
      %v4347 = vcvt.s32.f32 %v4345
      %v4348 = vadd.f32 %v4335, %v4346
      %v4349 = vadd.f32 %v4336, %v4347
      %4350 = vrot.lane.b32.xlu0 %v4220, 118
      %v4351 = vpop.permute.xlu0 %4350
      %s4352 = vtos %v4351
      %v4353 = vstv %s4352
      %vm4355 = vcmp.ge.f32.partialorder %v4207, %v4353
      %vm4356 = vcmp.ge.f32.partialorder %v4208, %v4353
      %v4357 = vsel %vm4355, 1, 0
      %v4358 = vsel %vm4356, 1, 0
      %v4359 = vcvt.s32.f32 %v4357
      %v4360 = vcvt.s32.f32 %v4358
      %v4361 = vadd.f32 %v4348, %v4359
      %v4362 = vadd.f32 %v4349, %v4360
      %4363 = vrot.lane.b32.xlu0 %v4220, 117
      %v4364 = vpop.permute.xlu0 %4363
      %s4365 = vtos %v4364
      %v4366 = vstv %s4365
      %vm4368 = vcmp.ge.f32.partialorder %v4207, %v4366
      %vm4369 = vcmp.ge.f32.partialorder %v4208, %v4366
      %v4370 = vsel %vm4368, 1, 0
      %v4371 = vsel %vm4369, 1, 0
      %v4372 = vcvt.s32.f32 %v4370
      %v4373 = vcvt.s32.f32 %v4371
      %v4374 = vadd.f32 %v4361, %v4372
      %v4375 = vadd.f32 %v4362, %v4373
      %4376 = vrot.lane.b32.xlu0 %v4220, 116
      %v4377 = vpop.permute.xlu0 %4376
      %s4378 = vtos %v4377
      %v4379 = vstv %s4378
      %vm4381 = vcmp.ge.f32.partialorder %v4207, %v4379
      %vm4382 = vcmp.ge.f32.partialorder %v4208, %v4379
      %v4383 = vsel %vm4381, 1, 0
      %v4384 = vsel %vm4382, 1, 0
      %v4385 = vcvt.s32.f32 %v4383
      %v4386 = vcvt.s32.f32 %v4384
      %v4387 = vadd.f32 %v4374, %v4385
      %v4388 = vadd.f32 %v4375, %v4386
      %4389 = vrot.lane.b32.xlu0 %v4220, 115
      %v4390 = vpop.permute.xlu0 %4389
      %s4391 = vtos %v4390
      %v4392 = vstv %s4391
      %vm4394 = vcmp.ge.f32.partialorder %v4207, %v4392
      %vm4395 = vcmp.ge.f32.partialorder %v4208, %v4392
      %v4396 = vsel %vm4394, 1, 0
      %v4397 = vsel %vm4395, 1, 0
      %v4398 = vcvt.s32.f32 %v4396
      %v4399 = vcvt.s32.f32 %v4397
      %v4400 = vadd.f32 %v4387, %v4398
      %v4401 = vadd.f32 %v4388, %v4399
      %4402 = vrot.lane.b32.xlu0 %v4220, 114
      %v4403 = vpop.permute.xlu0 %4402
      %s4404 = vtos %v4403
      %v4405 = vstv %s4404
      %vm4407 = vcmp.ge.f32.partialorder %v4207, %v4405
      %vm4408 = vcmp.ge.f32.partialorder %v4208, %v4405
      %v4409 = vsel %vm4407, 1, 0
      %v4410 = vsel %vm4408, 1, 0
      %v4411 = vcvt.s32.f32 %v4409
      %v4412 = vcvt.s32.f32 %v4410
      %v4413 = vadd.f32 %v4400, %v4411
      %v4414 = vadd.f32 %v4401, %v4412
      %4415 = vrot.lane.b32.xlu0 %v4220, 113
      %v4416 = vpop.permute.xlu0 %4415
      %s4417 = vtos %v4416
      %v4418 = vstv %s4417
      %vm4420 = vcmp.ge.f32.partialorder %v4207, %v4418
      %vm4421 = vcmp.ge.f32.partialorder %v4208, %v4418
      %v4422 = vsel %vm4420, 1, 0
      %v4423 = vsel %vm4421, 1, 0
      %v4424 = vcvt.s32.f32 %v4422
      %v4425 = vcvt.s32.f32 %v4423
      %v4426 = vadd.f32 %v4413, %v4424
      %v4427 = vadd.f32 %v4414, %v4425
    $region108: #{edgecut_forward.1} parent=1 // loop_footer
      %s4216 = sadd.s32 1, %s4212
    $region109: #{edgecut_forward.1} parent=1 // loop_footer_branch
      %4211 = sbr.rel target = $region105
    $region110: #{edgecut_forward.1} parent=1 // loop_exit
      _
    %v4428 = vsel %vm256, %v4205, 0.0
    %4429 = vadd.xlane.f32.xlu0 %v4428
    %v4430 = vpop.xlane.xlu0 %4429
    %v4431 = vsel %vm256, %v4206, 0.0
    %4432 = vadd.xlane.f32.xlu0 %v4431
    %v4433 = vpop.xlane.xlu0 %4432
    %v4434 = vadd.f32 %v4430, %v4433
    %v4435 = vrot.slane %v4434, 4
    %v4436 = vadd.f32 %v4434, %v4435
    %v4437 = vrot.slane %v4436, 2
    %v4438 = vadd.f32 %v4436, %v4437
    %v4439 = vrot.slane %v4438, 1
    %v4440 = vadd.f32 %v4438, %v4439
    %v4441 = vsub.f32 %v4440, 1.0
    %v4442 = vmul.f32 %v4441, 60.0
    %v4443 = vmul.f32 %v4442, %v940
    %v4444 = vfloor.f32 %v4443
    %v4445 = vsub.f32 %v4443, %v4444
    %v4446 = vadd.f32 %v4444, 1.0
    %v4447 = vmin.f32 %v4446, %v4441
    %vm4448 = vcmp.ge.f32.partialorder %v4217, %v4446
    %vm4449 = vcmp.ge.f32.partialorder %v4218, %v4446
    %vm4450 = vmand %vm4201, %vm4448
    %vm4451 = vmand %vm4202, %vm4449
    %v4452 = vsel %vm4450, %v4207, inf
    %v4453 = vsel %vm4451, %v4208, inf
    %v4454 = vsel %vm256, %v4452, inf
    %4455 = vmin.xlane.f32.xlu0 %v4454
    %v4456 = vpop.xlane.xlu0 %4455
    %v4457 = vsel %vm256, %v4453, inf
    %4458 = vmin.xlane.f32.xlu0 %v4457
    %v4459 = vpop.xlane.xlu0 %4458
    %v4460 = vmin.f32 %v4456, %v4459
    %v4461 = vrot.slane %v4460, 4
    %v4462 = vmin.f32 %v4460, %v4461
    %v4463 = vrot.slane %v4462, 2
    %v4464 = vmin.f32 %v4462, %v4463
    %v4465 = vrot.slane %v4464, 1
    %v4466 = vmin.f32 %v4464, %v4465
    %v4467 = vadd.f32 %v4447, 1.0
    %vm4468 = vcmp.ge.f32.partialorder %v4217, %v4467
    %vm4469 = vcmp.ge.f32.partialorder %v4218, %v4467
    %vm4470 = vmand %vm4201, %vm4468
    %vm4471 = vmand %vm4202, %vm4469
    %v4472 = vsel %vm4470, %v4207, inf
    %v4473 = vsel %vm4471, %v4208, inf
    %v4474 = vsel %vm256, %v4472, inf
    %4475 = vmin.xlane.f32.xlu0 %v4474
    %v4476 = vpop.xlane.xlu0 %4475
    %v4477 = vsel %vm256, %v4473, inf
    %4478 = vmin.xlane.f32.xlu0 %v4477
    %v4479 = vpop.xlane.xlu0 %4478
    %v4480 = vmin.f32 %v4476, %v4479
    %v4481 = vrot.slane %v4480, 4
    %v4482 = vmin.f32 %v4480, %v4481
    %v4483 = vrot.slane %v4482, 2
    %v4484 = vmin.f32 %v4482, %v4483
    %v4485 = vrot.slane %v4484, 1
    %v4486 = vmin.f32 %v4484, %v4485
    %v4487 = vsub.f32 1.0, %v4445
    %v4488 = vmul.f32 %v4487, %v4466
    %v4489 = vmul.f32 %v4445, %v4486
    %v4490 = vadd.f32 %v4488, %v4489
    %vm4491 = vcmp.ge.f32.partialorder %v4064, %v4490
    %vm4492 = vcmp.ge.f32.partialorder %v4065, %v4490
    %v4493 = vsel %vm4491, 1, 0
    %v4494 = vsel %vm4492, 1, 0
    %v4495 = vcvt.s32.f32 %v4493
    %v4496 = vcvt.s32.f32 %v4494
    %v4497 = vmul.f32 %v4064, %v4495
    %v4498 = vmul.f32 %v4065, %v4496
    %vm4499 = vcmp.gt.f32.partialorder %v4497, 0.0
    %vm4500 = vcmp.gt.f32.partialorder %v4498, 0.0
    %v4501 = vsel %vm4499, 1, 0
    %v4502 = vsel %vm4500, 1, 0
    %v4503 = vcvt.s32.f32 %v4501
    %v4504 = vcvt.s32.f32 %v4502
    %v4505 = vsel %vm256, %v4503, 0.0
    %4506 = vadd.xlane.f32.xlu0 %v4505
    %v4507 = vpop.xlane.xlu0 %4506
    %v4508 = vsel %vm256, %v4504, 0.0
    %4509 = vadd.xlane.f32.xlu0 %v4508
    %v4510 = vpop.xlane.xlu0 %4509
    %v4511 = vmax.f32 %v4507, 1.0
    %v4512 = vmax.f32 %v4510, 1.0
    %v4513 = vrcp.pop %v4511
    %v4514 = vrcp.pop %v4512
    %v4515 = vmul.f32 %v4497, %v4513
    %v4516 = vmul.f32 %v4498, %v4514
    %v4518 = vsel %vm256, %v4503, 0
    %v4521 = vsel %vm256, %v4504, 0
    %4523 = vmatprep.subr.mxu0 0.0
    %4524 = vmatpush1.msra.mxu0 0.0
    %4525 = vmatprep.subr.mxu0 0.0
    %4526 = vmatpush1.msra.mxu0 0.0
    %4527 = vmatprep.subr.mxu0 0.0
    %4528 = vmatpush1.msra.mxu0 0.0
    %4529 = vmatprep.subr.mxu0 0.0
    %4530 = vmatpush1.msra.mxu0 0.0
    %4531 = vmatprep.subr.mxu0 0.0
    %4532 = vmatpush1.msra.mxu0 0.0
    %4533 = vmatprep.subr.mxu0 0.0
    %4534 = vmatpush1.msra.mxu0 0.0
    %4535 = vmatprep.subr.mxu0 0.0
    %4536 = vmatpush1.msra.mxu0 0.0
    %4537 = vmatprep.subr.mxu0 0.0
    %4538 = vmatpush1.msra.mxu0 0.0
    %4539 = vmatprep.subr.mxu0 0.0
    %4540 = vmatpush1.msra.mxu0 0.0
    %4541 = vmatprep.subr.mxu0 0.0
    %4542 = vmatpush1.msra.mxu0 0.0
    %4543 = vmatprep.subr.mxu0 0.0
    %4544 = vmatpush1.msra.mxu0 0.0
    %4545 = vmatprep.subr.mxu0 0.0
    %4546 = vmatpush1.msra.mxu0 0.0
    %4547 = vmatprep.subr.mxu0 0.0
    %4548 = vmatpush1.msra.mxu0 0.0
    %4549 = vmatprep.subr.mxu0 0.0
    %4550 = vmatpush1.msra.mxu0 0.0
    %4551 = vmatprep.subr.mxu0 0.0
    %4552 = vmatpush1.msra.mxu0 %v4504
    %4553 = vmatprep.subr.mxu0 0.0
    %4554 = vmatpush1.msra.mxu0 %v4503
    %4555 = vmatprep.subr.mxu0 0.0
    %4556 = vmatpush2.msra.mxu0 0.0
    %4557 = vmatprep.subr.mxu0 0.0
    %4558 = vmatpush2.msra.mxu0 0.0
    %4559 = vmatprep.subr.mxu0 0.0
    %4560 = vmatpush2.msra.mxu0 0.0
    %4561 = vmatprep.subr.mxu0 0.0
    %4562 = vmatpush2.msra.mxu0 0.0
    %4563 = vmatprep.subr.mxu0 0.0
    %4564 = vmatpush2.msra.mxu0 0.0
    %4565 = vmatprep.subr.mxu0 0.0
    %4566 = vmatpush2.msra.mxu0 0.0
    %4567 = vmatprep.subr.mxu0 0.0
    %4568 = vmatpush2.msra.mxu0 0.0
    %4569 = vmatprep.subr.mxu0 0.0
    %4570 = vmatpush2.msra.mxu0 0.0
    %4571 = vmatprep.subr.mxu0 0.0
    %4572 = vmatpush2.msra.mxu0 0.0
    %4573 = vmatprep.subr.mxu0 0.0
    %4574 = vmatpush2.msra.mxu0 0.0
    %4575 = vmatprep.subr.mxu0 0.0
    %4576 = vmatpush2.msra.mxu0 0.0
    %4577 = vmatprep.subr.mxu0 0.0
    %4578 = vmatpush2.msra.mxu0 0.0
    %4579 = vmatprep.subr.mxu0 0.0
    %4580 = vmatpush2.msra.mxu0 0.0
    %4581 = vmatprep.subr.mxu0 0.0
    %4582 = vmatpush2.msra.mxu0 0.0
    %4583 = vmatprep.subr.mxu0 0.0
    %4584 = vmatpush2.msra.mxu0 0.0
    %4585 = vmatprep.subr.mxu0 0.0
    %4586 = vmatpush2.msra.mxu0 0.0
    %4587 = vmatprep.mubr.f32.mxu0 0.0
    %4588 = vmatmul.mubr.f32.gmra.mxu0 %v4518
    %v4589 = vpop.f32.mrf.mxu0
    %v4590 = vadd.f32 0.0, %v4589
    %v4591 = vpop.f32.mrf.mxu0
    %4592 = vmatprep.mubr.f32.mxu0 0.0
    %4593 = vmatmul.mubr.f32.gmra.mxu0 %v4521
    %v4594 = vpop.f32.mrf.mxu0
    %v4595 = vadd.f32 0.0, %v4594
    %v4596 = vpop.f32.mrf.mxu0
    %4597 = vdwg.mxu0
    %vm4598 = vcmp.gt.f32.partialorder %v4590, 0.0
    %vm4599 = vcmp.gt.f32.partialorder %v4595, 0.0
    %v4600 = vsel %vm4598, 1, 0
    %v4601 = vsel %vm4599, 1, 0
    %v4602 = vcvt.s32.f32 %v4600
    %v4603 = vcvt.s32.f32 %v4601
    %v4605 = vsel %vm256, %v4602, 0
    %v4608 = vsel %vm256, %v4603, 0
    %4610 = vmatprep.subr.mxu0 0.0
    %4611 = vmatpush1.msra.mxu0 0.0
    %4612 = vmatprep.subr.mxu0 0.0
    %4613 = vmatpush1.msra.mxu0 0.0
    %4614 = vmatprep.subr.mxu0 0.0
    %4615 = vmatpush1.msra.mxu0 0.0
    %4616 = vmatprep.subr.mxu0 0.0
    %4617 = vmatpush1.msra.mxu0 0.0
    %4618 = vmatprep.subr.mxu0 0.0
    %4619 = vmatpush1.msra.mxu0 0.0
    %4620 = vmatprep.subr.mxu0 0.0
    %4621 = vmatpush1.msra.mxu0 0.0
    %4622 = vmatprep.subr.mxu0 0.0
    %4623 = vmatpush1.msra.mxu0 0.0
    %4624 = vmatprep.subr.mxu0 0.0
    %4625 = vmatpush1.msra.mxu0 0.0
    %4626 = vmatprep.subr.mxu0 0.0
    %4627 = vmatpush1.msra.mxu0 0.0
    %4628 = vmatprep.subr.mxu0 0.0
    %4629 = vmatpush1.msra.mxu0 0.0
    %4630 = vmatprep.subr.mxu0 0.0
    %4631 = vmatpush1.msra.mxu0 0.0
    %4632 = vmatprep.subr.mxu0 0.0
    %4633 = vmatpush1.msra.mxu0 0.0
    %4634 = vmatprep.subr.mxu0 0.0
    %4635 = vmatpush1.msra.mxu0 0.0
    %4636 = vmatprep.subr.mxu0 0.0
    %4637 = vmatpush1.msra.mxu0 0.0
    %4638 = vmatprep.subr.mxu0 0.0
    %4639 = vmatpush1.msra.mxu0 %v4603
    %4640 = vmatprep.subr.mxu0 0.0
    %4641 = vmatpush1.msra.mxu0 %v4602
    %4642 = vmatprep.subr.mxu0 0.0
    %4643 = vmatpush2.msra.mxu0 0.0
    %4644 = vmatprep.subr.mxu0 0.0
    %4645 = vmatpush2.msra.mxu0 0.0
    %4646 = vmatprep.subr.mxu0 0.0
    %4647 = vmatpush2.msra.mxu0 0.0
    %4648 = vmatprep.subr.mxu0 0.0
    %4649 = vmatpush2.msra.mxu0 0.0
    %4650 = vmatprep.subr.mxu0 0.0
    %4651 = vmatpush2.msra.mxu0 0.0
    %4652 = vmatprep.subr.mxu0 0.0
    %4653 = vmatpush2.msra.mxu0 0.0
    %4654 = vmatprep.subr.mxu0 0.0
    %4655 = vmatpush2.msra.mxu0 0.0
    %4656 = vmatprep.subr.mxu0 0.0
    %4657 = vmatpush2.msra.mxu0 0.0
    %4658 = vmatprep.subr.mxu0 0.0
    %4659 = vmatpush2.msra.mxu0 0.0
    %4660 = vmatprep.subr.mxu0 0.0
    %4661 = vmatpush2.msra.mxu0 0.0
    %4662 = vmatprep.subr.mxu0 0.0
    %4663 = vmatpush2.msra.mxu0 0.0
    %4664 = vmatprep.subr.mxu0 0.0
    %4665 = vmatpush2.msra.mxu0 0.0
    %4666 = vmatprep.subr.mxu0 0.0
    %4667 = vmatpush2.msra.mxu0 0.0
    %4668 = vmatprep.subr.mxu0 0.0
    %4669 = vmatpush2.msra.mxu0 0.0
    %4670 = vmatprep.subr.mxu0 0.0
    %4671 = vmatpush2.msra.mxu0 0.0
    %4672 = vmatprep.subr.mxu0 0.0
    %4673 = vmatpush2.msra.mxu0 0.0
    %4674 = vmatprep.mubr.f32.mxu0 0.0
    %4675 = vmatmul.mubr.f32.gmra.mxu0 %v4605
    %v4676 = vpop.f32.mrf.mxu0
    %v4677 = vadd.f32 0.0, %v4676
    %v4678 = vpop.f32.mrf.mxu0
    %4679 = vmatprep.mubr.f32.mxu0 0.0
    %4680 = vmatmul.mubr.f32.gmra.mxu0 %v4608
    %v4681 = vpop.f32.mrf.mxu0
    %v4682 = vadd.f32 0.0, %v4681
    %v4683 = vpop.f32.mrf.mxu0
    %4684 = vdwg.mxu0
    %vm4685 = vcmp.gt.f32.partialorder %v4677, 0.0
    %vm4686 = vcmp.gt.f32.partialorder %v4682, 0.0
    %v4687 = vsel %vm4685, 1, 0
    %v4688 = vsel %vm4686, 1, 0
    %v4689 = vcvt.s32.f32 %v4687
    %v4690 = vcvt.s32.f32 %v4688
    %v4692 = vsel %vm256, %v4689, 0
    %v4695 = vsel %vm256, %v4690, 0
    %4697 = vmatprep.subr.mxu0 0.0
    %4698 = vmatpush1.msra.mxu0 0.0
    %4699 = vmatprep.subr.mxu0 0.0
    %4700 = vmatpush1.msra.mxu0 0.0
    %4701 = vmatprep.subr.mxu0 0.0
    %4702 = vmatpush1.msra.mxu0 0.0
    %4703 = vmatprep.subr.mxu0 0.0
    %4704 = vmatpush1.msra.mxu0 0.0
    %4705 = vmatprep.subr.mxu0 0.0
    %4706 = vmatpush1.msra.mxu0 0.0
    %4707 = vmatprep.subr.mxu0 0.0
    %4708 = vmatpush1.msra.mxu0 0.0
    %4709 = vmatprep.subr.mxu0 0.0
    %4710 = vmatpush1.msra.mxu0 0.0
    %4711 = vmatprep.subr.mxu0 0.0
    %4712 = vmatpush1.msra.mxu0 0.0
    %4713 = vmatprep.subr.mxu0 0.0
    %4714 = vmatpush1.msra.mxu0 0.0
    %4715 = vmatprep.subr.mxu0 0.0
    %4716 = vmatpush1.msra.mxu0 0.0
    %4717 = vmatprep.subr.mxu0 0.0
    %4718 = vmatpush1.msra.mxu0 0.0
    %4719 = vmatprep.subr.mxu0 0.0
    %4720 = vmatpush1.msra.mxu0 0.0
    %4721 = vmatprep.subr.mxu0 0.0
    %4722 = vmatpush1.msra.mxu0 0.0
    %4723 = vmatprep.subr.mxu0 0.0
    %4724 = vmatpush1.msra.mxu0 0.0
    %4725 = vmatprep.subr.mxu0 0.0
    %4726 = vmatpush1.msra.mxu0 %v4690
    %4727 = vmatprep.subr.mxu0 0.0
    %4728 = vmatpush1.msra.mxu0 %v4689
    %4729 = vmatprep.subr.mxu0 0.0
    %4730 = vmatpush2.msra.mxu0 0.0
    %4731 = vmatprep.subr.mxu0 0.0
    %4732 = vmatpush2.msra.mxu0 0.0
    %4733 = vmatprep.subr.mxu0 0.0
    %4734 = vmatpush2.msra.mxu0 0.0
    %4735 = vmatprep.subr.mxu0 0.0
    %4736 = vmatpush2.msra.mxu0 0.0
    %4737 = vmatprep.subr.mxu0 0.0
    %4738 = vmatpush2.msra.mxu0 0.0
    %4739 = vmatprep.subr.mxu0 0.0
    %4740 = vmatpush2.msra.mxu0 0.0
    %4741 = vmatprep.subr.mxu0 0.0
    %4742 = vmatpush2.msra.mxu0 0.0
    %4743 = vmatprep.subr.mxu0 0.0
    %4744 = vmatpush2.msra.mxu0 0.0
    %4745 = vmatprep.subr.mxu0 0.0
    %4746 = vmatpush2.msra.mxu0 0.0
    %4747 = vmatprep.subr.mxu0 0.0
    %4748 = vmatpush2.msra.mxu0 0.0
    %4749 = vmatprep.subr.mxu0 0.0
    %4750 = vmatpush2.msra.mxu0 0.0
    %4751 = vmatprep.subr.mxu0 0.0
    %4752 = vmatpush2.msra.mxu0 0.0
    %4753 = vmatprep.subr.mxu0 0.0
    %4754 = vmatpush2.msra.mxu0 0.0
    %4755 = vmatprep.subr.mxu0 0.0
    %4756 = vmatpush2.msra.mxu0 0.0
    %4757 = vmatprep.subr.mxu0 0.0
    %4758 = vmatpush2.msra.mxu0 0.0
    %4759 = vmatprep.subr.mxu0 0.0
    %4760 = vmatpush2.msra.mxu0 0.0
    %4761 = vmatprep.mubr.f32.mxu0 0.0
    %4762 = vmatmul.mubr.f32.gmra.mxu0 %v4692
    %v4763 = vpop.f32.mrf.mxu0
    %v4764 = vadd.f32 0.0, %v4763
    %v4765 = vpop.f32.mrf.mxu0
    %4766 = vmatprep.mubr.f32.mxu0 0.0
    %4767 = vmatmul.mubr.f32.gmra.mxu0 %v4695
    %v4768 = vpop.f32.mrf.mxu0
    %v4769 = vadd.f32 0.0, %v4768
    %v4770 = vpop.f32.mrf.mxu0
    %4771 = vdwg.mxu0
    %vm4772 = vcmp.gt.f32.partialorder %v4764, 0.0
    %vm4773 = vcmp.gt.f32.partialorder %v4769, 0.0
    %v4774 = vsel %vm4772, 1, 0
    %v4775 = vsel %vm4773, 1, 0
    %v4776 = vcvt.s32.f32 %v4774
    %v4777 = vcvt.s32.f32 %v4775
    %v4779 = vsel %vm256, %v4776, 0
    %v4782 = vsel %vm256, %v4777, 0
    %4784 = vmatprep.subr.mxu0 0.0
    %4785 = vmatpush1.msra.mxu0 0.0
    %4786 = vmatprep.subr.mxu0 0.0
    %4787 = vmatpush1.msra.mxu0 0.0
    %4788 = vmatprep.subr.mxu0 0.0
    %4789 = vmatpush1.msra.mxu0 0.0
    %4790 = vmatprep.subr.mxu0 0.0
    %4791 = vmatpush1.msra.mxu0 0.0
    %4792 = vmatprep.subr.mxu0 0.0
    %4793 = vmatpush1.msra.mxu0 0.0
    %4794 = vmatprep.subr.mxu0 0.0
    %4795 = vmatpush1.msra.mxu0 0.0
    %4796 = vmatprep.subr.mxu0 0.0
    %4797 = vmatpush1.msra.mxu0 0.0
    %4798 = vmatprep.subr.mxu0 0.0
    %4799 = vmatpush1.msra.mxu0 0.0
    %4800 = vmatprep.subr.mxu0 0.0
    %4801 = vmatpush1.msra.mxu0 0.0
    %4802 = vmatprep.subr.mxu0 0.0
    %4803 = vmatpush1.msra.mxu0 0.0
    %4804 = vmatprep.subr.mxu0 0.0
    %4805 = vmatpush1.msra.mxu0 0.0
    %4806 = vmatprep.subr.mxu0 0.0
    %4807 = vmatpush1.msra.mxu0 0.0
    %4808 = vmatprep.subr.mxu0 0.0
    %4809 = vmatpush1.msra.mxu0 0.0
    %4810 = vmatprep.subr.mxu0 0.0
    %4811 = vmatpush1.msra.mxu0 0.0
    %4812 = vmatprep.subr.mxu0 0.0
    %4813 = vmatpush1.msra.mxu0 %v4777
    %4814 = vmatprep.subr.mxu0 0.0
    %4815 = vmatpush1.msra.mxu0 %v4776
    %4816 = vmatprep.subr.mxu0 0.0
    %4817 = vmatpush2.msra.mxu0 0.0
    %4818 = vmatprep.subr.mxu0 0.0
    %4819 = vmatpush2.msra.mxu0 0.0
    %4820 = vmatprep.subr.mxu0 0.0
    %4821 = vmatpush2.msra.mxu0 0.0
    %4822 = vmatprep.subr.mxu0 0.0
    %4823 = vmatpush2.msra.mxu0 0.0
    %4824 = vmatprep.subr.mxu0 0.0
    %4825 = vmatpush2.msra.mxu0 0.0
    %4826 = vmatprep.subr.mxu0 0.0
    %4827 = vmatpush2.msra.mxu0 0.0
    %4828 = vmatprep.subr.mxu0 0.0
    %4829 = vmatpush2.msra.mxu0 0.0
    %4830 = vmatprep.subr.mxu0 0.0
    %4831 = vmatpush2.msra.mxu0 0.0
    %4832 = vmatprep.subr.mxu0 0.0
    %4833 = vmatpush2.msra.mxu0 0.0
    %4834 = vmatprep.subr.mxu0 0.0
    %4835 = vmatpush2.msra.mxu0 0.0
    %4836 = vmatprep.subr.mxu0 0.0
    %4837 = vmatpush2.msra.mxu0 0.0
    %4838 = vmatprep.subr.mxu0 0.0
    %4839 = vmatpush2.msra.mxu0 0.0
    %4840 = vmatprep.subr.mxu0 0.0
    %4841 = vmatpush2.msra.mxu0 0.0
    %4842 = vmatprep.subr.mxu0 0.0
    %4843 = vmatpush2.msra.mxu0 0.0
    %4844 = vmatprep.subr.mxu0 0.0
    %4845 = vmatpush2.msra.mxu0 0.0
    %4846 = vmatprep.subr.mxu0 0.0
    %4847 = vmatpush2.msra.mxu0 0.0
    %4848 = vmatprep.mubr.f32.mxu0 0.0
    %4849 = vmatmul.mubr.f32.gmra.mxu0 %v4779
    %v4850 = vpop.f32.mrf.mxu0
    %v4851 = vadd.f32 0.0, %v4850
    %v4852 = vpop.f32.mrf.mxu0
    %4853 = vmatprep.mubr.f32.mxu0 0.0
    %4854 = vmatmul.mubr.f32.gmra.mxu0 %v4782
    %v4855 = vpop.f32.mrf.mxu0
    %v4856 = vadd.f32 0.0, %v4855
    %v4857 = vpop.f32.mrf.mxu0
    %4858 = vdwg.mxu0
    %vm4859 = vcmp.gt.f32.partialorder %v4851, 0.0
    %vm4860 = vcmp.gt.f32.partialorder %v4856, 0.0
    %v4861 = vsel %vm4859, 1, 0
    %v4862 = vsel %vm4860, 1, 0
    %v4863 = vcvt.s32.f32 %v4861
    %v4864 = vcvt.s32.f32 %v4862
    %vm4865 = vcmp.gt.f32.partialorder %v4863, 0.0
    %vm4866 = vcmp.gt.f32.partialorder %v4864, 0.0
    %v4867 = vsel %vm4865, %v157, 1e+09
    %v4868 = vsel %vm4866, %v157, 1e+09
    %v4869 = vsel %vm256, %v4867, inf
    %4870 = vmin.xlane.f32.xlu0 %v4869
    %v4871 = vpop.xlane.xlu0 %4870
    %v4872 = vsel %vm256, %v4868, inf
    %4873 = vmin.xlane.f32.xlu0 %v4872
    %v4874 = vpop.xlane.xlu0 %4873
    %v4875 = vsel %vm4865, %v155, 1e+09
    %v4876 = vsel %vm4866, %v156, 1e+09
    %v4877 = vsel %vm256, %v4875, inf
    %v4878 = vsel %vm256, %v4876, inf
    %v4879 = vmin.f32 %v4877, %v4878
    %v4880 = vrot.slane %v4879, 4
    %v4881 = vmin.f32 %v4879, %v4880
    %v4882 = vrot.slane %v4881, 2
    %v4883 = vmin.f32 %v4881, %v4882
    %v4884 = vrot.slane %v4883, 1
    %v4885 = vmin.f32 %v4883, %v4884
    %vm4886 = vcmp.eq.f32.partialorder %v155, %v4885
    %vm4887 = vcmp.eq.f32.partialorder %v156, %v4885
    %v4888 = vsel %vm4886, 1, 0
    %v4889 = vsel %vm4887, 1, 0
    %v4890 = vcvt.s32.f32 %v4888
    %v4891 = vcvt.s32.f32 %v4889
    %vm4892 = vcmp.eq.f32.partialorder %v157, %v4871
    %vm4893 = vcmp.eq.f32.partialorder %v157, %v4874
    %v4894 = vsel %vm4892, 1, 0
    %v4895 = vsel %vm4893, 1, 0
    %v4896 = vcvt.s32.f32 %v4894
    %v4897 = vcvt.s32.f32 %v4895
    %v4899 = vsel %vm256, %v4890, 0
    %v4902 = vsel %vm256, %v4891, 0
    %4904 = vmatprep.subr.mxu0 0.0
    %4905 = vmatpush1.msra.mxu0 0.0
    %4906 = vmatprep.subr.mxu0 0.0
    %4907 = vmatpush1.msra.mxu0 0.0
    %4908 = vmatprep.subr.mxu0 0.0
    %4909 = vmatpush1.msra.mxu0 0.0
    %4910 = vmatprep.subr.mxu0 0.0
    %4911 = vmatpush1.msra.mxu0 0.0
    %4912 = vmatprep.subr.mxu0 0.0
    %4913 = vmatpush1.msra.mxu0 0.0
    %4914 = vmatprep.subr.mxu0 0.0
    %4915 = vmatpush1.msra.mxu0 0.0
    %4916 = vmatprep.subr.mxu0 0.0
    %4917 = vmatpush1.msra.mxu0 0.0
    %4918 = vmatprep.subr.mxu0 0.0
    %4919 = vmatpush1.msra.mxu0 0.0
    %4920 = vmatprep.subr.mxu0 0.0
    %4921 = vmatpush1.msra.mxu0 0.0
    %4922 = vmatprep.subr.mxu0 0.0
    %4923 = vmatpush1.msra.mxu0 0.0
    %4924 = vmatprep.subr.mxu0 0.0
    %4925 = vmatpush1.msra.mxu0 0.0
    %4926 = vmatprep.subr.mxu0 0.0
    %4927 = vmatpush1.msra.mxu0 0.0
    %4928 = vmatprep.subr.mxu0 0.0
    %4929 = vmatpush1.msra.mxu0 0.0
    %4930 = vmatprep.subr.mxu0 0.0
    %4931 = vmatpush1.msra.mxu0 0.0
    %4932 = vmatprep.subr.mxu0 0.0
    %4933 = vmatpush1.msra.mxu0 %v154
    %4934 = vmatprep.subr.mxu0 0.0
    %4935 = vmatpush1.msra.mxu0 %v153
    %4936 = vmatprep.subr.mxu0 0.0
    %4937 = vmatpush2.msra.mxu0 0.0
    %4938 = vmatprep.subr.mxu0 0.0
    %4939 = vmatpush2.msra.mxu0 0.0
    %4940 = vmatprep.subr.mxu0 0.0
    %4941 = vmatpush2.msra.mxu0 0.0
    %4942 = vmatprep.subr.mxu0 0.0
    %4943 = vmatpush2.msra.mxu0 0.0
    %4944 = vmatprep.subr.mxu0 0.0
    %4945 = vmatpush2.msra.mxu0 0.0
    %4946 = vmatprep.subr.mxu0 0.0
    %4947 = vmatpush2.msra.mxu0 0.0
    %4948 = vmatprep.subr.mxu0 0.0
    %4949 = vmatpush2.msra.mxu0 0.0
    %4950 = vmatprep.subr.mxu0 0.0
    %4951 = vmatpush2.msra.mxu0 0.0
    %4952 = vmatprep.subr.mxu0 0.0
    %4953 = vmatpush2.msra.mxu0 0.0
    %4954 = vmatprep.subr.mxu0 0.0
    %4955 = vmatpush2.msra.mxu0 0.0
    %4956 = vmatprep.subr.mxu0 0.0
    %4957 = vmatpush2.msra.mxu0 0.0
    %4958 = vmatprep.subr.mxu0 0.0
    %4959 = vmatpush2.msra.mxu0 0.0
    %4960 = vmatprep.subr.mxu0 0.0
    %4961 = vmatpush2.msra.mxu0 0.0
    %4962 = vmatprep.subr.mxu0 0.0
    %4963 = vmatpush2.msra.mxu0 0.0
    %4964 = vmatprep.subr.mxu0 0.0
    %4965 = vmatpush2.msra.mxu0 0.0
    %4966 = vmatprep.subr.mxu0 0.0
    %4967 = vmatpush2.msra.mxu0 0.0
    %4968 = vmatprep.mubr.f32.mxu0 0.0
    %4969 = vmatmul.mubr.f32.gmra.mxu0 %v4899
    %v4970 = vpop.f32.mrf.mxu0
    %v4971 = vadd.f32 0.0, %v4970
    %v4972 = vpop.f32.mrf.mxu0
    %4973 = vmatprep.mubr.f32.mxu0 0.0
    %4974 = vmatmul.mubr.f32.gmra.mxu0 %v4902
    %v4975 = vpop.f32.mrf.mxu0
    %v4976 = vadd.f32 0.0, %v4975
    %v4977 = vpop.f32.mrf.mxu0
    %4978 = vdwg.mxu0
    %s4979 = scalar_lea.vmem %s17, 32
    %4980 = vst [vmem:[%s4979] sm:$0xff] %v4971
    %4981 = vst [vmem:[%s4979 + $0x8] sm:$0xff] %v4976
    %v4983 = vsel %vm256, %v4515, 0
    %v4986 = vsel %vm256, %v4516, 0
    %4988 = vmatprep.subr.mxu0 0.0
    %4989 = vmatpush1.msra.mxu0 0.0
    %4990 = vmatprep.subr.mxu0 0.0
    %4991 = vmatpush1.msra.mxu0 0.0
    %4992 = vmatprep.subr.mxu0 0.0
    %4993 = vmatpush1.msra.mxu0 0.0
    %4994 = vmatprep.subr.mxu0 0.0
    %4995 = vmatpush1.msra.mxu0 0.0
    %4996 = vmatprep.subr.mxu0 0.0
    %4997 = vmatpush1.msra.mxu0 0.0
    %4998 = vmatprep.subr.mxu0 0.0
    %4999 = vmatpush1.msra.mxu0 0.0
    %5000 = vmatprep.subr.mxu0 0.0
    %5001 = vmatpush1.msra.mxu0 0.0
    %5002 = vmatprep.subr.mxu0 0.0
    %5003 = vmatpush1.msra.mxu0 0.0
    %5004 = vmatprep.subr.mxu0 0.0
    %5005 = vmatpush1.msra.mxu0 0.0
    %5006 = vmatprep.subr.mxu0 0.0
    %5007 = vmatpush1.msra.mxu0 0.0
    %5008 = vmatprep.subr.mxu0 0.0
    %5009 = vmatpush1.msra.mxu0 0.0
    %5010 = vmatprep.subr.mxu0 0.0
    %5011 = vmatpush1.msra.mxu0 0.0
    %5012 = vmatprep.subr.mxu0 0.0
    %5013 = vmatpush1.msra.mxu0 0.0
    %5014 = vmatprep.subr.mxu0 0.0
    %5015 = vmatpush1.msra.mxu0 0.0
    %5016 = vmatprep.subr.mxu0 0.0
    %5017 = vmatpush1.msra.mxu0 %v3849
    %5018 = vmatprep.subr.mxu0 0.0
    %5019 = vmatpush1.msra.mxu0 %v3848
    %5020 = vmatprep.subr.mxu0 0.0
    %5021 = vmatpush2.msra.mxu0 0.0
    %5022 = vmatprep.subr.mxu0 0.0
    %5023 = vmatpush2.msra.mxu0 0.0
    %5024 = vmatprep.subr.mxu0 0.0
    %5025 = vmatpush2.msra.mxu0 0.0
    %5026 = vmatprep.subr.mxu0 0.0
    %5027 = vmatpush2.msra.mxu0 0.0
    %5028 = vmatprep.subr.mxu0 0.0
    %5029 = vmatpush2.msra.mxu0 0.0
    %5030 = vmatprep.subr.mxu0 0.0
    %5031 = vmatpush2.msra.mxu0 0.0
    %5032 = vmatprep.subr.mxu0 0.0
    %5033 = vmatpush2.msra.mxu0 0.0
    %5034 = vmatprep.subr.mxu0 0.0
    %5035 = vmatpush2.msra.mxu0 0.0
    %5036 = vmatprep.subr.mxu0 0.0
    %5037 = vmatpush2.msra.mxu0 0.0
    %5038 = vmatprep.subr.mxu0 0.0
    %5039 = vmatpush2.msra.mxu0 0.0
    %5040 = vmatprep.subr.mxu0 0.0
    %5041 = vmatpush2.msra.mxu0 0.0
    %5042 = vmatprep.subr.mxu0 0.0
    %5043 = vmatpush2.msra.mxu0 0.0
    %5044 = vmatprep.subr.mxu0 0.0
    %5045 = vmatpush2.msra.mxu0 0.0
    %5046 = vmatprep.subr.mxu0 0.0
    %5047 = vmatpush2.msra.mxu0 0.0
    %5048 = vmatprep.subr.mxu0 0.0
    %5049 = vmatpush2.msra.mxu0 0.0
    %5050 = vmatprep.subr.mxu0 0.0
    %5051 = vmatpush2.msra.mxu0 0.0
    %5052 = vmatprep.mubr.f32.mxu0 0.0
    %5053 = vmatmul.mubr.f32.gmra.mxu0 %v4983
    %v5054 = vpop.f32.mrf.mxu0
    %v5055 = vadd.f32 0.0, %v5054
    %v5056 = vpop.f32.mrf.mxu0
    %5057 = vmatprep.mubr.f32.mxu0 0.0
    %5058 = vmatmul.mubr.f32.gmra.mxu0 %v4986
    %v5059 = vpop.f32.mrf.mxu0
    %v5060 = vadd.f32 0.0, %v5059
    %v5061 = vpop.f32.mrf.mxu0
    %5062 = vdwg.mxu0
    %5063 = vmatprep.subr.mxu0 0.0
    %5064 = vmatpush1.msra.mxu0 0.0
    %5065 = vmatprep.subr.mxu0 0.0
    %5066 = vmatpush1.msra.mxu0 0.0
    %5067 = vmatprep.subr.mxu0 0.0
    %5068 = vmatpush1.msra.mxu0 0.0
    %5069 = vmatprep.subr.mxu0 0.0
    %5070 = vmatpush1.msra.mxu0 0.0
    %5071 = vmatprep.subr.mxu0 0.0
    %5072 = vmatpush1.msra.mxu0 0.0
    %5073 = vmatprep.subr.mxu0 0.0
    %5074 = vmatpush1.msra.mxu0 0.0
    %5075 = vmatprep.subr.mxu0 0.0
    %5076 = vmatpush1.msra.mxu0 0.0
    %5077 = vmatprep.subr.mxu0 0.0
    %5078 = vmatpush1.msra.mxu0 0.0
    %5079 = vmatprep.subr.mxu0 0.0
    %5080 = vmatpush1.msra.mxu0 0.0
    %5081 = vmatprep.subr.mxu0 0.0
    %5082 = vmatpush1.msra.mxu0 0.0
    %5083 = vmatprep.subr.mxu0 0.0
    %5084 = vmatpush1.msra.mxu0 0.0
    %5085 = vmatprep.subr.mxu0 0.0
    %5086 = vmatpush1.msra.mxu0 0.0
    %5087 = vmatprep.subr.mxu0 0.0
    %5088 = vmatpush1.msra.mxu0 0.0
    %5089 = vmatprep.subr.mxu0 0.0
    %5090 = vmatpush1.msra.mxu0 0.0
    %5091 = vmatprep.subr.mxu0 0.0
    %5092 = vmatpush1.msra.mxu0 %v5060
    %5093 = vmatprep.subr.mxu0 0.0
    %5094 = vmatpush1.msra.mxu0 %v5055
    %5095 = vmatprep.subr.mxu0 0.0
    %5096 = vmatpush2.msra.mxu0 0.0
    %5097 = vmatprep.subr.mxu0 0.0
    %5098 = vmatpush2.msra.mxu0 0.0
    %5099 = vmatprep.subr.mxu0 0.0
    %5100 = vmatpush2.msra.mxu0 0.0
    %5101 = vmatprep.subr.mxu0 0.0
    %5102 = vmatpush2.msra.mxu0 0.0
    %5103 = vmatprep.subr.mxu0 0.0
    %5104 = vmatpush2.msra.mxu0 0.0
    %5105 = vmatprep.subr.mxu0 0.0
    %5106 = vmatpush2.msra.mxu0 0.0
    %5107 = vmatprep.subr.mxu0 0.0
    %5108 = vmatpush2.msra.mxu0 0.0
    %5109 = vmatprep.subr.mxu0 0.0
    %5110 = vmatpush2.msra.mxu0 0.0
    %5111 = vmatprep.subr.mxu0 0.0
    %5112 = vmatpush2.msra.mxu0 0.0
    %5113 = vmatprep.subr.mxu0 0.0
    %5114 = vmatpush2.msra.mxu0 0.0
    %5115 = vmatprep.subr.mxu0 0.0
    %5116 = vmatpush2.msra.mxu0 0.0
    %5117 = vmatprep.subr.mxu0 0.0
    %5118 = vmatpush2.msra.mxu0 0.0
    %5119 = vmatprep.subr.mxu0 0.0
    %5120 = vmatpush2.msra.mxu0 0.0
    %5121 = vmatprep.subr.mxu0 0.0
    %5122 = vmatpush2.msra.mxu0 0.0
    %5123 = vmatprep.subr.mxu0 0.0
    %5124 = vmatpush2.msra.mxu0 0.0
    %5125 = vmatprep.subr.mxu0 0.0
    %5126 = vmatpush2.msra.mxu0 0.0
    %5127 = vmatprep.mubr.f32.mxu0 0.0
    %5128 = vmatmul.mubr.f32.gmra.mxu0 %v4899
    %v5129 = vpop.f32.mrf.mxu0
    %v5130 = vadd.f32 0.0, %v5129
    %v5131 = vpop.f32.mrf.mxu0
    %5132 = vmatprep.mubr.f32.mxu0 0.0
    %5133 = vmatmul.mubr.f32.gmra.mxu0 %v4902
    %v5134 = vpop.f32.mrf.mxu0
    %v5135 = vadd.f32 0.0, %v5134
    %v5136 = vpop.f32.mrf.mxu0
    %5137 = vdwg.mxu0
    %v5138 = vmul.f32 %v5130, %v5130
    %v5139 = vmul.f32 %v5135, %v5135
    %5140 = vadd.xlane.f32.xlu0 %v5138
    %v5141 = vpop.xlane.xlu0 %5140
    %5142 = vadd.xlane.f32.xlu0 %v5139
    %v5143 = vpop.xlane.xlu0 %5142
    %v5144 = vmax.f32 %v5141, 1e-24
    %v5145 = vmax.f32 %v5143, 1e-24
    %v5146 = vrsqrt.pop %v5144
    %v5147 = vrsqrt.pop %v5145
    %v5148 = vmul.f32 %v5130, %v5146
    %v5149 = vmul.f32 %v5135, %v5147
    %5150 = vmatprep.subr.mxu0 0.0
    %5151 = vmatpush1.msra.mxu0 0.0
    %5152 = vmatprep.subr.mxu0 0.0
    %5153 = vmatpush1.msra.mxu0 0.0
    %5154 = vmatprep.subr.mxu0 0.0
    %5155 = vmatpush1.msra.mxu0 0.0
    %5156 = vmatprep.subr.mxu0 0.0
    %5157 = vmatpush1.msra.mxu0 0.0
    %5158 = vmatprep.subr.mxu0 0.0
    %5159 = vmatpush1.msra.mxu0 0.0
    %5160 = vmatprep.subr.mxu0 0.0
    %5161 = vmatpush1.msra.mxu0 0.0
    %5162 = vmatprep.subr.mxu0 0.0
    %5163 = vmatpush1.msra.mxu0 0.0
    %5164 = vmatprep.subr.mxu0 0.0
    %5165 = vmatpush1.msra.mxu0 0.0
    %5166 = vmatprep.subr.mxu0 0.0
    %5167 = vmatpush1.msra.mxu0 0.0
    %5168 = vmatprep.subr.mxu0 0.0
    %5169 = vmatpush1.msra.mxu0 0.0
    %5170 = vmatprep.subr.mxu0 0.0
    %5171 = vmatpush1.msra.mxu0 0.0
    %5172 = vmatprep.subr.mxu0 0.0
    %5173 = vmatpush1.msra.mxu0 0.0
    %5174 = vmatprep.subr.mxu0 0.0
    %5175 = vmatpush1.msra.mxu0 0.0
    %5176 = vmatprep.subr.mxu0 0.0
    %5177 = vmatpush1.msra.mxu0 0.0
    %5178 = vmatprep.subr.mxu0 0.0
    %5179 = vmatpush1.msra.mxu0 %v3589
    %5180 = vmatprep.subr.mxu0 0.0
    %5181 = vmatpush1.msra.mxu0 %v3588
    %5182 = vmatprep.subr.mxu0 0.0
    %5183 = vmatpush2.msra.mxu0 0.0
    %5184 = vmatprep.subr.mxu0 0.0
    %5185 = vmatpush2.msra.mxu0 0.0
    %5186 = vmatprep.subr.mxu0 0.0
    %5187 = vmatpush2.msra.mxu0 0.0
    %5188 = vmatprep.subr.mxu0 0.0
    %5189 = vmatpush2.msra.mxu0 0.0
    %5190 = vmatprep.subr.mxu0 0.0
    %5191 = vmatpush2.msra.mxu0 0.0
    %5192 = vmatprep.subr.mxu0 0.0
    %5193 = vmatpush2.msra.mxu0 0.0
    %5194 = vmatprep.subr.mxu0 0.0
    %5195 = vmatpush2.msra.mxu0 0.0
    %5196 = vmatprep.subr.mxu0 0.0
    %5197 = vmatpush2.msra.mxu0 0.0
    %5198 = vmatprep.subr.mxu0 0.0
    %5199 = vmatpush2.msra.mxu0 0.0
    %5200 = vmatprep.subr.mxu0 0.0
    %5201 = vmatpush2.msra.mxu0 0.0
    %5202 = vmatprep.subr.mxu0 0.0
    %5203 = vmatpush2.msra.mxu0 0.0
    %5204 = vmatprep.subr.mxu0 0.0
    %5205 = vmatpush2.msra.mxu0 0.0
    %5206 = vmatprep.subr.mxu0 0.0
    %5207 = vmatpush2.msra.mxu0 0.0
    %5208 = vmatprep.subr.mxu0 0.0
    %5209 = vmatpush2.msra.mxu0 0.0
    %5210 = vmatprep.subr.mxu0 0.0
    %5211 = vmatpush2.msra.mxu0 0.0
    %5212 = vmatprep.subr.mxu0 0.0
    %5213 = vmatpush2.msra.mxu0 0.0
    %5214 = vmatprep.mubr.f32.mxu0 0.0
    %5215 = vmatmul.mubr.f32.gmra.mxu0 %v4899
    %v5216 = vpop.f32.mrf.mxu0
    %v5217 = vadd.f32 0.0, %v5216
    %v5218 = vpop.f32.mrf.mxu0
    %5219 = vmatprep.mubr.f32.mxu0 0.0
    %5220 = vmatmul.mubr.f32.gmra.mxu0 %v4902
    %v5221 = vpop.f32.mrf.mxu0
    %v5222 = vadd.f32 0.0, %v5221
    %v5223 = vpop.f32.mrf.mxu0
    %5224 = vdwg.mxu0
    %v5226 = vsel %vm256, %v5217, 0
    %v5229 = vsel %vm256, %v5222, 0
    %5231 = vmatprep.subr.mxu0 0.0
    %5232 = vmatpush1.msra.mxu0 0.0
    %5233 = vmatprep.subr.mxu0 0.0
    %5234 = vmatpush1.msra.mxu0 0.0
    %5235 = vmatprep.subr.mxu0 0.0
    %5236 = vmatpush1.msra.mxu0 0.0
    %5237 = vmatprep.subr.mxu0 0.0
    %5238 = vmatpush1.msra.mxu0 0.0
    %5239 = vmatprep.subr.mxu0 0.0
    %5240 = vmatpush1.msra.mxu0 0.0
    %5241 = vmatprep.subr.mxu0 0.0
    %5242 = vmatpush1.msra.mxu0 0.0
    %5243 = vmatprep.subr.mxu0 0.0
    %5244 = vmatpush1.msra.mxu0 0.0
    %5245 = vmatprep.subr.mxu0 0.0
    %5246 = vmatpush1.msra.mxu0 0.0
    %5247 = vmatprep.subr.mxu0 0.0
    %5248 = vmatpush1.msra.mxu0 0.0
    %5249 = vmatprep.subr.mxu0 0.0
    %5250 = vmatpush1.msra.mxu0 0.0
    %5251 = vmatprep.subr.mxu0 0.0
    %5252 = vmatpush1.msra.mxu0 0.0
    %5253 = vmatprep.subr.mxu0 0.0
    %5254 = vmatpush1.msra.mxu0 0.0
    %5255 = vmatprep.subr.mxu0 0.0
    %5256 = vmatpush1.msra.mxu0 0.0
    %5257 = vmatprep.subr.mxu0 0.0
    %5258 = vmatpush1.msra.mxu0 0.0
    %5259 = vmatprep.subr.mxu0 0.0
    %5260 = vmatpush1.msra.mxu0 %v4897
    %5261 = vmatprep.subr.mxu0 0.0
    %5262 = vmatpush1.msra.mxu0 %v4896
    %5263 = vmatprep.subr.mxu0 0.0
    %5264 = vmatpush2.msra.mxu0 0.0
    %5265 = vmatprep.subr.mxu0 0.0
    %5266 = vmatpush2.msra.mxu0 0.0
    %5267 = vmatprep.subr.mxu0 0.0
    %5268 = vmatpush2.msra.mxu0 0.0
    %5269 = vmatprep.subr.mxu0 0.0
    %5270 = vmatpush2.msra.mxu0 0.0
    %5271 = vmatprep.subr.mxu0 0.0
    %5272 = vmatpush2.msra.mxu0 0.0
    %5273 = vmatprep.subr.mxu0 0.0
    %5274 = vmatpush2.msra.mxu0 0.0
    %5275 = vmatprep.subr.mxu0 0.0
    %5276 = vmatpush2.msra.mxu0 0.0
    %5277 = vmatprep.subr.mxu0 0.0
    %5278 = vmatpush2.msra.mxu0 0.0
    %5279 = vmatprep.subr.mxu0 0.0
    %5280 = vmatpush2.msra.mxu0 0.0
    %5281 = vmatprep.subr.mxu0 0.0
    %5282 = vmatpush2.msra.mxu0 0.0
    %5283 = vmatprep.subr.mxu0 0.0
    %5284 = vmatpush2.msra.mxu0 0.0
    %5285 = vmatprep.subr.mxu0 0.0
    %5286 = vmatpush2.msra.mxu0 0.0
    %5287 = vmatprep.subr.mxu0 0.0
    %5288 = vmatpush2.msra.mxu0 0.0
    %5289 = vmatprep.subr.mxu0 0.0
    %5290 = vmatpush2.msra.mxu0 0.0
    %5291 = vmatprep.subr.mxu0 0.0
    %5292 = vmatpush2.msra.mxu0 0.0
    %5293 = vmatprep.subr.mxu0 0.0
    %5294 = vmatpush2.msra.mxu0 0.0
    %5295 = vmatprep.mubr.f32.mxu0 0.0
    %5296 = vmatmul.mubr.f32.gmra.mxu0 %v5226
    %v5297 = vpop.f32.mrf.mxu0
    %v5298 = vadd.f32 0.0, %v5297
    %v5299 = vpop.f32.mrf.mxu0
    %5300 = vmatprep.mubr.f32.mxu0 0.0
    %5301 = vmatmul.mubr.f32.gmra.mxu0 %v5229
    %v5302 = vpop.f32.mrf.mxu0
    %v5303 = vadd.f32 0.0, %v5302
    %v5304 = vpop.f32.mrf.mxu0
    %5305 = vdwg.mxu0
    %5306 = vxpose.xlu0.b32.start [1/16] %v5298, 128
    %5307 = vxpose.xlu0.b32.cont [2/16] %v5303, 128
    %5308 = vxpose.xlu0.b32.cont [3/16] 0.0, 128
    %5309 = vxpose.xlu0.b32.cont [4/16] 0.0, 128
    %5310 = vxpose.xlu0.b32.cont [5/16] 0.0, 128
    %5311 = vxpose.xlu0.b32.cont [6/16] 0.0, 128
    %5312 = vxpose.xlu0.b32.cont [7/16] 0.0, 128
    %5313 = vxpose.xlu0.b32.cont [8/16] 0.0, 128
    %5314 = vxpose.xlu0.b32.cont [9/16] 0.0, 128
    %5315 = vxpose.xlu0.b32.cont [10/16] 0.0, 128
    %5316 = vxpose.xlu0.b32.cont [11/16] 0.0, 128
    %5317 = vxpose.xlu0.b32.cont [12/16] 0.0, 128
    %5318 = vxpose.xlu0.b32.cont [13/16] 0.0, 128
    %5319 = vxpose.xlu0.b32.cont [14/16] 0.0, 128
    %5320 = vxpose.xlu0.b32.cont [15/16] 0.0, 128
    %5321 = vxpose.xlu0.b32.end [16/16] 0.0, 128
    %v5322 = vpop.trf.xlu0
    %v5323 = vpop.trf.xlu0
    %v5324 = vpop.trf.xlu0
    %v5325 = vpop.trf.xlu0
    %v5326 = vpop.trf.xlu0
    %v5327 = vpop.trf.xlu0
    %v5328 = vpop.trf.xlu0
    %v5329 = vpop.trf.xlu0
    %v5330 = vpop.trf.xlu0
    %v5331 = vpop.trf.xlu0
    %v5332 = vpop.trf.xlu0
    %v5333 = vpop.trf.xlu0
    %v5334 = vpop.trf.xlu0
    %v5335 = vpop.trf.xlu0
    %v5336 = vpop.trf.xlu0
    %v5337 = vpop.trf.xlu0
    %v5338 = vadd.f32 %v5298, %v5322
    %v5339 = vadd.f32 %v5303, %v5323
    %v5340 = vmul.f32 %v5338, 0.5
    %v5341 = vmul.f32 %v5339, 0.5
    %v5342 = vadd.f32 %v5340, %v153
    %v5343 = vadd.f32 %v5341, %v154
    %v5344 = vsel %vm256, %v5342, 0.0
    %v5345 = vsel %vm256, %v5343, 0.0
    %v5346 = vadd.f32 %v5344, %v5345
    %v5347 = vrot.slane %v5346, 4
    %v5348 = vadd.f32 %v5346, %v5347
    %v5349 = vrot.slane %v5348, 2
    %v5350 = vadd.f32 %v5348, %v5349
    %v5351 = vrot.slane %v5350, 1
    %v5352 = vadd.f32 %v5350, %v5351
    %v5353 = vmax.f32 %v5352, 1e-12
    %v5354 = vrsqrt.pop %v5353
    %v5355 = vmul.f32 %v5342, %v5354
    %v5356 = vmul.f32 %v5343, %v5354
    %5357 = vxpose.xlu0.b32.start [1/16] %v5354, 128
    %5358 = vxpose.xlu0.b32.cont [2/16] 0.0, 128
    %5359 = vxpose.xlu0.b32.cont [3/16] 0.0, 128
    %5360 = vxpose.xlu0.b32.cont [4/16] 0.0, 128
    %5361 = vxpose.xlu0.b32.cont [5/16] 0.0, 128
    %5362 = vxpose.xlu0.b32.cont [6/16] 0.0, 128
    %5363 = vxpose.xlu0.b32.cont [7/16] 0.0, 128
    %5364 = vxpose.xlu0.b32.cont [8/16] 0.0, 128
    %5365 = vxpose.xlu0.b32.cont [9/16] 0.0, 128
    %5366 = vxpose.xlu0.b32.cont [10/16] 0.0, 128
    %5367 = vxpose.xlu0.b32.cont [11/16] 0.0, 128
    %5368 = vxpose.xlu0.b32.cont [12/16] 0.0, 128
    %5369 = vxpose.xlu0.b32.cont [13/16] 0.0, 128
    %5370 = vxpose.xlu0.b32.cont [14/16] 0.0, 128
    %5371 = vxpose.xlu0.b32.cont [15/16] 0.0, 128
    %5372 = vxpose.xlu0.b32.end [16/16] 0.0, 128
    %v5373 = vpop.trf.xlu0
    %v5374 = vpop.trf.xlu0
    %v5375 = vpop.trf.xlu0
    %v5376 = vpop.trf.xlu0
    %v5377 = vpop.trf.xlu0
    %v5378 = vpop.trf.xlu0
    %v5379 = vpop.trf.xlu0
    %v5380 = vpop.trf.xlu0
    %v5381 = vpop.trf.xlu0
    %v5382 = vpop.trf.xlu0
    %v5383 = vpop.trf.xlu0
    %v5384 = vpop.trf.xlu0
    %v5385 = vpop.trf.xlu0
    %v5386 = vpop.trf.xlu0
    %v5387 = vpop.trf.xlu0
    %v5388 = vpop.trf.xlu0
    %5390 = vset.pattern.permute.xlu0 0
    %5391 = vperm.xlu0 %5390, %v5373
    %v5392 = vpop.permute.xlu0 %5391
    %5395 = vset.pattern.permute.xlu0 0
    %5396 = vperm.xlu0 %5395, %v5374
    %v5397 = vpop.permute.xlu0 %5396
    %v5399 = vmul.f32 %v5355, %v5392
    %v5400 = vmul.f32 %v5356, %v5397
    %v5401 = vld [vmem:[#allocation7] sm:$0xff]
    %v5402 = vld [vmem:[#allocation7 + $0x8] sm:$0xff]
    %v5403 = vld [vmem:[#allocation7 + $0x10] sm:$0xff]
    %v5404 = vld [vmem:[#allocation7 + $0x18] sm:$0xff]
    %v5405 = vld [vmem:[#allocation7 + $0x20] sm:$0xff]
    %v5406 = vld [vmem:[#allocation7 + $0x28] sm:$0xff]
    %v5407 = vld [vmem:[#allocation7 + $0x30] sm:$0xff]
    %v5408 = vld [vmem:[#allocation7 + $0x38] sm:$0xff]
    %v5409 = vld [vmem:[#allocation7 + $0x40] sm:$0xff]
    %v5410 = vld [vmem:[#allocation7 + $0x48] sm:$0xff]
    %v5411 = vld [vmem:[#allocation7 + $0x50] sm:$0xff]
    %v5412 = vld [vmem:[#allocation7 + $0x58] sm:$0xff]
    %v5413 = vld [vmem:[#allocation7 + $0x60] sm:$0xff]
    %v5414 = vld [vmem:[#allocation7 + $0x68] sm:$0xff]
    %v5415 = vld [vmem:[#allocation7 + $0x70] sm:$0xff]
    %v5416 = vld [vmem:[#allocation7 + $0x78] sm:$0xff]
    %5417 = vmatprep.subr.mxu0 0.0
    %5418 = vmatpush1.msra.mxu0 %v5416
    %5419 = vmatprep.subr.mxu0 0.0
    %5420 = vmatpush1.msra.mxu0 %v5415
    %5421 = vmatprep.subr.mxu0 0.0
    %5422 = vmatpush1.msra.mxu0 %v5414
    %5423 = vmatprep.subr.mxu0 0.0
    %5424 = vmatpush1.msra.mxu0 %v5413
    %5425 = vmatprep.subr.mxu0 0.0
    %5426 = vmatpush1.msra.mxu0 %v5412
    %5427 = vmatprep.subr.mxu0 0.0
    %5428 = vmatpush1.msra.mxu0 %v5411
    %5429 = vmatprep.subr.mxu0 0.0
    %5430 = vmatpush1.msra.mxu0 %v5410
    %5431 = vmatprep.subr.mxu0 0.0
    %5432 = vmatpush1.msra.mxu0 %v5409
    %5433 = vmatprep.subr.mxu0 0.0
    %5434 = vmatpush1.msra.mxu0 %v5408
    %5435 = vmatprep.subr.mxu0 0.0
    %5436 = vmatpush1.msra.mxu0 %v5407
    %5437 = vmatprep.subr.mxu0 0.0
    %5438 = vmatpush1.msra.mxu0 %v5406
    %5439 = vmatprep.subr.mxu0 0.0
    %5440 = vmatpush1.msra.mxu0 %v5405
    %5441 = vmatprep.subr.mxu0 0.0
    %5442 = vmatpush1.msra.mxu0 %v5404
    %5443 = vmatprep.subr.mxu0 0.0
    %5444 = vmatpush1.msra.mxu0 %v5403
    %5445 = vmatprep.subr.mxu0 0.0
    %5446 = vmatpush1.msra.mxu0 %v5402
    %5447 = vmatprep.subr.mxu0 0.0
    %5448 = vmatpush1.msra.mxu0 %v5401
    %5449 = vmatprep.subr.mxu0 0.0
    %5450 = vmatpush2.msra.mxu0 0.0
    %5451 = vmatprep.subr.mxu0 0.0
    %5452 = vmatpush2.msra.mxu0 0.0
    %5453 = vmatprep.subr.mxu0 0.0
    %5454 = vmatpush2.msra.mxu0 0.0
    %5455 = vmatprep.subr.mxu0 0.0
    %5456 = vmatpush2.msra.mxu0 0.0
    %5457 = vmatprep.subr.mxu0 0.0
    %5458 = vmatpush2.msra.mxu0 0.0
    %5459 = vmatprep.subr.mxu0 0.0
    %5460 = vmatpush2.msra.mxu0 0.0
    %5461 = vmatprep.subr.mxu0 0.0
    %5462 = vmatpush2.msra.mxu0 0.0
    %5463 = vmatprep.subr.mxu0 0.0
    %5464 = vmatpush2.msra.mxu0 0.0
    %5465 = vmatprep.subr.mxu0 0.0
    %5466 = vmatpush2.msra.mxu0 0.0
    %5467 = vmatprep.subr.mxu0 0.0
    %5468 = vmatpush2.msra.mxu0 0.0
    %5469 = vmatprep.subr.mxu0 0.0
    %5470 = vmatpush2.msra.mxu0 0.0
    %5471 = vmatprep.subr.mxu0 0.0
    %5472 = vmatpush2.msra.mxu0 0.0
    %5473 = vmatprep.subr.mxu0 0.0
    %5474 = vmatpush2.msra.mxu0 0.0
    %5475 = vmatprep.subr.mxu0 0.0
    %5476 = vmatpush2.msra.mxu0 0.0
    %5477 = vmatprep.subr.mxu0 0.0
    %5478 = vmatpush2.msra.mxu0 0.0
    %5479 = vmatprep.subr.mxu0 0.0
    %5480 = vmatpush2.msra.mxu0 0.0
    %5481 = vmatprep.mubr.f32.mxu0 0.0
    %5482 = vmatmul.mubr.f32.gmra.mxu0 %v5148
    %v5483 = vpop.f32.mrf.mxu0
    %v5484 = vadd.f32 0.0, %v5483
    %v5485 = vpop.f32.mrf.mxu0
    %5486 = vmatprep.mubr.f32.mxu0 0.0
    %5487 = vmatmul.mubr.f32.gmra.mxu0 %v5149
    %v5488 = vpop.f32.mrf.mxu0
    %v5489 = vadd.f32 0.0, %v5488
    %v5490 = vpop.f32.mrf.mxu0
    %5491 = vdwg.mxu0
    %v5492 = vld [vmem:[%s10] sm:$0x1]
    %v5494 = vlaneseq
    %v5495 = vshrl.u32 %v5494, 7
    %v5496 = vsub.s32 0, %v5495
    %v5497 = vrot.slane %v5492, %v5496
    %v5500 = vsel %vm256, %v5399, 0
    %v5503 = vsel %vm256, %v5400, 0
    %5505 = vmatprep.subr.mxu0 0.0
    %5506 = vmatpush1.msra.mxu0 0.0
    %5507 = vmatprep.subr.mxu0 0.0
    %5508 = vmatpush1.msra.mxu0 0.0
    %5509 = vmatprep.subr.mxu0 0.0
    %5510 = vmatpush1.msra.mxu0 0.0
    %5511 = vmatprep.subr.mxu0 0.0
    %5512 = vmatpush1.msra.mxu0 0.0
    %5513 = vmatprep.subr.mxu0 0.0
    %5514 = vmatpush1.msra.mxu0 0.0
    %5515 = vmatprep.subr.mxu0 0.0
    %5516 = vmatpush1.msra.mxu0 0.0
    %5517 = vmatprep.subr.mxu0 0.0
    %5518 = vmatpush1.msra.mxu0 0.0
    %5519 = vmatprep.subr.mxu0 0.0
    %5520 = vmatpush1.msra.mxu0 0.0
    %5521 = vmatprep.subr.mxu0 0.0
    %5522 = vmatpush1.msra.mxu0 0.0
    %5523 = vmatprep.subr.mxu0 0.0
    %5524 = vmatpush1.msra.mxu0 0.0
    %5525 = vmatprep.subr.mxu0 0.0
    %5526 = vmatpush1.msra.mxu0 0.0
    %5527 = vmatprep.subr.mxu0 0.0
    %5528 = vmatpush1.msra.mxu0 0.0
    %5529 = vmatprep.subr.mxu0 0.0
    %5530 = vmatpush1.msra.mxu0 0.0
    %5531 = vmatprep.subr.mxu0 0.0
    %5532 = vmatpush1.msra.mxu0 0.0
    %5533 = vmatprep.subr.mxu0 0.0
    %5534 = vmatpush1.msra.mxu0 %v5489
    %5535 = vmatprep.subr.mxu0 0.0
    %5536 = vmatpush1.msra.mxu0 %v5484
    %5537 = vmatprep.subr.mxu0 0.0
    %5538 = vmatpush2.msra.mxu0 0.0
    %5539 = vmatprep.subr.mxu0 0.0
    %5540 = vmatpush2.msra.mxu0 0.0
    %5541 = vmatprep.subr.mxu0 0.0
    %5542 = vmatpush2.msra.mxu0 0.0
    %5543 = vmatprep.subr.mxu0 0.0
    %5544 = vmatpush2.msra.mxu0 0.0
    %5545 = vmatprep.subr.mxu0 0.0
    %5546 = vmatpush2.msra.mxu0 0.0
    %5547 = vmatprep.subr.mxu0 0.0
    %5548 = vmatpush2.msra.mxu0 0.0
    %5549 = vmatprep.subr.mxu0 0.0
    %5550 = vmatpush2.msra.mxu0 0.0
    %5551 = vmatprep.subr.mxu0 0.0
    %5552 = vmatpush2.msra.mxu0 0.0
    %5553 = vmatprep.subr.mxu0 0.0
    %5554 = vmatpush2.msra.mxu0 0.0
    %5555 = vmatprep.subr.mxu0 0.0
    %5556 = vmatpush2.msra.mxu0 0.0
    %5557 = vmatprep.subr.mxu0 0.0
    %5558 = vmatpush2.msra.mxu0 0.0
    %5559 = vmatprep.subr.mxu0 0.0
    %5560 = vmatpush2.msra.mxu0 0.0
    %5561 = vmatprep.subr.mxu0 0.0
    %5562 = vmatpush2.msra.mxu0 0.0
    %5563 = vmatprep.subr.mxu0 0.0
    %5564 = vmatpush2.msra.mxu0 0.0
    %5565 = vmatprep.subr.mxu0 0.0
    %5566 = vmatpush2.msra.mxu0 0.0
    %5567 = vmatprep.subr.mxu0 0.0
    %5568 = vmatpush2.msra.mxu0 0.0
    %5569 = vmatprep.mubr.f32.mxu0 0.0
    %5570 = vmatmul.mubr.f32.gmra.mxu0 %v5500
    %v5571 = vpop.f32.mrf.mxu0
    %v5572 = vadd.f32 %v5497, %v5571
    %v5573 = vpop.f32.mrf.mxu0
    %5574 = vmatprep.mubr.f32.mxu0 0.0
    %5575 = vmatmul.mubr.f32.gmra.mxu0 %v5503
    %v5576 = vpop.f32.mrf.mxu0
    %v5577 = vadd.f32 %v5497, %v5576
    %v5578 = vpop.f32.mrf.mxu0
    %5579 = vdwg.mxu0
    %vm5580 = vcmp.gt.f32.partialorder %v5572, 0.0
    %vm5581 = vcmp.gt.f32.partialorder %v5577, 0.0
    %v5582 = vmin.f32 %v5572, 0.0
    %v5583 = vmin.f32 %v5577, 0.0
    %v5584 = vmul.f32 %v5582, 1.442695
    %v5585 = vpow.pop %v5584
    %v5586 = vmul.f32 %v5583, 1.442695
    %v5587 = vpow.pop %v5586
    %v5588 = vsub.f32 %v5585, 1.0
    %v5589 = vsub.f32 %v5587, 1.0
    %v5590 = vsel %vm5580, %v5572, %v5588
    %v5591 = vsel %vm5581, %v5577, %v5589
    %v5592 = vmul.f32 %v5590, %v5590
    %v5593 = vmul.f32 %v5591, %v5591
    %5594 = vadd.xlane.f32.xlu0 %v5592
    %v5595 = vpop.xlane.xlu0 %5594
    %5596 = vadd.xlane.f32.xlu0 %v5593
    %v5597 = vpop.xlane.xlu0 %5596
    %v5598 = vmax.f32 %v5595, 1e-24
    %v5599 = vmax.f32 %v5597, 1e-24
    %v5600 = vrsqrt.pop %v5598
    %v5601 = vrsqrt.pop %v5599
    %v5602 = vmul.f32 %v5590, %v5600
    %v5603 = vmul.f32 %v5591, %v5601
    %v5605 = vsel %vm256, %v4896, 0
    %v5608 = vsel %vm256, %v4897, 0
    %5610 = vmatprep.subr.mxu0 0.0
    %5611 = vmatpush1.msra.mxu0 0.0
    %5612 = vmatprep.subr.mxu0 0.0
    %5613 = vmatpush1.msra.mxu0 0.0
    %5614 = vmatprep.subr.mxu0 0.0
    %5615 = vmatpush1.msra.mxu0 0.0
    %5616 = vmatprep.subr.mxu0 0.0
    %5617 = vmatpush1.msra.mxu0 0.0
    %5618 = vmatprep.subr.mxu0 0.0
    %5619 = vmatpush1.msra.mxu0 0.0
    %5620 = vmatprep.subr.mxu0 0.0
    %5621 = vmatpush1.msra.mxu0 0.0
    %5622 = vmatprep.subr.mxu0 0.0
    %5623 = vmatpush1.msra.mxu0 0.0
    %5624 = vmatprep.subr.mxu0 0.0
    %5625 = vmatpush1.msra.mxu0 0.0
    %5626 = vmatprep.subr.mxu0 0.0
    %5627 = vmatpush1.msra.mxu0 0.0
    %5628 = vmatprep.subr.mxu0 0.0
    %5629 = vmatpush1.msra.mxu0 0.0
    %5630 = vmatprep.subr.mxu0 0.0
    %5631 = vmatpush1.msra.mxu0 0.0
    %5632 = vmatprep.subr.mxu0 0.0
    %5633 = vmatpush1.msra.mxu0 0.0
    %5634 = vmatprep.subr.mxu0 0.0
    %5635 = vmatpush1.msra.mxu0 0.0
    %5636 = vmatprep.subr.mxu0 0.0
    %5637 = vmatpush1.msra.mxu0 0.0
    %5638 = vmatprep.subr.mxu0 0.0
    %5639 = vmatpush1.msra.mxu0 %v5603
    %5640 = vmatprep.subr.mxu0 0.0
    %5641 = vmatpush1.msra.mxu0 %v5602
    %5642 = vmatprep.subr.mxu0 0.0
    %5643 = vmatpush2.msra.mxu0 0.0
    %5644 = vmatprep.subr.mxu0 0.0
    %5645 = vmatpush2.msra.mxu0 0.0
    %5646 = vmatprep.subr.mxu0 0.0
    %5647 = vmatpush2.msra.mxu0 0.0
    %5648 = vmatprep.subr.mxu0 0.0
    %5649 = vmatpush2.msra.mxu0 0.0
    %5650 = vmatprep.subr.mxu0 0.0
    %5651 = vmatpush2.msra.mxu0 0.0
    %5652 = vmatprep.subr.mxu0 0.0
    %5653 = vmatpush2.msra.mxu0 0.0
    %5654 = vmatprep.subr.mxu0 0.0
    %5655 = vmatpush2.msra.mxu0 0.0
    %5656 = vmatprep.subr.mxu0 0.0
    %5657 = vmatpush2.msra.mxu0 0.0
    %5658 = vmatprep.subr.mxu0 0.0
    %5659 = vmatpush2.msra.mxu0 0.0
    %5660 = vmatprep.subr.mxu0 0.0
    %5661 = vmatpush2.msra.mxu0 0.0
    %5662 = vmatprep.subr.mxu0 0.0
    %5663 = vmatpush2.msra.mxu0 0.0
    %5664 = vmatprep.subr.mxu0 0.0
    %5665 = vmatpush2.msra.mxu0 0.0
    %5666 = vmatprep.subr.mxu0 0.0
    %5667 = vmatpush2.msra.mxu0 0.0
    %5668 = vmatprep.subr.mxu0 0.0
    %5669 = vmatpush2.msra.mxu0 0.0
    %5670 = vmatprep.subr.mxu0 0.0
    %5671 = vmatpush2.msra.mxu0 0.0
    %5672 = vmatprep.subr.mxu0 0.0
    %5673 = vmatpush2.msra.mxu0 0.0
    %5674 = vmatprep.mubr.f32.mxu0 0.0
    %5675 = vmatmul.mubr.f32.gmra.mxu0 %v5605
    %v5676 = vpop.f32.mrf.mxu0
    %v5677 = vadd.f32 0.0, %v5676
    %v5678 = vpop.f32.mrf.mxu0
    %5679 = vmatprep.mubr.f32.mxu0 0.0
    %5680 = vmatmul.mubr.f32.gmra.mxu0 %v5608
    %v5681 = vpop.f32.mrf.mxu0
    %v5682 = vadd.f32 0.0, %v5681
    %v5683 = vpop.f32.mrf.mxu0
    %5684 = vdwg.mxu0
    %v5685 = vld [vmem:[#allocation8] sm:$0xff]
    %v5686 = vld [vmem:[#allocation8 + $0x8] sm:$0xff]
    %v5687 = vld [vmem:[#allocation8 + $0x10] sm:$0xff]
    %v5688 = vld [vmem:[#allocation8 + $0x18] sm:$0xff]
    %v5689 = vld [vmem:[#allocation8 + $0x20] sm:$0xff]
    %v5690 = vld [vmem:[#allocation8 + $0x28] sm:$0xff]
    %v5691 = vld [vmem:[#allocation8 + $0x30] sm:$0xff]
    %v5692 = vld [vmem:[#allocation8 + $0x38] sm:$0xff]
    %v5693 = vld [vmem:[#allocation8 + $0x40] sm:$0xff]
    %v5694 = vld [vmem:[#allocation8 + $0x48] sm:$0xff]
    %v5695 = vld [vmem:[#allocation8 + $0x50] sm:$0xff]
    %v5696 = vld [vmem:[#allocation8 + $0x58] sm:$0xff]
    %v5697 = vld [vmem:[#allocation8 + $0x60] sm:$0xff]
    %v5698 = vld [vmem:[#allocation8 + $0x68] sm:$0xff]
    %v5699 = vld [vmem:[#allocation8 + $0x70] sm:$0xff]
    %v5700 = vld [vmem:[#allocation8 + $0x78] sm:$0xff]
    %v5701 = vld [vmem:[#allocation10] sm:$0xff]
    %v5702 = vld [vmem:[#allocation10 + $0x8] sm:$0xff]
    %v5703 = vld [vmem:[#allocation10 + $0x10] sm:$0xff]
    %v5704 = vld [vmem:[#allocation10 + $0x18] sm:$0xff]
    %v5705 = vld [vmem:[#allocation10 + $0x20] sm:$0xff]
    %v5706 = vld [vmem:[#allocation10 + $0x28] sm:$0xff]
    %v5707 = vld [vmem:[#allocation10 + $0x30] sm:$0xff]
    %v5708 = vld [vmem:[#allocation10 + $0x38] sm:$0xff]
    %v5709 = vld [vmem:[#allocation10 + $0x40] sm:$0xff]
    %v5710 = vld [vmem:[#allocation10 + $0x48] sm:$0xff]
    %v5711 = vld [vmem:[#allocation10 + $0x50] sm:$0xff]
    %v5712 = vld [vmem:[#allocation10 + $0x58] sm:$0xff]
    %v5713 = vld [vmem:[#allocation10 + $0x60] sm:$0xff]
    %v5714 = vld [vmem:[#allocation10 + $0x68] sm:$0xff]
    %v5715 = vld [vmem:[#allocation10 + $0x70] sm:$0xff]
    %v5716 = vld [vmem:[#allocation10 + $0x78] sm:$0xff]
    %5717 = vmatprep.subr.mxu0 0.0
    %5718 = vmatpush1.msra.mxu0 %v5716
    %5719 = vmatprep.subr.mxu0 0.0
    %5720 = vmatpush1.msra.mxu0 %v5715
    %5721 = vmatprep.subr.mxu0 0.0
    %5722 = vmatpush1.msra.mxu0 %v5714
    %5723 = vmatprep.subr.mxu0 0.0
    %5724 = vmatpush1.msra.mxu0 %v5713
    %5725 = vmatprep.subr.mxu0 0.0
    %5726 = vmatpush1.msra.mxu0 %v5712
    %5727 = vmatprep.subr.mxu0 0.0
    %5728 = vmatpush1.msra.mxu0 %v5711
    %5729 = vmatprep.subr.mxu0 0.0
    %5730 = vmatpush1.msra.mxu0 %v5710
    %5731 = vmatprep.subr.mxu0 0.0
    %5732 = vmatpush1.msra.mxu0 %v5709
    %5733 = vmatprep.subr.mxu0 0.0
    %5734 = vmatpush1.msra.mxu0 %v5708
    %5735 = vmatprep.subr.mxu0 0.0
    %5736 = vmatpush1.msra.mxu0 %v5707
    %5737 = vmatprep.subr.mxu0 0.0
    %5738 = vmatpush1.msra.mxu0 %v5706
    %5739 = vmatprep.subr.mxu0 0.0
    %5740 = vmatpush1.msra.mxu0 %v5705
    %5741 = vmatprep.subr.mxu0 0.0
    %5742 = vmatpush1.msra.mxu0 %v5704
    %5743 = vmatprep.subr.mxu0 0.0
    %5744 = vmatpush1.msra.mxu0 %v5703
    %5745 = vmatprep.subr.mxu0 0.0
    %5746 = vmatpush1.msra.mxu0 %v5702
    %5747 = vmatprep.subr.mxu0 0.0
    %5748 = vmatpush1.msra.mxu0 %v5701
    %5749 = vmatprep.subr.mxu0 0.0
    %5750 = vmatpush2.msra.mxu0 0.0
    %5751 = vmatprep.subr.mxu0 0.0
    %5752 = vmatpush2.msra.mxu0 0.0
    %5753 = vmatprep.subr.mxu0 0.0
    %5754 = vmatpush2.msra.mxu0 0.0
    %5755 = vmatprep.subr.mxu0 0.0
    %5756 = vmatpush2.msra.mxu0 0.0
    %5757 = vmatprep.subr.mxu0 0.0
    %5758 = vmatpush2.msra.mxu0 0.0
    %5759 = vmatprep.subr.mxu0 0.0
    %5760 = vmatpush2.msra.mxu0 0.0
    %5761 = vmatprep.subr.mxu0 0.0
    %5762 = vmatpush2.msra.mxu0 0.0
    %5763 = vmatprep.subr.mxu0 0.0
    %5764 = vmatpush2.msra.mxu0 0.0
    %5765 = vmatprep.subr.mxu0 0.0
    %5766 = vmatpush2.msra.mxu0 0.0
    %5767 = vmatprep.subr.mxu0 0.0
    %5768 = vmatpush2.msra.mxu0 0.0
    %5769 = vmatprep.subr.mxu0 0.0
    %5770 = vmatpush2.msra.mxu0 0.0
    %5771 = vmatprep.subr.mxu0 0.0
    %5772 = vmatpush2.msra.mxu0 0.0
    %5773 = vmatprep.subr.mxu0 0.0
    %5774 = vmatpush2.msra.mxu0 0.0
    %5775 = vmatprep.subr.mxu0 0.0
    %5776 = vmatpush2.msra.mxu0 0.0
    %5777 = vmatprep.subr.mxu0 0.0
    %5778 = vmatpush2.msra.mxu0 0.0
    %5779 = vmatprep.subr.mxu0 0.0
    %5780 = vmatpush2.msra.mxu0 0.0
    %5781 = vmatprep.mubr.f32.mxu0 0.0
    %5782 = vmatmul.mubr.f32.gmra.mxu0 %v3848
    %v5783 = vpop.f32.mrf.mxu0
    %v5784 = vadd.f32 0.0, %v5783
    %v5785 = vpop.f32.mrf.mxu0
    %5786 = vmatprep.mubr.f32.mxu0 0.0
    %5787 = vmatmul.mubr.f32.gmra.mxu0 %v3849
    %v5788 = vpop.f32.mrf.mxu0
    %v5789 = vadd.f32 0.0, %v5788
    %v5790 = vpop.f32.mrf.mxu0
    %5791 = vdwg.mxu0
    %5792 = vmatprep.subr.mxu0 0.0
    %5793 = vmatpush1.msra.mxu0 %v5700
    %5794 = vmatprep.subr.mxu0 0.0
    %5795 = vmatpush1.msra.mxu0 %v5699
    %5796 = vmatprep.subr.mxu0 0.0
    %5797 = vmatpush1.msra.mxu0 %v5698
    %5798 = vmatprep.subr.mxu0 0.0
    %5799 = vmatpush1.msra.mxu0 %v5697
    %5800 = vmatprep.subr.mxu0 0.0
    %5801 = vmatpush1.msra.mxu0 %v5696
    %5802 = vmatprep.subr.mxu0 0.0
    %5803 = vmatpush1.msra.mxu0 %v5695
    %5804 = vmatprep.subr.mxu0 0.0
    %5805 = vmatpush1.msra.mxu0 %v5694
    %5806 = vmatprep.subr.mxu0 0.0
    %5807 = vmatpush1.msra.mxu0 %v5693
    %5808 = vmatprep.subr.mxu0 0.0
    %5809 = vmatpush1.msra.mxu0 %v5692
    %5810 = vmatprep.subr.mxu0 0.0
    %5811 = vmatpush1.msra.mxu0 %v5691
    %5812 = vmatprep.subr.mxu0 0.0
    %5813 = vmatpush1.msra.mxu0 %v5690
    %5814 = vmatprep.subr.mxu0 0.0
    %5815 = vmatpush1.msra.mxu0 %v5689
    %5816 = vmatprep.subr.mxu0 0.0
    %5817 = vmatpush1.msra.mxu0 %v5688
    %5818 = vmatprep.subr.mxu0 0.0
    %5819 = vmatpush1.msra.mxu0 %v5687
    %5820 = vmatprep.subr.mxu0 0.0
    %5821 = vmatpush1.msra.mxu0 %v5686
    %5822 = vmatprep.subr.mxu0 0.0
    %5823 = vmatpush1.msra.mxu0 %v5685
    %5824 = vmatprep.subr.mxu0 0.0
    %5825 = vmatpush2.msra.mxu0 0.0
    %5826 = vmatprep.subr.mxu0 0.0
    %5827 = vmatpush2.msra.mxu0 0.0
    %5828 = vmatprep.subr.mxu0 0.0
    %5829 = vmatpush2.msra.mxu0 0.0
    %5830 = vmatprep.subr.mxu0 0.0
    %5831 = vmatpush2.msra.mxu0 0.0
    %5832 = vmatprep.subr.mxu0 0.0
    %5833 = vmatpush2.msra.mxu0 0.0
    %5834 = vmatprep.subr.mxu0 0.0
    %5835 = vmatpush2.msra.mxu0 0.0
    %5836 = vmatprep.subr.mxu0 0.0
    %5837 = vmatpush2.msra.mxu0 0.0
    %5838 = vmatprep.subr.mxu0 0.0
    %5839 = vmatpush2.msra.mxu0 0.0
    %5840 = vmatprep.subr.mxu0 0.0
    %5841 = vmatpush2.msra.mxu0 0.0
    %5842 = vmatprep.subr.mxu0 0.0
    %5843 = vmatpush2.msra.mxu0 0.0
    %5844 = vmatprep.subr.mxu0 0.0
    %5845 = vmatpush2.msra.mxu0 0.0
    %5846 = vmatprep.subr.mxu0 0.0
    %5847 = vmatpush2.msra.mxu0 0.0
    %5848 = vmatprep.subr.mxu0 0.0
    %5849 = vmatpush2.msra.mxu0 0.0
    %5850 = vmatprep.subr.mxu0 0.0
    %5851 = vmatpush2.msra.mxu0 0.0
    %5852 = vmatprep.subr.mxu0 0.0
    %5853 = vmatpush2.msra.mxu0 0.0
    %5854 = vmatprep.subr.mxu0 0.0
    %5855 = vmatpush2.msra.mxu0 0.0
    %5856 = vmatprep.mubr.f32.mxu0 0.0
    %5857 = vmatmul.mubr.f32.gmra.mxu0 %v5677
    %v5858 = vpop.f32.mrf.mxu0
    %v5859 = vadd.f32 %v5784, %v5858
    %v5860 = vpop.f32.mrf.mxu0
    %5861 = vmatprep.mubr.f32.mxu0 0.0
    %5862 = vmatmul.mubr.f32.gmra.mxu0 %v5682
    %v5863 = vpop.f32.mrf.mxu0
    %v5864 = vadd.f32 %v5789, %v5863
    %v5865 = vpop.f32.mrf.mxu0
    %5866 = vdwg.mxu0
    %v5867 = vld [vmem:[%s13] sm:$0x1]
    %v5869 = vlaneseq
    %v5870 = vshrl.u32 %v5869, 7
    %v5871 = vsub.s32 0, %v5870
    %v5872 = vrot.slane %v5867, %v5871
    %5874 = vmatprep.subr.mxu0 0.0
    %5875 = vmatpush1.msra.mxu0 0.0
    %5876 = vmatprep.subr.mxu0 0.0
    %5877 = vmatpush1.msra.mxu0 0.0
    %5878 = vmatprep.subr.mxu0 0.0
    %5879 = vmatpush1.msra.mxu0 0.0
    %5880 = vmatprep.subr.mxu0 0.0
    %5881 = vmatpush1.msra.mxu0 0.0
    %5882 = vmatprep.subr.mxu0 0.0
    %5883 = vmatpush1.msra.mxu0 0.0
    %5884 = vmatprep.subr.mxu0 0.0
    %5885 = vmatpush1.msra.mxu0 0.0
    %5886 = vmatprep.subr.mxu0 0.0
    %5887 = vmatpush1.msra.mxu0 0.0
    %5888 = vmatprep.subr.mxu0 0.0
    %5889 = vmatpush1.msra.mxu0 0.0
    %5890 = vmatprep.subr.mxu0 0.0
    %5891 = vmatpush1.msra.mxu0 0.0
    %5892 = vmatprep.subr.mxu0 0.0
    %5893 = vmatpush1.msra.mxu0 0.0
    %5894 = vmatprep.subr.mxu0 0.0
    %5895 = vmatpush1.msra.mxu0 0.0
    %5896 = vmatprep.subr.mxu0 0.0
    %5897 = vmatpush1.msra.mxu0 0.0
    %5898 = vmatprep.subr.mxu0 0.0
    %5899 = vmatpush1.msra.mxu0 0.0
    %5900 = vmatprep.subr.mxu0 0.0
    %5901 = vmatpush1.msra.mxu0 0.0
    %5902 = vmatprep.subr.mxu0 0.0
    %5903 = vmatpush1.msra.mxu0 %v5864
    %5904 = vmatprep.subr.mxu0 0.0
    %5905 = vmatpush1.msra.mxu0 %v5859
    %5906 = vmatprep.subr.mxu0 0.0
    %5907 = vmatpush2.msra.mxu0 0.0
    %5908 = vmatprep.subr.mxu0 0.0
    %5909 = vmatpush2.msra.mxu0 0.0
    %5910 = vmatprep.subr.mxu0 0.0
    %5911 = vmatpush2.msra.mxu0 0.0
    %5912 = vmatprep.subr.mxu0 0.0
    %5913 = vmatpush2.msra.mxu0 0.0
    %5914 = vmatprep.subr.mxu0 0.0
    %5915 = vmatpush2.msra.mxu0 0.0
    %5916 = vmatprep.subr.mxu0 0.0
    %5917 = vmatpush2.msra.mxu0 0.0
    %5918 = vmatprep.subr.mxu0 0.0
    %5919 = vmatpush2.msra.mxu0 0.0
    %5920 = vmatprep.subr.mxu0 0.0
    %5921 = vmatpush2.msra.mxu0 0.0
    %5922 = vmatprep.subr.mxu0 0.0
    %5923 = vmatpush2.msra.mxu0 0.0
    %5924 = vmatprep.subr.mxu0 0.0
    %5925 = vmatpush2.msra.mxu0 0.0
    %5926 = vmatprep.subr.mxu0 0.0
    %5927 = vmatpush2.msra.mxu0 0.0
    %5928 = vmatprep.subr.mxu0 0.0
    %5929 = vmatpush2.msra.mxu0 0.0
    %5930 = vmatprep.subr.mxu0 0.0
    %5931 = vmatpush2.msra.mxu0 0.0
    %5932 = vmatprep.subr.mxu0 0.0
    %5933 = vmatpush2.msra.mxu0 0.0
    %5934 = vmatprep.subr.mxu0 0.0
    %5935 = vmatpush2.msra.mxu0 0.0
    %5936 = vmatprep.subr.mxu0 0.0
    %5937 = vmatpush2.msra.mxu0 0.0
    %5938 = vmatprep.mubr.f32.mxu0 0.0
    %5939 = vmatmul.mubr.f32.gmra.mxu0 %v3754
    %v5940 = vpop.f32.mrf.mxu0
    %v5941 = vadd.f32 %v5872, %v5940
    %v5942 = vpop.f32.mrf.mxu0
    %5943 = vmatprep.mubr.f32.mxu0 0.0
    %5944 = vmatmul.mubr.f32.gmra.mxu0 %v3757
    %v5945 = vpop.f32.mrf.mxu0
    %v5946 = vadd.f32 %v5872, %v5945
    %v5947 = vpop.f32.mrf.mxu0
    %5948 = vdwg.mxu0
    %vm5949 = vcmp.gt.f32.partialorder %v5941, 0.0
    %vm5950 = vcmp.gt.f32.partialorder %v5946, 0.0
    %v5951 = vmin.f32 %v5941, 0.0
    %v5952 = vmin.f32 %v5946, 0.0
    %v5953 = vmul.f32 %v5951, 1.442695
    %v5954 = vpow.pop %v5953
    %v5955 = vmul.f32 %v5952, 1.442695
    %v5956 = vpow.pop %v5955
    %v5957 = vsub.f32 %v5954, 1.0
    %v5958 = vsub.f32 %v5956, 1.0
    %v5959 = vsel %vm5949, %v5941, %v5957
    %v5960 = vsel %vm5950, %v5946, %v5958
    %v5961 = vmul.f32 %v5959, %v5959
    %v5962 = vmul.f32 %v5960, %v5960
    %5963 = vadd.xlane.f32.xlu0 %v5961
    %v5964 = vpop.xlane.xlu0 %5963
    %5965 = vadd.xlane.f32.xlu0 %v5962
    %v5966 = vpop.xlane.xlu0 %5965
    %v5967 = vmax.f32 %v5964, 1e-24
    %v5968 = vmax.f32 %v5966, 1e-24
    %v5969 = vrsqrt.pop %v5967
    %v5970 = vrsqrt.pop %v5968
    %v5971 = vmul.f32 %v5959, %v5969
    %v5972 = vmul.f32 %v5960, %v5970
    %v5974 = vsel %vm256, %v3144, 0
    %v5977 = vsel %vm256, %v3145, 0
    %5979 = vmatprep.subr.mxu0 0.0
    %5980 = vmatpush1.msra.mxu0 0.0
    %5981 = vmatprep.subr.mxu0 0.0
    %5982 = vmatpush1.msra.mxu0 0.0
    %5983 = vmatprep.subr.mxu0 0.0
    %5984 = vmatpush1.msra.mxu0 0.0
    %5985 = vmatprep.subr.mxu0 0.0
    %5986 = vmatpush1.msra.mxu0 0.0
    %5987 = vmatprep.subr.mxu0 0.0
    %5988 = vmatpush1.msra.mxu0 0.0
    %5989 = vmatprep.subr.mxu0 0.0
    %5990 = vmatpush1.msra.mxu0 0.0
    %5991 = vmatprep.subr.mxu0 0.0
    %5992 = vmatpush1.msra.mxu0 0.0
    %5993 = vmatprep.subr.mxu0 0.0
    %5994 = vmatpush1.msra.mxu0 0.0
    %5995 = vmatprep.subr.mxu0 0.0
    %5996 = vmatpush1.msra.mxu0 0.0
    %5997 = vmatprep.subr.mxu0 0.0
    %5998 = vmatpush1.msra.mxu0 0.0
    %5999 = vmatprep.subr.mxu0 0.0
    %6000 = vmatpush1.msra.mxu0 0.0
    %6001 = vmatprep.subr.mxu0 0.0
    %6002 = vmatpush1.msra.mxu0 0.0
    %6003 = vmatprep.subr.mxu0 0.0
    %6004 = vmatpush1.msra.mxu0 0.0
    %6005 = vmatprep.subr.mxu0 0.0
    %6006 = vmatpush1.msra.mxu0 0.0
    %6007 = vmatprep.subr.mxu0 0.0
    %6008 = vmatpush1.msra.mxu0 %v5972
    %6009 = vmatprep.subr.mxu0 0.0
    %6010 = vmatpush1.msra.mxu0 %v5971
    %6011 = vmatprep.subr.mxu0 0.0
    %6012 = vmatpush2.msra.mxu0 0.0
    %6013 = vmatprep.subr.mxu0 0.0
    %6014 = vmatpush2.msra.mxu0 0.0
    %6015 = vmatprep.subr.mxu0 0.0
    %6016 = vmatpush2.msra.mxu0 0.0
    %6017 = vmatprep.subr.mxu0 0.0
    %6018 = vmatpush2.msra.mxu0 0.0
    %6019 = vmatprep.subr.mxu0 0.0
    %6020 = vmatpush2.msra.mxu0 0.0
    %6021 = vmatprep.subr.mxu0 0.0
    %6022 = vmatpush2.msra.mxu0 0.0
    %6023 = vmatprep.subr.mxu0 0.0
    %6024 = vmatpush2.msra.mxu0 0.0
    %6025 = vmatprep.subr.mxu0 0.0
    %6026 = vmatpush2.msra.mxu0 0.0
    %6027 = vmatprep.subr.mxu0 0.0
    %6028 = vmatpush2.msra.mxu0 0.0
    %6029 = vmatprep.subr.mxu0 0.0
    %6030 = vmatpush2.msra.mxu0 0.0
    %6031 = vmatprep.subr.mxu0 0.0
    %6032 = vmatpush2.msra.mxu0 0.0
    %6033 = vmatprep.subr.mxu0 0.0
    %6034 = vmatpush2.msra.mxu0 0.0
    %6035 = vmatprep.subr.mxu0 0.0
    %6036 = vmatpush2.msra.mxu0 0.0
    %6037 = vmatprep.subr.mxu0 0.0
    %6038 = vmatpush2.msra.mxu0 0.0
    %6039 = vmatprep.subr.mxu0 0.0
    %6040 = vmatpush2.msra.mxu0 0.0
    %6041 = vmatprep.subr.mxu0 0.0
    %6042 = vmatpush2.msra.mxu0 0.0
    %6043 = vmatprep.mubr.f32.mxu0 0.0
    %6044 = vmatmul.mubr.f32.gmra.mxu0 %v5974
    %v6045 = vpop.f32.mrf.mxu0
    %v6046 = vadd.f32 0.0, %v6045
    %v6047 = vpop.f32.mrf.mxu0
    %6048 = vmatprep.mubr.f32.mxu0 0.0
    %6049 = vmatmul.mubr.f32.gmra.mxu0 %v5977
    %v6050 = vpop.f32.mrf.mxu0
    %v6051 = vadd.f32 0.0, %v6050
    %v6052 = vpop.f32.mrf.mxu0
    %6053 = vdwg.mxu0
    %s6054 = scalar_lea.vmem [#allocation8], 128
    %v6055 = vld [vmem:[%s6054] sm:$0xff]
    %v6056 = vld [vmem:[%s6054 + $0x8] sm:$0xff]
    %v6057 = vld [vmem:[%s6054 + $0x10] sm:$0xff]
    %v6058 = vld [vmem:[%s6054 + $0x18] sm:$0xff]
    %v6059 = vld [vmem:[%s6054 + $0x20] sm:$0xff]
    %v6060 = vld [vmem:[%s6054 + $0x28] sm:$0xff]
    %v6061 = vld [vmem:[%s6054 + $0x30] sm:$0xff]
    %v6062 = vld [vmem:[%s6054 + $0x38] sm:$0xff]
    %v6063 = vld [vmem:[%s6054 + $0x40] sm:$0xff]
    %v6064 = vld [vmem:[%s6054 + $0x48] sm:$0xff]
    %v6065 = vld [vmem:[%s6054 + $0x50] sm:$0xff]
    %v6066 = vld [vmem:[%s6054 + $0x58] sm:$0xff]
    %v6067 = vld [vmem:[%s6054 + $0x60] sm:$0xff]
    %v6068 = vld [vmem:[%s6054 + $0x68] sm:$0xff]
    %v6069 = vld [vmem:[%s6054 + $0x70] sm:$0xff]
    %v6070 = vld [vmem:[%s6054 + $0x78] sm:$0xff]
    %s6071 = scalar_lea.vmem [#allocation10], 128
    %v6072 = vld [vmem:[%s6071] sm:$0xff]
    %v6073 = vld [vmem:[%s6071 + $0x8] sm:$0xff]
    %v6074 = vld [vmem:[%s6071 + $0x10] sm:$0xff]
    %v6075 = vld [vmem:[%s6071 + $0x18] sm:$0xff]
    %v6076 = vld [vmem:[%s6071 + $0x20] sm:$0xff]
    %v6077 = vld [vmem:[%s6071 + $0x28] sm:$0xff]
    %v6078 = vld [vmem:[%s6071 + $0x30] sm:$0xff]
    %v6079 = vld [vmem:[%s6071 + $0x38] sm:$0xff]
    %v6080 = vld [vmem:[%s6071 + $0x40] sm:$0xff]
    %v6081 = vld [vmem:[%s6071 + $0x48] sm:$0xff]
    %v6082 = vld [vmem:[%s6071 + $0x50] sm:$0xff]
    %v6083 = vld [vmem:[%s6071 + $0x58] sm:$0xff]
    %v6084 = vld [vmem:[%s6071 + $0x60] sm:$0xff]
    %v6085 = vld [vmem:[%s6071 + $0x68] sm:$0xff]
    %v6086 = vld [vmem:[%s6071 + $0x70] sm:$0xff]
    %v6087 = vld [vmem:[%s6071 + $0x78] sm:$0xff]
    %6088 = vmatprep.subr.mxu0 0.0
    %6089 = vmatpush1.msra.mxu0 %v6087
    %6090 = vmatprep.subr.mxu0 0.0
    %6091 = vmatpush1.msra.mxu0 %v6086
    %6092 = vmatprep.subr.mxu0 0.0
    %6093 = vmatpush1.msra.mxu0 %v6085
    %6094 = vmatprep.subr.mxu0 0.0
    %6095 = vmatpush1.msra.mxu0 %v6084
    %6096 = vmatprep.subr.mxu0 0.0
    %6097 = vmatpush1.msra.mxu0 %v6083
    %6098 = vmatprep.subr.mxu0 0.0
    %6099 = vmatpush1.msra.mxu0 %v6082
    %6100 = vmatprep.subr.mxu0 0.0
    %6101 = vmatpush1.msra.mxu0 %v6081
    %6102 = vmatprep.subr.mxu0 0.0
    %6103 = vmatpush1.msra.mxu0 %v6080
    %6104 = vmatprep.subr.mxu0 0.0
    %6105 = vmatpush1.msra.mxu0 %v6079
    %6106 = vmatprep.subr.mxu0 0.0
    %6107 = vmatpush1.msra.mxu0 %v6078
    %6108 = vmatprep.subr.mxu0 0.0
    %6109 = vmatpush1.msra.mxu0 %v6077
    %6110 = vmatprep.subr.mxu0 0.0
    %6111 = vmatpush1.msra.mxu0 %v6076
    %6112 = vmatprep.subr.mxu0 0.0
    %6113 = vmatpush1.msra.mxu0 %v6075
    %6114 = vmatprep.subr.mxu0 0.0
    %6115 = vmatpush1.msra.mxu0 %v6074
    %6116 = vmatprep.subr.mxu0 0.0
    %6117 = vmatpush1.msra.mxu0 %v6073
    %6118 = vmatprep.subr.mxu0 0.0
    %6119 = vmatpush1.msra.mxu0 %v6072
    %6120 = vmatprep.subr.mxu0 0.0
    %6121 = vmatpush2.msra.mxu0 0.0
    %6122 = vmatprep.subr.mxu0 0.0
    %6123 = vmatpush2.msra.mxu0 0.0
    %6124 = vmatprep.subr.mxu0 0.0
    %6125 = vmatpush2.msra.mxu0 0.0
    %6126 = vmatprep.subr.mxu0 0.0
    %6127 = vmatpush2.msra.mxu0 0.0
    %6128 = vmatprep.subr.mxu0 0.0
    %6129 = vmatpush2.msra.mxu0 0.0
    %6130 = vmatprep.subr.mxu0 0.0
    %6131 = vmatpush2.msra.mxu0 0.0
    %6132 = vmatprep.subr.mxu0 0.0
    %6133 = vmatpush2.msra.mxu0 0.0
    %6134 = vmatprep.subr.mxu0 0.0
    %6135 = vmatpush2.msra.mxu0 0.0
    %6136 = vmatprep.subr.mxu0 0.0
    %6137 = vmatpush2.msra.mxu0 0.0
    %6138 = vmatprep.subr.mxu0 0.0
    %6139 = vmatpush2.msra.mxu0 0.0
    %6140 = vmatprep.subr.mxu0 0.0
    %6141 = vmatpush2.msra.mxu0 0.0
    %6142 = vmatprep.subr.mxu0 0.0
    %6143 = vmatpush2.msra.mxu0 0.0
    %6144 = vmatprep.subr.mxu0 0.0
    %6145 = vmatpush2.msra.mxu0 0.0
    %6146 = vmatprep.subr.mxu0 0.0
    %6147 = vmatpush2.msra.mxu0 0.0
    %6148 = vmatprep.subr.mxu0 0.0
    %6149 = vmatpush2.msra.mxu0 0.0
    %6150 = vmatprep.subr.mxu0 0.0
    %6151 = vmatpush2.msra.mxu0 0.0
    %6152 = vmatprep.mubr.f32.mxu0 0.0
    %6153 = vmatmul.mubr.f32.gmra.mxu0 %v2096
    %v6154 = vpop.f32.mrf.mxu0
    %v6155 = vadd.f32 0.0, %v6154
    %v6156 = vpop.f32.mrf.mxu0
    %6157 = vmatprep.mubr.f32.mxu0 0.0
    %6158 = vmatmul.mubr.f32.gmra.mxu0 %v2097
    %v6159 = vpop.f32.mrf.mxu0
    %v6160 = vadd.f32 0.0, %v6159
    %v6161 = vpop.f32.mrf.mxu0
    %6162 = vdwg.mxu0
    %6163 = vmatprep.subr.mxu0 0.0
    %6164 = vmatpush1.msra.mxu0 %v6070
    %6165 = vmatprep.subr.mxu0 0.0
    %6166 = vmatpush1.msra.mxu0 %v6069
    %6167 = vmatprep.subr.mxu0 0.0
    %6168 = vmatpush1.msra.mxu0 %v6068
    %6169 = vmatprep.subr.mxu0 0.0
    %6170 = vmatpush1.msra.mxu0 %v6067
    %6171 = vmatprep.subr.mxu0 0.0
    %6172 = vmatpush1.msra.mxu0 %v6066
    %6173 = vmatprep.subr.mxu0 0.0
    %6174 = vmatpush1.msra.mxu0 %v6065
    %6175 = vmatprep.subr.mxu0 0.0
    %6176 = vmatpush1.msra.mxu0 %v6064
    %6177 = vmatprep.subr.mxu0 0.0
    %6178 = vmatpush1.msra.mxu0 %v6063
    %6179 = vmatprep.subr.mxu0 0.0
    %6180 = vmatpush1.msra.mxu0 %v6062
    %6181 = vmatprep.subr.mxu0 0.0
    %6182 = vmatpush1.msra.mxu0 %v6061
    %6183 = vmatprep.subr.mxu0 0.0
    %6184 = vmatpush1.msra.mxu0 %v6060
    %6185 = vmatprep.subr.mxu0 0.0
    %6186 = vmatpush1.msra.mxu0 %v6059
    %6187 = vmatprep.subr.mxu0 0.0
    %6188 = vmatpush1.msra.mxu0 %v6058
    %6189 = vmatprep.subr.mxu0 0.0
    %6190 = vmatpush1.msra.mxu0 %v6057
    %6191 = vmatprep.subr.mxu0 0.0
    %6192 = vmatpush1.msra.mxu0 %v6056
    %6193 = vmatprep.subr.mxu0 0.0
    %6194 = vmatpush1.msra.mxu0 %v6055
    %6195 = vmatprep.subr.mxu0 0.0
    %6196 = vmatpush2.msra.mxu0 0.0
    %6197 = vmatprep.subr.mxu0 0.0
    %6198 = vmatpush2.msra.mxu0 0.0
    %6199 = vmatprep.subr.mxu0 0.0
    %6200 = vmatpush2.msra.mxu0 0.0
    %6201 = vmatprep.subr.mxu0 0.0
    %6202 = vmatpush2.msra.mxu0 0.0
    %6203 = vmatprep.subr.mxu0 0.0
    %6204 = vmatpush2.msra.mxu0 0.0
    %6205 = vmatprep.subr.mxu0 0.0
    %6206 = vmatpush2.msra.mxu0 0.0
    %6207 = vmatprep.subr.mxu0 0.0
    %6208 = vmatpush2.msra.mxu0 0.0
    %6209 = vmatprep.subr.mxu0 0.0
    %6210 = vmatpush2.msra.mxu0 0.0
    %6211 = vmatprep.subr.mxu0 0.0
    %6212 = vmatpush2.msra.mxu0 0.0
    %6213 = vmatprep.subr.mxu0 0.0
    %6214 = vmatpush2.msra.mxu0 0.0
    %6215 = vmatprep.subr.mxu0 0.0
    %6216 = vmatpush2.msra.mxu0 0.0
    %6217 = vmatprep.subr.mxu0 0.0
    %6218 = vmatpush2.msra.mxu0 0.0
    %6219 = vmatprep.subr.mxu0 0.0
    %6220 = vmatpush2.msra.mxu0 0.0
    %6221 = vmatprep.subr.mxu0 0.0
    %6222 = vmatpush2.msra.mxu0 0.0
    %6223 = vmatprep.subr.mxu0 0.0
    %6224 = vmatpush2.msra.mxu0 0.0
    %6225 = vmatprep.subr.mxu0 0.0
    %6226 = vmatpush2.msra.mxu0 0.0
    %6227 = vmatprep.mubr.f32.mxu0 0.0
    %6228 = vmatmul.mubr.f32.gmra.mxu0 %v6046
    %v6229 = vpop.f32.mrf.mxu0
    %v6230 = vadd.f32 %v6155, %v6229
    %v6231 = vpop.f32.mrf.mxu0
    %6232 = vmatprep.mubr.f32.mxu0 0.0
    %6233 = vmatmul.mubr.f32.gmra.mxu0 %v6051
    %v6234 = vpop.f32.mrf.mxu0
    %v6235 = vadd.f32 %v6160, %v6234
    %v6236 = vpop.f32.mrf.mxu0
    %6237 = vdwg.mxu0
    %s6238 = scalar_lea.vmem %s13, 1
    %v6239 = vld [vmem:[%s6238] sm:$0x1]
    %v6241 = vlaneseq
    %v6242 = vshrl.u32 %v6241, 7
    %v6243 = vsub.s32 0, %v6242
    %v6244 = vrot.slane %v6239, %v6243
    %6246 = vmatprep.subr.mxu0 0.0
    %6247 = vmatpush1.msra.mxu0 0.0
    %6248 = vmatprep.subr.mxu0 0.0
    %6249 = vmatpush1.msra.mxu0 0.0
    %6250 = vmatprep.subr.mxu0 0.0
    %6251 = vmatpush1.msra.mxu0 0.0
    %6252 = vmatprep.subr.mxu0 0.0
    %6253 = vmatpush1.msra.mxu0 0.0
    %6254 = vmatprep.subr.mxu0 0.0
    %6255 = vmatpush1.msra.mxu0 0.0
    %6256 = vmatprep.subr.mxu0 0.0
    %6257 = vmatpush1.msra.mxu0 0.0
    %6258 = vmatprep.subr.mxu0 0.0
    %6259 = vmatpush1.msra.mxu0 0.0
    %6260 = vmatprep.subr.mxu0 0.0
    %6261 = vmatpush1.msra.mxu0 0.0
    %6262 = vmatprep.subr.mxu0 0.0
    %6263 = vmatpush1.msra.mxu0 0.0
    %6264 = vmatprep.subr.mxu0 0.0
    %6265 = vmatpush1.msra.mxu0 0.0
    %6266 = vmatprep.subr.mxu0 0.0
    %6267 = vmatpush1.msra.mxu0 0.0
    %6268 = vmatprep.subr.mxu0 0.0
    %6269 = vmatpush1.msra.mxu0 0.0
    %6270 = vmatprep.subr.mxu0 0.0
    %6271 = vmatpush1.msra.mxu0 0.0
    %6272 = vmatprep.subr.mxu0 0.0
    %6273 = vmatpush1.msra.mxu0 0.0
    %6274 = vmatprep.subr.mxu0 0.0
    %6275 = vmatpush1.msra.mxu0 %v6235
    %6276 = vmatprep.subr.mxu0 0.0
    %6277 = vmatpush1.msra.mxu0 %v6230
    %6278 = vmatprep.subr.mxu0 0.0
    %6279 = vmatpush2.msra.mxu0 0.0
    %6280 = vmatprep.subr.mxu0 0.0
    %6281 = vmatpush2.msra.mxu0 0.0
    %6282 = vmatprep.subr.mxu0 0.0
    %6283 = vmatpush2.msra.mxu0 0.0
    %6284 = vmatprep.subr.mxu0 0.0
    %6285 = vmatpush2.msra.mxu0 0.0
    %6286 = vmatprep.subr.mxu0 0.0
    %6287 = vmatpush2.msra.mxu0 0.0
    %6288 = vmatprep.subr.mxu0 0.0
    %6289 = vmatpush2.msra.mxu0 0.0
    %6290 = vmatprep.subr.mxu0 0.0
    %6291 = vmatpush2.msra.mxu0 0.0
    %6292 = vmatprep.subr.mxu0 0.0
    %6293 = vmatpush2.msra.mxu0 0.0
    %6294 = vmatprep.subr.mxu0 0.0
    %6295 = vmatpush2.msra.mxu0 0.0
    %6296 = vmatprep.subr.mxu0 0.0
    %6297 = vmatpush2.msra.mxu0 0.0
    %6298 = vmatprep.subr.mxu0 0.0
    %6299 = vmatpush2.msra.mxu0 0.0
    %6300 = vmatprep.subr.mxu0 0.0
    %6301 = vmatpush2.msra.mxu0 0.0
    %6302 = vmatprep.subr.mxu0 0.0
    %6303 = vmatpush2.msra.mxu0 0.0
    %6304 = vmatprep.subr.mxu0 0.0
    %6305 = vmatpush2.msra.mxu0 0.0
    %6306 = vmatprep.subr.mxu0 0.0
    %6307 = vmatpush2.msra.mxu0 0.0
    %6308 = vmatprep.subr.mxu0 0.0
    %6309 = vmatpush2.msra.mxu0 0.0
    %6310 = vmatprep.mubr.f32.mxu0 0.0
    %6311 = vmatmul.mubr.f32.gmra.mxu0 %v2002
    %v6312 = vpop.f32.mrf.mxu0
    %v6313 = vadd.f32 %v6244, %v6312
    %v6314 = vpop.f32.mrf.mxu0
    %6315 = vmatprep.mubr.f32.mxu0 0.0
    %6316 = vmatmul.mubr.f32.gmra.mxu0 %v2005
    %v6317 = vpop.f32.mrf.mxu0
    %v6318 = vadd.f32 %v6244, %v6317
    %v6319 = vpop.f32.mrf.mxu0
    %6320 = vdwg.mxu0
    %vm6321 = vcmp.gt.f32.partialorder %v6313, 0.0
    %vm6322 = vcmp.gt.f32.partialorder %v6318, 0.0
    %v6323 = vmin.f32 %v6313, 0.0
    %v6324 = vmin.f32 %v6318, 0.0
    %v6325 = vmul.f32 %v6323, 1.442695
    %v6326 = vpow.pop %v6325
    %v6327 = vmul.f32 %v6324, 1.442695
    %v6328 = vpow.pop %v6327
    %v6329 = vsub.f32 %v6326, 1.0
    %v6330 = vsub.f32 %v6328, 1.0
    %v6331 = vsel %vm6321, %v6313, %v6329
    %v6332 = vsel %vm6322, %v6318, %v6330
    %v6333 = vmul.f32 %v6331, %v6331
    %v6334 = vmul.f32 %v6332, %v6332
    %6335 = vadd.xlane.f32.xlu0 %v6333
    %v6336 = vpop.xlane.xlu0 %6335
    %6337 = vadd.xlane.f32.xlu0 %v6334
    %v6338 = vpop.xlane.xlu0 %6337
    %v6339 = vmax.f32 %v6336, 1e-24
    %v6340 = vmax.f32 %v6338, 1e-24
    %v6341 = vrsqrt.pop %v6339
    %v6342 = vrsqrt.pop %v6340
    %v6343 = vmul.f32 %v6331, %v6341
    %v6344 = vmul.f32 %v6332, %v6342
    %v6346 = vsel %vm256, %v1394, 0
    %v6349 = vsel %vm256, %v1395, 0
    %6351 = vmatprep.subr.mxu0 0.0
    %6352 = vmatpush1.msra.mxu0 0.0
    %6353 = vmatprep.subr.mxu0 0.0
    %6354 = vmatpush1.msra.mxu0 0.0
    %6355 = vmatprep.subr.mxu0 0.0
    %6356 = vmatpush1.msra.mxu0 0.0
    %6357 = vmatprep.subr.mxu0 0.0
    %6358 = vmatpush1.msra.mxu0 0.0
    %6359 = vmatprep.subr.mxu0 0.0
    %6360 = vmatpush1.msra.mxu0 0.0
    %6361 = vmatprep.subr.mxu0 0.0
    %6362 = vmatpush1.msra.mxu0 0.0
    %6363 = vmatprep.subr.mxu0 0.0
    %6364 = vmatpush1.msra.mxu0 0.0
    %6365 = vmatprep.subr.mxu0 0.0
    %6366 = vmatpush1.msra.mxu0 0.0
    %6367 = vmatprep.subr.mxu0 0.0
    %6368 = vmatpush1.msra.mxu0 0.0
    %6369 = vmatprep.subr.mxu0 0.0
    %6370 = vmatpush1.msra.mxu0 0.0
    %6371 = vmatprep.subr.mxu0 0.0
    %6372 = vmatpush1.msra.mxu0 0.0
    %6373 = vmatprep.subr.mxu0 0.0
    %6374 = vmatpush1.msra.mxu0 0.0
    %6375 = vmatprep.subr.mxu0 0.0
    %6376 = vmatpush1.msra.mxu0 0.0
    %6377 = vmatprep.subr.mxu0 0.0
    %6378 = vmatpush1.msra.mxu0 0.0
    %6379 = vmatprep.subr.mxu0 0.0
    %6380 = vmatpush1.msra.mxu0 %v6344
    %6381 = vmatprep.subr.mxu0 0.0
    %6382 = vmatpush1.msra.mxu0 %v6343
    %6383 = vmatprep.subr.mxu0 0.0
    %6384 = vmatpush2.msra.mxu0 0.0
    %6385 = vmatprep.subr.mxu0 0.0
    %6386 = vmatpush2.msra.mxu0 0.0
    %6387 = vmatprep.subr.mxu0 0.0
    %6388 = vmatpush2.msra.mxu0 0.0
    %6389 = vmatprep.subr.mxu0 0.0
    %6390 = vmatpush2.msra.mxu0 0.0
    %6391 = vmatprep.subr.mxu0 0.0
    %6392 = vmatpush2.msra.mxu0 0.0
    %6393 = vmatprep.subr.mxu0 0.0
    %6394 = vmatpush2.msra.mxu0 0.0
    %6395 = vmatprep.subr.mxu0 0.0
    %6396 = vmatpush2.msra.mxu0 0.0
    %6397 = vmatprep.subr.mxu0 0.0
    %6398 = vmatpush2.msra.mxu0 0.0
    %6399 = vmatprep.subr.mxu0 0.0
    %6400 = vmatpush2.msra.mxu0 0.0
    %6401 = vmatprep.subr.mxu0 0.0
    %6402 = vmatpush2.msra.mxu0 0.0
    %6403 = vmatprep.subr.mxu0 0.0
    %6404 = vmatpush2.msra.mxu0 0.0
    %6405 = vmatprep.subr.mxu0 0.0
    %6406 = vmatpush2.msra.mxu0 0.0
    %6407 = vmatprep.subr.mxu0 0.0
    %6408 = vmatpush2.msra.mxu0 0.0
    %6409 = vmatprep.subr.mxu0 0.0
    %6410 = vmatpush2.msra.mxu0 0.0
    %6411 = vmatprep.subr.mxu0 0.0
    %6412 = vmatpush2.msra.mxu0 0.0
    %6413 = vmatprep.subr.mxu0 0.0
    %6414 = vmatpush2.msra.mxu0 0.0
    %6415 = vmatprep.mubr.f32.mxu0 0.0
    %6416 = vmatmul.mubr.f32.gmra.mxu0 %v6346
    %v6417 = vpop.f32.mrf.mxu0
    %v6418 = vadd.f32 0.0, %v6417
    %v6419 = vpop.f32.mrf.mxu0
    %6420 = vmatprep.mubr.f32.mxu0 0.0
    %6421 = vmatmul.mubr.f32.gmra.mxu0 %v6349
    %v6422 = vpop.f32.mrf.mxu0
    %v6423 = vadd.f32 0.0, %v6422
    %v6424 = vpop.f32.mrf.mxu0
    %6425 = vdwg.mxu0
    %s6426 = scalar_lea.vmem [#allocation8], 256
    %v6427 = vld [vmem:[%s6426] sm:$0xff]
    %v6428 = vld [vmem:[%s6426 + $0x8] sm:$0xff]
    %v6429 = vld [vmem:[%s6426 + $0x10] sm:$0xff]
    %v6430 = vld [vmem:[%s6426 + $0x18] sm:$0xff]
    %v6431 = vld [vmem:[%s6426 + $0x20] sm:$0xff]
    %v6432 = vld [vmem:[%s6426 + $0x28] sm:$0xff]
    %v6433 = vld [vmem:[%s6426 + $0x30] sm:$0xff]
    %v6434 = vld [vmem:[%s6426 + $0x38] sm:$0xff]
    %v6435 = vld [vmem:[%s6426 + $0x40] sm:$0xff]
    %v6436 = vld [vmem:[%s6426 + $0x48] sm:$0xff]
    %v6437 = vld [vmem:[%s6426 + $0x50] sm:$0xff]
    %v6438 = vld [vmem:[%s6426 + $0x58] sm:$0xff]
    %v6439 = vld [vmem:[%s6426 + $0x60] sm:$0xff]
    %v6440 = vld [vmem:[%s6426 + $0x68] sm:$0xff]
    %v6441 = vld [vmem:[%s6426 + $0x70] sm:$0xff]
    %v6442 = vld [vmem:[%s6426 + $0x78] sm:$0xff]
    %s6443 = scalar_lea.vmem [#allocation10], 256
    %v6444 = vld [vmem:[%s6443] sm:$0xff]
    %v6445 = vld [vmem:[%s6443 + $0x8] sm:$0xff]
    %v6446 = vld [vmem:[%s6443 + $0x10] sm:$0xff]
    %v6447 = vld [vmem:[%s6443 + $0x18] sm:$0xff]
    %v6448 = vld [vmem:[%s6443 + $0x20] sm:$0xff]
    %v6449 = vld [vmem:[%s6443 + $0x28] sm:$0xff]
    %v6450 = vld [vmem:[%s6443 + $0x30] sm:$0xff]
    %v6451 = vld [vmem:[%s6443 + $0x38] sm:$0xff]
    %v6452 = vld [vmem:[%s6443 + $0x40] sm:$0xff]
    %v6453 = vld [vmem:[%s6443 + $0x48] sm:$0xff]
    %v6454 = vld [vmem:[%s6443 + $0x50] sm:$0xff]
    %v6455 = vld [vmem:[%s6443 + $0x58] sm:$0xff]
    %v6456 = vld [vmem:[%s6443 + $0x60] sm:$0xff]
    %v6457 = vld [vmem:[%s6443 + $0x68] sm:$0xff]
    %v6458 = vld [vmem:[%s6443 + $0x70] sm:$0xff]
    %v6459 = vld [vmem:[%s6443 + $0x78] sm:$0xff]
    %6460 = vmatprep.subr.mxu0 0.0
    %6461 = vmatpush1.msra.mxu0 %v6459
    %6462 = vmatprep.subr.mxu0 0.0
    %6463 = vmatpush1.msra.mxu0 %v6458
    %6464 = vmatprep.subr.mxu0 0.0
    %6465 = vmatpush1.msra.mxu0 %v6457
    %6466 = vmatprep.subr.mxu0 0.0
    %6467 = vmatpush1.msra.mxu0 %v6456
    %6468 = vmatprep.subr.mxu0 0.0
    %6469 = vmatpush1.msra.mxu0 %v6455
    %6470 = vmatprep.subr.mxu0 0.0
    %6471 = vmatpush1.msra.mxu0 %v6454
    %6472 = vmatprep.subr.mxu0 0.0
    %6473 = vmatpush1.msra.mxu0 %v6453
    %6474 = vmatprep.subr.mxu0 0.0
    %6475 = vmatpush1.msra.mxu0 %v6452
    %6476 = vmatprep.subr.mxu0 0.0
    %6477 = vmatpush1.msra.mxu0 %v6451
    %6478 = vmatprep.subr.mxu0 0.0
    %6479 = vmatpush1.msra.mxu0 %v6450
    %6480 = vmatprep.subr.mxu0 0.0
    %6481 = vmatpush1.msra.mxu0 %v6449
    %6482 = vmatprep.subr.mxu0 0.0
    %6483 = vmatpush1.msra.mxu0 %v6448
    %6484 = vmatprep.subr.mxu0 0.0
    %6485 = vmatpush1.msra.mxu0 %v6447
    %6486 = vmatprep.subr.mxu0 0.0
    %6487 = vmatpush1.msra.mxu0 %v6446
    %6488 = vmatprep.subr.mxu0 0.0
    %6489 = vmatpush1.msra.mxu0 %v6445
    %6490 = vmatprep.subr.mxu0 0.0
    %6491 = vmatpush1.msra.mxu0 %v6444
    %6492 = vmatprep.subr.mxu0 0.0
    %6493 = vmatpush2.msra.mxu0 0.0
    %6494 = vmatprep.subr.mxu0 0.0
    %6495 = vmatpush2.msra.mxu0 0.0
    %6496 = vmatprep.subr.mxu0 0.0
    %6497 = vmatpush2.msra.mxu0 0.0
    %6498 = vmatprep.subr.mxu0 0.0
    %6499 = vmatpush2.msra.mxu0 0.0
    %6500 = vmatprep.subr.mxu0 0.0
    %6501 = vmatpush2.msra.mxu0 0.0
    %6502 = vmatprep.subr.mxu0 0.0
    %6503 = vmatpush2.msra.mxu0 0.0
    %6504 = vmatprep.subr.mxu0 0.0
    %6505 = vmatpush2.msra.mxu0 0.0
    %6506 = vmatprep.subr.mxu0 0.0
    %6507 = vmatpush2.msra.mxu0 0.0
    %6508 = vmatprep.subr.mxu0 0.0
    %6509 = vmatpush2.msra.mxu0 0.0
    %6510 = vmatprep.subr.mxu0 0.0
    %6511 = vmatpush2.msra.mxu0 0.0
    %6512 = vmatprep.subr.mxu0 0.0
    %6513 = vmatpush2.msra.mxu0 0.0
    %6514 = vmatprep.subr.mxu0 0.0
    %6515 = vmatpush2.msra.mxu0 0.0
    %6516 = vmatprep.subr.mxu0 0.0
    %6517 = vmatpush2.msra.mxu0 0.0
    %6518 = vmatprep.subr.mxu0 0.0
    %6519 = vmatpush2.msra.mxu0 0.0
    %6520 = vmatprep.subr.mxu0 0.0
    %6521 = vmatpush2.msra.mxu0 0.0
    %6522 = vmatprep.subr.mxu0 0.0
    %6523 = vmatpush2.msra.mxu0 0.0
    %6524 = vmatprep.mubr.f32.mxu0 0.0
    %6525 = vmatmul.mubr.f32.gmra.mxu0 %v350
    %v6526 = vpop.f32.mrf.mxu0
    %v6527 = vadd.f32 0.0, %v6526
    %v6528 = vpop.f32.mrf.mxu0
    %6529 = vmatprep.mubr.f32.mxu0 0.0
    %6530 = vmatmul.mubr.f32.gmra.mxu0 %v351
    %v6531 = vpop.f32.mrf.mxu0
    %v6532 = vadd.f32 0.0, %v6531
    %v6533 = vpop.f32.mrf.mxu0
    %6534 = vdwg.mxu0
    %6535 = vmatprep.subr.mxu0 0.0
    %6536 = vmatpush1.msra.mxu0 %v6442
    %6537 = vmatprep.subr.mxu0 0.0
    %6538 = vmatpush1.msra.mxu0 %v6441
    %6539 = vmatprep.subr.mxu0 0.0
    %6540 = vmatpush1.msra.mxu0 %v6440
    %6541 = vmatprep.subr.mxu0 0.0
    %6542 = vmatpush1.msra.mxu0 %v6439
    %6543 = vmatprep.subr.mxu0 0.0
    %6544 = vmatpush1.msra.mxu0 %v6438
    %6545 = vmatprep.subr.mxu0 0.0
    %6546 = vmatpush1.msra.mxu0 %v6437
    %6547 = vmatprep.subr.mxu0 0.0
    %6548 = vmatpush1.msra.mxu0 %v6436
    %6549 = vmatprep.subr.mxu0 0.0
    %6550 = vmatpush1.msra.mxu0 %v6435
    %6551 = vmatprep.subr.mxu0 0.0
    %6552 = vmatpush1.msra.mxu0 %v6434
    %6553 = vmatprep.subr.mxu0 0.0
    %6554 = vmatpush1.msra.mxu0 %v6433
    %6555 = vmatprep.subr.mxu0 0.0
    %6556 = vmatpush1.msra.mxu0 %v6432
    %6557 = vmatprep.subr.mxu0 0.0
    %6558 = vmatpush1.msra.mxu0 %v6431
    %6559 = vmatprep.subr.mxu0 0.0
    %6560 = vmatpush1.msra.mxu0 %v6430
    %6561 = vmatprep.subr.mxu0 0.0
    %6562 = vmatpush1.msra.mxu0 %v6429
    %6563 = vmatprep.subr.mxu0 0.0
    %6564 = vmatpush1.msra.mxu0 %v6428
    %6565 = vmatprep.subr.mxu0 0.0
    %6566 = vmatpush1.msra.mxu0 %v6427
    %6567 = vmatprep.subr.mxu0 0.0
    %6568 = vmatpush2.msra.mxu0 0.0
    %6569 = vmatprep.subr.mxu0 0.0
    %6570 = vmatpush2.msra.mxu0 0.0
    %6571 = vmatprep.subr.mxu0 0.0
    %6572 = vmatpush2.msra.mxu0 0.0
    %6573 = vmatprep.subr.mxu0 0.0
    %6574 = vmatpush2.msra.mxu0 0.0
    %6575 = vmatprep.subr.mxu0 0.0
    %6576 = vmatpush2.msra.mxu0 0.0
    %6577 = vmatprep.subr.mxu0 0.0
    %6578 = vmatpush2.msra.mxu0 0.0
    %6579 = vmatprep.subr.mxu0 0.0
    %6580 = vmatpush2.msra.mxu0 0.0
    %6581 = vmatprep.subr.mxu0 0.0
    %6582 = vmatpush2.msra.mxu0 0.0
    %6583 = vmatprep.subr.mxu0 0.0
    %6584 = vmatpush2.msra.mxu0 0.0
    %6585 = vmatprep.subr.mxu0 0.0
    %6586 = vmatpush2.msra.mxu0 0.0
    %6587 = vmatprep.subr.mxu0 0.0
    %6588 = vmatpush2.msra.mxu0 0.0
    %6589 = vmatprep.subr.mxu0 0.0
    %6590 = vmatpush2.msra.mxu0 0.0
    %6591 = vmatprep.subr.mxu0 0.0
    %6592 = vmatpush2.msra.mxu0 0.0
    %6593 = vmatprep.subr.mxu0 0.0
    %6594 = vmatpush2.msra.mxu0 0.0
    %6595 = vmatprep.subr.mxu0 0.0
    %6596 = vmatpush2.msra.mxu0 0.0
    %6597 = vmatprep.subr.mxu0 0.0
    %6598 = vmatpush2.msra.mxu0 0.0
    %6599 = vmatprep.mubr.f32.mxu0 0.0
    %6600 = vmatmul.mubr.f32.gmra.mxu0 %v6418
    %v6601 = vpop.f32.mrf.mxu0
    %v6602 = vadd.f32 %v6527, %v6601
    %v6603 = vpop.f32.mrf.mxu0
    %6604 = vmatprep.mubr.f32.mxu0 0.0
    %6605 = vmatmul.mubr.f32.gmra.mxu0 %v6423
    %v6606 = vpop.f32.mrf.mxu0
    %v6607 = vadd.f32 %v6532, %v6606
    %v6608 = vpop.f32.mrf.mxu0
    %6609 = vdwg.mxu0
    %s6610 = scalar_lea.vmem %s13, 2
    %v6611 = vld [vmem:[%s6610] sm:$0x1]
    %v6613 = vlaneseq
    %v6614 = vshrl.u32 %v6613, 7
    %v6615 = vsub.s32 0, %v6614
    %v6616 = vrot.slane %v6611, %v6615
    %6618 = vmatprep.subr.mxu0 0.0
    %6619 = vmatpush1.msra.mxu0 0.0
    %6620 = vmatprep.subr.mxu0 0.0
    %6621 = vmatpush1.msra.mxu0 0.0
    %6622 = vmatprep.subr.mxu0 0.0
    %6623 = vmatpush1.msra.mxu0 0.0
    %6624 = vmatprep.subr.mxu0 0.0
    %6625 = vmatpush1.msra.mxu0 0.0
    %6626 = vmatprep.subr.mxu0 0.0
    %6627 = vmatpush1.msra.mxu0 0.0
    %6628 = vmatprep.subr.mxu0 0.0
    %6629 = vmatpush1.msra.mxu0 0.0
    %6630 = vmatprep.subr.mxu0 0.0
    %6631 = vmatpush1.msra.mxu0 0.0
    %6632 = vmatprep.subr.mxu0 0.0
    %6633 = vmatpush1.msra.mxu0 0.0
    %6634 = vmatprep.subr.mxu0 0.0
    %6635 = vmatpush1.msra.mxu0 0.0
    %6636 = vmatprep.subr.mxu0 0.0
    %6637 = vmatpush1.msra.mxu0 0.0
    %6638 = vmatprep.subr.mxu0 0.0
    %6639 = vmatpush1.msra.mxu0 0.0
    %6640 = vmatprep.subr.mxu0 0.0
    %6641 = vmatpush1.msra.mxu0 0.0
    %6642 = vmatprep.subr.mxu0 0.0
    %6643 = vmatpush1.msra.mxu0 0.0
    %6644 = vmatprep.subr.mxu0 0.0
    %6645 = vmatpush1.msra.mxu0 0.0
    %6646 = vmatprep.subr.mxu0 0.0
    %6647 = vmatpush1.msra.mxu0 %v6607
    %6648 = vmatprep.subr.mxu0 0.0
    %6649 = vmatpush1.msra.mxu0 %v6602
    %6650 = vmatprep.subr.mxu0 0.0
    %6651 = vmatpush2.msra.mxu0 0.0
    %6652 = vmatprep.subr.mxu0 0.0
    %6653 = vmatpush2.msra.mxu0 0.0
    %6654 = vmatprep.subr.mxu0 0.0
    %6655 = vmatpush2.msra.mxu0 0.0
    %6656 = vmatprep.subr.mxu0 0.0
    %6657 = vmatpush2.msra.mxu0 0.0
    %6658 = vmatprep.subr.mxu0 0.0
    %6659 = vmatpush2.msra.mxu0 0.0
    %6660 = vmatprep.subr.mxu0 0.0
    %6661 = vmatpush2.msra.mxu0 0.0
    %6662 = vmatprep.subr.mxu0 0.0
    %6663 = vmatpush2.msra.mxu0 0.0
    %6664 = vmatprep.subr.mxu0 0.0
    %6665 = vmatpush2.msra.mxu0 0.0
    %6666 = vmatprep.subr.mxu0 0.0
    %6667 = vmatpush2.msra.mxu0 0.0
    %6668 = vmatprep.subr.mxu0 0.0
    %6669 = vmatpush2.msra.mxu0 0.0
    %6670 = vmatprep.subr.mxu0 0.0
    %6671 = vmatpush2.msra.mxu0 0.0
    %6672 = vmatprep.subr.mxu0 0.0
    %6673 = vmatpush2.msra.mxu0 0.0
    %6674 = vmatprep.subr.mxu0 0.0
    %6675 = vmatpush2.msra.mxu0 0.0
    %6676 = vmatprep.subr.mxu0 0.0
    %6677 = vmatpush2.msra.mxu0 0.0
    %6678 = vmatprep.subr.mxu0 0.0
    %6679 = vmatpush2.msra.mxu0 0.0
    %6680 = vmatprep.subr.mxu0 0.0
    %6681 = vmatpush2.msra.mxu0 0.0
    %6682 = vmatprep.mubr.f32.mxu0 0.0
    %6683 = vmatmul.mubr.f32.gmra.mxu0 %v258
    %v6684 = vpop.f32.mrf.mxu0
    %v6685 = vadd.f32 %v6616, %v6684
    %v6686 = vpop.f32.mrf.mxu0
    %6687 = vmatprep.mubr.f32.mxu0 0.0
    %6688 = vmatmul.mubr.f32.gmra.mxu0 %v261
    %v6689 = vpop.f32.mrf.mxu0
    %v6690 = vadd.f32 %v6616, %v6689
    %v6691 = vpop.f32.mrf.mxu0
    %6692 = vdwg.mxu0
    %vm6693 = vcmp.gt.f32.partialorder %v6685, 0.0
    %vm6694 = vcmp.gt.f32.partialorder %v6690, 0.0
    %v6695 = vmin.f32 %v6685, 0.0
    %v6696 = vmin.f32 %v6690, 0.0
    %v6697 = vmul.f32 %v6695, 1.442695
    %v6698 = vpow.pop %v6697
    %v6699 = vmul.f32 %v6696, 1.442695
    %v6700 = vpow.pop %v6699
    %v6701 = vsub.f32 %v6698, 1.0
    %v6702 = vsub.f32 %v6700, 1.0
    %v6703 = vsel %vm6693, %v6685, %v6701
    %v6704 = vsel %vm6694, %v6690, %v6702
    %v6705 = vmul.f32 %v6703, %v6703
    %v6706 = vmul.f32 %v6704, %v6704
    %6707 = vadd.xlane.f32.xlu0 %v6705
    %v6708 = vpop.xlane.xlu0 %6707
    %6709 = vadd.xlane.f32.xlu0 %v6706
    %v6710 = vpop.xlane.xlu0 %6709
    %v6711 = vmax.f32 %v6708, 1e-24
    %v6712 = vmax.f32 %v6710, 1e-24
    %v6713 = vrsqrt.pop %v6711
    %v6714 = vrsqrt.pop %v6712
    %v6715 = vmul.f32 %v6703, %v6713
    %v6716 = vmul.f32 %v6704, %v6714
    %v6717 = vld [vmem:[#allocation11] sm:$0xff]
    %v6718 = vld [vmem:[#allocation11 + $0x8] sm:$0xff]
    %v6719 = vld [vmem:[#allocation11 + $0x10] sm:$0xff]
    %v6720 = vld [vmem:[#allocation11 + $0x18] sm:$0xff]
    %v6721 = vld [vmem:[#allocation11 + $0x20] sm:$0xff]
    %v6722 = vld [vmem:[#allocation11 + $0x28] sm:$0xff]
    %v6723 = vld [vmem:[#allocation11 + $0x30] sm:$0xff]
    %v6724 = vld [vmem:[#allocation11 + $0x38] sm:$0xff]
    %v6725 = vld [vmem:[#allocation11 + $0x40] sm:$0xff]
    %v6726 = vld [vmem:[#allocation11 + $0x48] sm:$0xff]
    %v6727 = vld [vmem:[#allocation11 + $0x50] sm:$0xff]
    %v6728 = vld [vmem:[#allocation11 + $0x58] sm:$0xff]
    %v6729 = vld [vmem:[#allocation11 + $0x60] sm:$0xff]
    %v6730 = vld [vmem:[#allocation11 + $0x68] sm:$0xff]
    %v6731 = vld [vmem:[#allocation11 + $0x70] sm:$0xff]
    %v6732 = vld [vmem:[#allocation11 + $0x78] sm:$0xff]
    %6733 = vmatprep.subr.mxu0 0.0
    %6734 = vmatpush1.msra.mxu0 %v6732
    %6735 = vmatprep.subr.mxu0 0.0
    %6736 = vmatpush1.msra.mxu0 %v6731
    %6737 = vmatprep.subr.mxu0 0.0
    %6738 = vmatpush1.msra.mxu0 %v6730
    %6739 = vmatprep.subr.mxu0 0.0
    %6740 = vmatpush1.msra.mxu0 %v6729
    %6741 = vmatprep.subr.mxu0 0.0
    %6742 = vmatpush1.msra.mxu0 %v6728
    %6743 = vmatprep.subr.mxu0 0.0
    %6744 = vmatpush1.msra.mxu0 %v6727
    %6745 = vmatprep.subr.mxu0 0.0
    %6746 = vmatpush1.msra.mxu0 %v6726
    %6747 = vmatprep.subr.mxu0 0.0
    %6748 = vmatpush1.msra.mxu0 %v6725
    %6749 = vmatprep.subr.mxu0 0.0
    %6750 = vmatpush1.msra.mxu0 %v6724
    %6751 = vmatprep.subr.mxu0 0.0
    %6752 = vmatpush1.msra.mxu0 %v6723
    %6753 = vmatprep.subr.mxu0 0.0
    %6754 = vmatpush1.msra.mxu0 %v6722
    %6755 = vmatprep.subr.mxu0 0.0
    %6756 = vmatpush1.msra.mxu0 %v6721
    %6757 = vmatprep.subr.mxu0 0.0
    %6758 = vmatpush1.msra.mxu0 %v6720
    %6759 = vmatprep.subr.mxu0 0.0
    %6760 = vmatpush1.msra.mxu0 %v6719
    %6761 = vmatprep.subr.mxu0 0.0
    %6762 = vmatpush1.msra.mxu0 %v6718
    %6763 = vmatprep.subr.mxu0 0.0
    %6764 = vmatpush1.msra.mxu0 %v6717
    %6765 = vmatprep.subr.mxu0 0.0
    %6766 = vmatpush2.msra.mxu0 0.0
    %6767 = vmatprep.subr.mxu0 0.0
    %6768 = vmatpush2.msra.mxu0 0.0
    %6769 = vmatprep.subr.mxu0 0.0
    %6770 = vmatpush2.msra.mxu0 0.0
    %6771 = vmatprep.subr.mxu0 0.0
    %6772 = vmatpush2.msra.mxu0 0.0
    %6773 = vmatprep.subr.mxu0 0.0
    %6774 = vmatpush2.msra.mxu0 0.0
    %6775 = vmatprep.subr.mxu0 0.0
    %6776 = vmatpush2.msra.mxu0 0.0
    %6777 = vmatprep.subr.mxu0 0.0
    %6778 = vmatpush2.msra.mxu0 0.0
    %6779 = vmatprep.subr.mxu0 0.0
    %6780 = vmatpush2.msra.mxu0 0.0
    %6781 = vmatprep.subr.mxu0 0.0
    %6782 = vmatpush2.msra.mxu0 0.0
    %6783 = vmatprep.subr.mxu0 0.0
    %6784 = vmatpush2.msra.mxu0 0.0
    %6785 = vmatprep.subr.mxu0 0.0
    %6786 = vmatpush2.msra.mxu0 0.0
    %6787 = vmatprep.subr.mxu0 0.0
    %6788 = vmatpush2.msra.mxu0 0.0
    %6789 = vmatprep.subr.mxu0 0.0
    %6790 = vmatpush2.msra.mxu0 0.0
    %6791 = vmatprep.subr.mxu0 0.0
    %6792 = vmatpush2.msra.mxu0 0.0
    %6793 = vmatprep.subr.mxu0 0.0
    %6794 = vmatpush2.msra.mxu0 0.0
    %6795 = vmatprep.subr.mxu0 0.0
    %6796 = vmatpush2.msra.mxu0 0.0
    %6797 = vmatprep.mubr.f32.mxu0 0.0
    %6798 = vmatmul.mubr.f32.gmra.mxu0 %v6715
    %v6799 = vpop.f32.mrf.mxu0
    %v6800 = vadd.f32 0.0, %v6799
    %v6801 = vpop.f32.mrf.mxu0
    %6802 = vmatprep.mubr.f32.mxu0 0.0
    %6803 = vmatmul.mubr.f32.gmra.mxu0 %v6716
    %v6804 = vpop.f32.mrf.mxu0
    %v6805 = vadd.f32 0.0, %v6804
    %v6806 = vpop.f32.mrf.mxu0
    %6807 = vdwg.mxu0
    %v6808 = vld [vmem:[%s15] sm:$0x1]
    %v6810 = vlaneseq
    %v6811 = vshrl.u32 %v6810, 7
    %v6812 = vsub.s32 0, %v6811
    %v6813 = vrot.slane %v6808, %v6812
    %6815 = vmatprep.subr.mxu0 0.0
    %6816 = vmatpush1.msra.mxu0 0.0
    %6817 = vmatprep.subr.mxu0 0.0
    %6818 = vmatpush1.msra.mxu0 0.0
    %6819 = vmatprep.subr.mxu0 0.0
    %6820 = vmatpush1.msra.mxu0 0.0
    %6821 = vmatprep.subr.mxu0 0.0
    %6822 = vmatpush1.msra.mxu0 0.0
    %6823 = vmatprep.subr.mxu0 0.0
    %6824 = vmatpush1.msra.mxu0 0.0
    %6825 = vmatprep.subr.mxu0 0.0
    %6826 = vmatpush1.msra.mxu0 0.0
    %6827 = vmatprep.subr.mxu0 0.0
    %6828 = vmatpush1.msra.mxu0 0.0
    %6829 = vmatprep.subr.mxu0 0.0
    %6830 = vmatpush1.msra.mxu0 0.0
    %6831 = vmatprep.subr.mxu0 0.0
    %6832 = vmatpush1.msra.mxu0 0.0
    %6833 = vmatprep.subr.mxu0 0.0
    %6834 = vmatpush1.msra.mxu0 0.0
    %6835 = vmatprep.subr.mxu0 0.0
    %6836 = vmatpush1.msra.mxu0 0.0
    %6837 = vmatprep.subr.mxu0 0.0
    %6838 = vmatpush1.msra.mxu0 0.0
    %6839 = vmatprep.subr.mxu0 0.0
    %6840 = vmatpush1.msra.mxu0 0.0
    %6841 = vmatprep.subr.mxu0 0.0
    %6842 = vmatpush1.msra.mxu0 0.0
    %6843 = vmatprep.subr.mxu0 0.0
    %6844 = vmatpush1.msra.mxu0 %v6805
    %6845 = vmatprep.subr.mxu0 0.0
    %6846 = vmatpush1.msra.mxu0 %v6800
    %6847 = vmatprep.subr.mxu0 0.0
    %6848 = vmatpush2.msra.mxu0 0.0
    %6849 = vmatprep.subr.mxu0 0.0
    %6850 = vmatpush2.msra.mxu0 0.0
    %6851 = vmatprep.subr.mxu0 0.0
    %6852 = vmatpush2.msra.mxu0 0.0
    %6853 = vmatprep.subr.mxu0 0.0
    %6854 = vmatpush2.msra.mxu0 0.0
    %6855 = vmatprep.subr.mxu0 0.0
    %6856 = vmatpush2.msra.mxu0 0.0
    %6857 = vmatprep.subr.mxu0 0.0
    %6858 = vmatpush2.msra.mxu0 0.0
    %6859 = vmatprep.subr.mxu0 0.0
    %6860 = vmatpush2.msra.mxu0 0.0
    %6861 = vmatprep.subr.mxu0 0.0
    %6862 = vmatpush2.msra.mxu0 0.0
    %6863 = vmatprep.subr.mxu0 0.0
    %6864 = vmatpush2.msra.mxu0 0.0
    %6865 = vmatprep.subr.mxu0 0.0
    %6866 = vmatpush2.msra.mxu0 0.0
    %6867 = vmatprep.subr.mxu0 0.0
    %6868 = vmatpush2.msra.mxu0 0.0
    %6869 = vmatprep.subr.mxu0 0.0
    %6870 = vmatpush2.msra.mxu0 0.0
    %6871 = vmatprep.subr.mxu0 0.0
    %6872 = vmatpush2.msra.mxu0 0.0
    %6873 = vmatprep.subr.mxu0 0.0
    %6874 = vmatpush2.msra.mxu0 0.0
    %6875 = vmatprep.subr.mxu0 0.0
    %6876 = vmatpush2.msra.mxu0 0.0
    %6877 = vmatprep.subr.mxu0 0.0
    %6878 = vmatpush2.msra.mxu0 0.0
    %6879 = vmatprep.mubr.f32.mxu0 0.0
    %6880 = vmatmul.mubr.f32.gmra.mxu0 %v258
    %v6881 = vpop.f32.mrf.mxu0
    %v6882 = vadd.f32 %v6813, %v6881
    %v6883 = vpop.f32.mrf.mxu0
    %6884 = vmatprep.mubr.f32.mxu0 0.0
    %6885 = vmatmul.mubr.f32.gmra.mxu0 %v261
    %v6886 = vpop.f32.mrf.mxu0
    %v6887 = vadd.f32 %v6813, %v6886
    %v6888 = vpop.f32.mrf.mxu0
    %6889 = vdwg.mxu0
    %vm6890 = vcmp.lt.s32.totalorder %v148, 4
    %v6891 = vsel %vm6890, %v6882, -1e+30
    %v6892 = vsel %vm6890, %v6887, -1e+30
    %6893 = vmax.xlane.f32.xlu0 %v6891
    %v6894 = vpop.xlane.xlu0 %6893
    %6895 = vmax.xlane.f32.xlu0 %v6892
    %v6896 = vpop.xlane.xlu0 %6895
    %v6897 = vsub.f32 %v6891, %v6894
    %v6898 = vsub.f32 %v6892, %v6896
    %v6899 = vmul.f32 %v6897, 1.442695
    %v6900 = vpow.pop %v6899
    %v6901 = vmul.f32 %v6898, 1.442695
    %v6902 = vpow.pop %v6901
    %6903 = vadd.xlane.f32.xlu0 %v6900
    %v6904 = vpop.xlane.xlu0 %6903
    %6905 = vadd.xlane.f32.xlu0 %v6902
    %v6906 = vpop.xlane.xlu0 %6905
    %v6907 = vlog2.pop %v6904
    %v6908 = vmul.f32 %v6907, 0.6931472
    %v6909 = vlog2.pop %v6906
    %v6910 = vmul.f32 %v6909, 0.6931472
    %v6911 = vadd.f32 %v6894, %v6908
    %v6912 = vadd.f32 %v6896, %v6910
    %v6913 = vsub.f32 %v6891, %v6911
    %v6914 = vsub.f32 %v6892, %v6912
    %6915 = vst [vmem:[%s16] sm:$0xff] %v6913
    %6916 = vst [vmem:[%s16 + $0x8] sm:$0xff] %v6914
    // Predicated region
    $region111: #{edgecut_forward.1} parent=1 // pred_check
      _
    $region112: #{edgecut_forward.1} parent=1 // pred_check_branch
      %6918 = sbr.rel (0) target = $region114
    $region113: #{edgecut_forward.1} parent=1 // pred_region
      _
    $region114: #{edgecut_forward.1} parent=1 // pred_fallthru
      _
    // Predicated region
    $region115: #{edgecut_forward.1} parent=1 // pred_check
      _
    $region116: #{edgecut_forward.1} parent=1 // pred_check_branch
      %6920 = sbr.rel (0) target = $region118
    $region117: #{edgecut_forward.1} parent=1 // pred_region
      _
    $region118: #{edgecut_forward.1} parent=1 // pred_fallthru
      _
    // Predicated region
    $region119: #{edgecut_forward.1} parent=1 // pred_check
      _
    $region120: #{edgecut_forward.1} parent=1 // pred_check_branch
      %6922 = sbr.rel (0) target = $region122
    $region121: #{edgecut_forward.1} parent=1 // pred_region
      _
    $region122: #{edgecut_forward.1} parent=1 // pred_fallthru
      _
    // Predicated region
    $region123: #{edgecut_forward.1} parent=1 // pred_check
      _
    $region124: #{edgecut_forward.1} parent=1 // pred_check_branch
      %6924 = sbr.rel (0) target = $region126
    $region125: #{edgecut_forward.1} parent=1 // pred_region
      _
    $region126: #{edgecut_forward.1} parent=1 // pred_fallthru
      _
    // Predicated region
    $region127: #{edgecut_forward.1} parent=1 // pred_check
      _
    $region128: #{edgecut_forward.1} parent=1 // pred_check_branch
      %6926 = sbr.rel (0) target = $region130
    $region129: #{edgecut_forward.1} parent=1 // pred_region
      _
    $region130: #{edgecut_forward.1} parent=1 // pred_fallthru
      _
    // Predicated region
    $region131: #{edgecut_forward.1} parent=1 // pred_check
      _
    $region132: #{edgecut_forward.1} parent=1 // pred_check_branch
      %6928 = sbr.rel (0) target = $region134
    $region133: #{edgecut_forward.1} parent=1 // pred_region
      _
    $region134: #{edgecut_forward.1} parent=1 // pred_fallthru
      _
    %6929 = vsyncpa [#allocation4], 1
    %6930 = vsyncpa [#allocation6], 1
    %6931 = vsyncpa [#allocation9], 1
    %6932 = vsyncpa [#allocation12], 1

</llo_original>
